<compile_context>
chip_gen: v6e
topology: v6e:2x2x1
jax: 0.10.0
libtpu: 0.0.40
codegen_flags: <defaults>
</compile_context>

<pallas_src>
import math
import functools

import jax
import jax.numpy as jnp
from jax.experimental import pallas as pl
from jax.experimental.pallas import tpu as pltpu

NEF = 32
EPS = 1e-5              # nn.InstanceNorm2d default eps
NEG_SLOPE = 0.2         # LeakyReLU(0.2)
INV_SQRT2 = 1.0 / math.sqrt(2.0)

# MXU input dtype.  Kept f32 to match PyTorch numerics exactly; on v6e/v7x set
# to jnp.bfloat16 for ~2x MXU throughput and half the conv DMA bytes
# (accumulation stays f32 via preferred_element_type).  Keep f32 on v5e.
MXU_DTYPE = jnp.float32


# ------------------------- conv kernel -------------------------

def _conv_tap_kernel(*refs, kw, stride, owc, fuse_res, res_scale):
    """Direct conv.  grid = (N, OH, KH); KH (tap rows) is the reduction axis.

    Per grid step one output row (owc x Cout) receives the contribution of one
    kernel row: KW statically-unrolled MXU matmuls accumulated into an f32
    VMEM scratch.  Bias (and optionally residual skip + scale) fused into the
    finalize epilogue at the last tap row.
    """
    if fuse_res:
        x_ref, w_ref, b_ref, r_ref, o_ref, acc_ref = refs
    else:
        x_ref, w_ref, b_ref, o_ref, acc_ref = refs

    kh = pl.program_id(2)

    @pl.when(kh == 0)
    def _init():
        acc_ref[...] = jnp.zeros_like(acc_ref)

    row = pl.program_id(1) * stride + kh          # exact row stride (no waste)
    part = jnp.zeros(acc_ref.shape, jnp.float32)
    for j in range(kw):                            # static unroll over KW taps
        win = x_ref[0, row, pl.ds(j, owc), :]      # (owc, Kc) static col slice
        w_t = w_ref[kh * kw + j]                   # (Kc, Cout), weight resident
        part = part + jnp.dot(win.astype(MXU_DTYPE), w_t.astype(MXU_DTYPE),
                              preferred_element_type=jnp.float32)
    acc_ref[...] += part

    @pl.when(kh == pl.num_programs(2) - 1)
    def _finalize():
        y = acc_ref[...] + b_ref[...].astype(jnp.float32)
        if fuse_res:                               # fused (out + id) / sqrt(2)
            y = (y + r_ref[0, 0].astype(jnp.float32)) * res_scale
        o_ref[0, 0] = y.astype(o_ref.dtype)


def conv2d(x, w_oihw, bias, stride, pad, *, residual=None, res_scale=1.0,
           fold_kw=False):
    """NHWC conv without materialized im2col.

    For stride > 1 only the columns are over-computed at stride 1 and
    subsampled in the wrapper (rows are strided exactly in the kernel).
    `fold_kw=True` (used for the Cin=1 stem conv) folds the KW taps into the
    contraction dim so the MXU sees rank-KW instead of rank-1 matmuls.
    """
    N, H, W, Cin = x.shape
    Cout, _, KH, KW = w_oihw.shape
    OH = (H + 2 * pad - KH) // stride + 1
    owc = (W + 2 * pad - KW) + 1                   # stride-1 column count

    # TODO(synk): fuse the zero-pad halo into the kernel (masked edge taps) to
    # avoid one extra HBM round trip of the activation per conv.
    xp = jnp.pad(x, ((0, 0), (pad, pad), (pad, pad), (0, 0)))
    whwio = jnp.transpose(w_oihw, (2, 3, 1, 0))    # (KH, KW, Cin, Cout)

    if fold_kw:
        assert stride == 1
        xin = jnp.concatenate([xp[:, :, j:j + owc, :] for j in range(KW)],
                              axis=-1)             # (N, Hp, owc, KW*Cin)
        wmat = whwio.reshape(KH, KW * Cin, Cout)
        taps, kw_dec = KH, 1
    else:
        xin = xp                                    # (N, Hp, Wp, Cin)
        wmat = whwio.reshape(KH * KW, Cin, Cout)
        taps, kw_dec = KH, KW

    Hp2, Wx, Kc = xin.shape[1], xin.shape[2], xin.shape[3]
    bias2 = bias.reshape(1, Cout)
    fuse_res = residual is not None

    # TODO(synk): for very large H*W the per-batch input block should be
    # row-tiled with a KH-1 halo instead of kept fully resident.
    in_arrays = [xin, wmat, bias2]
    in_specs = [
        pl.BlockSpec((1, Hp2, Wx, Kc), lambda n, oh, t: (n, 0, 0, 0)),  # per-batch resident
        pl.BlockSpec((taps * kw_dec if fold_kw else KH * KW, Kc, Cout),
                     lambda n, oh, t: (0, 0, 0)),                        # weight resident
        pl.BlockSpec((1, Cout), lambda n, oh, t: (0, 0)),                # bias resident
    ]
    if fuse_res:
        assert residual.shape == (N, OH, owc, Cout)
        in_arrays.append(residual)
        in_specs.append(pl.BlockSpec((1, 1, owc, Cout),
                                     lambda n, oh, t: (n, oh, 0, 0)))

    kernel = functools.partial(_conv_tap_kernel, kw=kw_dec, stride=stride,
                               owc=owc, fuse_res=fuse_res, res_scale=res_scale)
    flops = 2 * N * OH * owc * Kc * Cout * taps * kw_dec
    bytes_accessed = 4 * (xin.size + wmat.size + bias2.size
                          + N * OH * owc * Cout
                          + (residual.size if fuse_res else 0))

    out_full = pl.pallas_call(
        kernel,
        out_shape=jax.ShapeDtypeStruct((N, OH, owc, Cout), x.dtype),
        grid=(N, OH, taps),
        in_specs=in_specs,
        out_specs=pl.BlockSpec((1, 1, owc, Cout), lambda n, oh, t: (n, oh, 0, 0)),
        scratch_shapes=[pltpu.VMEM((owc, Cout), jnp.float32)],
        compiler_params=pltpu.CompilerParams(
            dimension_semantics=("parallel", "parallel", "arbitrary")),
        cost_estimate=pl.CostEstimate(flops=flops, transcendentals=0,
                                      bytes_accessed=bytes_accessed),
    )(*in_arrays)

    if stride > 1:
        out_full = out_full[:, :, ::stride, :]      # drop over-computed columns
    return out_full


# ------------------------- instance norm + LeakyReLU -------------------------

def _in_moments_kernel(x_ref, g_ref, b_ref, scale_ref, shift_ref,
                       sum_ref, sq_ref, *, inv_hw):
    i = pl.program_id(1)

    @pl.when(i == 0)
    def _init():
        sum_ref[...] = jnp.zeros_like(sum_ref)
        sq_ref[...] = jnp.zeros_like(sq_ref)

    xb = x_ref[0].astype(jnp.float32)               # (thw, C)
    sum_ref[...] += jnp.sum(xb, axis=0, keepdims=True)
    sq_ref[...] += jnp.sum(xb * xb, axis=0, keepdims=True)

    @pl.when(i == pl.num_programs(1) - 1)
    def _finalize():
        mean = sum_ref[...] * inv_hw
        var = sq_ref[...] * inv_hw - mean * mean     # biased variance
        rstd = jax.lax.rsqrt(var + EPS)
        sc = g_ref[...] * rstd
        scale_ref[0] = sc
        shift_ref[0] = b_ref[...] - mean * sc


def _in_apply_kernel(x_ref, sc_ref, sh_ref, o_ref):
    x = x_ref[0].astype(jnp.float32)                 # (tr, L)
    y = x * sc_ref[0] + sh_ref[0]
    o_ref[0] = jnp.where(y > 0, y, NEG_SLOPE * y).astype(o_ref.dtype)


def _largest_tile(total, cap=512):
    """Largest divisor of `total` that is <= cap and a multiple of 8,
    falling back to the full extent (always a legal block)."""
    if total <= cap:
        return total
    best = 0
    for d in range(8, cap + 1, 8):
        if total % d == 0:
            best = d
    return best if best else total


def instnorm_lrelu(x, gamma, beta):
    """InstanceNorm2d(affine=True, biased var, eps=1e-5) + LeakyReLU(0.2)."""
    N, H, W, C = x.shape
    HW = H * W
    x3 = x.reshape(N, HW, C)

    # Pass 1: tiled per-(n,c) moments -> folded scale/shift (f32).
    thw = _largest_tile(HW)
    scale, shift = pl.pallas_call(
        functools.partial(_in_moments_kernel, inv_hw=1.0 / HW),
        out_shape=(jax.ShapeDtypeStruct((N, 1, C), jnp.float32),
                   jax.ShapeDtypeStruct((N, 1, C), jnp.float32)),
        grid=(N, HW // thw),
        in_specs=[
            pl.BlockSpec((1, thw, C), lambda n, i: (n, i, 0)),
            pl.BlockSpec((1, C), lambda n, i: (0, 0)),      # gamma resident
            pl.BlockSpec((1, C), lambda n, i: (0, 0)),      # beta resident
        ],
        out_specs=(pl.BlockSpec((1, 1, C), lambda n, i: (n, 0, 0)),
                   pl.BlockSpec((1, 1, C), lambda n, i: (n, 0, 0))),
        scratch_shapes=[pltpu.VMEM((1, C), jnp.float32),
                        pltpu.VMEM((1, C), jnp.float32)],
        compiler_params=pltpu.CompilerParams(
            dimension_semantics=("parallel", "arbitrary")),
        cost_estimate=pl.CostEstimate(flops=3 * N * HW * C, transcendentals=0,
                                      bytes_accessed=4 * (x3.size + 4 * N * C)),
    )(x3, gamma.reshape(1, C), beta.reshape(1, C))

    # Pass 2: lane-dense apply.  For C < 128 pack spatial positions onto the
    # 128-lane axis so stores are full width (avoids masked vst on C=32/64).
    rep = None
    if C < 128 and 128 % C == 0 and (HW * C) % 128 == 0:
        rep = 128 // C
    if rep is not None:
        xv = x3.reshape(N, HW * C // 128, 128)
        sc = jnp.tile(scale, (1, 1, rep))
        sh = jnp.tile(shift, (1, 1, rep))
    else:
        xv, sc, sh = x3, scale, shift
    R, L = xv.shape[1], xv.shape[2]
    tr = _largest_tile(R)
    y = pl.pallas_call(
        _in_apply_kernel,
        out_shape=jax.ShapeDtypeStruct(xv.shape, x.dtype),
        grid=(N, R // tr),
        in_specs=[
            pl.BlockSpec((1, tr, L), lambda n, i: (n, i, 0)),
            pl.BlockSpec((1, 1, L), lambda n, i: (n, 0, 0)),  # scale resident
            pl.BlockSpec((1, 1, L), lambda n, i: (n, 0, 0)),  # shift resident
        ],
        out_specs=pl.BlockSpec((1, tr, L), lambda n, i: (n, i, 0)),
        compiler_params=pltpu.CompilerParams(
            dimension_semantics=("parallel", "parallel")),
        cost_estimate=pl.CostEstimate(flops=3 * N * R * L, transcendentals=0,
                                      bytes_accessed=4 * 2 * xv.size),
    )(xv, sc, sh)
    return y.reshape(N, H, W, C)


# ------------------------- parameters -------------------------

def _conv_init(key, cout, cin, kh, kw):
    k1, k2 = jax.random.split(key)
    fan_in = cin * kh * kw
    bound = 1.0 / math.sqrt(fan_in)
    w = jax.random.uniform(k1, (cout, cin, kh, kw), jnp.float32, -bound, bound)
    b = jax.random.uniform(k2, (cout,), jnp.float32, -bound, bound)
    return w, b


def _norm_init(key, c):
    k1, k2 = jax.random.split(key)
    g = 1.0 + 0.1 * jax.random.normal(k1, (c,), jnp.float32)
    b = 0.1 * jax.random.normal(k2, (c,), jnp.float32)
    return g, b


def init_params(key, nef=NEF):
    keys = jax.random.split(key, 32)
    p = {}
    p["conv0_w"], p["conv0_b"] = _conv_init(keys[0], nef, 1, 7, 7)
    p["in0_g"], p["in0_b"] = _norm_init(keys[1], nef)
    p["conv1_w"], p["conv1_b"] = _conv_init(keys[2], nef * 2, nef, 4, 4)
    p["in1_g"], p["in1_b"] = _norm_init(keys[3], nef * 2)
    p["conv2_w"], p["conv2_b"] = _conv_init(keys[4], nef * 4, nef * 2, 4, 4)
    p["in2_g"], p["in2_b"] = _norm_init(keys[5], nef * 4)
    p["res"] = []
    c = nef * 4
    for k in range(4):
        base = 6 + k * 6
        r = {}
        r["c1_w"], r["c1_b"] = _conv_init(keys[base + 0], c, c, 3, 3)
        r["n1_g"], r["n1_b"] = _norm_init(keys[base + 1], c)
        r["c2_w"], r["c2_b"] = _conv_init(keys[base + 2], c, c, 3, 3)
        r["n2_g"], r["n2_b"] = _norm_init(keys[base + 3], c)
        p["res"].append(r)
    return p


# ------------------------- forward -------------------------

def content_encoder_forward(params, x_nchw):
    x = jnp.transpose(x_nchw, (0, 2, 3, 1))       # NCHW -> NHWC

    # Stem: Conv(1->nef, 7x7, s1, p3) + IN + LReLU (KW folded since Cin=1).
    x = conv2d(x, params["conv0_w"], params["conv0_b"], stride=1, pad=3,
               fold_kw=True)
    x = instnorm_lrelu(x, params["in0_g"], params["in0_b"])
    # Conv(nef->2nef, 4x4, s2, p1) + IN + LReLU
    x = conv2d(x, params["conv1_w"], params["conv1_b"], stride=2, pad=1)
    x = instnorm_lrelu(x, params["in1_g"], params["in1_b"])
    # Conv(2nef->4nef, 4x4, s2, p1) + IN + LReLU
    x = conv2d(x, params["conv2_w"], params["conv2_b"], stride=2, pad=1)
    x = instnorm_lrelu(x, params["in2_g"], params["in2_b"])

    # 4 x ResBlk; the skip-add and 1/sqrt(2) scale are fused into conv2's
    # epilogue inside the Pallas conv kernel.
    for r in params["res"]:
        identity = x
        out = instnorm_lrelu(x, r["n1_g"], r["n1_b"])
        out = conv2d(out, r["c1_w"], r["c1_b"], stride=1, pad=1)
        out = instnorm_lrelu(out, r["n2_g"], r["n2_b"])
        x = conv2d(out, r["c2_w"], r["c2_b"], stride=1, pad=1,
                   residual=identity, res_scale=INV_SQRT2)

    return jnp.transpose(x, (0, 3, 1, 2))         # NHWC -> NCHW


if __name__ == "__main__":
    key = jax.random.PRNGKey(0)
    params = init_params(key, nef=NEF)
    x = jax.random.normal(jax.random.fold_in(key, 999), (2, 1, 16, 16),
                          jnp.float32)

    fwd = jax.jit(functools.partial(content_encoder_forward, params))
    y = fwd(x)
    jax.block_until_ready(y)

    assert y.shape == (2, 4 * NEF, 4, 4), y.shape
    assert jnp.all(jnp.isfinite(y))
    print("KERNEL_OK")
</pallas_src>

<mosaic_0001>
module attributes {stable_mosaic.version = 11 : i64} {
  func.func @_conv_tap_kernel(%arg0: i32, %arg1: i32, %arg2: i32, %arg3: memref<1x22x16x7xf32, #tpu.memory_space<vmem>>, %arg4: memref<7x7x32xf32, #tpu.memory_space<vmem>>, %arg5: memref<1x32xf32, #tpu.memory_space<vmem>>, %arg6: memref<1x1x16x32xf32, #tpu.memory_space<vmem>>, %arg7: memref<16x32xf32, #tpu.memory_space<vmem>>) attributes {dimension_semantics = [#tpu.dimension_semantics<parallel>, #tpu.dimension_semantics<parallel>, #tpu.dimension_semantics<arbitrary>], iteration_bounds = array<i64: 2, 16, 7>, scalar_prefetch = 0 : i64, scratch_operands = 1 : i64, tpu.core_type = #tpu.core_type<tc>, window_params = [{transform_indices = @transform_0, window_bounds = array<i64: 1, 22, 16, 7>}, {pipeline_mode = #tpu.pipeline_mode<synchronous>, transform_indices = @transform_1, window_bounds = array<i64: 7, 7, 32>}, {pipeline_mode = #tpu.pipeline_mode<synchronous>, transform_indices = @transform_2, window_bounds = array<i64: 1, 32>}, {transform_indices = @transform_3, window_bounds = array<i64: 1, 1, 16, 32>}]} {
    %c0_i32 = arith.constant 0 : i32
    %0 = arith.cmpi eq, %arg2, %c0_i32 : i32
    %1 = arith.extui %0 : i1 to i32
    %c0_i32_0 = arith.constant 0 : i32
    %2 = arith.cmpi ne, %1, %c0_i32_0 : i32
    scf.if %2 {
      %cst_13 = arith.constant 0.000000e+00 : f32
      %22 = vector.broadcast %cst_13 : f32 to vector<16x32xf32>
      %c0_14 = arith.constant 0 : index
      %c0_15 = arith.constant 0 : index
      %23 = vector.load %arg7[%c0_14, %c0_15] : memref<16x32xf32, #tpu.memory_space<vmem>>, vector<16x32xf32>
      tpu.vector_store %arg7[%c0_14, %c0_15], %22 {strides = array<i32>} : memref<16x32xf32, #tpu.memory_space<vmem>>, vector<16x32xf32>,
    } else {
    }
    %c1_i32 = arith.constant 1 : i32
    %3 = arith.muli %arg1, %c1_i32 : i32
    %4 = arith.addi %3, %arg2 : i32
    %cst = arith.constant 0.000000e+00 : f32
    %5 = vector.broadcast %cst : f32 to vector<16x32xf32>
    %c0 = arith.constant 0 : index
    %6 = arith.index_cast %4 : i32 to index
    %c0_1 = arith.constant 0 : index
    %c0_2 = arith.constant 0 : index
    %7 = vector.load %arg3[%c0, %6, %c0_1, %c0_2] : memref<1x22x16x7xf32, #tpu.memory_space<vmem>>, vector<1x1x16x7xf32>
    %8 = vector.shape_cast %7 : vector<1x1x16x7xf32> to vector<16x7xf32>
    %c1_i32_3 = arith.constant 1 : i32
    %9 = arith.muli %arg2, %c1_i32_3 : i32
    %c0_i32_4 = arith.constant 0 : i32
    %10 = arith.addi %9, %c0_i32_4 : i32
    %11 = arith.index_cast %10 : i32 to index
    %c0_5 = arith.constant 0 : index
    %c0_6 = arith.constant 0 : index
    %12 = vector.load %arg4[%11, %c0_5, %c0_6] : memref<7x7x32xf32, #tpu.memory_space<vmem>>, vector<1x7x32xf32>
    %13 = vector.shape_cast %12 : vector<1x7x32xf32> to vector<7x32xf32>
    %cst_7 = arith.constant dense<0.000000e+00> : vector<16x32xf32>
    %14 = tpu.matmul %8, %13, %cst_7 {dimension_numbers = #tpu.dot_dimension_numbers<[1], [0], [0], [1], [0, 0, 1, 1], [], []>} : vector<16x7xf32>, vector<7x32xf32>, vector<16x32xf32> -> vector<16x32xf32>
    %15 = arith.addf %5, %14 : vector<16x32xf32>
    %c0_8 = arith.constant 0 : index
    %c0_9 = arith.constant 0 : index
    %16 = vector.load %arg7[%c0_8, %c0_9] : memref<16x32xf32, #tpu.memory_space<vmem>>, vector<16x32xf32>
    %17 = arith.addf %16, %15 : vector<16x32xf32>
    %c0_10 = arith.constant 0 : index
    %c0_11 = arith.constant 0 : index
    %18 = vector.load %arg7[%c0_10, %c0_11] : memref<16x32xf32, #tpu.memory_space<vmem>>, vector<16x32xf32>
    tpu.vector_store %arg7[%c0_10, %c0_11], %17 {strides = array<i32>} : memref<16x32xf32, #tpu.memory_space<vmem>>, vector<16x32xf32>,
    %c6_i32 = arith.constant 6 : i32
    %19 = arith.cmpi eq, %arg2, %c6_i32 : i32
    %20 = arith.extui %19 : i1 to i32
    %c0_i32_12 = arith.constant 0 : i32
    %21 = arith.cmpi ne, %20, %c0_i32_12 : i32
    scf.if %21 {
      %c0_13 = arith.constant 0 : index
      %c0_14 = arith.constant 0 : index
      %22 = vector.load %arg7[%c0_13, %c0_14] : memref<16x32xf32, #tpu.memory_space<vmem>>, vector<16x32xf32>
      %c0_15 = arith.constant 0 : index
      %c0_16 = arith.constant 0 : index
      %23 = vector.load %arg5[%c0_15, %c0_16] : memref<1x32xf32, #tpu.memory_space<vmem>>, vector<1x32xf32>
      %24 = vector.broadcast %23 : vector<1x32xf32> to vector<16x32xf32>
      %25 = arith.addf %22, %24 : vector<16x32xf32>
      %c0_17 = arith.constant 0 : index
      %c0_18 = arith.constant 0 : index
      %c0_19 = arith.constant 0 : index
      %c0_20 = arith.constant 0 : index
      %26 = vector.load %arg6[%c0_17, %c0_18, %c0_19, %c0_20] : memref<1x1x16x32xf32, #tpu.memory_space<vmem>>, vector<1x1x16x32xf32>
      %27 = vector.shape_cast %26 : vector<1x1x16x32xf32> to vector<16x32xf32>
      %28 = vector.shape_cast %25 : vector<16x32xf32> to vector<1x1x16x32xf32>
      tpu.vector_store %arg6[%c0_17, %c0_18, %c0_19, %c0_20], %28 {strides = array<i32>} : memref<1x1x16x32xf32, #tpu.memory_space<vmem>>, vector<1x1x16x32xf32>,
    } else {
    }
    return
  }
  func.func @transform_0(%arg0: i32, %arg1: i32, %arg2: i32) -> (i32, i32, i32, i32) {
    %c0_i32 = arith.constant 0 : i32
    %c0_i32_0 = arith.constant 0 : i32
    %c0_i32_1 = arith.constant 0 : i32
    %c0_i32_2 = arith.constant 0 : i32
    return %arg0, %c0_i32, %c0_i32_0, %c0_i32_1 : i32, i32, i32, i32
  }
  func.func @transform_1(%arg0: i32, %arg1: i32, %arg2: i32) -> (i32, i32, i32) {
    %c0_i32 = arith.constant 0 : i32
    %c0_i32_0 = arith.constant 0 : i32
    %c0_i32_1 = arith.constant 0 : i32
    %c0_i32_2 = arith.constant 0 : i32
    return %c0_i32, %c0_i32_0, %c0_i32_1 : i32, i32, i32
  }
  func.func @transform_2(%arg0: i32, %arg1: i32, %arg2: i32) -> (i32, i32) {
    %c0_i32 = arith.constant 0 : i32
    %c0_i32_0 = arith.constant 0 : i32
    %c0_i32_1 = arith.constant 0 : i32
    return %c0_i32, %c0_i32_0 : i32, i32
  }
  func.func @transform_3(%arg0: i32, %arg1: i32, %arg2: i32) -> (i32, i32, i32, i32) {
    %c0_i32 = arith.constant 0 : i32
    %c0_i32_0 = arith.constant 0 : i32
    %c0_i32_1 = arith.constant 0 : i32
    return %arg0, %arg1, %c0_i32, %c0_i32_0 : i32, i32, i32, i32
  }
}

module attributes {stable_mosaic.version = 11 : i64} {
  func.func @_in_moments_kernel(%arg0: i32, %arg1: i32, %arg2: memref<1x256x32xf32, #tpu.memory_space<vmem>>, %arg3: memref<1x32xf32, #tpu.memory_space<vmem>>, %arg4: memref<1x32xf32, #tpu.memory_space<vmem>>, %arg5: memref<1x1x32xf32, #tpu.memory_space<vmem>>, %arg6: memref<1x1x32xf32, #tpu.memory_space<vmem>>, %arg7: memref<1x32xf32, #tpu.memory_space<vmem>>, %arg8: memref<1x32xf32, #tpu.memory_space<vmem>>) attributes {dimension_semantics = [#tpu.dimension_semantics<parallel>, #tpu.dimension_semantics<arbitrary>], iteration_bounds = array<i64: 2, 1>, scalar_prefetch = 0 : i64, scratch_operands = 2 : i64, tpu.core_type = #tpu.core_type<tc>, window_params = [{transform_indices = @transform_0, window_bounds = array<i64: 1, 256, 32>}, {pipeline_mode = #tpu.pipeline_mode<synchronous>, transform_indices = @transform_1, window_bounds = array<i64: 1, 32>}, {pipeline_mode = #tpu.pipeline_mode<synchronous>, transform_indices = @transform_2, window_bounds = array<i64: 1, 32>}, {transform_indices = @transform_3, window_bounds = array<i64: 1, 1, 32>}, {transform_indices = @transform_4, window_bounds = array<i64: 1, 1, 32>}]} {
    %c0_i32 = arith.constant 0 : i32
    %0 = arith.cmpi eq, %arg1, %c0_i32 : i32
    %1 = arith.extui %0 : i1 to i32
    %c0_i32_0 = arith.constant 0 : i32
    %2 = arith.cmpi ne, %1, %c0_i32_0 : i32
    scf.if %2 {
      %cst_14 = arith.constant 0.000000e+00 : f32
      %19 = vector.broadcast %cst_14 : f32 to vector<1x32xf32>
      %c0_15 = arith.constant 0 : index
      %c0_16 = arith.constant 0 : index
      %20 = vector.load %arg7[%c0_15, %c0_16] : memref<1x32xf32, #tpu.memory_space<vmem>>, vector<1x32xf32>
      tpu.vector_store %arg7[%c0_15, %c0_16], %19 {strides = array<i32>} : memref<1x32xf32, #tpu.memory_space<vmem>>, vector<1x32xf32>,
      %cst_17 = arith.constant 0.000000e+00 : f32
      %21 = vector.broadcast %cst_17 : f32 to vector<1x32xf32>
      %c0_18 = arith.constant 0 : index
      %c0_19 = arith.constant 0 : index
      %22 = vector.load %arg8[%c0_18, %c0_19] : memref<1x32xf32, #tpu.memory_space<vmem>>, vector<1x32xf32>
      tpu.vector_store %arg8[%c0_18, %c0_19], %21 {strides = array<i32>} : memref<1x32xf32, #tpu.memory_space<vmem>>, vector<1x32xf32>,
    } else {
    }
    %c0 = arith.constant 0 : index
    %c0_1 = arith.constant 0 : index
    %c0_2 = arith.constant 0 : index
    %3 = vector.load %arg2[%c0, %c0_1, %c0_2] : memref<1x256x32xf32, #tpu.memory_space<vmem>>, vector<1x256x32xf32>
    %4 = vector.shape_cast %3 : vector<1x256x32xf32> to vector<256x32xf32>
    %c0_3 = arith.constant 0 : index
    %c0_4 = arith.constant 0 : index
    %5 = vector.load %arg7[%c0_3, %c0_4] : memref<1x32xf32, #tpu.memory_space<vmem>>, vector<1x32xf32>
    %cst = arith.constant dense<0.000000e+00> : vector<32xf32>
    %6 = vector.multi_reduction <add>, %4, %cst [0] : vector<256x32xf32> to vector<32xf32>
    %7 = vector.shape_cast %6 : vector<32xf32> to vector<1x32xf32>
    %8 = arith.addf %5, %7 : vector<1x32xf32>
    %c0_5 = arith.constant 0 : index
    %c0_6 = arith.constant 0 : index
    %9 = vector.load %arg7[%c0_5, %c0_6] : memref<1x32xf32, #tpu.memory_space<vmem>>, vector<1x32xf32>
    tpu.vector_store %arg7[%c0_5, %c0_6], %8 {strides = array<i32>} : memref<1x32xf32, #tpu.memory_space<vmem>>, vector<1x32xf32>,
    %c0_7 = arith.constant 0 : index
    %c0_8 = arith.constant 0 : index
    %10 = vector.load %arg8[%c0_7, %c0_8] : memref<1x32xf32, #tpu.memory_space<vmem>>, vector<1x32xf32>
    %11 = arith.mulf %4, %4 : vector<256x32xf32>
    %cst_9 = arith.constant dense<0.000000e+00> : vector<32xf32>
    %12 = vector.multi_reduction <add>, %11, %cst_9 [0] : vector<256x32xf32> to vector<32xf32>
    %13 = vector.shape_cast %12 : vector<32xf32> to vector<1x32xf32>
    %14 = arith.addf %10, %13 : vector<1x32xf32>
    %c0_10 = arith.constant 0 : index
    %c0_11 = arith.constant 0 : index
    %15 = vector.load %arg8[%c0_10, %c0_11] : memref<1x32xf32, #tpu.memory_space<vmem>>, vector<1x32xf32>
    tpu.vector_store %arg8[%c0_10, %c0_11], %14 {strides = array<i32>} : memref<1x32xf32, #tpu.memory_space<vmem>>, vector<1x32xf32>,
    %c0_i32_12 = arith.constant 0 : i32
    %16 = arith.cmpi eq, %arg1, %c0_i32_12 : i32
    %17 = arith.extui %16 : i1 to i32
    %c0_i32_13 = arith.constant 0 : i32
    %18 = arith.cmpi ne, %17, %c0_i32_13 : i32
    scf.if %18 {
      %c0_14 = arith.constant 0 : index
      %c0_15 = arith.constant 0 : index
      %19 = vector.load %arg7[%c0_14, %c0_15] : memref<1x32xf32, #tpu.memory_space<vmem>>, vector<1x32xf32>
      %cst_16 = arith.constant 3.906250e-03 : f32
      %20 = vector.broadcast %cst_16 : f32 to vector<1x32xf32>
      %21 = arith.mulf %19, %20 : vector<1x32xf32>
      %c0_17 = arith.constant 0 : index
      %c0_18 = arith.constant 0 : index
      %22 = vector.load %arg8[%c0_17, %c0_18] : memref<1x32xf32, #tpu.memory_space<vmem>>, vector<1x32xf32>
      %cst_19 = arith.constant 3.906250e-03 : f32
      %23 = vector.broadcast %cst_19 : f32 to vector<1x32xf32>
      %24 = arith.mulf %22, %23 : vector<1x32xf32>
      %25 = arith.mulf %21, %21 : vector<1x32xf32>
      %26 = arith.subf %24, %25 : vector<1x32xf32>
      %cst_20 = arith.constant 9.99999974E-6 : f32
      %27 = vector.broadcast %cst_20 : f32 to vector<1x32xf32>
      %28 = arith.addf %26, %27 : vector<1x32xf32>
      %29 = math.rsqrt %28 : vector<1x32xf32>
      %c0_21 = arith.constant 0 : index
      %c0_22 = arith.constant 0 : index
      %30 = vector.load %arg3[%c0_21, %c0_22] : memref<1x32xf32, #tpu.memory_space<vmem>>, vector<1x32xf32>
      %31 = arith.mulf %30, %29 : vector<1x32xf32>
      %c0_23 = arith.constant 0 : index
      %c0_24 = arith.constant 0 : index
      %c0_25 = arith.constant 0 : index
      %32 = vector.load %arg5[%c0_23, %c0_24, %c0_25] : memref<1x1x32xf32, #tpu.memory_space<vmem>>, vector<1x1x32xf32>
      %33 = vector.shape_cast %32 : vector<1x1x32xf32> to vector<1x32xf32>
      %34 = vector.shape_cast %31 : vector<1x32xf32> to vector<1x1x32xf32>
      tpu.vector_store %arg5[%c0_23, %c0_24, %c0_25], %34 {strides = array<i32>} : memref<1x1x32xf32, #tpu.memory_space<vmem>>, vector<1x1x32xf32>,
      %c0_26 = arith.constant 0 : index
      %c0_27 = arith.constant 0 : index
      %35 = vector.load %arg4[%c0_26, %c0_27] : memref<1x32xf32, #tpu.memory_space<vmem>>, vector<1x32xf32>
      %36 = arith.mulf %21, %31 : vector<1x32xf32>
      %37 = arith.subf %35, %36 : vector<1x32xf32>
      %c0_28 = arith.constant 0 : index
      %c0_29 = arith.constant 0 : index
      %c0_30 = arith.constant 0 : index
      %38 = vector.load %arg6[%c0_28, %c0_29, %c0_30] : memref<1x1x32xf32, #tpu.memory_space<vmem>>, vector<1x1x32xf32>
      %39 = vector.shape_cast %38 : vector<1x1x32xf32> to vector<1x32xf32>
      %40 = vector.shape_cast %37 : vector<1x32xf32> to vector<1x1x32xf32>
      tpu.vector_store %arg6[%c0_28, %c0_29, %c0_30], %40 {strides = array<i32>} : memref<1x1x32xf32, #tpu.memory_space<vmem>>, vector<1x1x32xf32>,
    } else {
    }
    return
  }
  func.func @transform_0(%arg0: i32, %arg1: i32) -> (i32, i32, i32) {
    %c0_i32 = arith.constant 0 : i32
    %c0_i32_0 = arith.constant 0 : i32
    return %arg0, %arg1, %c0_i32 : i32, i32, i32
  }
  func.func @transform_1(%arg0: i32, %arg1: i32) -> (i32, i32) {
    %c0_i32 = arith.constant 0 : i32
    %c0_i32_0 = arith.constant 0 : i32
    %c0_i32_1 = arith.constant 0 : i32
    return %c0_i32, %c0_i32_0 : i32, i32
  }
  func.func @transform_2(%arg0: i32, %arg1: i32) -> (i32, i32) {
    %c0_i32 = arith.constant 0 : i32
    %c0_i32_0 = arith.constant 0 : i32
    %c0_i32_1 = arith.constant 0 : i32
    return %c0_i32, %c0_i32_0 : i32, i32
  }
  func.func @transform_3(%arg0: i32, %arg1: i32) -> (i32, i32, i32) {
    %c0_i32 = arith.constant 0 : i32
    %c0_i32_0 = arith.constant 0 : i32
    %c0_i32_1 = arith.constant 0 : i32
    return %arg0, %c0_i32, %c0_i32_0 : i32, i32, i32
  }
  func.func @transform_4(%arg0: i32, %arg1: i32) -> (i32, i32, i32) {
    %c0_i32 = arith.constant 0 : i32
    %c0_i32_0 = arith.constant 0 : i32
    %c0_i32_1 = arith.constant 0 : i32
    return %arg0, %c0_i32, %c0_i32_0 : i32, i32, i32
  }
}

module attributes {stable_mosaic.version = 11 : i64} {
  func.func @_in_apply_kernel(%arg0: i32, %arg1: i32, %arg2: memref<1x64x128xf32, #tpu.memory_space<vmem>>, %arg3: memref<1x1x128xf32, #tpu.memory_space<vmem>>, %arg4: memref<1x1x128xf32, #tpu.memory_space<vmem>>, %arg5: memref<1x64x128xf32, #tpu.memory_space<vmem>>) attributes {dimension_semantics = [#tpu.dimension_semantics<parallel>, #tpu.dimension_semantics<parallel>], iteration_bounds = array<i64: 2, 1>, scalar_prefetch = 0 : i64, scratch_operands = 0 : i64, tpu.core_type = #tpu.core_type<tc>, window_params = [{transform_indices = @transform_0, window_bounds = array<i64: 1, 64, 128>}, {transform_indices = @transform_1, window_bounds = array<i64: 1, 1, 128>}, {transform_indices = @transform_2, window_bounds = array<i64: 1, 1, 128>}, {transform_indices = @transform_3, window_bounds = array<i64: 1, 64, 128>}]} {
    %c0 = arith.constant 0 : index
    %c0_0 = arith.constant 0 : index
    %c0_1 = arith.constant 0 : index
    %0 = vector.load %arg2[%c0, %c0_0, %c0_1] : memref<1x64x128xf32, #tpu.memory_space<vmem>>, vector<1x64x128xf32>
    %1 = vector.shape_cast %0 : vector<1x64x128xf32> to vector<64x128xf32>
    %c0_2 = arith.constant 0 : index
    %c0_3 = arith.constant 0 : index
    %c0_4 = arith.constant 0 : index
    %2 = vector.load %arg3[%c0_2, %c0_3, %c0_4] : memref<1x1x128xf32, #tpu.memory_space<vmem>>, vector<1x1x128xf32>
    %3 = vector.shape_cast %2 : vector<1x1x128xf32> to vector<1x128xf32>
    %4 = vector.broadcast %3 : vector<1x128xf32> to vector<64x128xf32>
    %5 = arith.mulf %1, %4 : vector<64x128xf32>
    %c0_5 = arith.constant 0 : index
    %c0_6 = arith.constant 0 : index
    %c0_7 = arith.constant 0 : index
    %6 = vector.load %arg4[%c0_5, %c0_6, %c0_7] : memref<1x1x128xf32, #tpu.memory_space<vmem>>, vector<1x1x128xf32>
    %7 = vector.shape_cast %6 : vector<1x1x128xf32> to vector<1x128xf32>
    %8 = vector.broadcast %7 : vector<1x128xf32> to vector<64x128xf32>
    %9 = arith.addf %5, %8 : vector<64x128xf32>
    %cst = arith.constant 0.000000e+00 : f32
    %10 = vector.broadcast %cst : f32 to vector<64x128xf32>
    %11 = arith.cmpf ogt, %9, %10 : vector<64x128xf32>
    %cst_8 = arith.constant 2.000000e-01 : f32
    %12 = vector.broadcast %cst_8 : f32 to vector<64x128xf32>
    %13 = arith.mulf %12, %9 : vector<64x128xf32>
    %14 = arith.select %11, %9, %13 : vector<64x128xi1>, vector<64x128xf32>
    %c0_9 = arith.constant 0 : index
    %c0_10 = arith.constant 0 : index
    %c0_11 = arith.constant 0 : index
    %15 = vector.load %arg5[%c0_9, %c0_10, %c0_11] : memref<1x64x128xf32, #tpu.memory_space<vmem>>, vector<1x64x128xf32>
    %16 = vector.shape_cast %15 : vector<1x64x128xf32> to vector<64x128xf32>
    %17 = vector.shape_cast %14 : vector<64x128xf32> to vector<1x64x128xf32>
    tpu.vector_store %arg5[%c0_9, %c0_10, %c0_11], %17 {strides = array<i32>} : memref<1x64x128xf32, #tpu.memory_space<vmem>>, vector<1x64x128xf32>,
    return
  }
  func.func @transform_0(%arg0: i32, %arg1: i32) -> (i32, i32, i32) {
    %c0_i32 = arith.constant 0 : i32
    %c0_i32_0 = arith.constant 0 : i32
    return %arg0, %arg1, %c0_i32 : i32, i32, i32
  }
  func.func @transform_1(%arg0: i32, %arg1: i32) -> (i32, i32, i32) {
    %c0_i32 = arith.constant 0 : i32
    %c0_i32_0 = arith.constant 0 : i32
    %c0_i32_1 = arith.constant 0 : i32
    return %arg0, %c0_i32, %c0_i32_0 : i32, i32, i32
  }
  func.func @transform_2(%arg0: i32, %arg1: i32) -> (i32, i32, i32) {
    %c0_i32 = arith.constant 0 : i32
    %c0_i32_0 = arith.constant 0 : i32
    %c0_i32_1 = arith.constant 0 : i32
    return %arg0, %c0_i32, %c0_i32_0 : i32, i32, i32
  }
  func.func @transform_3(%arg0: i32, %arg1: i32) -> (i32, i32, i32) {
    %c0_i32 = arith.constant 0 : i32
    %c0_i32_0 = arith.constant 0 : i32
    return %arg0, %arg1, %c0_i32 : i32, i32, i32
  }
}

module attributes {stable_mosaic.version = 11 : i64} {
  func.func @_conv_tap_kernel(%arg0: i32, %arg1: i32, %arg2: i32, %arg3: memref<1x18x18x32xf32, #tpu.memory_space<vmem>>, %arg4: memref<16x32x64xf32, #tpu.memory_space<vmem>>, %arg5: memref<1x64xf32, #tpu.memory_space<vmem>>, %arg6: memref<1x1x15x64xf32, #tpu.memory_space<vmem>>, %arg7: memref<15x64xf32, #tpu.memory_space<vmem>>) attributes {dimension_semantics = [#tpu.dimension_semantics<parallel>, #tpu.dimension_semantics<parallel>, #tpu.dimension_semantics<arbitrary>], iteration_bounds = array<i64: 2, 8, 4>, scalar_prefetch = 0 : i64, scratch_operands = 1 : i64, tpu.core_type = #tpu.core_type<tc>, window_params = [{transform_indices = @transform_0, window_bounds = array<i64: 1, 18, 18, 32>}, {pipeline_mode = #tpu.pipeline_mode<synchronous>, transform_indices = @transform_1, window_bounds = array<i64: 16, 32, 64>}, {pipeline_mode = #tpu.pipeline_mode<synchronous>, transform_indices = @transform_2, window_bounds = array<i64: 1, 64>}, {transform_indices = @transform_3, window_bounds = array<i64: 1, 1, 15, 64>}]} {
    %c0_i32 = arith.constant 0 : i32
    %0 = arith.cmpi eq, %arg2, %c0_i32 : i32
    %1 = arith.extui %0 : i1 to i32
    %c0_i32_0 = arith.constant 0 : i32
    %2 = arith.cmpi ne, %1, %c0_i32_0 : i32
    scf.if %2 {
      %cst_32 = arith.constant 0.000000e+00 : f32
      %52 = vector.broadcast %cst_32 : f32 to vector<15x64xf32>
      %c0_33 = arith.constant 0 : index
      %c0_34 = arith.constant 0 : index
      %53 = vector.load %arg7[%c0_33, %c0_34] : memref<15x64xf32, #tpu.memory_space<vmem>>, vector<15x64xf32>
      tpu.vector_store %arg7[%c0_33, %c0_34], %52 {strides = array<i32>} : memref<15x64xf32, #tpu.memory_space<vmem>>, vector<15x64xf32>,
    } else {
    }
    %c2_i32 = arith.constant 2 : i32
    %3 = arith.muli %arg1, %c2_i32 : i32
    %4 = arith.addi %3, %arg2 : i32
    %cst = arith.constant 0.000000e+00 : f32
    %5 = vector.broadcast %cst : f32 to vector<15x64xf32>
    %c0 = arith.constant 0 : index
    %6 = arith.index_cast %4 : i32 to index
    %c0_1 = arith.constant 0 : index
    %c0_2 = arith.constant 0 : index
    %7 = vector.load %arg3[%c0, %6, %c0_1, %c0_2] : memref<1x18x18x32xf32, #tpu.memory_space<vmem>>, vector<1x1x15x32xf32>
    %8 = vector.shape_cast %7 : vector<1x1x15x32xf32> to vector<15x32xf32>
    %c4_i32 = arith.constant 4 : i32
    %9 = arith.muli %arg2, %c4_i32 : i32
    %c0_i32_3 = arith.constant 0 : i32
    %10 = arith.addi %9, %c0_i32_3 : i32
    %11 = arith.index_cast %10 : i32 to index
    %c0_4 = arith.constant 0 : index
    %c0_5 = arith.constant 0 : index
    %12 = vector.load %arg4[%11, %c0_4, %c0_5] : memref<16x32x64xf32, #tpu.memory_space<vmem>>, vector<1x32x64xf32>
    %13 = vector.shape_cast %12 : vector<1x32x64xf32> to vector<32x64xf32>
    %cst_6 = arith.constant dense<0.000000e+00> : vector<15x64xf32>
    %14 = tpu.matmul %8, %13, %cst_6 {dimension_numbers = #tpu.dot_dimension_numbers<[1], [0], [0], [1], [0, 0, 1, 1], [], []>} : vector<15x32xf32>, vector<32x64xf32>, vector<15x64xf32> -> vector<15x64xf32>
    %15 = arith.addf %5, %14 : vector<15x64xf32>
    %c0_7 = arith.constant 0 : index
    %16 = arith.index_cast %4 : i32 to index
    %c1 = arith.constant 1 : index
    %c0_8 = arith.constant 0 : index
    %17 = vector.load %arg3[%c0_7, %16, %c1, %c0_8] : memref<1x18x18x32xf32, #tpu.memory_space<vmem>>, vector<1x1x15x32xf32>
    %18 = vector.shape_cast %17 : vector<1x1x15x32xf32> to vector<15x32xf32>
    %c4_i32_9 = arith.constant 4 : i32
    %19 = arith.muli %arg2, %c4_i32_9 : i32
    %c1_i32 = arith.constant 1 : i32
    %20 = arith.addi %19, %c1_i32 : i32
    %21 = arith.index_cast %20 : i32 to index
    %c0_10 = arith.constant 0 : index
    %c0_11 = arith.constant 0 : index
    %22 = vector.load %arg4[%21, %c0_10, %c0_11] : memref<16x32x64xf32, #tpu.memory_space<vmem>>, vector<1x32x64xf32>
    %23 = vector.shape_cast %22 : vector<1x32x64xf32> to vector<32x64xf32>
    %cst_12 = arith.constant dense<0.000000e+00> : vector<15x64xf32>
    %24 = tpu.matmul %18, %23, %cst_12 {dimension_numbers = #tpu.dot_dimension_numbers<[1], [0], [0], [1], [0, 0, 1, 1], [], []>} : vector<15x32xf32>, vector<32x64xf32>, vector<15x64xf32> -> vector<15x64xf32>
    %25 = arith.addf %15, %24 : vector<15x64xf32>
    %c0_13 = arith.constant 0 : index
    %26 = arith.index_cast %4 : i32 to index
    %c2 = arith.constant 2 : index
    %c0_14 = arith.constant 0 : index
    %27 = vector.load %arg3[%c0_13, %26, %c2, %c0_14] : memref<1x18x18x32xf32, #tpu.memory_space<vmem>>, vector<1x1x15x32xf32>
    %28 = vector.shape_cast %27 : vector<1x1x15x32xf32> to vector<15x32xf32>
    %c4_i32_15 = arith.constant 4 : i32
    %29 = arith.muli %arg2, %c4_i32_15 : i32
    %c2_i32_16 = arith.constant 2 : i32
    %30 = arith.addi %29, %c2_i32_16 : i32
    %31 = arith.index_cast %30 : i32 to index
    %c0_17 = arith.constant 0 : index
    %c0_18 = arith.constant 0 : index
    %32 = vector.load %arg4[%31, %c0_17, %c0_18] : memref<16x32x64xf32, #tpu.memory_space<vmem>>, vector<1x32x64xf32>
    %33 = vector.shape_cast %32 : vector<1x32x64xf32> to vector<32x64xf32>
    %cst_19 = arith.constant dense<0.000000e+00> : vector<15x64xf32>
    %34 = tpu.matmul %28, %33, %cst_19 {dimension_numbers = #tpu.dot_dimension_numbers<[1], [0], [0], [1], [0, 0, 1, 1], [], []>} : vector<15x32xf32>, vector<32x64xf32>, vector<15x64xf32> -> vector<15x64xf32>
    %35 = arith.addf %25, %34 : vector<15x64xf32>
    %c0_20 = arith.constant 0 : index
    %36 = arith.index_cast %4 : i32 to index
    %c3 = arith.constant 3 : index
    %c0_21 = arith.constant 0 : index
    %37 = vector.load %arg3[%c0_20, %36, %c3, %c0_21] : memref<1x18x18x32xf32, #tpu.memory_space<vmem>>, vector<1x1x15x32xf32>
    %38 = vector.shape_cast %37 : vector<1x1x15x32xf32> to vector<15x32xf32>
    %c4_i32_22 = arith.constant 4 : i32
    %39 = arith.muli %arg2, %c4_i32_22 : i32
    %c3_i32 = arith.constant 3 : i32
    %40 = arith.addi %39, %c3_i32 : i32
    %41 = arith.index_cast %40 : i32 to index
    %c0_23 = arith.constant 0 : index
    %c0_24 = arith.constant 0 : index
    %42 = vector.load %arg4[%41, %c0_23, %c0_24] : memref<16x32x64xf32, #tpu.memory_space<vmem>>, vector<1x32x64xf32>
    %43 = vector.shape_cast %42 : vector<1x32x64xf32> to vector<32x64xf32>
    %cst_25 = arith.constant dense<0.000000e+00> : vector<15x64xf32>
    %44 = tpu.matmul %38, %43, %cst_25 {dimension_numbers = #tpu.dot_dimension_numbers<[1], [0], [0], [1], [0, 0, 1, 1], [], []>} : vector<15x32xf32>, vector<32x64xf32>, vector<15x64xf32> -> vector<15x64xf32>
    %45 = arith.addf %35, %44 : vector<15x64xf32>
    %c0_26 = arith.constant 0 : index
    %c0_27 = arith.constant 0 : index
    %46 = vector.load %arg7[%c0_26, %c0_27] : memref<15x64xf32, #tpu.memory_space<vmem>>, vector<15x64xf32>
    %47 = arith.addf %46, %45 : vector<15x64xf32>
    %c0_28 = arith.constant 0 : index
    %c0_29 = arith.constant 0 : index
    %48 = vector.load %arg7[%c0_28, %c0_29] : memref<15x64xf32, #tpu.memory_space<vmem>>, vector<15x64xf32>
    tpu.vector_store %arg7[%c0_28, %c0_29], %47 {strides = array<i32>} : memref<15x64xf32, #tpu.memory_space<vmem>>, vector<15x64xf32>,
    %c3_i32_30 = arith.constant 3 : i32
    %49 = arith.cmpi eq, %arg2, %c3_i32_30 : i32
    %50 = arith.extui %49 : i1 to i32
    %c0_i32_31 = arith.constant 0 : i32
    %51 = arith.cmpi ne, %50, %c0_i32_31 : i32
    scf.if %51 {
      %c0_32 = arith.constant 0 : index
      %c0_33 = arith.constant 0 : index
      %52 = vector.load %arg7[%c0_32, %c0_33] : memref<15x64xf32, #tpu.memory_space<vmem>>, vector<15x64xf32>
      %c0_34 = arith.constant 0 : index
      %c0_35 = arith.constant 0 : index
      %53 = vector.load %arg5[%c0_34, %c0_35] : memref<1x64xf32, #tpu.memory_space<vmem>>, vector<1x64xf32>
      %54 = vector.broadcast %53 : vector<1x64xf32> to vector<15x64xf32>
      %55 = arith.addf %52, %54 : vector<15x64xf32>
      %c0_36 = arith.constant 0 : index
      %c0_37 = arith.constant 0 : index
      %c0_38 = arith.constant 0 : index
      %c0_39 = arith.constant 0 : index
      %56 = vector.load %arg6[%c0_36, %c0_37, %c0_38, %c0_39] : memref<1x1x15x64xf32, #tpu.memory_space<vmem>>, vector<1x1x15x64xf32>
      %57 = vector.shape_cast %56 : vector<1x1x15x64xf32> to vector<15x64xf32>
      %58 = vector.shape_cast %55 : vector<15x64xf32> to vector<1x1x15x64xf32>
      tpu.vector_store %arg6[%c0_36, %c0_37, %c0_38, %c0_39], %58 {strides = array<i32>} : memref<1x1x15x64xf32, #tpu.memory_space<vmem>>, vector<1x1x15x64xf32>,
    } else {
    }
    return
  }
  func.func @transform_0(%arg0: i32, %arg1: i32, %arg2: i32) -> (i32, i32, i32, i32) {
    %c0_i32 = arith.constant 0 : i32
    %c0_i32_0 = arith.constant 0 : i32
    %c0_i32_1 = arith.constant 0 : i32
    %c0_i32_2 = arith.constant 0 : i32
    return %arg0, %c0_i32, %c0_i32_0, %c0_i32_1 : i32, i32, i32, i32
  }
  func.func @transform_1(%arg0: i32, %arg1: i32, %arg2: i32) -> (i32, i32, i32) {
    %c0_i32 = arith.constant 0 : i32
    %c0_i32_0 = arith.constant 0 : i32
    %c0_i32_1 = arith.constant 0 : i32
    %c0_i32_2 = arith.constant 0 : i32
    return %c0_i32, %c0_i32_0, %c0_i32_1 : i32, i32, i32
  }
  func.func @transform_2(%arg0: i32, %arg1: i32, %arg2: i32) -> (i32, i32) {
    %c0_i32 = arith.constant 0 : i32
    %c0_i32_0 = arith.constant 0 : i32
    %c0_i32_1 = arith.constant 0 : i32
    return %c0_i32, %c0_i32_0 : i32, i32
  }
  func.func @transform_3(%arg0: i32, %arg1: i32, %arg2: i32) -> (i32, i32, i32, i32) {
    %c0_i32 = arith.constant 0 : i32
    %c0_i32_0 = arith.constant 0 : i32
    %c0_i32_1 = arith.constant 0 : i32
    return %arg0, %arg1, %c0_i32, %c0_i32_0 : i32, i32, i32, i32
  }
}

module attributes {stable_mosaic.version = 11 : i64} {
  func.func @_in_moments_kernel(%arg0: i32, %arg1: i32, %arg2: memref<1x64x64xf32, #tpu.memory_space<vmem>>, %arg3: memref<1x64xf32, #tpu.memory_space<vmem>>, %arg4: memref<1x64xf32, #tpu.memory_space<vmem>>, %arg5: memref<1x1x64xf32, #tpu.memory_space<vmem>>, %arg6: memref<1x1x64xf32, #tpu.memory_space<vmem>>, %arg7: memref<1x64xf32, #tpu.memory_space<vmem>>, %arg8: memref<1x64xf32, #tpu.memory_space<vmem>>) attributes {dimension_semantics = [#tpu.dimension_semantics<parallel>, #tpu.dimension_semantics<arbitrary>], iteration_bounds = array<i64: 2, 1>, scalar_prefetch = 0 : i64, scratch_operands = 2 : i64, tpu.core_type = #tpu.core_type<tc>, window_params = [{transform_indices = @transform_0, window_bounds = array<i64: 1, 64, 64>}, {pipeline_mode = #tpu.pipeline_mode<synchronous>, transform_indices = @transform_1, window_bounds = array<i64: 1, 64>}, {pipeline_mode = #tpu.pipeline_mode<synchronous>, transform_indices = @transform_2, window_bounds = array<i64: 1, 64>}, {transform_indices = @transform_3, window_bounds = array<i64: 1, 1, 64>}, {transform_indices = @transform_4, window_bounds = array<i64: 1, 1, 64>}]} {
    %c0_i32 = arith.constant 0 : i32
    %0 = arith.cmpi eq, %arg1, %c0_i32 : i32
    %1 = arith.extui %0 : i1 to i32
    %c0_i32_0 = arith.constant 0 : i32
    %2 = arith.cmpi ne, %1, %c0_i32_0 : i32
    scf.if %2 {
      %cst_14 = arith.constant 0.000000e+00 : f32
      %19 = vector.broadcast %cst_14 : f32 to vector<1x64xf32>
      %c0_15 = arith.constant 0 : index
      %c0_16 = arith.constant 0 : index
      %20 = vector.load %arg7[%c0_15, %c0_16] : memref<1x64xf32, #tpu.memory_space<vmem>>, vector<1x64xf32>
      tpu.vector_store %arg7[%c0_15, %c0_16], %19 {strides = array<i32>} : memref<1x64xf32, #tpu.memory_space<vmem>>, vector<1x64xf32>,
      %cst_17 = arith.constant 0.000000e+00 : f32
      %21 = vector.broadcast %cst_17 : f32 to vector<1x64xf32>
      %c0_18 = arith.constant 0 : index
      %c0_19 = arith.constant 0 : index
      %22 = vector.load %arg8[%c0_18, %c0_19] : memref<1x64xf32, #tpu.memory_space<vmem>>, vector<1x64xf32>
      tpu.vector_store %arg8[%c0_18, %c0_19], %21 {strides = array<i32>} : memref<1x64xf32, #tpu.memory_space<vmem>>, vector<1x64xf32>,
    } else {
    }
    %c0 = arith.constant 0 : index
    %c0_1 = arith.constant 0 : index
    %c0_2 = arith.constant 0 : index
    %3 = vector.load %arg2[%c0, %c0_1, %c0_2] : memref<1x64x64xf32, #tpu.memory_space<vmem>>, vector<1x64x64xf32>
    %4 = vector.shape_cast %3 : vector<1x64x64xf32> to vector<64x64xf32>
    %c0_3 = arith.constant 0 : index
    %c0_4 = arith.constant 0 : index
    %5 = vector.load %arg7[%c0_3, %c0_4] : memref<1x64xf32, #tpu.memory_space<vmem>>, vector<1x64xf32>
    %cst = arith.constant dense<0.000000e+00> : vector<64xf32>
    %6 = vector.multi_reduction <add>, %4, %cst [0] : vector<64x64xf32> to vector<64xf32>
    %7 = vector.shape_cast %6 : vector<64xf32> to vector<1x64xf32>
    %8 = arith.addf %5, %7 : vector<1x64xf32>
    %c0_5 = arith.constant 0 : index
    %c0_6 = arith.constant 0 : index
    %9 = vector.load %arg7[%c0_5, %c0_6] : memref<1x64xf32, #tpu.memory_space<vmem>>, vector<1x64xf32>
    tpu.vector_store %arg7[%c0_5, %c0_6], %8 {strides = array<i32>} : memref<1x64xf32, #tpu.memory_space<vmem>>, vector<1x64xf32>,
    %c0_7 = arith.constant 0 : index
    %c0_8 = arith.constant 0 : index
    %10 = vector.load %arg8[%c0_7, %c0_8] : memref<1x64xf32, #tpu.memory_space<vmem>>, vector<1x64xf32>
    %11 = arith.mulf %4, %4 : vector<64x64xf32>
    %cst_9 = arith.constant dense<0.000000e+00> : vector<64xf32>
    %12 = vector.multi_reduction <add>, %11, %cst_9 [0] : vector<64x64xf32> to vector<64xf32>
    %13 = vector.shape_cast %12 : vector<64xf32> to vector<1x64xf32>
    %14 = arith.addf %10, %13 : vector<1x64xf32>
    %c0_10 = arith.constant 0 : index
    %c0_11 = arith.constant 0 : index
    %15 = vector.load %arg8[%c0_10, %c0_11] : memref<1x64xf32, #tpu.memory_space<vmem>>, vector<1x64xf32>
    tpu.vector_store %arg8[%c0_10, %c0_11], %14 {strides = array<i32>} : memref<1x64xf32, #tpu.memory_space<vmem>>, vector<1x64xf32>,
    %c0_i32_12 = arith.constant 0 : i32
    %16 = arith.cmpi eq, %arg1, %c0_i32_12 : i32
    %17 = arith.extui %16 : i1 to i32
    %c0_i32_13 = arith.constant 0 : i32
    %18 = arith.cmpi ne, %17, %c0_i32_13 : i32
    scf.if %18 {
      %c0_14 = arith.constant 0 : index
      %c0_15 = arith.constant 0 : index
      %19 = vector.load %arg7[%c0_14, %c0_15] : memref<1x64xf32, #tpu.memory_space<vmem>>, vector<1x64xf32>
      %cst_16 = arith.constant 1.562500e-02 : f32
      %20 = vector.broadcast %cst_16 : f32 to vector<1x64xf32>
      %21 = arith.mulf %19, %20 : vector<1x64xf32>
      %c0_17 = arith.constant 0 : index
      %c0_18 = arith.constant 0 : index
      %22 = vector.load %arg8[%c0_17, %c0_18] : memref<1x64xf32, #tpu.memory_space<vmem>>, vector<1x64xf32>
      %cst_19 = arith.constant 1.562500e-02 : f32
      %23 = vector.broadcast %cst_19 : f32 to vector<1x64xf32>
      %24 = arith.mulf %22, %23 : vector<1x64xf32>
      %25 = arith.mulf %21, %21 : vector<1x64xf32>
      %26 = arith.subf %24, %25 : vector<1x64xf32>
      %cst_20 = arith.constant 9.99999974E-6 : f32
      %27 = vector.broadcast %cst_20 : f32 to vector<1x64xf32>
      %28 = arith.addf %26, %27 : vector<1x64xf32>
      %29 = math.rsqrt %28 : vector<1x64xf32>
      %c0_21 = arith.constant 0 : index
      %c0_22 = arith.constant 0 : index
      %30 = vector.load %arg3[%c0_21, %c0_22] : memref<1x64xf32, #tpu.memory_space<vmem>>, vector<1x64xf32>
      %31 = arith.mulf %30, %29 : vector<1x64xf32>
      %c0_23 = arith.constant 0 : index
      %c0_24 = arith.constant 0 : index
      %c0_25 = arith.constant 0 : index
      %32 = vector.load %arg5[%c0_23, %c0_24, %c0_25] : memref<1x1x64xf32, #tpu.memory_space<vmem>>, vector<1x1x64xf32>
      %33 = vector.shape_cast %32 : vector<1x1x64xf32> to vector<1x64xf32>
      %34 = vector.shape_cast %31 : vector<1x64xf32> to vector<1x1x64xf32>
      tpu.vector_store %arg5[%c0_23, %c0_24, %c0_25], %34 {strides = array<i32>} : memref<1x1x64xf32, #tpu.memory_space<vmem>>, vector<1x1x64xf32>,
      %c0_26 = arith.constant 0 : index
      %c0_27 = arith.constant 0 : index
      %35 = vector.load %arg4[%c0_26, %c0_27] : memref<1x64xf32, #tpu.memory_space<vmem>>, vector<1x64xf32>
      %36 = arith.mulf %21, %31 : vector<1x64xf32>
      %37 = arith.subf %35, %36 : vector<1x64xf32>
      %c0_28 = arith.constant 0 : index
      %c0_29 = arith.constant 0 : index
      %c0_30 = arith.constant 0 : index
      %38 = vector.load %arg6[%c0_28, %c0_29, %c0_30] : memref<1x1x64xf32, #tpu.memory_space<vmem>>, vector<1x1x64xf32>
      %39 = vector.shape_cast %38 : vector<1x1x64xf32> to vector<1x64xf32>
      %40 = vector.shape_cast %37 : vector<1x64xf32> to vector<1x1x64xf32>
      tpu.vector_store %arg6[%c0_28, %c0_29, %c0_30], %40 {strides = array<i32>} : memref<1x1x64xf32, #tpu.memory_space<vmem>>, vector<1x1x64xf32>,
    } else {
    }
    return
  }
  func.func @transform_0(%arg0: i32, %arg1: i32) -> (i32, i32, i32) {
    %c0_i32 = arith.constant 0 : i32
    %c0_i32_0 = arith.constant 0 : i32
    return %arg0, %arg1, %c0_i32 : i32, i32, i32
  }
  func.func @transform_1(%arg0: i32, %arg1: i32) -> (i32, i32) {
    %c0_i32 = arith.constant 0 : i32
    %c0_i32_0 = arith.constant 0 : i32
    %c0_i32_1 = arith.constant 0 : i32
    return %c0_i32, %c0_i32_0 : i32, i32
  }
  func.func @transform_2(%arg0: i32, %arg1: i32) -> (i32, i32) {
    %c0_i32 = arith.constant 0 : i32
    %c0_i32_0 = arith.constant 0 : i32
    %c0_i32_1 = arith.constant 0 : i32
    return %c0_i32, %c0_i32_0 : i32, i32
  }
  func.func @transform_3(%arg0: i32, %arg1: i32) -> (i32, i32, i32) {
    %c0_i32 = arith.constant 0 : i32
    %c0_i32_0 = arith.constant 0 : i32
    %c0_i32_1 = arith.constant 0 : i32
    return %arg0, %c0_i32, %c0_i32_0 : i32, i32, i32
  }
  func.func @transform_4(%arg0: i32, %arg1: i32) -> (i32, i32, i32) {
    %c0_i32 = arith.constant 0 : i32
    %c0_i32_0 = arith.constant 0 : i32
    %c0_i32_1 = arith.constant 0 : i32
    return %arg0, %c0_i32, %c0_i32_0 : i32, i32, i32
  }
}

module attributes {stable_mosaic.version = 11 : i64} {
  func.func @_in_apply_kernel(%arg0: i32, %arg1: i32, %arg2: memref<1x32x128xf32, #tpu.memory_space<vmem>>, %arg3: memref<1x1x128xf32, #tpu.memory_space<vmem>>, %arg4: memref<1x1x128xf32, #tpu.memory_space<vmem>>, %arg5: memref<1x32x128xf32, #tpu.memory_space<vmem>>) attributes {dimension_semantics = [#tpu.dimension_semantics<parallel>, #tpu.dimension_semantics<parallel>], iteration_bounds = array<i64: 2, 1>, scalar_prefetch = 0 : i64, scratch_operands = 0 : i64, tpu.core_type = #tpu.core_type<tc>, window_params = [{transform_indices = @transform_0, window_bounds = array<i64: 1, 32, 128>}, {transform_indices = @transform_1, window_bounds = array<i64: 1, 1, 128>}, {transform_indices = @transform_2, window_bounds = array<i64: 1, 1, 128>}, {transform_indices = @transform_3, window_bounds = array<i64: 1, 32, 128>}]} {
    %c0 = arith.constant 0 : index
    %c0_0 = arith.constant 0 : index
    %c0_1 = arith.constant 0 : index
    %0 = vector.load %arg2[%c0, %c0_0, %c0_1] : memref<1x32x128xf32, #tpu.memory_space<vmem>>, vector<1x32x128xf32>
    %1 = vector.shape_cast %0 : vector<1x32x128xf32> to vector<32x128xf32>
    %c0_2 = arith.constant 0 : index
    %c0_3 = arith.constant 0 : index
    %c0_4 = arith.constant 0 : index
    %2 = vector.load %arg3[%c0_2, %c0_3, %c0_4] : memref<1x1x128xf32, #tpu.memory_space<vmem>>, vector<1x1x128xf32>
    %3 = vector.shape_cast %2 : vector<1x1x128xf32> to vector<1x128xf32>
    %4 = vector.broadcast %3 : vector<1x128xf32> to vector<32x128xf32>
    %5 = arith.mulf %1, %4 : vector<32x128xf32>
    %c0_5 = arith.constant 0 : index
    %c0_6 = arith.constant 0 : index
    %c0_7 = arith.constant 0 : index
    %6 = vector.load %arg4[%c0_5, %c0_6, %c0_7] : memref<1x1x128xf32, #tpu.memory_space<vmem>>, vector<1x1x128xf32>
    %7 = vector.shape_cast %6 : vector<1x1x128xf32> to vector<1x128xf32>
    %8 = vector.broadcast %7 : vector<1x128xf32> to vector<32x128xf32>
    %9 = arith.addf %5, %8 : vector<32x128xf32>
    %cst = arith.constant 0.000000e+00 : f32
    %10 = vector.broadcast %cst : f32 to vector<32x128xf32>
    %11 = arith.cmpf ogt, %9, %10 : vector<32x128xf32>
    %cst_8 = arith.constant 2.000000e-01 : f32
    %12 = vector.broadcast %cst_8 : f32 to vector<32x128xf32>
    %13 = arith.mulf %12, %9 : vector<32x128xf32>
    %14 = arith.select %11, %9, %13 : vector<32x128xi1>, vector<32x128xf32>
    %c0_9 = arith.constant 0 : index
    %c0_10 = arith.constant 0 : index
    %c0_11 = arith.constant 0 : index
    %15 = vector.load %arg5[%c0_9, %c0_10, %c0_11] : memref<1x32x128xf32, #tpu.memory_space<vmem>>, vector<1x32x128xf32>
    %16 = vector.shape_cast %15 : vector<1x32x128xf32> to vector<32x128xf32>
    %17 = vector.shape_cast %14 : vector<32x128xf32> to vector<1x32x128xf32>
    tpu.vector_store %arg5[%c0_9, %c0_10, %c0_11], %17 {strides = array<i32>} : memref<1x32x128xf32, #tpu.memory_space<vmem>>, vector<1x32x128xf32>,
    return
  }
  func.func @transform_0(%arg0: i32, %arg1: i32) -> (i32, i32, i32) {
    %c0_i32 = arith.constant 0 : i32
    %c0_i32_0 = arith.constant 0 : i32
    return %arg0, %arg1, %c0_i32 : i32, i32, i32
  }
  func.func @transform_1(%arg0: i32, %arg1: i32) -> (i32, i32, i32) {
    %c0_i32 = arith.constant 0 : i32
    %c0_i32_0 = arith.constant 0 : i32
    %c0_i32_1 = arith.constant 0 : i32
    return %arg0, %c0_i32, %c0_i32_0 : i32, i32, i32
  }
  func.func @transform_2(%arg0: i32, %arg1: i32) -> (i32, i32, i32) {
    %c0_i32 = arith.constant 0 : i32
    %c0_i32_0 = arith.constant 0 : i32
    %c0_i32_1 = arith.constant 0 : i32
    return %arg0, %c0_i32, %c0_i32_0 : i32, i32, i32
  }
  func.func @transform_3(%arg0: i32, %arg1: i32) -> (i32, i32, i32) {
    %c0_i32 = arith.constant 0 : i32
    %c0_i32_0 = arith.constant 0 : i32
    return %arg0, %arg1, %c0_i32 : i32, i32, i32
  }
}

module attributes {stable_mosaic.version = 11 : i64} {
  func.func @_conv_tap_kernel(%arg0: i32, %arg1: i32, %arg2: i32, %arg3: memref<1x10x10x64xf32, #tpu.memory_space<vmem>>, %arg4: memref<16x64x128xf32, #tpu.memory_space<vmem>>, %arg5: memref<1x128xf32, #tpu.memory_space<vmem>>, %arg6: memref<1x1x7x128xf32, #tpu.memory_space<vmem>>, %arg7: memref<7x128xf32, #tpu.memory_space<vmem>>) attributes {dimension_semantics = [#tpu.dimension_semantics<parallel>, #tpu.dimension_semantics<parallel>, #tpu.dimension_semantics<arbitrary>], iteration_bounds = array<i64: 2, 4, 4>, scalar_prefetch = 0 : i64, scratch_operands = 1 : i64, tpu.core_type = #tpu.core_type<tc>, window_params = [{transform_indices = @transform_0, window_bounds = array<i64: 1, 10, 10, 64>}, {pipeline_mode = #tpu.pipeline_mode<synchronous>, transform_indices = @transform_1, window_bounds = array<i64: 16, 64, 128>}, {pipeline_mode = #tpu.pipeline_mode<synchronous>, transform_indices = @transform_2, window_bounds = array<i64: 1, 128>}, {transform_indices = @transform_3, window_bounds = array<i64: 1, 1, 7, 128>}]} {
    %c0_i32 = arith.constant 0 : i32
    %0 = arith.cmpi eq, %arg2, %c0_i32 : i32
    %1 = arith.extui %0 : i1 to i32
    %c0_i32_0 = arith.constant 0 : i32
    %2 = arith.cmpi ne, %1, %c0_i32_0 : i32
    scf.if %2 {
      %cst_32 = arith.constant 0.000000e+00 : f32
      %52 = vector.broadcast %cst_32 : f32 to vector<7x128xf32>
      %c0_33 = arith.constant 0 : index
      %c0_34 = arith.constant 0 : index
      %53 = vector.load %arg7[%c0_33, %c0_34] : memref<7x128xf32, #tpu.memory_space<vmem>>, vector<7x128xf32>
      tpu.vector_store %arg7[%c0_33, %c0_34], %52 {strides = array<i32>} : memref<7x128xf32, #tpu.memory_space<vmem>>, vector<7x128xf32>,
    } else {
    }
    %c2_i32 = arith.constant 2 : i32
    %3 = arith.muli %arg1, %c2_i32 : i32
    %4 = arith.addi %3, %arg2 : i32
    %cst = arith.constant 0.000000e+00 : f32
    %5 = vector.broadcast %cst : f32 to vector<7x128xf32>
    %c0 = arith.constant 0 : index
    %6 = arith.index_cast %4 : i32 to index
    %c0_1 = arith.constant 0 : index
    %c0_2 = arith.constant 0 : index
    %7 = vector.load %arg3[%c0, %6, %c0_1, %c0_2] : memref<1x10x10x64xf32, #tpu.memory_space<vmem>>, vector<1x1x7x64xf32>
    %8 = vector.shape_cast %7 : vector<1x1x7x64xf32> to vector<7x64xf32>
    %c4_i32 = arith.constant 4 : i32
    %9 = arith.muli %arg2, %c4_i32 : i32
    %c0_i32_3 = arith.constant 0 : i32
    %10 = arith.addi %9, %c0_i32_3 : i32
    %11 = arith.index_cast %10 : i32 to index
    %c0_4 = arith.constant 0 : index
    %c0_5 = arith.constant 0 : index
    %12 = vector.load %arg4[%11, %c0_4, %c0_5] : memref<16x64x128xf32, #tpu.memory_space<vmem>>, vector<1x64x128xf32>
    %13 = vector.shape_cast %12 : vector<1x64x128xf32> to vector<64x128xf32>
    %cst_6 = arith.constant dense<0.000000e+00> : vector<7x128xf32>
    %14 = tpu.matmul %8, %13, %cst_6 {dimension_numbers = #tpu.dot_dimension_numbers<[1], [0], [0], [1], [0, 0, 1, 1], [], []>} : vector<7x64xf32>, vector<64x128xf32>, vector<7x128xf32> -> vector<7x128xf32>
    %15 = arith.addf %5, %14 : vector<7x128xf32>
    %c0_7 = arith.constant 0 : index
    %16 = arith.index_cast %4 : i32 to index
    %c1 = arith.constant 1 : index
    %c0_8 = arith.constant 0 : index
    %17 = vector.load %arg3[%c0_7, %16, %c1, %c0_8] : memref<1x10x10x64xf32, #tpu.memory_space<vmem>>, vector<1x1x7x64xf32>
    %18 = vector.shape_cast %17 : vector<1x1x7x64xf32> to vector<7x64xf32>
    %c4_i32_9 = arith.constant 4 : i32
    %19 = arith.muli %arg2, %c4_i32_9 : i32
    %c1_i32 = arith.constant 1 : i32
    %20 = arith.addi %19, %c1_i32 : i32
    %21 = arith.index_cast %20 : i32 to index
    %c0_10 = arith.constant 0 : index
    %c0_11 = arith.constant 0 : index
    %22 = vector.load %arg4[%21, %c0_10, %c0_11] : memref<16x64x128xf32, #tpu.memory_space<vmem>>, vector<1x64x128xf32>
    %23 = vector.shape_cast %22 : vector<1x64x128xf32> to vector<64x128xf32>
    %cst_12 = arith.constant dense<0.000000e+00> : vector<7x128xf32>
    %24 = tpu.matmul %18, %23, %cst_12 {dimension_numbers = #tpu.dot_dimension_numbers<[1], [0], [0], [1], [0, 0, 1, 1], [], []>} : vector<7x64xf32>, vector<64x128xf32>, vector<7x128xf32> -> vector<7x128xf32>
    %25 = arith.addf %15, %24 : vector<7x128xf32>
    %c0_13 = arith.constant 0 : index
    %26 = arith.index_cast %4 : i32 to index
    %c2 = arith.constant 2 : index
    %c0_14 = arith.constant 0 : index
    %27 = vector.load %arg3[%c0_13, %26, %c2, %c0_14] : memref<1x10x10x64xf32, #tpu.memory_space<vmem>>, vector<1x1x7x64xf32>
    %28 = vector.shape_cast %27 : vector<1x1x7x64xf32> to vector<7x64xf32>
    %c4_i32_15 = arith.constant 4 : i32
    %29 = arith.muli %arg2, %c4_i32_15 : i32
    %c2_i32_16 = arith.constant 2 : i32
    %30 = arith.addi %29, %c2_i32_16 : i32
    %31 = arith.index_cast %30 : i32 to index
    %c0_17 = arith.constant 0 : index
    %c0_18 = arith.constant 0 : index
    %32 = vector.load %arg4[%31, %c0_17, %c0_18] : memref<16x64x128xf32, #tpu.memory_space<vmem>>, vector<1x64x128xf32>
    %33 = vector.shape_cast %32 : vector<1x64x128xf32> to vector<64x128xf32>
    %cst_19 = arith.constant dense<0.000000e+00> : vector<7x128xf32>
    %34 = tpu.matmul %28, %33, %cst_19 {dimension_numbers = #tpu.dot_dimension_numbers<[1], [0], [0], [1], [0, 0, 1, 1], [], []>} : vector<7x64xf32>, vector<64x128xf32>, vector<7x128xf32> -> vector<7x128xf32>
    %35 = arith.addf %25, %34 : vector<7x128xf32>
    %c0_20 = arith.constant 0 : index
    %36 = arith.index_cast %4 : i32 to index
    %c3 = arith.constant 3 : index
    %c0_21 = arith.constant 0 : index
    %37 = vector.load %arg3[%c0_20, %36, %c3, %c0_21] : memref<1x10x10x64xf32, #tpu.memory_space<vmem>>, vector<1x1x7x64xf32>
    %38 = vector.shape_cast %37 : vector<1x1x7x64xf32> to vector<7x64xf32>
    %c4_i32_22 = arith.constant 4 : i32
    %39 = arith.muli %arg2, %c4_i32_22 : i32
    %c3_i32 = arith.constant 3 : i32
    %40 = arith.addi %39, %c3_i32 : i32
    %41 = arith.index_cast %40 : i32 to index
    %c0_23 = arith.constant 0 : index
    %c0_24 = arith.constant 0 : index
    %42 = vector.load %arg4[%41, %c0_23, %c0_24] : memref<16x64x128xf32, #tpu.memory_space<vmem>>, vector<1x64x128xf32>
    %43 = vector.shape_cast %42 : vector<1x64x128xf32> to vector<64x128xf32>
    %cst_25 = arith.constant dense<0.000000e+00> : vector<7x128xf32>
    %44 = tpu.matmul %38, %43, %cst_25 {dimension_numbers = #tpu.dot_dimension_numbers<[1], [0], [0], [1], [0, 0, 1, 1], [], []>} : vector<7x64xf32>, vector<64x128xf32>, vector<7x128xf32> -> vector<7x128xf32>
    %45 = arith.addf %35, %44 : vector<7x128xf32>
    %c0_26 = arith.constant 0 : index
    %c0_27 = arith.constant 0 : index
    %46 = vector.load %arg7[%c0_26, %c0_27] : memref<7x128xf32, #tpu.memory_space<vmem>>, vector<7x128xf32>
    %47 = arith.addf %46, %45 : vector<7x128xf32>
    %c0_28 = arith.constant 0 : index
    %c0_29 = arith.constant 0 : index
    %48 = vector.load %arg7[%c0_28, %c0_29] : memref<7x128xf32, #tpu.memory_space<vmem>>, vector<7x128xf32>
    tpu.vector_store %arg7[%c0_28, %c0_29], %47 {strides = array<i32>} : memref<7x128xf32, #tpu.memory_space<vmem>>, vector<7x128xf32>,
    %c3_i32_30 = arith.constant 3 : i32
    %49 = arith.cmpi eq, %arg2, %c3_i32_30 : i32
    %50 = arith.extui %49 : i1 to i32
    %c0_i32_31 = arith.constant 0 : i32
    %51 = arith.cmpi ne, %50, %c0_i32_31 : i32
    scf.if %51 {
      %c0_32 = arith.constant 0 : index
      %c0_33 = arith.constant 0 : index
      %52 = vector.load %arg7[%c0_32, %c0_33] : memref<7x128xf32, #tpu.memory_space<vmem>>, vector<7x128xf32>
      %c0_34 = arith.constant 0 : index
      %c0_35 = arith.constant 0 : index
      %53 = vector.load %arg5[%c0_34, %c0_35] : memref<1x128xf32, #tpu.memory_space<vmem>>, vector<1x128xf32>
      %54 = vector.broadcast %53 : vector<1x128xf32> to vector<7x128xf32>
      %55 = arith.addf %52, %54 : vector<7x128xf32>
      %c0_36 = arith.constant 0 : index
      %c0_37 = arith.constant 0 : index
      %c0_38 = arith.constant 0 : index
      %c0_39 = arith.constant 0 : index
      %56 = vector.load %arg6[%c0_36, %c0_37, %c0_38, %c0_39] : memref<1x1x7x128xf32, #tpu.memory_space<vmem>>, vector<1x1x7x128xf32>
      %57 = vector.shape_cast %56 : vector<1x1x7x128xf32> to vector<7x128xf32>
      %58 = vector.shape_cast %55 : vector<7x128xf32> to vector<1x1x7x128xf32>
      tpu.vector_store %arg6[%c0_36, %c0_37, %c0_38, %c0_39], %58 {strides = array<i32>} : memref<1x1x7x128xf32, #tpu.memory_space<vmem>>, vector<1x1x7x128xf32>,
    } else {
    }
    return
  }
  func.func @transform_0(%arg0: i32, %arg1: i32, %arg2: i32) -> (i32, i32, i32, i32) {
    %c0_i32 = arith.constant 0 : i32
    %c0_i32_0 = arith.constant 0 : i32
    %c0_i32_1 = arith.constant 0 : i32
    %c0_i32_2 = arith.constant 0 : i32
    return %arg0, %c0_i32, %c0_i32_0, %c0_i32_1 : i32, i32, i32, i32
  }
  func.func @transform_1(%arg0: i32, %arg1: i32, %arg2: i32) -> (i32, i32, i32) {
    %c0_i32 = arith.constant 0 : i32
    %c0_i32_0 = arith.constant 0 : i32
    %c0_i32_1 = arith.constant 0 : i32
    %c0_i32_2 = arith.constant 0 : i32
    return %c0_i32, %c0_i32_0, %c0_i32_1 : i32, i32, i32
  }
  func.func @transform_2(%arg0: i32, %arg1: i32, %arg2: i32) -> (i32, i32) {
    %c0_i32 = arith.constant 0 : i32
    %c0_i32_0 = arith.constant 0 : i32
    %c0_i32_1 = arith.constant 0 : i32
    return %c0_i32, %c0_i32_0 : i32, i32
  }
  func.func @transform_3(%arg0: i32, %arg1: i32, %arg2: i32) -> (i32, i32, i32, i32) {
    %c0_i32 = arith.constant 0 : i32
    %c0_i32_0 = arith.constant 0 : i32
    %c0_i32_1 = arith.constant 0 : i32
    return %arg0, %arg1, %c0_i32, %c0_i32_0 : i32, i32, i32, i32
  }
}

module attributes {stable_mosaic.version = 11 : i64} {
  func.func @_in_apply_kernel(%arg0: i32, %arg1: i32, %arg2: memref<1x16x128xf32, #tpu.memory_space<vmem>>, %arg3: memref<1x1x128xf32, #tpu.memory_space<vmem>>, %arg4: memref<1x1x128xf32, #tpu.memory_space<vmem>>, %arg5: memref<1x16x128xf32, #tpu.memory_space<vmem>>) attributes {dimension_semantics = [#tpu.dimension_semantics<parallel>, #tpu.dimension_semantics<parallel>], iteration_bounds = array<i64: 2, 1>, scalar_prefetch = 0 : i64, scratch_operands = 0 : i64, tpu.core_type = #tpu.core_type<tc>, window_params = [{transform_indices = @transform_0, window_bounds = array<i64: 1, 16, 128>}, {transform_indices = @transform_1, window_bounds = array<i64: 1, 1, 128>}, {transform_indices = @transform_2, window_bounds = array<i64: 1, 1, 128>}, {transform_indices = @transform_3, window_bounds = array<i64: 1, 16, 128>}]} {
    %c0 = arith.constant 0 : index
    %c0_0 = arith.constant 0 : index
    %c0_1 = arith.constant 0 : index
    %0 = vector.load %arg2[%c0, %c0_0, %c0_1] : memref<1x16x128xf32, #tpu.memory_space<vmem>>, vector<1x16x128xf32>
    %1 = vector.shape_cast %0 : vector<1x16x128xf32> to vector<16x128xf32>
    %c0_2 = arith.constant 0 : index
    %c0_3 = arith.constant 0 : index
    %c0_4 = arith.constant 0 : index
    %2 = vector.load %arg3[%c0_2, %c0_3, %c0_4] : memref<1x1x128xf32, #tpu.memory_space<vmem>>, vector<1x1x128xf32>
    %3 = vector.shape_cast %2 : vector<1x1x128xf32> to vector<1x128xf32>
    %4 = vector.broadcast %3 : vector<1x128xf32> to vector<16x128xf32>
    %5 = arith.mulf %1, %4 : vector<16x128xf32>
    %c0_5 = arith.constant 0 : index
    %c0_6 = arith.constant 0 : index
    %c0_7 = arith.constant 0 : index
    %6 = vector.load %arg4[%c0_5, %c0_6, %c0_7] : memref<1x1x128xf32, #tpu.memory_space<vmem>>, vector<1x1x128xf32>
    %7 = vector.shape_cast %6 : vector<1x1x128xf32> to vector<1x128xf32>
    %8 = vector.broadcast %7 : vector<1x128xf32> to vector<16x128xf32>
    %9 = arith.addf %5, %8 : vector<16x128xf32>
    %cst = arith.constant 0.000000e+00 : f32
    %10 = vector.broadcast %cst : f32 to vector<16x128xf32>
    %11 = arith.cmpf ogt, %9, %10 : vector<16x128xf32>
    %cst_8 = arith.constant 2.000000e-01 : f32
    %12 = vector.broadcast %cst_8 : f32 to vector<16x128xf32>
    %13 = arith.mulf %12, %9 : vector<16x128xf32>
    %14 = arith.select %11, %9, %13 : vector<16x128xi1>, vector<16x128xf32>
    %c0_9 = arith.constant 0 : index
    %c0_10 = arith.constant 0 : index
    %c0_11 = arith.constant 0 : index
    %15 = vector.load %arg5[%c0_9, %c0_10, %c0_11] : memref<1x16x128xf32, #tpu.memory_space<vmem>>, vector<1x16x128xf32>
    %16 = vector.shape_cast %15 : vector<1x16x128xf32> to vector<16x128xf32>
    %17 = vector.shape_cast %14 : vector<16x128xf32> to vector<1x16x128xf32>
    tpu.vector_store %arg5[%c0_9, %c0_10, %c0_11], %17 {strides = array<i32>} : memref<1x16x128xf32, #tpu.memory_space<vmem>>, vector<1x16x128xf32>,
    return
  }
  func.func @transform_0(%arg0: i32, %arg1: i32) -> (i32, i32, i32) {
    %c0_i32 = arith.constant 0 : i32
    %c0_i32_0 = arith.constant 0 : i32
    return %arg0, %arg1, %c0_i32 : i32, i32, i32
  }
  func.func @transform_1(%arg0: i32, %arg1: i32) -> (i32, i32, i32) {
    %c0_i32 = arith.constant 0 : i32
    %c0_i32_0 = arith.constant 0 : i32
    %c0_i32_1 = arith.constant 0 : i32
    return %arg0, %c0_i32, %c0_i32_0 : i32, i32, i32
  }
  func.func @transform_2(%arg0: i32, %arg1: i32) -> (i32, i32, i32) {
    %c0_i32 = arith.constant 0 : i32
    %c0_i32_0 = arith.constant 0 : i32
    %c0_i32_1 = arith.constant 0 : i32
    return %arg0, %c0_i32, %c0_i32_0 : i32, i32, i32
  }
  func.func @transform_3(%arg0: i32, %arg1: i32) -> (i32, i32, i32) {
    %c0_i32 = arith.constant 0 : i32
    %c0_i32_0 = arith.constant 0 : i32
    return %arg0, %arg1, %c0_i32 : i32, i32, i32
  }
}

module attributes {stable_mosaic.version = 11 : i64} {
  func.func @_conv_tap_kernel(%arg0: i32, %arg1: i32, %arg2: i32, %arg3: memref<1x6x6x128xf32, #tpu.memory_space<vmem>>, %arg4: memref<9x128x128xf32, #tpu.memory_space<vmem>>, %arg5: memref<1x128xf32, #tpu.memory_space<vmem>>, %arg6: memref<1x1x4x128xf32, #tpu.memory_space<vmem>>, %arg7: memref<4x128xf32, #tpu.memory_space<vmem>>) attributes {dimension_semantics = [#tpu.dimension_semantics<parallel>, #tpu.dimension_semantics<parallel>, #tpu.dimension_semantics<arbitrary>], iteration_bounds = array<i64: 2, 4, 3>, scalar_prefetch = 0 : i64, scratch_operands = 1 : i64, tpu.core_type = #tpu.core_type<tc>, window_params = [{transform_indices = @transform_0, window_bounds = array<i64: 1, 6, 6, 128>}, {pipeline_mode = #tpu.pipeline_mode<synchronous>, transform_indices = @transform_1, window_bounds = array<i64: 9, 128, 128>}, {pipeline_mode = #tpu.pipeline_mode<synchronous>, transform_indices = @transform_2, window_bounds = array<i64: 1, 128>}, {transform_indices = @transform_3, window_bounds = array<i64: 1, 1, 4, 128>}]} {
    %c0_i32 = arith.constant 0 : i32
    %0 = arith.cmpi eq, %arg2, %c0_i32 : i32
    %1 = arith.extui %0 : i1 to i32
    %c0_i32_0 = arith.constant 0 : i32
    %2 = arith.cmpi ne, %1, %c0_i32_0 : i32
    scf.if %2 {
      %cst_26 = arith.constant 0.000000e+00 : f32
      %42 = vector.broadcast %cst_26 : f32 to vector<4x128xf32>
      %c0_27 = arith.constant 0 : index
      %c0_28 = arith.constant 0 : index
      %43 = vector.load %arg7[%c0_27, %c0_28] : memref<4x128xf32, #tpu.memory_space<vmem>>, vector<4x128xf32>
      tpu.vector_store %arg7[%c0_27, %c0_28], %42 {strides = array<i32>} : memref<4x128xf32, #tpu.memory_space<vmem>>, vector<4x128xf32>,
    } else {
    }
    %c1_i32 = arith.constant 1 : i32
    %3 = arith.muli %arg1, %c1_i32 : i32
    %4 = arith.addi %3, %arg2 : i32
    %cst = arith.constant 0.000000e+00 : f32
    %5 = vector.broadcast %cst : f32 to vector<4x128xf32>
    %c0 = arith.constant 0 : index
    %6 = arith.index_cast %4 : i32 to index
    %c0_1 = arith.constant 0 : index
    %c0_2 = arith.constant 0 : index
    %7 = vector.load %arg3[%c0, %6, %c0_1, %c0_2] : memref<1x6x6x128xf32, #tpu.memory_space<vmem>>, vector<1x1x4x128xf32>
    %8 = vector.shape_cast %7 : vector<1x1x4x128xf32> to vector<4x128xf32>
    %c3_i32 = arith.constant 3 : i32
    %9 = arith.muli %arg2, %c3_i32 : i32
    %c0_i32_3 = arith.constant 0 : i32
    %10 = arith.addi %9, %c0_i32_3 : i32
    %11 = arith.index_cast %10 : i32 to index
    %c0_4 = arith.constant 0 : index
    %c0_5 = arith.constant 0 : index
    %12 = vector.load %arg4[%11, %c0_4, %c0_5] : memref<9x128x128xf32, #tpu.memory_space<vmem>>, vector<1x128x128xf32>
    %13 = vector.shape_cast %12 : vector<1x128x128xf32> to vector<128x128xf32>
    %cst_6 = arith.constant dense<0.000000e+00> : vector<4x128xf32>
    %14 = tpu.matmul %8, %13, %cst_6 {dimension_numbers = #tpu.dot_dimension_numbers<[1], [0], [0], [1], [0, 0, 1, 1], [], []>} : vector<4x128xf32>, vector<128x128xf32>, vector<4x128xf32> -> vector<4x128xf32>
    %15 = arith.addf %5, %14 : vector<4x128xf32>
    %c0_7 = arith.constant 0 : index
    %16 = arith.index_cast %4 : i32 to index
    %c1 = arith.constant 1 : index
    %c0_8 = arith.constant 0 : index
    %17 = vector.load %arg3[%c0_7, %16, %c1, %c0_8] : memref<1x6x6x128xf32, #tpu.memory_space<vmem>>, vector<1x1x4x128xf32>
    %18 = vector.shape_cast %17 : vector<1x1x4x128xf32> to vector<4x128xf32>
    %c3_i32_9 = arith.constant 3 : i32
    %19 = arith.muli %arg2, %c3_i32_9 : i32
    %c1_i32_10 = arith.constant 1 : i32
    %20 = arith.addi %19, %c1_i32_10 : i32
    %21 = arith.index_cast %20 : i32 to index
    %c0_11 = arith.constant 0 : index
    %c0_12 = arith.constant 0 : index
    %22 = vector.load %arg4[%21, %c0_11, %c0_12] : memref<9x128x128xf32, #tpu.memory_space<vmem>>, vector<1x128x128xf32>
    %23 = vector.shape_cast %22 : vector<1x128x128xf32> to vector<128x128xf32>
    %cst_13 = arith.constant dense<0.000000e+00> : vector<4x128xf32>
    %24 = tpu.matmul %18, %23, %cst_13 {dimension_numbers = #tpu.dot_dimension_numbers<[1], [0], [0], [1], [0, 0, 1, 1], [], []>} : vector<4x128xf32>, vector<128x128xf32>, vector<4x128xf32> -> vector<4x128xf32>
    %25 = arith.addf %15, %24 : vector<4x128xf32>
    %c0_14 = arith.constant 0 : index
    %26 = arith.index_cast %4 : i32 to index
    %c2 = arith.constant 2 : index
    %c0_15 = arith.constant 0 : index
    %27 = vector.load %arg3[%c0_14, %26, %c2, %c0_15] : memref<1x6x6x128xf32, #tpu.memory_space<vmem>>, vector<1x1x4x128xf32>
    %28 = vector.shape_cast %27 : vector<1x1x4x128xf32> to vector<4x128xf32>
    %c3_i32_16 = arith.constant 3 : i32
    %29 = arith.muli %arg2, %c3_i32_16 : i32
    %c2_i32 = arith.constant 2 : i32
    %30 = arith.addi %29, %c2_i32 : i32
    %31 = arith.index_cast %30 : i32 to index
    %c0_17 = arith.constant 0 : index
    %c0_18 = arith.constant 0 : index
    %32 = vector.load %arg4[%31, %c0_17, %c0_18] : memref<9x128x128xf32, #tpu.memory_space<vmem>>, vector<1x128x128xf32>
    %33 = vector.shape_cast %32 : vector<1x128x128xf32> to vector<128x128xf32>
    %cst_19 = arith.constant dense<0.000000e+00> : vector<4x128xf32>
    %34 = tpu.matmul %28, %33, %cst_19 {dimension_numbers = #tpu.dot_dimension_numbers<[1], [0], [0], [1], [0, 0, 1, 1], [], []>} : vector<4x128xf32>, vector<128x128xf32>, vector<4x128xf32> -> vector<4x128xf32>
    %35 = arith.addf %25, %34 : vector<4x128xf32>
    %c0_20 = arith.constant 0 : index
    %c0_21 = arith.constant 0 : index
    %36 = vector.load %arg7[%c0_20, %c0_21] : memref<4x128xf32, #tpu.memory_space<vmem>>, vector<4x128xf32>
    %37 = arith.addf %36, %35 : vector<4x128xf32>
    %c0_22 = arith.constant 0 : index
    %c0_23 = arith.constant 0 : index
    %38 = vector.load %arg7[%c0_22, %c0_23] : memref<4x128xf32, #tpu.memory_space<vmem>>, vector<4x128xf32>
    tpu.vector_store %arg7[%c0_22, %c0_23], %37 {strides = array<i32>} : memref<4x128xf32, #tpu.memory_space<vmem>>, vector<4x128xf32>,
    %c2_i32_24 = arith.constant 2 : i32
    %39 = arith.cmpi eq, %arg2, %c2_i32_24 : i32
    %40 = arith.extui %39 : i1 to i32
    %c0_i32_25 = arith.constant 0 : i32
    %41 = arith.cmpi ne, %40, %c0_i32_25 : i32
    scf.if %41 {
      %c0_26 = arith.constant 0 : index
      %c0_27 = arith.constant 0 : index
      %42 = vector.load %arg7[%c0_26, %c0_27] : memref<4x128xf32, #tpu.memory_space<vmem>>, vector<4x128xf32>
      %c0_28 = arith.constant 0 : index
      %c0_29 = arith.constant 0 : index
      %43 = vector.load %arg5[%c0_28, %c0_29] : memref<1x128xf32, #tpu.memory_space<vmem>>, vector<1x128xf32>
      %44 = vector.broadcast %43 : vector<1x128xf32> to vector<4x128xf32>
      %45 = arith.addf %42, %44 : vector<4x128xf32>
      %c0_30 = arith.constant 0 : index
      %c0_31 = arith.constant 0 : index
      %c0_32 = arith.constant 0 : index
      %c0_33 = arith.constant 0 : index
      %46 = vector.load %arg6[%c0_30, %c0_31, %c0_32, %c0_33] : memref<1x1x4x128xf32, #tpu.memory_space<vmem>>, vector<1x1x4x128xf32>
      %47 = vector.shape_cast %46 : vector<1x1x4x128xf32> to vector<4x128xf32>
      %48 = vector.shape_cast %45 : vector<4x128xf32> to vector<1x1x4x128xf32>
      tpu.vector_store %arg6[%c0_30, %c0_31, %c0_32, %c0_33], %48 {strides = array<i32>} : memref<1x1x4x128xf32, #tpu.memory_space<vmem>>, vector<1x1x4x128xf32>,
    } else {
    }
    return
  }
  func.func @transform_0(%arg0: i32, %arg1: i32, %arg2: i32) -> (i32, i32, i32, i32) {
    %c0_i32 = arith.constant 0 : i32
    %c0_i32_0 = arith.constant 0 : i32
    %c0_i32_1 = arith.constant 0 : i32
    %c0_i32_2 = arith.constant 0 : i32
    return %arg0, %c0_i32, %c0_i32_0, %c0_i32_1 : i32, i32, i32, i32
  }
  func.func @transform_1(%arg0: i32, %arg1: i32, %arg2: i32) -> (i32, i32, i32) {
    %c0_i32 = arith.constant 0 : i32
    %c0_i32_0 = arith.constant 0 : i32
    %c0_i32_1 = arith.constant 0 : i32
    %c0_i32_2 = arith.constant 0 : i32
    return %c0_i32, %c0_i32_0, %c0_i32_1 : i32, i32, i32
  }
  func.func @transform_2(%arg0: i32, %arg1: i32, %arg2: i32) -> (i32, i32) {
    %c0_i32 = arith.constant 0 : i32
    %c0_i32_0 = arith.constant 0 : i32
    %c0_i32_1 = arith.constant 0 : i32
    return %c0_i32, %c0_i32_0 : i32, i32
  }
  func.func @transform_3(%arg0: i32, %arg1: i32, %arg2: i32) -> (i32, i32, i32, i32) {
    %c0_i32 = arith.constant 0 : i32
    %c0_i32_0 = arith.constant 0 : i32
    %c0_i32_1 = arith.constant 0 : i32
    return %arg0, %arg1, %c0_i32, %c0_i32_0 : i32, i32, i32, i32
  }
}

module attributes {stable_mosaic.version = 11 : i64} {
  func.func @_in_moments_kernel(%arg0: i32, %arg1: i32, %arg2: memref<1x16x128xf32, #tpu.memory_space<vmem>>, %arg3: memref<1x128xf32, #tpu.memory_space<vmem>>, %arg4: memref<1x128xf32, #tpu.memory_space<vmem>>, %arg5: memref<1x1x128xf32, #tpu.memory_space<vmem>>, %arg6: memref<1x1x128xf32, #tpu.memory_space<vmem>>, %arg7: memref<1x128xf32, #tpu.memory_space<vmem>>, %arg8: memref<1x128xf32, #tpu.memory_space<vmem>>) attributes {dimension_semantics = [#tpu.dimension_semantics<parallel>, #tpu.dimension_semantics<arbitrary>], iteration_bounds = array<i64: 2, 1>, scalar_prefetch = 0 : i64, scratch_operands = 2 : i64, tpu.core_type = #tpu.core_type<tc>, window_params = [{transform_indices = @transform_0, window_bounds = array<i64: 1, 16, 128>}, {pipeline_mode = #tpu.pipeline_mode<synchronous>, transform_indices = @transform_1, window_bounds = array<i64: 1, 128>}, {pipeline_mode = #tpu.pipeline_mode<synchronous>, transform_indices = @transform_2, window_bounds = array<i64: 1, 128>}, {transform_indices = @transform_3, window_bounds = array<i64: 1, 1, 128>}, {transform_indices = @transform_4, window_bounds = array<i64: 1, 1, 128>}]} {
    %c0_i32 = arith.constant 0 : i32
    %0 = arith.cmpi eq, %arg1, %c0_i32 : i32
    %1 = arith.extui %0 : i1 to i32
    %c0_i32_0 = arith.constant 0 : i32
    %2 = arith.cmpi ne, %1, %c0_i32_0 : i32
    scf.if %2 {
      %cst_14 = arith.constant 0.000000e+00 : f32
      %19 = vector.broadcast %cst_14 : f32 to vector<1x128xf32>
      %c0_15 = arith.constant 0 : index
      %c0_16 = arith.constant 0 : index
      %20 = vector.load %arg7[%c0_15, %c0_16] : memref<1x128xf32, #tpu.memory_space<vmem>>, vector<1x128xf32>
      tpu.vector_store %arg7[%c0_15, %c0_16], %19 {strides = array<i32>} : memref<1x128xf32, #tpu.memory_space<vmem>>, vector<1x128xf32>,
      %cst_17 = arith.constant 0.000000e+00 : f32
      %21 = vector.broadcast %cst_17 : f32 to vector<1x128xf32>
      %c0_18 = arith.constant 0 : index
      %c0_19 = arith.constant 0 : index
      %22 = vector.load %arg8[%c0_18, %c0_19] : memref<1x128xf32, #tpu.memory_space<vmem>>, vector<1x128xf32>
      tpu.vector_store %arg8[%c0_18, %c0_19], %21 {strides = array<i32>} : memref<1x128xf32, #tpu.memory_space<vmem>>, vector<1x128xf32>,
    } else {
    }
    %c0 = arith.constant 0 : index
    %c0_1 = arith.constant 0 : index
    %c0_2 = arith.constant 0 : index
    %3 = vector.load %arg2[%c0, %c0_1, %c0_2] : memref<1x16x128xf32, #tpu.memory_space<vmem>>, vector<1x16x128xf32>
    %4 = vector.shape_cast %3 : vector<1x16x128xf32> to vector<16x128xf32>
    %c0_3 = arith.constant 0 : index
    %c0_4 = arith.constant 0 : index
    %5 = vector.load %arg7[%c0_3, %c0_4] : memref<1x128xf32, #tpu.memory_space<vmem>>, vector<1x128xf32>
    %cst = arith.constant dense<0.000000e+00> : vector<128xf32>
    %6 = vector.multi_reduction <add>, %4, %cst [0] : vector<16x128xf32> to vector<128xf32>
    %7 = vector.shape_cast %6 : vector<128xf32> to vector<1x128xf32>
    %8 = arith.addf %5, %7 : vector<1x128xf32>
    %c0_5 = arith.constant 0 : index
    %c0_6 = arith.constant 0 : index
    %9 = vector.load %arg7[%c0_5, %c0_6] : memref<1x128xf32, #tpu.memory_space<vmem>>, vector<1x128xf32>
    tpu.vector_store %arg7[%c0_5, %c0_6], %8 {strides = array<i32>} : memref<1x128xf32, #tpu.memory_space<vmem>>, vector<1x128xf32>,
    %c0_7 = arith.constant 0 : index
    %c0_8 = arith.constant 0 : index
    %10 = vector.load %arg8[%c0_7, %c0_8] : memref<1x128xf32, #tpu.memory_space<vmem>>, vector<1x128xf32>
    %11 = arith.mulf %4, %4 : vector<16x128xf32>
    %cst_9 = arith.constant dense<0.000000e+00> : vector<128xf32>
    %12 = vector.multi_reduction <add>, %11, %cst_9 [0] : vector<16x128xf32> to vector<128xf32>
    %13 = vector.shape_cast %12 : vector<128xf32> to vector<1x128xf32>
    %14 = arith.addf %10, %13 : vector<1x128xf32>
    %c0_10 = arith.constant 0 : index
    %c0_11 = arith.constant 0 : index
    %15 = vector.load %arg8[%c0_10, %c0_11] : memref<1x128xf32, #tpu.memory_space<vmem>>, vector<1x128xf32>
    tpu.vector_store %arg8[%c0_10, %c0_11], %14 {strides = array<i32>} : memref<1x128xf32, #tpu.memory_space<vmem>>, vector<1x128xf32>,
    %c0_i32_12 = arith.constant 0 : i32
    %16 = arith.cmpi eq, %arg1, %c0_i32_12 : i32
    %17 = arith.extui %16 : i1 to i32
    %c0_i32_13 = arith.constant 0 : i32
    %18 = arith.cmpi ne, %17, %c0_i32_13 : i32
    scf.if %18 {
      %c0_14 = arith.constant 0 : index
      %c0_15 = arith.constant 0 : index
      %19 = vector.load %arg7[%c0_14, %c0_15] : memref<1x128xf32, #tpu.memory_space<vmem>>, vector<1x128xf32>
      %cst_16 = arith.constant 6.250000e-02 : f32
      %20 = vector.broadcast %cst_16 : f32 to vector<1x128xf32>
      %21 = arith.mulf %19, %20 : vector<1x128xf32>
      %c0_17 = arith.constant 0 : index
      %c0_18 = arith.constant 0 : index
      %22 = vector.load %arg8[%c0_17, %c0_18] : memref<1x128xf32, #tpu.memory_space<vmem>>, vector<1x128xf32>
      %cst_19 = arith.constant 6.250000e-02 : f32
      %23 = vector.broadcast %cst_19 : f32 to vector<1x128xf32>
      %24 = arith.mulf %22, %23 : vector<1x128xf32>
      %25 = arith.mulf %21, %21 : vector<1x128xf32>
      %26 = arith.subf %24, %25 : vector<1x128xf32>
      %cst_20 = arith.constant 9.99999974E-6 : f32
      %27 = vector.broadcast %cst_20 : f32 to vector<1x128xf32>
      %28 = arith.addf %26, %27 : vector<1x128xf32>
      %29 = math.rsqrt %28 : vector<1x128xf32>
      %c0_21 = arith.constant 0 : index
      %c0_22 = arith.constant 0 : index
      %30 = vector.load %arg3[%c0_21, %c0_22] : memref<1x128xf32, #tpu.memory_space<vmem>>, vector<1x128xf32>
      %31 = arith.mulf %30, %29 : vector<1x128xf32>
      %c0_23 = arith.constant 0 : index
      %c0_24 = arith.constant 0 : index
      %c0_25 = arith.constant 0 : index
      %32 = vector.load %arg5[%c0_23, %c0_24, %c0_25] : memref<1x1x128xf32, #tpu.memory_space<vmem>>, vector<1x1x128xf32>
      %33 = vector.shape_cast %32 : vector<1x1x128xf32> to vector<1x128xf32>
      %34 = vector.shape_cast %31 : vector<1x128xf32> to vector<1x1x128xf32>
      tpu.vector_store %arg5[%c0_23, %c0_24, %c0_25], %34 {strides = array<i32>} : memref<1x1x128xf32, #tpu.memory_space<vmem>>, vector<1x1x128xf32>,
      %c0_26 = arith.constant 0 : index
      %c0_27 = arith.constant 0 : index
      %35 = vector.load %arg4[%c0_26, %c0_27] : memref<1x128xf32, #tpu.memory_space<vmem>>, vector<1x128xf32>
      %36 = arith.mulf %21, %31 : vector<1x128xf32>
      %37 = arith.subf %35, %36 : vector<1x128xf32>
      %c0_28 = arith.constant 0 : index
      %c0_29 = arith.constant 0 : index
      %c0_30 = arith.constant 0 : index
      %38 = vector.load %arg6[%c0_28, %c0_29, %c0_30] : memref<1x1x128xf32, #tpu.memory_space<vmem>>, vector<1x1x128xf32>
      %39 = vector.shape_cast %38 : vector<1x1x128xf32> to vector<1x128xf32>
      %40 = vector.shape_cast %37 : vector<1x128xf32> to vector<1x1x128xf32>
      tpu.vector_store %arg6[%c0_28, %c0_29, %c0_30], %40 {strides = array<i32>} : memref<1x1x128xf32, #tpu.memory_space<vmem>>, vector<1x1x128xf32>,
    } else {
    }
    return
  }
  func.func @transform_0(%arg0: i32, %arg1: i32) -> (i32, i32, i32) {
    %c0_i32 = arith.constant 0 : i32
    %c0_i32_0 = arith.constant 0 : i32
    return %arg0, %arg1, %c0_i32 : i32, i32, i32
  }
  func.func @transform_1(%arg0: i32, %arg1: i32) -> (i32, i32) {
    %c0_i32 = arith.constant 0 : i32
    %c0_i32_0 = arith.constant 0 : i32
    %c0_i32_1 = arith.constant 0 : i32
    return %c0_i32, %c0_i32_0 : i32, i32
  }
  func.func @transform_2(%arg0: i32, %arg1: i32) -> (i32, i32) {
    %c0_i32 = arith.constant 0 : i32
    %c0_i32_0 = arith.constant 0 : i32
    %c0_i32_1 = arith.constant 0 : i32
    return %c0_i32, %c0_i32_0 : i32, i32
  }
  func.func @transform_3(%arg0: i32, %arg1: i32) -> (i32, i32, i32) {
    %c0_i32 = arith.constant 0 : i32
    %c0_i32_0 = arith.constant 0 : i32
    %c0_i32_1 = arith.constant 0 : i32
    return %arg0, %c0_i32, %c0_i32_0 : i32, i32, i32
  }
  func.func @transform_4(%arg0: i32, %arg1: i32) -> (i32, i32, i32) {
    %c0_i32 = arith.constant 0 : i32
    %c0_i32_0 = arith.constant 0 : i32
    %c0_i32_1 = arith.constant 0 : i32
    return %arg0, %c0_i32, %c0_i32_0 : i32, i32, i32
  }
}

module attributes {stable_mosaic.version = 11 : i64} {
  func.func @_conv_tap_kernel(%arg0: i32, %arg1: i32, %arg2: i32, %arg3: memref<1x6x6x128xf32, #tpu.memory_space<vmem>>, %arg4: memref<9x128x128xf32, #tpu.memory_space<vmem>>, %arg5: memref<1x128xf32, #tpu.memory_space<vmem>>, %arg6: memref<1x1x4x128xf32, #tpu.memory_space<vmem>>, %arg7: memref<1x1x4x128xf32, #tpu.memory_space<vmem>>, %arg8: memref<4x128xf32, #tpu.memory_space<vmem>>) attributes {dimension_semantics = [#tpu.dimension_semantics<parallel>, #tpu.dimension_semantics<parallel>, #tpu.dimension_semantics<arbitrary>], iteration_bounds = array<i64: 2, 4, 3>, scalar_prefetch = 0 : i64, scratch_operands = 1 : i64, tpu.core_type = #tpu.core_type<tc>, window_params = [{transform_indices = @transform_0, window_bounds = array<i64: 1, 6, 6, 128>}, {pipeline_mode = #tpu.pipeline_mode<synchronous>, transform_indices = @transform_1, window_bounds = array<i64: 9, 128, 128>}, {pipeline_mode = #tpu.pipeline_mode<synchronous>, transform_indices = @transform_2, window_bounds = array<i64: 1, 128>}, {transform_indices = @transform_3, window_bounds = array<i64: 1, 1, 4, 128>}, {transform_indices = @transform_4, window_bounds = array<i64: 1, 1, 4, 128>}]} {
    %c0_i32 = arith.constant 0 : i32
    %0 = arith.cmpi eq, %arg2, %c0_i32 : i32
    %1 = arith.extui %0 : i1 to i32
    %c0_i32_0 = arith.constant 0 : i32
    %2 = arith.cmpi ne, %1, %c0_i32_0 : i32
    scf.if %2 {
      %cst_26 = arith.constant 0.000000e+00 : f32
      %42 = vector.broadcast %cst_26 : f32 to vector<4x128xf32>
      %c0_27 = arith.constant 0 : index
      %c0_28 = arith.constant 0 : index
      %43 = vector.load %arg8[%c0_27, %c0_28] : memref<4x128xf32, #tpu.memory_space<vmem>>, vector<4x128xf32>
      tpu.vector_store %arg8[%c0_27, %c0_28], %42 {strides = array<i32>} : memref<4x128xf32, #tpu.memory_space<vmem>>, vector<4x128xf32>,
    } else {
    }
    %c1_i32 = arith.constant 1 : i32
    %3 = arith.muli %arg1, %c1_i32 : i32
    %4 = arith.addi %3, %arg2 : i32
    %cst = arith.constant 0.000000e+00 : f32
    %5 = vector.broadcast %cst : f32 to vector<4x128xf32>
    %c0 = arith.constant 0 : index
    %6 = arith.index_cast %4 : i32 to index
    %c0_1 = arith.constant 0 : index
    %c0_2 = arith.constant 0 : index
    %7 = vector.load %arg3[%c0, %6, %c0_1, %c0_2] : memref<1x6x6x128xf32, #tpu.memory_space<vmem>>, vector<1x1x4x128xf32>
    %8 = vector.shape_cast %7 : vector<1x1x4x128xf32> to vector<4x128xf32>
    %c3_i32 = arith.constant 3 : i32
    %9 = arith.muli %arg2, %c3_i32 : i32
    %c0_i32_3 = arith.constant 0 : i32
    %10 = arith.addi %9, %c0_i32_3 : i32
    %11 = arith.index_cast %10 : i32 to index
    %c0_4 = arith.constant 0 : index
    %c0_5 = arith.constant 0 : index
    %12 = vector.load %arg4[%11, %c0_4, %c0_5] : memref<9x128x128xf32, #tpu.memory_space<vmem>>, vector<1x128x128xf32>
    %13 = vector.shape_cast %12 : vector<1x128x128xf32> to vector<128x128xf32>
    %cst_6 = arith.constant dense<0.000000e+00> : vector<4x128xf32>
    %14 = tpu.matmul %8, %13, %cst_6 {dimension_numbers = #tpu.dot_dimension_numbers<[1], [0], [0], [1], [0, 0, 1, 1], [], []>} : vector<4x128xf32>, vector<128x128xf32>, vector<4x128xf32> -> vector<4x128xf32>
    %15 = arith.addf %5, %14 : vector<4x128xf32>
    %c0_7 = arith.constant 0 : index
    %16 = arith.index_cast %4 : i32 to index
    %c1 = arith.constant 1 : index
    %c0_8 = arith.constant 0 : index
    %17 = vector.load %arg3[%c0_7, %16, %c1, %c0_8] : memref<1x6x6x128xf32, #tpu.memory_space<vmem>>, vector<1x1x4x128xf32>
    %18 = vector.shape_cast %17 : vector<1x1x4x128xf32> to vector<4x128xf32>
    %c3_i32_9 = arith.constant 3 : i32
    %19 = arith.muli %arg2, %c3_i32_9 : i32
    %c1_i32_10 = arith.constant 1 : i32
    %20 = arith.addi %19, %c1_i32_10 : i32
    %21 = arith.index_cast %20 : i32 to index
    %c0_11 = arith.constant 0 : index
    %c0_12 = arith.constant 0 : index
    %22 = vector.load %arg4[%21, %c0_11, %c0_12] : memref<9x128x128xf32, #tpu.memory_space<vmem>>, vector<1x128x128xf32>
    %23 = vector.shape_cast %22 : vector<1x128x128xf32> to vector<128x128xf32>
    %cst_13 = arith.constant dense<0.000000e+00> : vector<4x128xf32>
    %24 = tpu.matmul %18, %23, %cst_13 {dimension_numbers = #tpu.dot_dimension_numbers<[1], [0], [0], [1], [0, 0, 1, 1], [], []>} : vector<4x128xf32>, vector<128x128xf32>, vector<4x128xf32> -> vector<4x128xf32>
    %25 = arith.addf %15, %24 : vector<4x128xf32>
    %c0_14 = arith.constant 0 : index
    %26 = arith.index_cast %4 : i32 to index
    %c2 = arith.constant 2 : index
    %c0_15 = arith.constant 0 : index
    %27 = vector.load %arg3[%c0_14, %26, %c2, %c0_15] : memref<1x6x6x128xf32, #tpu.memory_space<vmem>>, vector<1x1x4x128xf32>
    %28 = vector.shape_cast %27 : vector<1x1x4x128xf32> to vector<4x128xf32>
    %c3_i32_16 = arith.constant 3 : i32
    %29 = arith.muli %arg2, %c3_i32_16 : i32
    %c2_i32 = arith.constant 2 : i32
    %30 = arith.addi %29, %c2_i32 : i32
    %31 = arith.index_cast %30 : i32 to index
    %c0_17 = arith.constant 0 : index
    %c0_18 = arith.constant 0 : index
    %32 = vector.load %arg4[%31, %c0_17, %c0_18] : memref<9x128x128xf32, #tpu.memory_space<vmem>>, vector<1x128x128xf32>
    %33 = vector.shape_cast %32 : vector<1x128x128xf32> to vector<128x128xf32>
    %cst_19 = arith.constant dense<0.000000e+00> : vector<4x128xf32>
    %34 = tpu.matmul %28, %33, %cst_19 {dimension_numbers = #tpu.dot_dimension_numbers<[1], [0], [0], [1], [0, 0, 1, 1], [], []>} : vector<4x128xf32>, vector<128x128xf32>, vector<4x128xf32> -> vector<4x128xf32>
    %35 = arith.addf %25, %34 : vector<4x128xf32>
    %c0_20 = arith.constant 0 : index
    %c0_21 = arith.constant 0 : index
    %36 = vector.load %arg8[%c0_20, %c0_21] : memref<4x128xf32, #tpu.memory_space<vmem>>, vector<4x128xf32>
    %37 = arith.addf %36, %35 : vector<4x128xf32>
    %c0_22 = arith.constant 0 : index
    %c0_23 = arith.constant 0 : index
    %38 = vector.load %arg8[%c0_22, %c0_23] : memref<4x128xf32, #tpu.memory_space<vmem>>, vector<4x128xf32>
    tpu.vector_store %arg8[%c0_22, %c0_23], %37 {strides = array<i32>} : memref<4x128xf32, #tpu.memory_space<vmem>>, vector<4x128xf32>,
    %c2_i32_24 = arith.constant 2 : i32
    %39 = arith.cmpi eq, %arg2, %c2_i32_24 : i32
    %40 = arith.extui %39 : i1 to i32
    %c0_i32_25 = arith.constant 0 : i32
    %41 = arith.cmpi ne, %40, %c0_i32_25 : i32
    scf.if %41 {
      %c0_26 = arith.constant 0 : index
      %c0_27 = arith.constant 0 : index
      %42 = vector.load %arg8[%c0_26, %c0_27] : memref<4x128xf32, #tpu.memory_space<vmem>>, vector<4x128xf32>
      %c0_28 = arith.constant 0 : index
      %c0_29 = arith.constant 0 : index
      %43 = vector.load %arg5[%c0_28, %c0_29] : memref<1x128xf32, #tpu.memory_space<vmem>>, vector<1x128xf32>
      %44 = vector.broadcast %43 : vector<1x128xf32> to vector<4x128xf32>
      %45 = arith.addf %42, %44 : vector<4x128xf32>
      %c0_30 = arith.constant 0 : index
      %c0_31 = arith.constant 0 : index
      %c0_32 = arith.constant 0 : index
      %c0_33 = arith.constant 0 : index
      %46 = vector.load %arg6[%c0_30, %c0_31, %c0_32, %c0_33] : memref<1x1x4x128xf32, #tpu.memory_space<vmem>>, vector<1x1x4x128xf32>
      %47 = vector.shape_cast %46 : vector<1x1x4x128xf32> to vector<4x128xf32>
      %48 = arith.addf %45, %47 : vector<4x128xf32>
      %cst_34 = arith.constant 0.707106769 : f32
      %49 = vector.broadcast %cst_34 : f32 to vector<4x128xf32>
      %50 = arith.mulf %48, %49 : vector<4x128xf32>
      %c0_35 = arith.constant 0 : index
      %c0_36 = arith.constant 0 : index
      %c0_37 = arith.constant 0 : index
      %c0_38 = arith.constant 0 : index
      %51 = vector.load %arg7[%c0_35, %c0_36, %c0_37, %c0_38] : memref<1x1x4x128xf32, #tpu.memory_space<vmem>>, vector<1x1x4x128xf32>
      %52 = vector.shape_cast %51 : vector<1x1x4x128xf32> to vector<4x128xf32>
      %53 = vector.shape_cast %50 : vector<4x128xf32> to vector<1x1x4x128xf32>
      tpu.vector_store %arg7[%c0_35, %c0_36, %c0_37, %c0_38], %53 {strides = array<i32>} : memref<1x1x4x128xf32, #tpu.memory_space<vmem>>, vector<1x1x4x128xf32>,
    } else {
    }
    return
  }
  func.func @transform_0(%arg0: i32, %arg1: i32, %arg2: i32) -> (i32, i32, i32, i32) {
    %c0_i32 = arith.constant 0 : i32
    %c0_i32_0 = arith.constant 0 : i32
    %c0_i32_1 = arith.constant 0 : i32
    %c0_i32_2 = arith.constant 0 : i32
    return %arg0, %c0_i32, %c0_i32_0, %c0_i32_1 : i32, i32, i32, i32
  }
  func.func @transform_1(%arg0: i32, %arg1: i32, %arg2: i32) -> (i32, i32, i32) {
    %c0_i32 = arith.constant 0 : i32
    %c0_i32_0 = arith.constant 0 : i32
    %c0_i32_1 = arith.constant 0 : i32
    %c0_i32_2 = arith.constant 0 : i32
    return %c0_i32, %c0_i32_0, %c0_i32_1 : i32, i32, i32
  }
  func.func @transform_2(%arg0: i32, %arg1: i32, %arg2: i32) -> (i32, i32) {
    %c0_i32 = arith.constant 0 : i32
    %c0_i32_0 = arith.constant 0 : i32
    %c0_i32_1 = arith.constant 0 : i32
    return %c0_i32, %c0_i32_0 : i32, i32
  }
  func.func @transform_3(%arg0: i32, %arg1: i32, %arg2: i32) -> (i32, i32, i32, i32) {
    %c0_i32 = arith.constant 0 : i32
    %c0_i32_0 = arith.constant 0 : i32
    %c0_i32_1 = arith.constant 0 : i32
    return %arg0, %arg1, %c0_i32, %c0_i32_0 : i32, i32, i32, i32
  }
  func.func @transform_4(%arg0: i32, %arg1: i32, %arg2: i32) -> (i32, i32, i32, i32) {
    %c0_i32 = arith.constant 0 : i32
    %c0_i32_0 = arith.constant 0 : i32
    %c0_i32_1 = arith.constant 0 : i32
    return %arg0, %arg1, %c0_i32, %c0_i32_0 : i32, i32, i32, i32
  }
}

module attributes {stable_mosaic.version = 11 : i64} {
  func.func @_conv_tap_kernel(%arg0: i32, %arg1: i32, %arg2: i32, %arg3: memref<1x6x6x128xf32, #tpu.memory_space<vmem>>, %arg4: memref<9x128x128xf32, #tpu.memory_space<vmem>>, %arg5: memref<1x128xf32, #tpu.memory_space<vmem>>, %arg6: memref<1x1x4x128xf32, #tpu.memory_space<vmem>>, %arg7: memref<1x1x4x128xf32, #tpu.memory_space<vmem>>, %arg8: memref<4x128xf32, #tpu.memory_space<vmem>>) attributes {dimension_semantics = [#tpu.dimension_semantics<parallel>, #tpu.dimension_semantics<parallel>, #tpu.dimension_semantics<arbitrary>], iteration_bounds = array<i64: 2, 4, 3>, scalar_prefetch = 0 : i64, scratch_operands = 1 : i64, tpu.core_type = #tpu.core_type<tc>, window_params = [{transform_indices = @transform_0, window_bounds = array<i64: 1, 6, 6, 128>}, {pipeline_mode = #tpu.pipeline_mode<synchronous>, transform_indices = @transform_1, window_bounds = array<i64: 9, 128, 128>}, {pipeline_mode = #tpu.pipeline_mode<synchronous>, transform_indices = @transform_2, window_bounds = array<i64: 1, 128>}, {transform_indices = @transform_3, window_bounds = array<i64: 1, 1, 4, 128>}, {transform_indices = @transform_4, window_bounds = array<i64: 1, 1, 4, 128>}]} {
    %c0_i32 = arith.constant 0 : i32
    %0 = arith.cmpi eq, %arg2, %c0_i32 : i32
    %1 = arith.extui %0 : i1 to i32
    %c0_i32_0 = arith.constant 0 : i32
    %2 = arith.cmpi ne, %1, %c0_i32_0 : i32
    scf.if %2 {
      %cst_26 = arith.constant 0.000000e+00 : f32
      %42 = vector.broadcast %cst_26 : f32 to vector<4x128xf32>
      %c0_27 = arith.constant 0 : index
      %c0_28 = arith.constant 0 : index
      %43 = vector.load %arg8[%c0_27, %c0_28] : memref<4x128xf32, #tpu.memory_space<vmem>>, vector<4x128xf32>
      tpu.vector_store %arg8[%c0_27, %c0_28], %42 {strides = array<i32>} : memref<4x128xf32, #tpu.memory_space<vmem>>, vector<4x128xf32>,
    } else {
    }
    %c1_i32 = arith.constant 1 : i32
    %3 = arith.muli %arg1, %c1_i32 : i32
    %4 = arith.addi %3, %arg2 : i32
    %cst = arith.constant 0.000000e+00 : f32
    %5 = vector.broadcast %cst : f32 to vector<4x128xf32>
    %c0 = arith.constant 0 : index
    %6 = arith.index_cast %4 : i32 to index
    %c0_1 = arith.constant 0 : index
    %c0_2 = arith.constant 0 : index
    %7 = vector.load %arg3[%c0, %6, %c0_1, %c0_2] : memref<1x6x6x128xf32, #tpu.memory_space<vmem>>, vector<1x1x4x128xf32>
    %8 = vector.shape_cast %7 : vector<1x1x4x128xf32> to vector<4x128xf32>
    %c3_i32 = arith.constant 3 : i32
    %9 = arith.muli %arg2, %c3_i32 : i32
    %c0_i32_3 = arith.constant 0 : i32
    %10 = arith.addi %9, %c0_i32_3 : i32
    %11 = arith.index_cast %10 : i32 to index
    %c0_4 = arith.constant 0 : index
    %c0_5 = arith.constant 0 : index
    %12 = vector.load %arg4[%11, %c0_4, %c0_5] : memref<9x128x128xf32, #tpu.memory_space<vmem>>, vector<1x128x128xf32>
    %13 = vector.shape_cast %12 : vector<1x128x128xf32> to vector<128x128xf32>
    %cst_6 = arith.constant dense<0.000000e+00> : vector<4x128xf32>
    %14 = tpu.matmul %8, %13, %cst_6 {dimension_numbers = #tpu.dot_dimension_numbers<[1], [0], [0], [1], [0, 0, 1, 1], [], []>} : vector<4x128xf32>, vector<128x128xf32>, vector<4x128xf32> -> vector<4x128xf32>
    %15 = arith.addf %5, %14 : vector<4x128xf32>
    %c0_7 = arith.constant 0 : index
    %16 = arith.index_cast %4 : i32 to index
    %c1 = arith.constant 1 : index
    %c0_8 = arith.constant 0 : index
    %17 = vector.load %arg3[%c0_7, %16, %c1, %c0_8] : memref<1x6x6x128xf32, #tpu.memory_space<vmem>>, vector<1x1x4x128xf32>
    %18 = vector.shape_cast %17 : vector<1x1x4x128xf32> to vector<4x128xf32>
    %c3_i32_9 = arith.constant 3 : i32
    %19 = arith.muli %arg2, %c3_i32_9 : i32
    %c1_i32_10 = arith.constant 1 : i32
    %20 = arith.addi %19, %c1_i32_10 : i32
    %21 = arith.index_cast %20 : i32 to index
    %c0_11 = arith.constant 0 : index
    %c0_12 = arith.constant 0 : index
    %22 = vector.load %arg4[%21, %c0_11, %c0_12] : memref<9x128x128xf32, #tpu.memory_space<vmem>>, vector<1x128x128xf32>
    %23 = vector.shape_cast %22 : vector<1x128x128xf32> to vector<128x128xf32>
    %cst_13 = arith.constant dense<0.000000e+00> : vector<4x128xf32>
    %24 = tpu.matmul %18, %23, %cst_13 {dimension_numbers = #tpu.dot_dimension_numbers<[1], [0], [0], [1], [0, 0, 1, 1], [], []>} : vector<4x128xf32>, vector<128x128xf32>, vector<4x128xf32> -> vector<4x128xf32>
    %25 = arith.addf %15, %24 : vector<4x128xf32>
    %c0_14 = arith.constant 0 : index
    %26 = arith.index_cast %4 : i32 to index
    %c2 = arith.constant 2 : index
    %c0_15 = arith.constant 0 : index
    %27 = vector.load %arg3[%c0_14, %26, %c2, %c0_15] : memref<1x6x6x128xf32, #tpu.memory_space<vmem>>, vector<1x1x4x128xf32>
    %28 = vector.shape_cast %27 : vector<1x1x4x128xf32> to vector<4x128xf32>
    %c3_i32_16 = arith.constant 3 : i32
    %29 = arith.muli %arg2, %c3_i32_16 : i32
    %c2_i32 = arith.constant 2 : i32
    %30 = arith.addi %29, %c2_i32 : i32
    %31 = arith.index_cast %30 : i32 to index
    %c0_17 = arith.constant 0 : index
    %c0_18 = arith.constant 0 : index
    %32 = vector.load %arg4[%31, %c0_17, %c0_18] : memref<9x128x128xf32, #tpu.memory_space<vmem>>, vector<1x128x128xf32>
    %33 = vector.shape_cast %32 : vector<1x128x128xf32> to vector<128x128xf32>
    %cst_19 = arith.constant dense<0.000000e+00> : vector<4x128xf32>
    %34 = tpu.matmul %28, %33, %cst_19 {dimension_numbers = #tpu.dot_dimension_numbers<[1], [0], [0], [1], [0, 0, 1, 1], [], []>} : vector<4x128xf32>, vector<128x128xf32>, vector<4x128xf32> -> vector<4x128xf32>
    %35 = arith.addf %25, %34 : vector<4x128xf32>
    %c0_20 = arith.constant 0 : index
    %c0_21 = arith.constant 0 : index
    %36 = vector.load %arg8[%c0_20, %c0_21] : memref<4x128xf32, #tpu.memory_space<vmem>>, vector<4x128xf32>
    %37 = arith.addf %36, %35 : vector<4x128xf32>
    %c0_22 = arith.constant 0 : index
    %c0_23 = arith.constant 0 : index
    %38 = vector.load %arg8[%c0_22, %c0_23] : memref<4x128xf32, #tpu.memory_space<vmem>>, vector<4x128xf32>
    tpu.vector_store %arg8[%c0_22, %c0_23], %37 {strides = array<i32>} : memref<4x128xf32, #tpu.memory_space<vmem>>, vector<4x128xf32>,
    %c2_i32_24 = arith.constant 2 : i32
    %39 = arith.cmpi eq, %arg2, %c2_i32_24 : i32
    %40 = arith.extui %39 : i1 to i32
    %c0_i32_25 = arith.constant 0 : i32
    %41 = arith.cmpi ne, %40, %c0_i32_25 : i32
    scf.if %41 {
      %c0_26 = arith.constant 0 : index
      %c0_27 = arith.constant 0 : index
      %42 = vector.load %arg8[%c0_26, %c0_27] : memref<4x128xf32, #tpu.memory_space<vmem>>, vector<4x128xf32>
      %c0_28 = arith.constant 0 : index
      %c0_29 = arith.constant 0 : index
      %43 = vector.load %arg5[%c0_28, %c0_29] : memref<1x128xf32, #tpu.memory_space<vmem>>, vector<1x128xf32>
      %44 = vector.broadcast %43 : vector<1x128xf32> to vector<4x128xf32>
      %45 = arith.addf %42, %44 : vector<4x128xf32>
      %c0_30 = arith.constant 0 : index
      %c0_31 = arith.constant 0 : index
      %c0_32 = arith.constant 0 : index
      %c0_33 = arith.constant 0 : index
      %46 = vector.load %arg6[%c0_30, %c0_31, %c0_32, %c0_33] : memref<1x1x4x128xf32, #tpu.memory_space<vmem>>, vector<1x1x4x128xf32>
      %47 = vector.shape_cast %46 : vector<1x1x4x128xf32> to vector<4x128xf32>
      %48 = arith.addf %45, %47 : vector<4x128xf32>
      %cst_34 = arith.constant 0.707106769 : f32
      %49 = vector.broadcast %cst_34 : f32 to vector<4x128xf32>
      %50 = arith.mulf %48, %49 : vector<4x128xf32>
      %c0_35 = arith.constant 0 : index
      %c0_36 = arith.constant 0 : index
      %c0_37 = arith.constant 0 : index
      %c0_38 = arith.constant 0 : index
      %51 = vector.load %arg7[%c0_35, %c0_36, %c0_37, %c0_38] : memref<1x1x4x128xf32, #tpu.memory_space<vmem>>, vector<1x1x4x128xf32>
      %52 = vector.shape_cast %51 : vector<1x1x4x128xf32> to vector<4x128xf32>
      %53 = vector.shape_cast %50 : vector<4x128xf32> to vector<1x1x4x128xf32>
      tpu.vector_store %arg7[%c0_35, %c0_36, %c0_37, %c0_38], %53 {strides = array<i32>} : memref<1x1x4x128xf32, #tpu.memory_space<vmem>>, vector<1x1x4x128xf32>,
    } else {
    }
    return
  }
  func.func @transform_0(%arg0: i32, %arg1: i32, %arg2: i32) -> (i32, i32, i32, i32) {
    %c0_i32 = arith.constant 0 : i32
    %c0_i32_0 = arith.constant 0 : i32
    %c0_i32_1 = arith.constant 0 : i32
    %c0_i32_2 = arith.constant 0 : i32
    return %arg0, %c0_i32, %c0_i32_0, %c0_i32_1 : i32, i32, i32, i32
  }
  func.func @transform_1(%arg0: i32, %arg1: i32, %arg2: i32) -> (i32, i32, i32) {
    %c0_i32 = arith.constant 0 : i32
    %c0_i32_0 = arith.constant 0 : i32
    %c0_i32_1 = arith.constant 0 : i32
    %c0_i32_2 = arith.constant 0 : i32
    return %c0_i32, %c0_i32_0, %c0_i32_1 : i32, i32, i32
  }
  func.func @transform_2(%arg0: i32, %arg1: i32, %arg2: i32) -> (i32, i32) {
    %c0_i32 = arith.constant 0 : i32
    %c0_i32_0 = arith.constant 0 : i32
    %c0_i32_1 = arith.constant 0 : i32
    return %c0_i32, %c0_i32_0 : i32, i32
  }
  func.func @transform_3(%arg0: i32, %arg1: i32, %arg2: i32) -> (i32, i32, i32, i32) {
    %c0_i32 = arith.constant 0 : i32
    %c0_i32_0 = arith.constant 0 : i32
    %c0_i32_1 = arith.constant 0 : i32
    return %arg0, %arg1, %c0_i32, %c0_i32_0 : i32, i32, i32, i32
  }
  func.func @transform_4(%arg0: i32, %arg1: i32, %arg2: i32) -> (i32, i32, i32, i32) {
    %c0_i32 = arith.constant 0 : i32
    %c0_i32_0 = arith.constant 0 : i32
    %c0_i32_1 = arith.constant 0 : i32
    return %arg0, %arg1, %c0_i32, %c0_i32_0 : i32, i32, i32, i32
  }
}

</mosaic_0001>

<llo_original>
// kernel: content_encoder_forward.33
$region0: #{content_encoder_forward.33}
  #allocation0 [shape = 'u32[]', space=smem, size = 0x4, offset = 0x4, fixed_abs, tag = 'smem constant byte address 0x4 - core index']
  #allocation1 [shape = 'u32[144,128]{1,0:T(1,128)}', space=vmem, size = 0x12000, scoped, tag = 'internal scratch']
  #allocation2 [shape = 'f32[16,32]{1,0:T(8,128)}', space=vmem, size = 0x2000, scoped, tag = 'scratch operand']
  %s0 = inlined_call_operand.vmem [shape: f32[2,22,16,7], index: 0, kind: input, shape index: {}]
  %s1 = inlined_call_operand.vmem [shape: f32[7,7,32], index: 1, kind: input, shape index: {}]
  %s2 = inlined_call_operand.vmem [shape: f32[1,32], index: 2, kind: input, shape index: {}]
  %s3 = inlined_call_operand.vmem [shape: f32[2,16,16,32], index: 3, kind: output, shape index: {}]
  %s4 = sld [smem:[#allocation0]]
  $region53: #{content_encoder_forward.33} parent=0
    _
  %s6 = ssub.s32 1, %s4
  %s7 = scalar_select 0, %s6, %s4
  loop: start=0, step=1, limit=226
  $region2: #{content_encoder_forward.33} parent=0 // loop_pre_header
    _
  $region3: #{content_encoder_forward.33} parent=0 // loop_header
    %s9 = sphi 0, %s13
    %p10 = scmp.ge.s32.totalorder %s9, 226
    %s16 = sphi 0, %s35
    %s17 = sphi 0, %s31
    %s18 = sphi 0, %s27
    %s19 = sphi 0, %s16
    %s20 = sphi 0, %s17
    %s21 = sphi 0, %s18
    %s22 = sphi 0, %s19
    %s23 = sphi 0, %s20
    %s24 = sphi 0, %s21
    %s38 = sphi 0, %s40
    %s41 = sphi 0, %s38
    %s42 = sphi 0, %s41
    %s58 = sphi 0, %s42
    %s62 = sphi 0, %s62
    %s64 = sphi 0, %s62
    %s65 = sphi 0, %s64
    %s79 = sphi 0, %s65
    %s83 = sphi 0, %s83
    %s85 = sphi 0, %s83
    %s86 = sphi 0, %s85
    %s100 = sphi 0, %s86
    %s108 = sphi 0, %s110
    %s111 = sphi 0, %s108
    %s112 = sphi 0, %s111
    %s128 = sphi 0, %s112
  $region4: #{content_encoder_forward.33} parent=0 // loop_header_branch
    %12 = sbr.rel (%p10) target = $region8
  $region5: #{content_encoder_forward.33} parent=0 // loop_body
    %s14 = ssub.s32 %s9, 1
    %s15 = ssub.s32 %s9, 2
    %s25 = sadd.s32 1, %s18
    %p26 = scmp.ge.s32.totalorder %s25, 7
    %s27 = scalar_select %p26, 0, %s25
    %s28 = sadd.s32 1, %s17
    %s29 = scalar_select %p26, %s28, %s17
    %p30 = scmp.ge.s32.totalorder %s29, 16
    %s31 = scalar_select %p30, 0, %s29
    %s32 = sadd.s32 1, %s16
    %s33 = scalar_select %p30, %s32, %s16
    %p34 = scmp.ge.s32.totalorder %s33, 2
    %s35 = scalar_select %p34, 0, %s33
    %s36 = ssub.s32 %s16, %s35
    %p37 = scmp.eq.s32.totalorder %s36, 0
    %s39 = sadd.s32 %s38, 1
    %s40 = scalar_select %p37, %s38, %s39
    %p43 = pneg %p37
    %p44 = scmp.eq.s32.totalorder %s9, 223
    %p45 = por %p43, %p44
    %p46 = scmp.ne.s32.totalorder %s38, %s41
    %p47 = scmp.eq.s32.totalorder %s9, 0
    %p48 = por %p46, %p47
    %p49 = scmp.ne.s32.totalorder %s38, %s41
    %p50 = scmp.eq.s32.totalorder %s14, 223
    %p51 = por %p49, %p50
    %p52 = scmp.ne.s32.totalorder %s41, %s42
    %p53 = scmp.eq.s32.totalorder %s14, 0
    %p54 = por %p52, %p53
    %p55 = scmp.ne.s32.totalorder %s41, %s42
    %p56 = scmp.eq.s32.totalorder %s15, 223
    %p57 = por %p55, %p56
    %p59 = scmp.ne.s32.totalorder %s42, %s58
    %p60 = scmp.eq.s32.totalorder %s15, 0
    %p61 = por %p59, %p60
    %s63 = sadd.s32 %s62, 1
    %p66 = scmp.eq.s32.totalorder %s9, 223
    %p67 = scmp.ne.s32.totalorder %s62, %s64
    %p68 = scmp.eq.s32.totalorder %s9, 0
    %p69 = por %p67, %p68
    %p70 = scmp.ne.s32.totalorder %s62, %s64
    %p71 = scmp.eq.s32.totalorder %s14, 223
    %p72 = por %p70, %p71
    %p73 = scmp.ne.s32.totalorder %s64, %s65
    %p74 = scmp.eq.s32.totalorder %s14, 0
    %p75 = por %p73, %p74
    %p76 = scmp.ne.s32.totalorder %s64, %s65
    %p77 = scmp.eq.s32.totalorder %s15, 223
    %p78 = por %p76, %p77
    %p80 = scmp.ne.s32.totalorder %s65, %s79
    %p81 = scmp.eq.s32.totalorder %s15, 0
    %p82 = por %p80, %p81
    %s84 = sadd.s32 %s83, 1
    %p87 = scmp.eq.s32.totalorder %s9, 223
    %p88 = scmp.ne.s32.totalorder %s83, %s85
    %p89 = scmp.eq.s32.totalorder %s9, 0
    %p90 = por %p88, %p89
    %p91 = scmp.ne.s32.totalorder %s83, %s85
    %p92 = scmp.eq.s32.totalorder %s14, 223
    %p93 = por %p91, %p92
    %p94 = scmp.ne.s32.totalorder %s85, %s86
    %p95 = scmp.eq.s32.totalorder %s14, 0
    %p96 = por %p94, %p95
    %p97 = scmp.ne.s32.totalorder %s85, %s86
    %p98 = scmp.eq.s32.totalorder %s15, 223
    %p99 = por %p97, %p98
    %p101 = scmp.ne.s32.totalorder %s86, %s100
    %p102 = scmp.eq.s32.totalorder %s15, 0
    %p103 = por %p101, %p102
    %s104 = ssub.s32 %s16, %s35
    %s105 = ssub.s32 %s17, %s31
    %s106 = sor.u32 %s104, %s105
    %p107 = scmp.eq.s32.totalorder %s106, 0
    %s109 = sadd.s32 %s108, 1
    %s110 = scalar_select %p107, %s108, %s109
    %p113 = pneg %p107
    %p114 = scmp.eq.s32.totalorder %s9, 223
    %p115 = por %p113, %p114
    %p116 = scmp.ne.s32.totalorder %s108, %s111
    %p117 = scmp.eq.s32.totalorder %s9, 0
    %p118 = por %p116, %p117
    %p119 = scmp.ne.s32.totalorder %s108, %s111
    %p120 = scmp.eq.s32.totalorder %s14, 223
    %p121 = por %p119, %p120
    %p122 = scmp.ne.s32.totalorder %s111, %s112
    %p123 = scmp.eq.s32.totalorder %s14, 0
    %p124 = por %p122, %p123
    %p125 = scmp.ne.s32.totalorder %s111, %s112
    %p126 = scmp.eq.s32.totalorder %s15, 223
    %p127 = por %p125, %p126
    %p129 = scmp.ne.s32.totalorder %s112, %s128
    %p130 = scmp.eq.s32.totalorder %s15, 0
    %p131 = por %p129, %p130
    %p132 = scmp.le.s32.totalorder 1, %s9
    %p133 = scmp.lt.s32.totalorder %s9, 225
    %p134 = pnand %p132, %p133
    %p135 = pneg %p134
    // Predicated region
    $region9: #{content_encoder_forward.33} parent=5 // pred_check
      _
    $region10: #{content_encoder_forward.33} parent=5 // pred_check_branch
      %137 = sbr.rel (%p134) target = $region12
    $region11: #{content_encoder_forward.33} parent=5 // pred_region
      %s138 = ssub.s32 %s9, 1
      // Predicated region
      $region13: #{content_encoder_forward.33} parent=11 // pred_check
        %p139 = pneg %p75
      $region14: #{content_encoder_forward.33} parent=11 // pred_check_branch
        %141 = sbr.rel (%p139) target = $region16
      $region15: #{content_encoder_forward.33} parent=11 // pred_region
        _
      $region16: #{content_encoder_forward.33} parent=11 // pred_fallthru
        _
      // Predicated region
      $region17: #{content_encoder_forward.33} parent=11 // pred_check
        %p142 = pneg %p96
      $region18: #{content_encoder_forward.33} parent=11 // pred_check_branch
        %144 = sbr.rel (%p142) target = $region20
      $region19: #{content_encoder_forward.33} parent=11 // pred_region
        _
      $region20: #{content_encoder_forward.33} parent=11 // pred_fallthru
        _
    $region12: #{content_encoder_forward.33} parent=5 // pred_fallthru
      _
    %p145 = scmp.lt.s32.totalorder %s9, 224
    // Predicated region
    $region21: #{content_encoder_forward.33} parent=5 // pred_check
      %p146 = pneg %p145
    $region22: #{content_encoder_forward.33} parent=5 // pred_check_branch
      %148 = sbr.rel (%p146) target = $region24
    $region23: #{content_encoder_forward.33} parent=5 // pred_region
      // Predicated region
      $region25: #{content_encoder_forward.33} parent=23 // pred_check
        %p149 = pneg %p48
      $region26: #{content_encoder_forward.33} parent=23 // pred_check_branch
        %151 = sbr.rel (%p149) target = $region28
      $region27: #{content_encoder_forward.33} parent=23 // pred_region
        %p152 = scmp.lt.s32.totalorder %s16, 1
        %s153 = scalar_select %p152, %s16, 1
        %s154 = smul.addr %s153, 44
        %s155 = smul.addr %s154, 8
        %s156 = scalar_lea.vmem %s0, %s155
      $region28: #{content_encoder_forward.33} parent=23 // pred_fallthru
        _
    $region24: #{content_encoder_forward.33} parent=5 // pred_fallthru
      _
    %p157 = scmp.le.s32.totalorder 1, %s9
    %p158 = scmp.lt.s32.totalorder %s9, 225
    %p159 = pnand %p157, %p158
    %p160 = pneg %p159
    // Predicated region
    $region29: #{content_encoder_forward.33} parent=5 // pred_check
      _
    $region30: #{content_encoder_forward.33} parent=5 // pred_check_branch
      %162 = sbr.rel (%p159) target = $region32
    $region31: #{content_encoder_forward.33} parent=5 // pred_region
      %s163 = ssub.s32 %s9, 1
      %p164 = scmp.lt.s32.totalorder %s19, 1
      %s165 = scalar_select %p164, %s19, 1
      %s166 = smul.addr %s165, 44
      %s167 = smul.addr %s166, 8
      %s168 = scalar_lea.vmem %s0, %s167
      %p169 = pneg %p54
      %p170 = pneg %p51
      %p171 = pneg %p75
      %p172 = pneg %p72
      %p173 = pneg %p96
      %p174 = pneg %p93
      %p175 = pneg %p124
      %p176 = pneg %p121
      %p177 = scmp.lt.s32.totalorder %s19, 1
      %s178 = scalar_select %p177, %s19, 1
      %p179 = scmp.lt.s32.totalorder %s20, 15
      %s180 = scalar_select %p179, %s20, 15
      %s181 = smul.addr %s180, 2
      %s182 = smul.addr %s178, 32
      %s183 = sadd.s32 %s181, %s182
      %s184 = smul.addr %s183, 8
      %s185 = scalar_lea.vmem %s3, %s184
      %p186 = scmp.lt.s32.totalorder %s19, 1
      %s187 = scalar_select %p186, %s19, 1
      %s188 = smul.addr %s187, 44
      %s189 = smul.addr %s188, 8
      %s190 = scalar_lea.vmem %s0, %s189
      %p191 = scmp.lt.s32.totalorder %s19, 1
      %s192 = scalar_select %p191, %s19, 1
      %p193 = scmp.lt.s32.totalorder %s20, 15
      %s194 = scalar_select %p193, %s20, 15
      %s195 = smul.addr %s194, 2
      %s196 = smul.addr %s192, 32
      %s197 = sadd.s32 %s195, %s196
      %s198 = smul.addr %s197, 8
      %s199 = scalar_lea.vmem %s3, %s198
      %p200 = scmp.eq.s32.totalorder %s21, 0
      // Predicated region
      $region33: #{content_encoder_forward.33} parent=31 // pred_check
        %p201 = pneg %p200
      $region34: #{content_encoder_forward.33} parent=31 // pred_check_branch
        %203 = sbr.rel (%p201) target = $region36
      $region35: #{content_encoder_forward.33} parent=31 // pred_region
        %vm204 = vcmask 261120
        %205 = vst.msk [vmem:[#allocation2] sm:$0xff] %vm204, 0.0
        %206 = vst.msk [vmem:[#allocation2 + $0x8] sm:$0xff] %vm204, 0.0
      $region36: #{content_encoder_forward.33} parent=31 // pred_fallthru
        _
      %s207 = sadd.s32 %s20, %s21
      %s208 = smul.u32 %s207, 16
      %s209 = scalar_lea.vmem %s190, %s208
      %v210 = vld [vmem:[%s209] sm:$0xff]
      %v211 = vld [vmem:[%s209 + $0x8] sm:$0xff]
      %s212 = smul.u32 %s21, 8
      %s213 = scalar_lea.vmem %s1, %s212
      %v214 = vld [vmem:[%s213] sm:$0x7f]
      %vm215 = vcmask 56320
      %v217 = vsel %vm215, %v210, 0
      %v220 = vsel %vm215, %v211, 0
      %vm222 = vcmask 1046528
      %v224 = vsel %vm222, %v214, 0
      %226 = vmatprep.subr.mxu0 0.0
      %227 = vmatpush1.msra.mxu0 0.0
      %228 = vmatprep.subr.mxu0 0.0
      %229 = vmatpush1.msra.mxu0 0.0
      %230 = vmatprep.subr.mxu0 0.0
      %231 = vmatpush1.msra.mxu0 0.0
      %232 = vmatprep.subr.mxu0 0.0
      %233 = vmatpush1.msra.mxu0 0.0
      %234 = vmatprep.subr.mxu0 0.0
      %235 = vmatpush1.msra.mxu0 0.0
      %236 = vmatprep.subr.mxu0 0.0
      %237 = vmatpush1.msra.mxu0 0.0
      %238 = vmatprep.subr.mxu0 0.0
      %239 = vmatpush1.msra.mxu0 0.0
      %240 = vmatprep.subr.mxu0 0.0
      %241 = vmatpush1.msra.mxu0 0.0
      %242 = vmatprep.subr.mxu0 0.0
      %243 = vmatpush1.msra.mxu0 0.0
      %244 = vmatprep.subr.mxu0 0.0
      %245 = vmatpush1.msra.mxu0 0.0
      %246 = vmatprep.subr.mxu0 0.0
      %247 = vmatpush1.msra.mxu0 0.0
      %248 = vmatprep.subr.mxu0 0.0
      %249 = vmatpush1.msra.mxu0 0.0
      %250 = vmatprep.subr.mxu0 0.0
      %251 = vmatpush1.msra.mxu0 0.0
      %252 = vmatprep.subr.mxu0 0.0
      %253 = vmatpush1.msra.mxu0 0.0
      %254 = vmatprep.subr.mxu0 0.0
      %255 = vmatpush1.msra.mxu0 0.0
      %256 = vmatprep.subr.mxu0 0.0
      %257 = vmatpush1.msra.mxu0 %v224
      %258 = vmatprep.subr.mxu0 0.0
      %259 = vmatpush2.msra.mxu0 0.0
      %260 = vmatprep.subr.mxu0 0.0
      %261 = vmatpush2.msra.mxu0 0.0
      %262 = vmatprep.subr.mxu0 0.0
      %263 = vmatpush2.msra.mxu0 0.0
      %264 = vmatprep.subr.mxu0 0.0
      %265 = vmatpush2.msra.mxu0 0.0
      %266 = vmatprep.subr.mxu0 0.0
      %267 = vmatpush2.msra.mxu0 0.0
      %268 = vmatprep.subr.mxu0 0.0
      %269 = vmatpush2.msra.mxu0 0.0
      %270 = vmatprep.subr.mxu0 0.0
      %271 = vmatpush2.msra.mxu0 0.0
      %272 = vmatprep.subr.mxu0 0.0
      %273 = vmatpush2.msra.mxu0 0.0
      %274 = vmatprep.subr.mxu0 0.0
      %275 = vmatpush2.msra.mxu0 0.0
      %276 = vmatprep.subr.mxu0 0.0
      %277 = vmatpush2.msra.mxu0 0.0
      %278 = vmatprep.subr.mxu0 0.0
      %279 = vmatpush2.msra.mxu0 0.0
      %280 = vmatprep.subr.mxu0 0.0
      %281 = vmatpush2.msra.mxu0 0.0
      %282 = vmatprep.subr.mxu0 0.0
      %283 = vmatpush2.msra.mxu0 0.0
      %284 = vmatprep.subr.mxu0 0.0
      %285 = vmatpush2.msra.mxu0 0.0
      %286 = vmatprep.subr.mxu0 0.0
      %287 = vmatpush2.msra.mxu0 0.0
      %288 = vmatprep.subr.mxu0 0.0
      %289 = vmatpush2.msra.mxu0 0.0
      %290 = vmatprep.mubr.f32.mxu0 0.0
      %291 = vmatmul.mubr.f32.gmra.mxu0 %v217
      %v292 = vpop.f32.mrf.mxu0
      %v293 = vadd.f32 0.0, %v292
      %v294 = vpop.f32.mrf.mxu0
      %295 = vmatprep.mubr.f32.mxu0 0.0
      %296 = vmatmul.mubr.f32.gmra.mxu0 %v220
      %v297 = vpop.f32.mrf.mxu0
      %v298 = vadd.f32 0.0, %v297
      %v299 = vpop.f32.mrf.mxu0
      %300 = vdwg.mxu0
      %v301 = vld [vmem:[#allocation2] sm:$0xff]
      %v302 = vld [vmem:[#allocation2 + $0x8] sm:$0xff]
      %v303 = vadd.f32 %v301, %v293
      %v304 = vadd.f32 %v302, %v298
      %vm305 = vcmask 261120
      %306 = vst.msk [vmem:[#allocation2] sm:$0xff] %vm305, %v303
      %307 = vst.msk [vmem:[#allocation2 + $0x8] sm:$0xff] %vm305, %v304
      %p308 = scmp.eq.s32.totalorder %s21, 6
      // Predicated region
      $region37: #{content_encoder_forward.33} parent=31 // pred_check
        %p309 = pneg %p308
      $region38: #{content_encoder_forward.33} parent=31 // pred_check_branch
        %311 = sbr.rel (%p309) target = $region40
      $region39: #{content_encoder_forward.33} parent=31 // pred_region
        %v312 = vld [vmem:[#allocation2] sm:$0xff]
        %v313 = vld [vmem:[#allocation2 + $0x8] sm:$0xff]
        %v314 = vld [vmem:[%s2] sm:$0x1]
        %v316 = vlaneseq
        %v317 = vshrl.u32 %v316, 7
        %v318 = vsub.s32 0, %v317
        %v319 = vrot.slane %v314, %v318
        %v321 = vadd.f32 %v312, %v319
        %v322 = vadd.f32 %v313, %v319
        %323 = vst.msk [vmem:[%s199] sm:$0xff] %vm305, %v321
        %324 = vst.msk [vmem:[%s199 + $0x8] sm:$0xff] %vm305, %v322
      $region40: #{content_encoder_forward.33} parent=31 // pred_fallthru
        _
      %p325 = scmp.lt.s32.totalorder %s19, 1
      %s326 = scalar_select %p325, %s19, 1
      %p327 = scmp.lt.s32.totalorder %s20, 15
      %s328 = scalar_select %p327, %s20, 15
      %s329 = smul.addr %s328, 2
      %s330 = smul.addr %s326, 32
      %s331 = sadd.s32 %s329, %s330
      %s332 = smul.addr %s331, 8
      %s333 = scalar_lea.vmem %s3, %s332
      // Predicated region
      $region41: #{content_encoder_forward.33} parent=31 // pred_check
        %p334 = pneg %p121
      $region42: #{content_encoder_forward.33} parent=31 // pred_check_branch
        %336 = sbr.rel (%p334) target = $region44
      $region43: #{content_encoder_forward.33} parent=31 // pred_region
        _
      $region44: #{content_encoder_forward.33} parent=31 // pred_fallthru
        _
    $region32: #{content_encoder_forward.33} parent=5 // pred_fallthru
      _
    %p337 = scmp.le.s32.totalorder 2, %s9
    // Predicated region
    $region45: #{content_encoder_forward.33} parent=5 // pred_check
      %p338 = pneg %p337
    $region46: #{content_encoder_forward.33} parent=5 // pred_check_branch
      %340 = sbr.rel (%p338) target = $region48
    $region47: #{content_encoder_forward.33} parent=5 // pred_region
      %s341 = ssub.s32 %s9, 2
      // Predicated region
      $region49: #{content_encoder_forward.33} parent=47 // pred_check
        %p342 = pneg %p127
      $region50: #{content_encoder_forward.33} parent=47 // pred_check_branch
        %344 = sbr.rel (%p342) target = $region52
      $region51: #{content_encoder_forward.33} parent=47 // pred_region
        %p345 = scmp.lt.s32.totalorder %s22, 1
        %s346 = scalar_select %p345, %s22, 1
        %p347 = scmp.lt.s32.totalorder %s23, 15
        %s348 = scalar_select %p347, %s23, 15
        %s349 = smul.addr %s348, 2
        %s350 = smul.addr %s346, 32
        %s351 = sadd.s32 %s349, %s350
        %s352 = smul.addr %s351, 8
        %s353 = scalar_lea.vmem %s3, %s352
      $region52: #{content_encoder_forward.33} parent=47 // pred_fallthru
        _
    $region48: #{content_encoder_forward.33} parent=5 // pred_fallthru
      _
  $region6: #{content_encoder_forward.33} parent=0 // loop_footer
    %s13 = sadd.s32 1, %s9
  $region7: #{content_encoder_forward.33} parent=0 // loop_footer_branch
    %8 = sbr.rel target = $region3
  $region8: #{content_encoder_forward.33} parent=0 // loop_exit
    _

// kernel: content_encoder_forward.34
$region0: #{content_encoder_forward.34}
  #allocation0 [shape = 'u32[]', space=smem, size = 0x4, offset = 0x4, fixed_abs, tag = 'smem constant byte address 0x4 - core index']
  #allocation1 [shape = 'u32[144,128]{1,0:T(1,128)}', space=vmem, size = 0x12000, scoped, tag = 'internal scratch']
  #allocation2 [shape = 'f32[1,32]{1,0:T(1,128)}', space=vmem, size = 0x200, scoped, tag = 'scratch operand']
  #allocation3 [shape = 'f32[1,32]{1,0:T(1,128)}', space=vmem, size = 0x200, scoped, tag = 'scratch operand']
  %s0 = inlined_call_operand.vmem [shape: f32[2,256,32], index: 0, kind: input, shape index: {}]
  %s1 = inlined_call_operand.vmem [shape: f32[1,32], index: 1, kind: input, shape index: {}]
  %s2 = inlined_call_operand.vmem [shape: f32[1,32], index: 2, kind: input, shape index: {}]
  %s3 = inlined_call_operand.vmem [shape: f32[2,1,32], index: 3, kind: output, shape index: {0}]
  %s4 = inlined_call_operand.vmem [shape: f32[2,1,32], index: 4, kind: output, shape index: {1}]
  %5 = xla_tuple %s3, %s4
  %s6 = sld [smem:[#allocation0]]
  $region61: #{content_encoder_forward.34} parent=0
    _
  %s8 = ssub.s32 1, %s6
  %s9 = scalar_select 0, %s8, %s6
  loop: start=0, step=1, limit=4
  $region2: #{content_encoder_forward.34} parent=0 // loop_pre_header
    _
  $region3: #{content_encoder_forward.34} parent=0 // loop_header
    %s11 = sphi 0, %s15
    %p12 = scmp.ge.s32.totalorder %s11, 4
    %s18 = sphi 0, %s30
    %s19 = sphi 0, %s26
    %s20 = sphi 0, %s18
    %s21 = sphi 0, %s19
    %s22 = sphi 0, %s20
    %s23 = sphi 0, %s21
    %s35 = sphi 0, %s37
    %s38 = sphi 0, %s35
    %s39 = sphi 0, %s38
    %s55 = sphi 0, %s39
    %s59 = sphi 0, %s59
    %s61 = sphi 0, %s59
    %s62 = sphi 0, %s61
    %s76 = sphi 0, %s62
    %s80 = sphi 0, %s80
    %s82 = sphi 0, %s80
    %s83 = sphi 0, %s82
    %s97 = sphi 0, %s83
    %s103 = sphi 0, %s105
    %s106 = sphi 0, %s103
    %s107 = sphi 0, %s106
    %s123 = sphi 0, %s107
    %s129 = sphi 0, %s131
    %s132 = sphi 0, %s129
    %s133 = sphi 0, %s132
    %s149 = sphi 0, %s133
  $region4: #{content_encoder_forward.34} parent=0 // loop_header_branch
    %14 = sbr.rel (%p12) target = $region8
  $region5: #{content_encoder_forward.34} parent=0 // loop_body
    %s16 = ssub.s32 %s11, 1
    %s17 = ssub.s32 %s11, 2
    %s24 = sadd.s32 1, %s19
    %p25 = scmp.ge.s32.totalorder %s24, 1
    %s26 = scalar_select %p25, 0, %s24
    %s27 = sadd.s32 1, %s18
    %s28 = scalar_select %p25, %s27, %s18
    %p29 = scmp.ge.s32.totalorder %s28, 2
    %s30 = scalar_select %p29, 0, %s28
    %s31 = ssub.s32 %s18, %s30
    %s32 = ssub.s32 %s19, %s26
    %s33 = sor.u32 %s31, %s32
    %p34 = scmp.eq.s32.totalorder %s33, 0
    %s36 = sadd.s32 %s35, 1
    %s37 = scalar_select %p34, %s35, %s36
    %p40 = pneg %p34
    %p41 = scmp.eq.s32.totalorder %s11, 1
    %p42 = por %p40, %p41
    %p43 = scmp.ne.s32.totalorder %s35, %s38
    %p44 = scmp.eq.s32.totalorder %s11, 0
    %p45 = por %p43, %p44
    %p46 = scmp.ne.s32.totalorder %s35, %s38
    %p47 = scmp.eq.s32.totalorder %s16, 1
    %p48 = por %p46, %p47
    %p49 = scmp.ne.s32.totalorder %s38, %s39
    %p50 = scmp.eq.s32.totalorder %s16, 0
    %p51 = por %p49, %p50
    %p52 = scmp.ne.s32.totalorder %s38, %s39
    %p53 = scmp.eq.s32.totalorder %s17, 1
    %p54 = por %p52, %p53
    %p56 = scmp.ne.s32.totalorder %s39, %s55
    %p57 = scmp.eq.s32.totalorder %s17, 0
    %p58 = por %p56, %p57
    %s60 = sadd.s32 %s59, 1
    %p63 = scmp.eq.s32.totalorder %s11, 1
    %p64 = scmp.ne.s32.totalorder %s59, %s61
    %p65 = scmp.eq.s32.totalorder %s11, 0
    %p66 = por %p64, %p65
    %p67 = scmp.ne.s32.totalorder %s59, %s61
    %p68 = scmp.eq.s32.totalorder %s16, 1
    %p69 = por %p67, %p68
    %p70 = scmp.ne.s32.totalorder %s61, %s62
    %p71 = scmp.eq.s32.totalorder %s16, 0
    %p72 = por %p70, %p71
    %p73 = scmp.ne.s32.totalorder %s61, %s62
    %p74 = scmp.eq.s32.totalorder %s17, 1
    %p75 = por %p73, %p74
    %p77 = scmp.ne.s32.totalorder %s62, %s76
    %p78 = scmp.eq.s32.totalorder %s17, 0
    %p79 = por %p77, %p78
    %s81 = sadd.s32 %s80, 1
    %p84 = scmp.eq.s32.totalorder %s11, 1
    %p85 = scmp.ne.s32.totalorder %s80, %s82
    %p86 = scmp.eq.s32.totalorder %s11, 0
    %p87 = por %p85, %p86
    %p88 = scmp.ne.s32.totalorder %s80, %s82
    %p89 = scmp.eq.s32.totalorder %s16, 1
    %p90 = por %p88, %p89
    %p91 = scmp.ne.s32.totalorder %s82, %s83
    %p92 = scmp.eq.s32.totalorder %s16, 0
    %p93 = por %p91, %p92
    %p94 = scmp.ne.s32.totalorder %s82, %s83
    %p95 = scmp.eq.s32.totalorder %s17, 1
    %p96 = por %p94, %p95
    %p98 = scmp.ne.s32.totalorder %s83, %s97
    %p99 = scmp.eq.s32.totalorder %s17, 0
    %p100 = por %p98, %p99
    %s101 = ssub.s32 %s18, %s30
    %p102 = scmp.eq.s32.totalorder %s101, 0
    %s104 = sadd.s32 %s103, 1
    %s105 = scalar_select %p102, %s103, %s104
    %p108 = pneg %p102
    %p109 = scmp.eq.s32.totalorder %s11, 1
    %p110 = por %p108, %p109
    %p111 = scmp.ne.s32.totalorder %s103, %s106
    %p112 = scmp.eq.s32.totalorder %s11, 0
    %p113 = por %p111, %p112
    %p114 = scmp.ne.s32.totalorder %s103, %s106
    %p115 = scmp.eq.s32.totalorder %s16, 1
    %p116 = por %p114, %p115
    %p117 = scmp.ne.s32.totalorder %s106, %s107
    %p118 = scmp.eq.s32.totalorder %s16, 0
    %p119 = por %p117, %p118
    %p120 = scmp.ne.s32.totalorder %s106, %s107
    %p121 = scmp.eq.s32.totalorder %s17, 1
    %p122 = por %p120, %p121
    %p124 = scmp.ne.s32.totalorder %s107, %s123
    %p125 = scmp.eq.s32.totalorder %s17, 0
    %p126 = por %p124, %p125
    %s127 = ssub.s32 %s18, %s30
    %p128 = scmp.eq.s32.totalorder %s127, 0
    %s130 = sadd.s32 %s129, 1
    %s131 = scalar_select %p128, %s129, %s130
    %p134 = pneg %p128
    %p135 = scmp.eq.s32.totalorder %s11, 1
    %p136 = por %p134, %p135
    %p137 = scmp.ne.s32.totalorder %s129, %s132
    %p138 = scmp.eq.s32.totalorder %s11, 0
    %p139 = por %p137, %p138
    %p140 = scmp.ne.s32.totalorder %s129, %s132
    %p141 = scmp.eq.s32.totalorder %s16, 1
    %p142 = por %p140, %p141
    %p143 = scmp.ne.s32.totalorder %s132, %s133
    %p144 = scmp.eq.s32.totalorder %s16, 0
    %p145 = por %p143, %p144
    %p146 = scmp.ne.s32.totalorder %s132, %s133
    %p147 = scmp.eq.s32.totalorder %s17, 1
    %p148 = por %p146, %p147
    %p150 = scmp.ne.s32.totalorder %s133, %s149
    %p151 = scmp.eq.s32.totalorder %s17, 0
    %p152 = por %p150, %p151
    %p153 = scmp.le.s32.totalorder 1, %s11
    %p154 = scmp.lt.s32.totalorder %s11, 3
    %p155 = pnand %p153, %p154
    %p156 = pneg %p155
    // Predicated region
    $region9: #{content_encoder_forward.34} parent=5 // pred_check
      _
    $region10: #{content_encoder_forward.34} parent=5 // pred_check_branch
      %158 = sbr.rel (%p155) target = $region12
    $region11: #{content_encoder_forward.34} parent=5 // pred_region
      %s159 = ssub.s32 %s11, 1
      // Predicated region
      $region13: #{content_encoder_forward.34} parent=11 // pred_check
        %p160 = pneg %p72
      $region14: #{content_encoder_forward.34} parent=11 // pred_check_branch
        %162 = sbr.rel (%p160) target = $region16
      $region15: #{content_encoder_forward.34} parent=11 // pred_region
        _
      $region16: #{content_encoder_forward.34} parent=11 // pred_fallthru
        _
      // Predicated region
      $region17: #{content_encoder_forward.34} parent=11 // pred_check
        %p163 = pneg %p93
      $region18: #{content_encoder_forward.34} parent=11 // pred_check_branch
        %165 = sbr.rel (%p163) target = $region20
      $region19: #{content_encoder_forward.34} parent=11 // pred_region
        _
      $region20: #{content_encoder_forward.34} parent=11 // pred_fallthru
        _
    $region12: #{content_encoder_forward.34} parent=5 // pred_fallthru
      _
    %p166 = scmp.lt.s32.totalorder %s11, 2
    // Predicated region
    $region21: #{content_encoder_forward.34} parent=5 // pred_check
      %p167 = pneg %p166
    $region22: #{content_encoder_forward.34} parent=5 // pred_check_branch
      %169 = sbr.rel (%p167) target = $region24
    $region23: #{content_encoder_forward.34} parent=5 // pred_region
      // Predicated region
      $region25: #{content_encoder_forward.34} parent=23 // pred_check
        %p170 = pneg %p45
      $region26: #{content_encoder_forward.34} parent=23 // pred_check_branch
        %172 = sbr.rel (%p170) target = $region28
      $region27: #{content_encoder_forward.34} parent=23 // pred_region
        %s173 = smul.u32 32, %s19
        %p174 = scmp.lt.s32.totalorder %s18, 1
        %s175 = scalar_select %p174, %s18, 1
        %p176 = scmp.lt.s32.totalorder %s173, 31
        %s177 = scalar_select %p176, %s173, 31
        %s178 = smul.addr %s175, 32
        %s179 = sadd.s32 %s177, %s178
        %s180 = smul.addr %s179, 8
        %s181 = scalar_lea.vmem %s0, %s180
        %s182 = smul.u32 32, %s19
      $region28: #{content_encoder_forward.34} parent=23 // pred_fallthru
        _
    $region24: #{content_encoder_forward.34} parent=5 // pred_fallthru
      _
    %p183 = scmp.le.s32.totalorder 1, %s11
    %p184 = scmp.lt.s32.totalorder %s11, 3
    %p185 = pnand %p183, %p184
    %p186 = pneg %p185
    // Predicated region
    $region29: #{content_encoder_forward.34} parent=5 // pred_check
      _
    $region30: #{content_encoder_forward.34} parent=5 // pred_check_branch
      %188 = sbr.rel (%p185) target = $region32
    $region31: #{content_encoder_forward.34} parent=5 // pred_region
      %s189 = ssub.s32 %s11, 1
      %s190 = smul.u32 32, %s21
      %p191 = scmp.lt.s32.totalorder %s20, 1
      %s192 = scalar_select %p191, %s20, 1
      %p193 = scmp.lt.s32.totalorder %s190, 31
      %s194 = scalar_select %p193, %s190, 31
      %s195 = smul.addr %s192, 32
      %s196 = sadd.s32 %s194, %s195
      %s197 = smul.addr %s196, 8
      %s198 = scalar_lea.vmem %s0, %s197
      %p199 = pneg %p51
      %p200 = pneg %p48
      %p201 = pneg %p72
      %p202 = pneg %p69
      %p203 = pneg %p93
      %p204 = pneg %p90
      %p205 = pneg %p119
      %p206 = pneg %p116
      %p207 = scmp.lt.s32.totalorder %s20, 1
      %s208 = scalar_select %p207, %s20, 1
      %s209 = scalar_lea.vmem %s3, %s208
      %p210 = pneg %p145
      %p211 = pneg %p142
      %p212 = scmp.lt.s32.totalorder %s20, 1
      %s213 = scalar_select %p212, %s20, 1
      %s214 = scalar_lea.vmem %s4, %s213
      %s215 = smul.u32 32, %s21
      %p216 = scmp.lt.s32.totalorder %s20, 1
      %s217 = scalar_select %p216, %s20, 1
      %p218 = scmp.lt.s32.totalorder %s215, 31
      %s219 = scalar_select %p218, %s215, 31
      %s220 = smul.addr %s217, 32
      %s221 = sadd.s32 %s219, %s220
      %s222 = smul.addr %s221, 8
      %s223 = scalar_lea.vmem %s0, %s222
      %s224 = smul.u32 32, %s21
      %p225 = scmp.lt.s32.totalorder %s20, 1
      %s226 = scalar_select %p225, %s20, 1
      %s227 = scalar_lea.vmem %s3, %s226
      %p228 = scmp.lt.s32.totalorder %s20, 1
      %s229 = scalar_select %p228, %s20, 1
      %s230 = scalar_lea.vmem %s4, %s229
      %p231 = scmp.eq.s32.totalorder %s21, 0
      // Predicated region
      $region33: #{content_encoder_forward.34} parent=31 // pred_check
        %p232 = pneg %p231
      $region34: #{content_encoder_forward.34} parent=31 // pred_check_branch
        %234 = sbr.rel (%p232) target = $region36
      $region35: #{content_encoder_forward.34} parent=31 // pred_region
        %vm235 = vcmask 253952
        %236 = vst.msk [vmem:[#allocation2] sm:$0x1] %vm235, 0.0
        %237 = vst.msk [vmem:[#allocation3] sm:$0x1] %vm235, 0.0
      $region36: #{content_encoder_forward.34} parent=31 // pred_fallthru
        _
      %v238 = vld [vmem:[%s223] sm:$0xff]
      %v239 = vld [vmem:[%s223 + $0x8] sm:$0xff]
      %v240 = vld [vmem:[%s223 + $0x10] sm:$0xff]
      %v241 = vld [vmem:[%s223 + $0x18] sm:$0xff]
      %v242 = vld [vmem:[%s223 + $0x20] sm:$0xff]
      %v243 = vld [vmem:[%s223 + $0x28] sm:$0xff]
      %v244 = vld [vmem:[%s223 + $0x30] sm:$0xff]
      %v245 = vld [vmem:[%s223 + $0x38] sm:$0xff]
      %v246 = vld [vmem:[%s223 + $0x40] sm:$0xff]
      %v247 = vld [vmem:[%s223 + $0x48] sm:$0xff]
      %v248 = vld [vmem:[%s223 + $0x50] sm:$0xff]
      %v249 = vld [vmem:[%s223 + $0x58] sm:$0xff]
      %v250 = vld [vmem:[%s223 + $0x60] sm:$0xff]
      %v251 = vld [vmem:[%s223 + $0x68] sm:$0xff]
      %v252 = vld [vmem:[%s223 + $0x70] sm:$0xff]
      %v253 = vld [vmem:[%s223 + $0x78] sm:$0xff]
      %v254 = vld [vmem:[%s223 + $0x80] sm:$0xff]
      %v255 = vld [vmem:[%s223 + $0x88] sm:$0xff]
      %v256 = vld [vmem:[%s223 + $0x90] sm:$0xff]
      %v257 = vld [vmem:[%s223 + $0x98] sm:$0xff]
      %v258 = vld [vmem:[%s223 + $0xa0] sm:$0xff]
      %v259 = vld [vmem:[%s223 + $0xa8] sm:$0xff]
      %v260 = vld [vmem:[%s223 + $0xb0] sm:$0xff]
      %v261 = vld [vmem:[%s223 + $0xb8] sm:$0xff]
      %v262 = vld [vmem:[%s223 + $0xc0] sm:$0xff]
      %v263 = vld [vmem:[%s223 + $0xc8] sm:$0xff]
      %v264 = vld [vmem:[%s223 + $0xd0] sm:$0xff]
      %v265 = vld [vmem:[%s223 + $0xd8] sm:$0xff]
      %v266 = vld [vmem:[%s223 + $0xe0] sm:$0xff]
      %v267 = vld [vmem:[%s223 + $0xe8] sm:$0xff]
      %v268 = vld [vmem:[%s223 + $0xf0] sm:$0xff]
      %v269 = vld [vmem:[%s223 + $0xf8] sm:$0xff]
      %v270 = vld [vmem:[#allocation2] sm:$0x1]
      %vm271 = vcmask 261120
      %v272 = vsel %vm271, %v238, 0.0
      %v273 = vsel %vm271, %v239, 0.0
      %v274 = vadd.f32 %v272, %v273
      %v275 = vsel %vm271, %v240, 0.0
      %v276 = vadd.f32 %v274, %v275
      %v277 = vsel %vm271, %v241, 0.0
      %v278 = vadd.f32 %v276, %v277
      %v279 = vsel %vm271, %v242, 0.0
      %v280 = vadd.f32 %v278, %v279
      %v281 = vsel %vm271, %v243, 0.0
      %v282 = vadd.f32 %v280, %v281
      %v283 = vsel %vm271, %v244, 0.0
      %v284 = vadd.f32 %v282, %v283
      %v285 = vsel %vm271, %v245, 0.0
      %v286 = vadd.f32 %v284, %v285
      %v287 = vsel %vm271, %v246, 0.0
      %v288 = vadd.f32 %v286, %v287
      %v289 = vsel %vm271, %v247, 0.0
      %v290 = vadd.f32 %v288, %v289
      %v291 = vsel %vm271, %v248, 0.0
      %v292 = vadd.f32 %v290, %v291
      %v293 = vsel %vm271, %v249, 0.0
      %v294 = vadd.f32 %v292, %v293
      %v295 = vsel %vm271, %v250, 0.0
      %v296 = vadd.f32 %v294, %v295
      %v297 = vsel %vm271, %v251, 0.0
      %v298 = vadd.f32 %v296, %v297
      %v299 = vsel %vm271, %v252, 0.0
      %v300 = vadd.f32 %v298, %v299
      %v301 = vsel %vm271, %v253, 0.0
      %v302 = vadd.f32 %v300, %v301
      %v303 = vsel %vm271, %v254, 0.0
      %v304 = vadd.f32 %v302, %v303
      %v305 = vsel %vm271, %v255, 0.0
      %v306 = vadd.f32 %v304, %v305
      %v307 = vsel %vm271, %v256, 0.0
      %v308 = vadd.f32 %v306, %v307
      %v309 = vsel %vm271, %v257, 0.0
      %v310 = vadd.f32 %v308, %v309
      %v311 = vsel %vm271, %v258, 0.0
      %v312 = vadd.f32 %v310, %v311
      %v313 = vsel %vm271, %v259, 0.0
      %v314 = vadd.f32 %v312, %v313
      %v315 = vsel %vm271, %v260, 0.0
      %v316 = vadd.f32 %v314, %v315
      %v317 = vsel %vm271, %v261, 0.0
      %v318 = vadd.f32 %v316, %v317
      %v319 = vsel %vm271, %v262, 0.0
      %v320 = vadd.f32 %v318, %v319
      %v321 = vsel %vm271, %v263, 0.0
      %v322 = vadd.f32 %v320, %v321
      %v323 = vsel %vm271, %v264, 0.0
      %v324 = vadd.f32 %v322, %v323
      %v325 = vsel %vm271, %v265, 0.0
      %v326 = vadd.f32 %v324, %v325
      %v327 = vsel %vm271, %v266, 0.0
      %v328 = vadd.f32 %v326, %v327
      %v329 = vsel %vm271, %v267, 0.0
      %v330 = vadd.f32 %v328, %v329
      %v331 = vsel %vm271, %v268, 0.0
      %v332 = vadd.f32 %v330, %v331
      %v333 = vsel %vm271, %v269, 0.0
      %v334 = vadd.f32 %v332, %v333
      %v335 = vrot.slane %v334, 4
      %v336 = vadd.f32 %v334, %v335
      %v337 = vrot.slane %v336, 2
      %v338 = vadd.f32 %v336, %v337
      %v339 = vrot.slane %v338, 1
      %v340 = vadd.f32 %v338, %v339
      %v341 = vadd.f32 %v270, %v340
      %vm342 = vcmask 253952
      %343 = vst.msk [vmem:[#allocation2] sm:$0x1] %vm342, %v341
      %v344 = vld [vmem:[#allocation3] sm:$0x1]
      %v345 = vmul.f32 %v238, %v238
      %v346 = vmul.f32 %v239, %v239
      %v347 = vmul.f32 %v240, %v240
      %v348 = vmul.f32 %v241, %v241
      %v349 = vmul.f32 %v242, %v242
      %v350 = vmul.f32 %v243, %v243
      %v351 = vmul.f32 %v244, %v244
      %v352 = vmul.f32 %v245, %v245
      %v353 = vmul.f32 %v246, %v246
      %v354 = vmul.f32 %v247, %v247
      %v355 = vmul.f32 %v248, %v248
      %v356 = vmul.f32 %v249, %v249
      %v357 = vmul.f32 %v250, %v250
      %v358 = vmul.f32 %v251, %v251
      %v359 = vmul.f32 %v252, %v252
      %v360 = vmul.f32 %v253, %v253
      %v361 = vmul.f32 %v254, %v254
      %v362 = vmul.f32 %v255, %v255
      %v363 = vmul.f32 %v256, %v256
      %v364 = vmul.f32 %v257, %v257
      %v365 = vmul.f32 %v258, %v258
      %v366 = vmul.f32 %v259, %v259
      %v367 = vmul.f32 %v260, %v260
      %v368 = vmul.f32 %v261, %v261
      %v369 = vmul.f32 %v262, %v262
      %v370 = vmul.f32 %v263, %v263
      %v371 = vmul.f32 %v264, %v264
      %v372 = vmul.f32 %v265, %v265
      %v373 = vmul.f32 %v266, %v266
      %v374 = vmul.f32 %v267, %v267
      %v375 = vmul.f32 %v268, %v268
      %v376 = vmul.f32 %v269, %v269
      %v377 = vsel %vm271, %v345, 0.0
      %v378 = vsel %vm271, %v346, 0.0
      %v379 = vadd.f32 %v377, %v378
      %v380 = vsel %vm271, %v347, 0.0
      %v381 = vadd.f32 %v379, %v380
      %v382 = vsel %vm271, %v348, 0.0
      %v383 = vadd.f32 %v381, %v382
      %v384 = vsel %vm271, %v349, 0.0
      %v385 = vadd.f32 %v383, %v384
      %v386 = vsel %vm271, %v350, 0.0
      %v387 = vadd.f32 %v385, %v386
      %v388 = vsel %vm271, %v351, 0.0
      %v389 = vadd.f32 %v387, %v388
      %v390 = vsel %vm271, %v352, 0.0
      %v391 = vadd.f32 %v389, %v390
      %v392 = vsel %vm271, %v353, 0.0
      %v393 = vadd.f32 %v391, %v392
      %v394 = vsel %vm271, %v354, 0.0
      %v395 = vadd.f32 %v393, %v394
      %v396 = vsel %vm271, %v355, 0.0
      %v397 = vadd.f32 %v395, %v396
      %v398 = vsel %vm271, %v356, 0.0
      %v399 = vadd.f32 %v397, %v398
      %v400 = vsel %vm271, %v357, 0.0
      %v401 = vadd.f32 %v399, %v400
      %v402 = vsel %vm271, %v358, 0.0
      %v403 = vadd.f32 %v401, %v402
      %v404 = vsel %vm271, %v359, 0.0
      %v405 = vadd.f32 %v403, %v404
      %v406 = vsel %vm271, %v360, 0.0
      %v407 = vadd.f32 %v405, %v406
      %v408 = vsel %vm271, %v361, 0.0
      %v409 = vadd.f32 %v407, %v408
      %v410 = vsel %vm271, %v362, 0.0
      %v411 = vadd.f32 %v409, %v410
      %v412 = vsel %vm271, %v363, 0.0
      %v413 = vadd.f32 %v411, %v412
      %v414 = vsel %vm271, %v364, 0.0
      %v415 = vadd.f32 %v413, %v414
      %v416 = vsel %vm271, %v365, 0.0
      %v417 = vadd.f32 %v415, %v416
      %v418 = vsel %vm271, %v366, 0.0
      %v419 = vadd.f32 %v417, %v418
      %v420 = vsel %vm271, %v367, 0.0
      %v421 = vadd.f32 %v419, %v420
      %v422 = vsel %vm271, %v368, 0.0
      %v423 = vadd.f32 %v421, %v422
      %v424 = vsel %vm271, %v369, 0.0
      %v425 = vadd.f32 %v423, %v424
      %v426 = vsel %vm271, %v370, 0.0
      %v427 = vadd.f32 %v425, %v426
      %v428 = vsel %vm271, %v371, 0.0
      %v429 = vadd.f32 %v427, %v428
      %v430 = vsel %vm271, %v372, 0.0
      %v431 = vadd.f32 %v429, %v430
      %v432 = vsel %vm271, %v373, 0.0
      %v433 = vadd.f32 %v431, %v432
      %v434 = vsel %vm271, %v374, 0.0
      %v435 = vadd.f32 %v433, %v434
      %v436 = vsel %vm271, %v375, 0.0
      %v437 = vadd.f32 %v435, %v436
      %v438 = vsel %vm271, %v376, 0.0
      %v439 = vadd.f32 %v437, %v438
      %v440 = vrot.slane %v439, 4
      %v441 = vadd.f32 %v439, %v440
      %v442 = vrot.slane %v441, 2
      %v443 = vadd.f32 %v441, %v442
      %v444 = vrot.slane %v443, 1
      %v445 = vadd.f32 %v443, %v444
      %v446 = vadd.f32 %v344, %v445
      %447 = vst.msk [vmem:[#allocation3] sm:$0x1] %vm342, %v446
      // Predicated region
      $region37: #{content_encoder_forward.34} parent=31 // pred_check
        %p448 = pneg %p231
      $region38: #{content_encoder_forward.34} parent=31 // pred_check_branch
        %450 = sbr.rel (%p448) target = $region40
      $region39: #{content_encoder_forward.34} parent=31 // pred_region
        %v451 = vld [vmem:[#allocation2] sm:$0x1]
        %v452 = vmul.f32 %v451, 0.00390625
        %v453 = vld [vmem:[#allocation3] sm:$0x1]
        %v454 = vmul.f32 %v453, 0.00390625
        %v455 = vmul.f32 %v452, %v452
        %v456 = vsub.f32 %v454, %v455
        %v457 = vadd.f32 %v456, 1e-05
        %v458 = vrsqrt.pop %v457
        %v459 = vld [vmem:[%s1] sm:$0x1]
        %v460 = vmul.f32 %v459, %v458
        %461 = vst.msk [vmem:[%s227] sm:$0x1] %vm342, %v460
        %v462 = vld [vmem:[%s2] sm:$0x1]
        %v463 = vmul.f32 %v452, %v460
        %v464 = vsub.f32 %v462, %v463
        %465 = vst.msk [vmem:[%s230] sm:$0x1] %vm342, %v464
      $region40: #{content_encoder_forward.34} parent=31 // pred_fallthru
        _
      %p466 = scmp.lt.s32.totalorder %s20, 1
      %s467 = scalar_select %p466, %s20, 1
      %s468 = scalar_lea.vmem %s3, %s467
      %p469 = scmp.lt.s32.totalorder %s20, 1
      %s470 = scalar_select %p469, %s20, 1
      %s471 = scalar_lea.vmem %s4, %s470
      // Predicated region
      $region41: #{content_encoder_forward.34} parent=31 // pred_check
        %p472 = pneg %p116
      $region42: #{content_encoder_forward.34} parent=31 // pred_check_branch
        %474 = sbr.rel (%p472) target = $region44
      $region43: #{content_encoder_forward.34} parent=31 // pred_region
        _
      $region44: #{content_encoder_forward.34} parent=31 // pred_fallthru
        _
      // Predicated region
      $region45: #{content_encoder_forward.34} parent=31 // pred_check
        %p475 = pneg %p142
      $region46: #{content_encoder_forward.34} parent=31 // pred_check_branch
        %477 = sbr.rel (%p475) target = $region48
      $region47: #{content_encoder_forward.34} parent=31 // pred_region
        _
      $region48: #{content_encoder_forward.34} parent=31 // pred_fallthru
        _
    $region32: #{content_encoder_forward.34} parent=5 // pred_fallthru
      _
    %p478 = scmp.le.s32.totalorder 2, %s11
    // Predicated region
    $region49: #{content_encoder_forward.34} parent=5 // pred_check
      %p479 = pneg %p478
    $region50: #{content_encoder_forward.34} parent=5 // pred_check_branch
      %481 = sbr.rel (%p479) target = $region52
    $region51: #{content_encoder_forward.34} parent=5 // pred_region
      %s482 = ssub.s32 %s11, 2
      // Predicated region
      $region53: #{content_encoder_forward.34} parent=51 // pred_check
        %p483 = pneg %p122
      $region54: #{content_encoder_forward.34} parent=51 // pred_check_branch
        %485 = sbr.rel (%p483) target = $region56
      $region55: #{content_encoder_forward.34} parent=51 // pred_region
        %p486 = scmp.lt.s32.totalorder %s22, 1
        %s487 = scalar_select %p486, %s22, 1
        %s488 = scalar_lea.vmem %s3, %s487
      $region56: #{content_encoder_forward.34} parent=51 // pred_fallthru
        _
      // Predicated region
      $region57: #{content_encoder_forward.34} parent=51 // pred_check
        %p489 = pneg %p148
      $region58: #{content_encoder_forward.34} parent=51 // pred_check_branch
        %491 = sbr.rel (%p489) target = $region60
      $region59: #{content_encoder_forward.34} parent=51 // pred_region
        %p492 = scmp.lt.s32.totalorder %s22, 1
        %s493 = scalar_select %p492, %s22, 1
        %s494 = scalar_lea.vmem %s4, %s493
      $region60: #{content_encoder_forward.34} parent=51 // pred_fallthru
        _
    $region52: #{content_encoder_forward.34} parent=5 // pred_fallthru
      _
  $region6: #{content_encoder_forward.34} parent=0 // loop_footer
    %s15 = sadd.s32 1, %s11
  $region7: #{content_encoder_forward.34} parent=0 // loop_footer_branch
    %10 = sbr.rel target = $region3
  $region8: #{content_encoder_forward.34} parent=0 // loop_exit
    _

// kernel: content_encoder_forward.35
$region0: #{content_encoder_forward.35}
  #allocation0 [shape = 'u32[]', space=smem, size = 0x4, offset = 0x4, fixed_abs, tag = 'smem constant byte address 0x4 - core index']
  #allocation1 [shape = 'u32[144,128]{1,0:T(1,128)}', space=vmem, size = 0x12000, scoped, tag = 'internal scratch']
  %s0 = inlined_call_operand.vmem [shape: f32[2,64,128], index: 0, kind: input, shape index: {}]
  %s1 = inlined_call_operand.vmem [shape: f32[2,1,128], index: 1, kind: input, shape index: {}]
  %s2 = inlined_call_operand.vmem [shape: f32[2,1,128], index: 2, kind: input, shape index: {}]
  %s3 = inlined_call_operand.vmem [shape: f32[2,64,128], index: 3, kind: output, shape index: {}]
  %s4 = sld [smem:[#allocation0]]
  $region45: #{content_encoder_forward.35} parent=0
    _
  %s6 = ssub.s32 1, %s4
  %s7 = scalar_select 0, %s6, %s4
  loop: start=0, step=1, limit=4
  $region2: #{content_encoder_forward.35} parent=0 // loop_pre_header
    _
  $region3: #{content_encoder_forward.35} parent=0 // loop_header
    %s9 = sphi 0, %s13
    %p10 = scmp.ge.s32.totalorder %s9, 4
    %s16 = sphi 0, %s28
    %s17 = sphi 0, %s24
    %s18 = sphi 0, %s16
    %s19 = sphi 0, %s17
    %s20 = sphi 0, %s18
    %s21 = sphi 0, %s19
    %s33 = sphi 0, %s35
    %s36 = sphi 0, %s33
    %s37 = sphi 0, %s36
    %s53 = sphi 0, %s37
    %s59 = sphi 0, %s61
    %s62 = sphi 0, %s59
    %s63 = sphi 0, %s62
    %s79 = sphi 0, %s63
    %s85 = sphi 0, %s87
    %s88 = sphi 0, %s85
    %s89 = sphi 0, %s88
    %s105 = sphi 0, %s89
    %s113 = sphi 0, %s115
    %s116 = sphi 0, %s113
    %s117 = sphi 0, %s116
    %s133 = sphi 0, %s117
  $region4: #{content_encoder_forward.35} parent=0 // loop_header_branch
    %12 = sbr.rel (%p10) target = $region8
  $region5: #{content_encoder_forward.35} parent=0 // loop_body
    %s14 = ssub.s32 %s9, 1
    %s15 = ssub.s32 %s9, 2
    %s22 = sadd.s32 1, %s17
    %p23 = scmp.ge.s32.totalorder %s22, 1
    %s24 = scalar_select %p23, 0, %s22
    %s25 = sadd.s32 1, %s16
    %s26 = scalar_select %p23, %s25, %s16
    %p27 = scmp.ge.s32.totalorder %s26, 2
    %s28 = scalar_select %p27, 0, %s26
    %s29 = ssub.s32 %s16, %s28
    %s30 = ssub.s32 %s17, %s24
    %s31 = sor.u32 %s29, %s30
    %p32 = scmp.eq.s32.totalorder %s31, 0
    %s34 = sadd.s32 %s33, 1
    %s35 = scalar_select %p32, %s33, %s34
    %p38 = pneg %p32
    %p39 = scmp.eq.s32.totalorder %s9, 1
    %p40 = por %p38, %p39
    %p41 = scmp.ne.s32.totalorder %s33, %s36
    %p42 = scmp.eq.s32.totalorder %s9, 0
    %p43 = por %p41, %p42
    %p44 = scmp.ne.s32.totalorder %s33, %s36
    %p45 = scmp.eq.s32.totalorder %s14, 1
    %p46 = por %p44, %p45
    %p47 = scmp.ne.s32.totalorder %s36, %s37
    %p48 = scmp.eq.s32.totalorder %s14, 0
    %p49 = por %p47, %p48
    %p50 = scmp.ne.s32.totalorder %s36, %s37
    %p51 = scmp.eq.s32.totalorder %s15, 1
    %p52 = por %p50, %p51
    %p54 = scmp.ne.s32.totalorder %s37, %s53
    %p55 = scmp.eq.s32.totalorder %s15, 0
    %p56 = por %p54, %p55
    %s57 = ssub.s32 %s16, %s28
    %p58 = scmp.eq.s32.totalorder %s57, 0
    %s60 = sadd.s32 %s59, 1
    %s61 = scalar_select %p58, %s59, %s60
    %p64 = pneg %p58
    %p65 = scmp.eq.s32.totalorder %s9, 1
    %p66 = por %p64, %p65
    %p67 = scmp.ne.s32.totalorder %s59, %s62
    %p68 = scmp.eq.s32.totalorder %s9, 0
    %p69 = por %p67, %p68
    %p70 = scmp.ne.s32.totalorder %s59, %s62
    %p71 = scmp.eq.s32.totalorder %s14, 1
    %p72 = por %p70, %p71
    %p73 = scmp.ne.s32.totalorder %s62, %s63
    %p74 = scmp.eq.s32.totalorder %s14, 0
    %p75 = por %p73, %p74
    %p76 = scmp.ne.s32.totalorder %s62, %s63
    %p77 = scmp.eq.s32.totalorder %s15, 1
    %p78 = por %p76, %p77
    %p80 = scmp.ne.s32.totalorder %s63, %s79
    %p81 = scmp.eq.s32.totalorder %s15, 0
    %p82 = por %p80, %p81
    %s83 = ssub.s32 %s16, %s28
    %p84 = scmp.eq.s32.totalorder %s83, 0
    %s86 = sadd.s32 %s85, 1
    %s87 = scalar_select %p84, %s85, %s86
    %p90 = pneg %p84
    %p91 = scmp.eq.s32.totalorder %s9, 1
    %p92 = por %p90, %p91
    %p93 = scmp.ne.s32.totalorder %s85, %s88
    %p94 = scmp.eq.s32.totalorder %s9, 0
    %p95 = por %p93, %p94
    %p96 = scmp.ne.s32.totalorder %s85, %s88
    %p97 = scmp.eq.s32.totalorder %s14, 1
    %p98 = por %p96, %p97
    %p99 = scmp.ne.s32.totalorder %s88, %s89
    %p100 = scmp.eq.s32.totalorder %s14, 0
    %p101 = por %p99, %p100
    %p102 = scmp.ne.s32.totalorder %s88, %s89
    %p103 = scmp.eq.s32.totalorder %s15, 1
    %p104 = por %p102, %p103
    %p106 = scmp.ne.s32.totalorder %s89, %s105
    %p107 = scmp.eq.s32.totalorder %s15, 0
    %p108 = por %p106, %p107
    %s109 = ssub.s32 %s16, %s28
    %s110 = ssub.s32 %s17, %s24
    %s111 = sor.u32 %s109, %s110
    %p112 = scmp.eq.s32.totalorder %s111, 0
    %s114 = sadd.s32 %s113, 1
    %s115 = scalar_select %p112, %s113, %s114
    %p118 = pneg %p112
    %p119 = scmp.eq.s32.totalorder %s9, 1
    %p120 = por %p118, %p119
    %p121 = scmp.ne.s32.totalorder %s113, %s116
    %p122 = scmp.eq.s32.totalorder %s9, 0
    %p123 = por %p121, %p122
    %p124 = scmp.ne.s32.totalorder %s113, %s116
    %p125 = scmp.eq.s32.totalorder %s14, 1
    %p126 = por %p124, %p125
    %p127 = scmp.ne.s32.totalorder %s116, %s117
    %p128 = scmp.eq.s32.totalorder %s14, 0
    %p129 = por %p127, %p128
    %p130 = scmp.ne.s32.totalorder %s116, %s117
    %p131 = scmp.eq.s32.totalorder %s15, 1
    %p132 = por %p130, %p131
    %p134 = scmp.ne.s32.totalorder %s117, %s133
    %p135 = scmp.eq.s32.totalorder %s15, 0
    %p136 = por %p134, %p135
    %p137 = scmp.le.s32.totalorder 1, %s9
    %p138 = scmp.lt.s32.totalorder %s9, 3
    %p139 = pnand %p137, %p138
    %p140 = pneg %p139
    // Predicated region
    $region9: #{content_encoder_forward.35} parent=5 // pred_check
      _
    $region10: #{content_encoder_forward.35} parent=5 // pred_check_branch
      %142 = sbr.rel (%p139) target = $region12
    $region11: #{content_encoder_forward.35} parent=5 // pred_region
      %s143 = ssub.s32 %s9, 1
    $region12: #{content_encoder_forward.35} parent=5 // pred_fallthru
      _
    %p144 = scmp.lt.s32.totalorder %s9, 2
    // Predicated region
    $region13: #{content_encoder_forward.35} parent=5 // pred_check
      %p145 = pneg %p144
    $region14: #{content_encoder_forward.35} parent=5 // pred_check_branch
      %147 = sbr.rel (%p145) target = $region16
    $region15: #{content_encoder_forward.35} parent=5 // pred_region
      // Predicated region
      $region17: #{content_encoder_forward.35} parent=15 // pred_check
        %p148 = pneg %p43
      $region18: #{content_encoder_forward.35} parent=15 // pred_check_branch
        %150 = sbr.rel (%p148) target = $region20
      $region19: #{content_encoder_forward.35} parent=15 // pred_region
        %s151 = smul.u32 8, %s17
        %p152 = scmp.lt.s32.totalorder %s16, 1
        %s153 = scalar_select %p152, %s16, 1
        %p154 = scmp.lt.s32.totalorder %s151, 7
        %s155 = scalar_select %p154, %s151, 7
        %s156 = smul.addr %s153, 8
        %s157 = sadd.s32 %s155, %s156
        %s158 = smul.addr %s157, 8
        %s159 = scalar_lea.vmem %s0, %s158
        %s160 = smul.u32 8, %s17
      $region20: #{content_encoder_forward.35} parent=15 // pred_fallthru
        _
      // Predicated region
      $region21: #{content_encoder_forward.35} parent=15 // pred_check
        %p161 = pneg %p69
      $region22: #{content_encoder_forward.35} parent=15 // pred_check_branch
        %163 = sbr.rel (%p161) target = $region24
      $region23: #{content_encoder_forward.35} parent=15 // pred_region
        %p164 = scmp.lt.s32.totalorder %s16, 1
        %s165 = scalar_select %p164, %s16, 1
        %s166 = scalar_lea.vmem %s1, %s165
      $region24: #{content_encoder_forward.35} parent=15 // pred_fallthru
        _
      // Predicated region
      $region25: #{content_encoder_forward.35} parent=15 // pred_check
        %p167 = pneg %p95
      $region26: #{content_encoder_forward.35} parent=15 // pred_check_branch
        %169 = sbr.rel (%p167) target = $region28
      $region27: #{content_encoder_forward.35} parent=15 // pred_region
        %p170 = scmp.lt.s32.totalorder %s16, 1
        %s171 = scalar_select %p170, %s16, 1
        %s172 = scalar_lea.vmem %s2, %s171
      $region28: #{content_encoder_forward.35} parent=15 // pred_fallthru
        _
    $region16: #{content_encoder_forward.35} parent=5 // pred_fallthru
      _
    %p173 = scmp.le.s32.totalorder 1, %s9
    %p174 = scmp.lt.s32.totalorder %s9, 3
    %p175 = pnand %p173, %p174
    %p176 = pneg %p175
    // Predicated region
    $region29: #{content_encoder_forward.35} parent=5 // pred_check
      _
    $region30: #{content_encoder_forward.35} parent=5 // pred_check_branch
      %178 = sbr.rel (%p175) target = $region32
    $region31: #{content_encoder_forward.35} parent=5 // pred_region
      %s179 = ssub.s32 %s9, 1
      %s180 = smul.u32 8, %s19
      %p181 = scmp.lt.s32.totalorder %s18, 1
      %s182 = scalar_select %p181, %s18, 1
      %p183 = scmp.lt.s32.totalorder %s180, 7
      %s184 = scalar_select %p183, %s180, 7
      %s185 = smul.addr %s182, 8
      %s186 = sadd.s32 %s184, %s185
      %s187 = smul.addr %s186, 8
      %s188 = scalar_lea.vmem %s0, %s187
      %p189 = pneg %p49
      %p190 = pneg %p46
      %p191 = scmp.lt.s32.totalorder %s18, 1
      %s192 = scalar_select %p191, %s18, 1
      %s193 = scalar_lea.vmem %s1, %s192
      %p194 = pneg %p75
      %p195 = pneg %p72
      %p196 = scmp.lt.s32.totalorder %s18, 1
      %s197 = scalar_select %p196, %s18, 1
      %s198 = scalar_lea.vmem %s2, %s197
      %p199 = pneg %p101
      %p200 = pneg %p98
      %p201 = pneg %p129
      %p202 = pneg %p126
      %s203 = smul.u32 8, %s19
      %p204 = scmp.lt.s32.totalorder %s18, 1
      %s205 = scalar_select %p204, %s18, 1
      %p206 = scmp.lt.s32.totalorder %s203, 7
      %s207 = scalar_select %p206, %s203, 7
      %s208 = smul.addr %s205, 8
      %s209 = sadd.s32 %s207, %s208
      %s210 = smul.addr %s209, 8
      %s211 = scalar_lea.vmem %s3, %s210
      %s212 = smul.u32 8, %s19
      %p213 = scmp.lt.s32.totalorder %s18, 1
      %s214 = scalar_select %p213, %s18, 1
      %p215 = scmp.lt.s32.totalorder %s212, 7
      %s216 = scalar_select %p215, %s212, 7
      %s217 = smul.addr %s214, 8
      %s218 = sadd.s32 %s216, %s217
      %s219 = smul.addr %s218, 8
      %s220 = scalar_lea.vmem %s0, %s219
      %s221 = smul.u32 8, %s19
      %p222 = scmp.lt.s32.totalorder %s18, 1
      %s223 = scalar_select %p222, %s18, 1
      %s224 = scalar_lea.vmem %s1, %s223
      %p225 = scmp.lt.s32.totalorder %s18, 1
      %s226 = scalar_select %p225, %s18, 1
      %s227 = scalar_lea.vmem %s2, %s226
      %s228 = smul.u32 8, %s19
      %p229 = scmp.lt.s32.totalorder %s18, 1
      %s230 = scalar_select %p229, %s18, 1
      %p231 = scmp.lt.s32.totalorder %s228, 7
      %s232 = scalar_select %p231, %s228, 7
      %s233 = smul.addr %s230, 8
      %s234 = sadd.s32 %s232, %s233
      %s235 = smul.addr %s234, 8
      %s236 = scalar_lea.vmem %s3, %s235
      %s237 = smul.u32 8, %s19
      %v238 = vld [vmem:[%s220] sm:$0xff]
      %v239 = vld [vmem:[%s220 + $0x8] sm:$0xff]
      %v240 = vld [vmem:[%s220 + $0x10] sm:$0xff]
      %v241 = vld [vmem:[%s220 + $0x18] sm:$0xff]
      %v242 = vld [vmem:[%s220 + $0x20] sm:$0xff]
      %v243 = vld [vmem:[%s220 + $0x28] sm:$0xff]
      %v244 = vld [vmem:[%s220 + $0x30] sm:$0xff]
      %v245 = vld [vmem:[%s220 + $0x38] sm:$0xff]
      %v246 = vld [vmem:[%s224] sm:$0x1]
      %v248 = vlaneseq
      %v249 = vshrl.u32 %v248, 7
      %v250 = vsub.s32 0, %v249
      %v251 = vrot.slane %v246, %v250
      %v253 = vmul.f32 %v238, %v251
      %v254 = vmul.f32 %v239, %v251
      %v255 = vmul.f32 %v240, %v251
      %v256 = vmul.f32 %v241, %v251
      %v257 = vmul.f32 %v242, %v251
      %v258 = vmul.f32 %v243, %v251
      %v259 = vmul.f32 %v244, %v251
      %v260 = vmul.f32 %v245, %v251
      %v261 = vld [vmem:[%s227] sm:$0x1]
      %v263 = vlaneseq
      %v264 = vshrl.u32 %v263, 7
      %v265 = vsub.s32 0, %v264
      %v266 = vrot.slane %v261, %v265
      %v268 = vadd.f32 %v253, %v266
      %v269 = vadd.f32 %v254, %v266
      %v270 = vadd.f32 %v255, %v266
      %v271 = vadd.f32 %v256, %v266
      %v272 = vadd.f32 %v257, %v266
      %v273 = vadd.f32 %v258, %v266
      %v274 = vadd.f32 %v259, %v266
      %v275 = vadd.f32 %v260, %v266
      %vm276 = vcmp.gt.f32.partialorder %v268, 0.0
      %vm277 = vcmp.gt.f32.partialorder %v269, 0.0
      %vm278 = vcmp.gt.f32.partialorder %v270, 0.0
      %vm279 = vcmp.gt.f32.partialorder %v271, 0.0
      %vm280 = vcmp.gt.f32.partialorder %v272, 0.0
      %vm281 = vcmp.gt.f32.partialorder %v273, 0.0
      %vm282 = vcmp.gt.f32.partialorder %v274, 0.0
      %vm283 = vcmp.gt.f32.partialorder %v275, 0.0
      %v284 = vmul.f32 %v268, 0.2
      %v285 = vmul.f32 %v269, 0.2
      %v286 = vmul.f32 %v270, 0.2
      %v287 = vmul.f32 %v271, 0.2
      %v288 = vmul.f32 %v272, 0.2
      %v289 = vmul.f32 %v273, 0.2
      %v290 = vmul.f32 %v274, 0.2
      %v291 = vmul.f32 %v275, 0.2
      %v292 = vsel %vm276, %v268, %v284
      %v293 = vsel %vm277, %v269, %v285
      %v294 = vsel %vm278, %v270, %v286
      %v295 = vsel %vm279, %v271, %v287
      %v296 = vsel %vm280, %v272, %v288
      %v297 = vsel %vm281, %v273, %v289
      %v298 = vsel %vm282, %v274, %v290
      %v299 = vsel %vm283, %v275, %v291
      %300 = vst [vmem:[%s236] sm:$0xff] %v292
      %301 = vst [vmem:[%s236 + $0x8] sm:$0xff] %v293
      %302 = vst [vmem:[%s236 + $0x10] sm:$0xff] %v294
      %303 = vst [vmem:[%s236 + $0x18] sm:$0xff] %v295
      %304 = vst [vmem:[%s236 + $0x20] sm:$0xff] %v296
      %305 = vst [vmem:[%s236 + $0x28] sm:$0xff] %v297
      %306 = vst [vmem:[%s236 + $0x30] sm:$0xff] %v298
      %307 = vst [vmem:[%s236 + $0x38] sm:$0xff] %v299
      %s308 = smul.u32 8, %s19
      %p309 = scmp.lt.s32.totalorder %s18, 1
      %s310 = scalar_select %p309, %s18, 1
      %p311 = scmp.lt.s32.totalorder %s308, 7
      %s312 = scalar_select %p311, %s308, 7
      %s313 = smul.addr %s310, 8
      %s314 = sadd.s32 %s312, %s313
      %s315 = smul.addr %s314, 8
      %s316 = scalar_lea.vmem %s3, %s315
      // Predicated region
      $region33: #{content_encoder_forward.35} parent=31 // pred_check
        %p317 = pneg %p126
      $region34: #{content_encoder_forward.35} parent=31 // pred_check_branch
        %319 = sbr.rel (%p317) target = $region36
      $region35: #{content_encoder_forward.35} parent=31 // pred_region
        %s320 = smul.u32 8, %s19
      $region36: #{content_encoder_forward.35} parent=31 // pred_fallthru
        _
    $region32: #{content_encoder_forward.35} parent=5 // pred_fallthru
      _
    %p321 = scmp.le.s32.totalorder 2, %s9
    // Predicated region
    $region37: #{content_encoder_forward.35} parent=5 // pred_check
      %p322 = pneg %p321
    $region38: #{content_encoder_forward.35} parent=5 // pred_check_branch
      %324 = sbr.rel (%p322) target = $region40
    $region39: #{content_encoder_forward.35} parent=5 // pred_region
      %s325 = ssub.s32 %s9, 2
      // Predicated region
      $region41: #{content_encoder_forward.35} parent=39 // pred_check
        %p326 = pneg %p132
      $region42: #{content_encoder_forward.35} parent=39 // pred_check_branch
        %328 = sbr.rel (%p326) target = $region44
      $region43: #{content_encoder_forward.35} parent=39 // pred_region
        %s329 = smul.u32 8, %s21
        %p330 = scmp.lt.s32.totalorder %s20, 1
        %s331 = scalar_select %p330, %s20, 1
        %p332 = scmp.lt.s32.totalorder %s329, 7
        %s333 = scalar_select %p332, %s329, 7
        %s334 = smul.addr %s331, 8
        %s335 = sadd.s32 %s333, %s334
        %s336 = smul.addr %s335, 8
        %s337 = scalar_lea.vmem %s3, %s336
      $region44: #{content_encoder_forward.35} parent=39 // pred_fallthru
        _
    $region40: #{content_encoder_forward.35} parent=5 // pred_fallthru
      _
  $region6: #{content_encoder_forward.35} parent=0 // loop_footer
    %s13 = sadd.s32 1, %s9
  $region7: #{content_encoder_forward.35} parent=0 // loop_footer_branch
    %8 = sbr.rel target = $region3
  $region8: #{content_encoder_forward.35} parent=0 // loop_exit
    _

// kernel: content_encoder_forward.36
$region0: #{content_encoder_forward.36}
  #allocation0 [shape = 'u32[]', space=smem, size = 0x4, offset = 0x4, fixed_abs, tag = 'smem constant byte address 0x4 - core index']
  #allocation1 [shape = 'u32[144,128]{1,0:T(1,128)}', space=vmem, size = 0x12000, scoped, tag = 'internal scratch']
  #allocation2 [shape = 'f32[15,64]{1,0:T(8,128)}', space=vmem, size = 0x2000, scoped, tag = 'scratch operand']
  %s0 = inlined_call_operand.vmem [shape: f32[2,18,18,32], index: 0, kind: input, shape index: {}]
  %s1 = inlined_call_operand.vmem [shape: f32[16,32,64], index: 1, kind: input, shape index: {}]
  %s2 = inlined_call_operand.vmem [shape: f32[1,64], index: 2, kind: input, shape index: {}]
  %s3 = inlined_call_operand.vmem [shape: f32[2,8,15,64], index: 3, kind: output, shape index: {}]
  %s4 = sld [smem:[#allocation0]]
  $region53: #{content_encoder_forward.36} parent=0
    _
  %s6 = ssub.s32 1, %s4
  %s7 = scalar_select 0, %s6, %s4
  loop: start=0, step=1, limit=66
  $region2: #{content_encoder_forward.36} parent=0 // loop_pre_header
    _
  $region3: #{content_encoder_forward.36} parent=0 // loop_header
    %s9 = sphi 0, %s13
    %p10 = scmp.ge.s32.totalorder %s9, 66
    %s16 = sphi 0, %s35
    %s17 = sphi 0, %s31
    %s18 = sphi 0, %s27
    %s19 = sphi 0, %s16
    %s20 = sphi 0, %s17
    %s21 = sphi 0, %s18
    %s22 = sphi 0, %s19
    %s23 = sphi 0, %s20
    %s24 = sphi 0, %s21
    %s38 = sphi 0, %s40
    %s41 = sphi 0, %s38
    %s42 = sphi 0, %s41
    %s58 = sphi 0, %s42
    %s62 = sphi 0, %s62
    %s64 = sphi 0, %s62
    %s65 = sphi 0, %s64
    %s79 = sphi 0, %s65
    %s83 = sphi 0, %s83
    %s85 = sphi 0, %s83
    %s86 = sphi 0, %s85
    %s100 = sphi 0, %s86
    %s108 = sphi 0, %s110
    %s111 = sphi 0, %s108
    %s112 = sphi 0, %s111
    %s128 = sphi 0, %s112
  $region4: #{content_encoder_forward.36} parent=0 // loop_header_branch
    %12 = sbr.rel (%p10) target = $region8
  $region5: #{content_encoder_forward.36} parent=0 // loop_body
    %s14 = ssub.s32 %s9, 1
    %s15 = ssub.s32 %s9, 2
    %s25 = sadd.s32 1, %s18
    %p26 = scmp.ge.s32.totalorder %s25, 4
    %s27 = scalar_select %p26, 0, %s25
    %s28 = sadd.s32 1, %s17
    %s29 = scalar_select %p26, %s28, %s17
    %p30 = scmp.ge.s32.totalorder %s29, 8
    %s31 = scalar_select %p30, 0, %s29
    %s32 = sadd.s32 1, %s16
    %s33 = scalar_select %p30, %s32, %s16
    %p34 = scmp.ge.s32.totalorder %s33, 2
    %s35 = scalar_select %p34, 0, %s33
    %s36 = ssub.s32 %s16, %s35
    %p37 = scmp.eq.s32.totalorder %s36, 0
    %s39 = sadd.s32 %s38, 1
    %s40 = scalar_select %p37, %s38, %s39
    %p43 = pneg %p37
    %p44 = scmp.eq.s32.totalorder %s9, 63
    %p45 = por %p43, %p44
    %p46 = scmp.ne.s32.totalorder %s38, %s41
    %p47 = scmp.eq.s32.totalorder %s9, 0
    %p48 = por %p46, %p47
    %p49 = scmp.ne.s32.totalorder %s38, %s41
    %p50 = scmp.eq.s32.totalorder %s14, 63
    %p51 = por %p49, %p50
    %p52 = scmp.ne.s32.totalorder %s41, %s42
    %p53 = scmp.eq.s32.totalorder %s14, 0
    %p54 = por %p52, %p53
    %p55 = scmp.ne.s32.totalorder %s41, %s42
    %p56 = scmp.eq.s32.totalorder %s15, 63
    %p57 = por %p55, %p56
    %p59 = scmp.ne.s32.totalorder %s42, %s58
    %p60 = scmp.eq.s32.totalorder %s15, 0
    %p61 = por %p59, %p60
    %s63 = sadd.s32 %s62, 1
    %p66 = scmp.eq.s32.totalorder %s9, 63
    %p67 = scmp.ne.s32.totalorder %s62, %s64
    %p68 = scmp.eq.s32.totalorder %s9, 0
    %p69 = por %p67, %p68
    %p70 = scmp.ne.s32.totalorder %s62, %s64
    %p71 = scmp.eq.s32.totalorder %s14, 63
    %p72 = por %p70, %p71
    %p73 = scmp.ne.s32.totalorder %s64, %s65
    %p74 = scmp.eq.s32.totalorder %s14, 0
    %p75 = por %p73, %p74
    %p76 = scmp.ne.s32.totalorder %s64, %s65
    %p77 = scmp.eq.s32.totalorder %s15, 63
    %p78 = por %p76, %p77
    %p80 = scmp.ne.s32.totalorder %s65, %s79
    %p81 = scmp.eq.s32.totalorder %s15, 0
    %p82 = por %p80, %p81
    %s84 = sadd.s32 %s83, 1
    %p87 = scmp.eq.s32.totalorder %s9, 63
    %p88 = scmp.ne.s32.totalorder %s83, %s85
    %p89 = scmp.eq.s32.totalorder %s9, 0
    %p90 = por %p88, %p89
    %p91 = scmp.ne.s32.totalorder %s83, %s85
    %p92 = scmp.eq.s32.totalorder %s14, 63
    %p93 = por %p91, %p92
    %p94 = scmp.ne.s32.totalorder %s85, %s86
    %p95 = scmp.eq.s32.totalorder %s14, 0
    %p96 = por %p94, %p95
    %p97 = scmp.ne.s32.totalorder %s85, %s86
    %p98 = scmp.eq.s32.totalorder %s15, 63
    %p99 = por %p97, %p98
    %p101 = scmp.ne.s32.totalorder %s86, %s100
    %p102 = scmp.eq.s32.totalorder %s15, 0
    %p103 = por %p101, %p102
    %s104 = ssub.s32 %s16, %s35
    %s105 = ssub.s32 %s17, %s31
    %s106 = sor.u32 %s104, %s105
    %p107 = scmp.eq.s32.totalorder %s106, 0
    %s109 = sadd.s32 %s108, 1
    %s110 = scalar_select %p107, %s108, %s109
    %p113 = pneg %p107
    %p114 = scmp.eq.s32.totalorder %s9, 63
    %p115 = por %p113, %p114
    %p116 = scmp.ne.s32.totalorder %s108, %s111
    %p117 = scmp.eq.s32.totalorder %s9, 0
    %p118 = por %p116, %p117
    %p119 = scmp.ne.s32.totalorder %s108, %s111
    %p120 = scmp.eq.s32.totalorder %s14, 63
    %p121 = por %p119, %p120
    %p122 = scmp.ne.s32.totalorder %s111, %s112
    %p123 = scmp.eq.s32.totalorder %s14, 0
    %p124 = por %p122, %p123
    %p125 = scmp.ne.s32.totalorder %s111, %s112
    %p126 = scmp.eq.s32.totalorder %s15, 63
    %p127 = por %p125, %p126
    %p129 = scmp.ne.s32.totalorder %s112, %s128
    %p130 = scmp.eq.s32.totalorder %s15, 0
    %p131 = por %p129, %p130
    %p132 = scmp.le.s32.totalorder 1, %s9
    %p133 = scmp.lt.s32.totalorder %s9, 65
    %p134 = pnand %p132, %p133
    %p135 = pneg %p134
    // Predicated region
    $region9: #{content_encoder_forward.36} parent=5 // pred_check
      _
    $region10: #{content_encoder_forward.36} parent=5 // pred_check_branch
      %137 = sbr.rel (%p134) target = $region12
    $region11: #{content_encoder_forward.36} parent=5 // pred_region
      %s138 = ssub.s32 %s9, 1
      // Predicated region
      $region13: #{content_encoder_forward.36} parent=11 // pred_check
        %p139 = pneg %p75
      $region14: #{content_encoder_forward.36} parent=11 // pred_check_branch
        %141 = sbr.rel (%p139) target = $region16
      $region15: #{content_encoder_forward.36} parent=11 // pred_region
        _
      $region16: #{content_encoder_forward.36} parent=11 // pred_fallthru
        _
      // Predicated region
      $region17: #{content_encoder_forward.36} parent=11 // pred_check
        %p142 = pneg %p96
      $region18: #{content_encoder_forward.36} parent=11 // pred_check_branch
        %144 = sbr.rel (%p142) target = $region20
      $region19: #{content_encoder_forward.36} parent=11 // pred_region
        _
      $region20: #{content_encoder_forward.36} parent=11 // pred_fallthru
        _
    $region12: #{content_encoder_forward.36} parent=5 // pred_fallthru
      _
    %p145 = scmp.lt.s32.totalorder %s9, 64
    // Predicated region
    $region21: #{content_encoder_forward.36} parent=5 // pred_check
      %p146 = pneg %p145
    $region22: #{content_encoder_forward.36} parent=5 // pred_check_branch
      %148 = sbr.rel (%p146) target = $region24
    $region23: #{content_encoder_forward.36} parent=5 // pred_region
      // Predicated region
      $region25: #{content_encoder_forward.36} parent=23 // pred_check
        %p149 = pneg %p48
      $region26: #{content_encoder_forward.36} parent=23 // pred_check_branch
        %151 = sbr.rel (%p149) target = $region28
      $region27: #{content_encoder_forward.36} parent=23 // pred_region
        %p152 = scmp.lt.s32.totalorder %s16, 1
        %s153 = scalar_select %p152, %s16, 1
        %s154 = smul.addr %s153, 54
        %s155 = smul.addr %s154, 8
        %s156 = scalar_lea.vmem %s0, %s155
      $region28: #{content_encoder_forward.36} parent=23 // pred_fallthru
        _
    $region24: #{content_encoder_forward.36} parent=5 // pred_fallthru
      _
    %p157 = scmp.le.s32.totalorder 1, %s9
    %p158 = scmp.lt.s32.totalorder %s9, 65
    %p159 = pnand %p157, %p158
    %p160 = pneg %p159
    // Predicated region
    $region29: #{content_encoder_forward.36} parent=5 // pred_check
      _
    $region30: #{content_encoder_forward.36} parent=5 // pred_check_branch
      %162 = sbr.rel (%p159) target = $region32
    $region31: #{content_encoder_forward.36} parent=5 // pred_region
      %s163 = ssub.s32 %s9, 1
      %p164 = scmp.lt.s32.totalorder %s19, 1
      %s165 = scalar_select %p164, %s19, 1
      %s166 = smul.addr %s165, 54
      %s167 = smul.addr %s166, 8
      %s168 = scalar_lea.vmem %s0, %s167
      %p169 = pneg %p54
      %p170 = pneg %p51
      %p171 = pneg %p75
      %p172 = pneg %p72
      %p173 = pneg %p96
      %p174 = pneg %p93
      %p175 = pneg %p124
      %p176 = pneg %p121
      %p177 = scmp.lt.s32.totalorder %s19, 1
      %s178 = scalar_select %p177, %s19, 1
      %p179 = scmp.lt.s32.totalorder %s20, 7
      %s180 = scalar_select %p179, %s20, 7
      %s181 = smul.addr %s180, 2
      %s182 = smul.addr %s178, 16
      %s183 = sadd.s32 %s181, %s182
      %s184 = smul.addr %s183, 8
      %s185 = scalar_lea.vmem %s3, %s184
      %p186 = scmp.lt.s32.totalorder %s19, 1
      %s187 = scalar_select %p186, %s19, 1
      %s188 = smul.addr %s187, 54
      %s189 = smul.addr %s188, 8
      %s190 = scalar_lea.vmem %s0, %s189
      %p191 = scmp.lt.s32.totalorder %s19, 1
      %s192 = scalar_select %p191, %s19, 1
      %p193 = scmp.lt.s32.totalorder %s20, 7
      %s194 = scalar_select %p193, %s20, 7
      %s195 = smul.addr %s194, 2
      %s196 = smul.addr %s192, 16
      %s197 = sadd.s32 %s195, %s196
      %s198 = smul.addr %s197, 8
      %s199 = scalar_lea.vmem %s3, %s198
      %p200 = scmp.eq.s32.totalorder %s21, 0
      // Predicated region
      $region33: #{content_encoder_forward.36} parent=31 // pred_check
        %p201 = pneg %p200
      $region34: #{content_encoder_forward.36} parent=31 // pred_check_branch
        %203 = sbr.rel (%p201) target = $region36
      $region35: #{content_encoder_forward.36} parent=31 // pred_region
        %vm204 = vcmask 523264
        %205 = vst.msk [vmem:[#allocation2] sm:$0xff] %vm204, 0.0
        %vm206 = vcmask 522240
        %207 = vst.msk [vmem:[#allocation2 + $0x8] sm:$0x7f] %vm206, 0.0
      $region36: #{content_encoder_forward.36} parent=31 // pred_fallthru
        _
      %s208 = smul.u32 %s20, 2
      %s209 = sadd.s32 %s208, %s21
      %s210 = smul.u32 %s209, 24
      %s211 = scalar_lea.vmem %s190, %s210
      %v212 = vld [vmem:[%s211] sm:$0xff]
      %v213 = vld [vmem:[%s211 + $0x8] sm:$0x7f]
      %s214 = smul.u32 %s21, 4
      %s215 = smul.u32 %s214, 32
      %s216 = scalar_lea.vmem %s1, %s215
      %v217 = vld [vmem:[%s216] sm:$0xff]
      %v218 = vld [vmem:[%s216 + $0x8] sm:$0xff]
      %v219 = vld [vmem:[%s216 + $0x10] sm:$0xff]
      %v220 = vld [vmem:[%s216 + $0x18] sm:$0xff]
      %v221 = vld [vmem:[%s211 + $0x1] sm:$0xff]
      %v222 = vld [vmem:[%s211 + $0x9] sm:$0x7f]
      %s223 = sadd.s32 %s214, 1
      %s224 = smul.u32 %s223, 32
      %s225 = scalar_lea.vmem %s1, %s224
      %v226 = vld [vmem:[%s225] sm:$0xff]
      %v227 = vld [vmem:[%s225 + $0x8] sm:$0xff]
      %v228 = vld [vmem:[%s225 + $0x10] sm:$0xff]
      %v229 = vld [vmem:[%s225 + $0x18] sm:$0xff]
      %vm230 = vcmask 261120
      %v232 = vsel %vm230, %v221, 0
      %v235 = vsel %vm230, %v222, 0
      %237 = vmatprep.subr.mxu0 0.0
      %238 = vmatpush1.msra.mxu0 0.0
      %239 = vmatprep.subr.mxu0 0.0
      %240 = vmatpush1.msra.mxu0 0.0
      %241 = vmatprep.subr.mxu0 0.0
      %242 = vmatpush1.msra.mxu0 0.0
      %243 = vmatprep.subr.mxu0 0.0
      %244 = vmatpush1.msra.mxu0 0.0
      %245 = vmatprep.subr.mxu0 0.0
      %246 = vmatpush1.msra.mxu0 0.0
      %247 = vmatprep.subr.mxu0 0.0
      %248 = vmatpush1.msra.mxu0 0.0
      %249 = vmatprep.subr.mxu0 0.0
      %250 = vmatpush1.msra.mxu0 0.0
      %251 = vmatprep.subr.mxu0 0.0
      %252 = vmatpush1.msra.mxu0 0.0
      %253 = vmatprep.subr.mxu0 0.0
      %254 = vmatpush1.msra.mxu0 0.0
      %255 = vmatprep.subr.mxu0 0.0
      %256 = vmatpush1.msra.mxu0 0.0
      %257 = vmatprep.subr.mxu0 0.0
      %258 = vmatpush1.msra.mxu0 0.0
      %259 = vmatprep.subr.mxu0 0.0
      %260 = vmatpush1.msra.mxu0 0.0
      %261 = vmatprep.subr.mxu0 0.0
      %262 = vmatpush1.msra.mxu0 %v229
      %263 = vmatprep.subr.mxu0 0.0
      %264 = vmatpush1.msra.mxu0 %v228
      %265 = vmatprep.subr.mxu0 0.0
      %266 = vmatpush1.msra.mxu0 %v227
      %267 = vmatprep.subr.mxu0 0.0
      %268 = vmatpush1.msra.mxu0 %v226
      %269 = vmatprep.subr.mxu0 0.0
      %270 = vmatpush2.msra.mxu0 0.0
      %271 = vmatprep.subr.mxu0 0.0
      %272 = vmatpush2.msra.mxu0 0.0
      %273 = vmatprep.subr.mxu0 0.0
      %274 = vmatpush2.msra.mxu0 0.0
      %275 = vmatprep.subr.mxu0 0.0
      %276 = vmatpush2.msra.mxu0 0.0
      %277 = vmatprep.subr.mxu0 0.0
      %278 = vmatpush2.msra.mxu0 0.0
      %279 = vmatprep.subr.mxu0 0.0
      %280 = vmatpush2.msra.mxu0 0.0
      %281 = vmatprep.subr.mxu0 0.0
      %282 = vmatpush2.msra.mxu0 0.0
      %283 = vmatprep.subr.mxu0 0.0
      %284 = vmatpush2.msra.mxu0 0.0
      %285 = vmatprep.subr.mxu0 0.0
      %286 = vmatpush2.msra.mxu0 0.0
      %287 = vmatprep.subr.mxu0 0.0
      %288 = vmatpush2.msra.mxu0 0.0
      %289 = vmatprep.subr.mxu0 0.0
      %290 = vmatpush2.msra.mxu0 0.0
      %291 = vmatprep.subr.mxu0 0.0
      %292 = vmatpush2.msra.mxu0 0.0
      %293 = vmatprep.subr.mxu0 0.0
      %294 = vmatpush2.msra.mxu0 0.0
      %295 = vmatprep.subr.mxu0 0.0
      %296 = vmatpush2.msra.mxu0 0.0
      %297 = vmatprep.subr.mxu0 0.0
      %298 = vmatpush2.msra.mxu0 0.0
      %299 = vmatprep.subr.mxu0 0.0
      %300 = vmatpush2.msra.mxu0 0.0
      %301 = vmatprep.mubr.f32.mxu0 0.0
      %302 = vmatmul.mubr.f32.gmra.mxu0 %v232
      %v303 = vpop.f32.mrf.mxu0
      %v304 = vadd.f32 0.0, %v303
      %v305 = vpop.f32.mrf.mxu0
      %306 = vmatprep.mubr.f32.mxu0 0.0
      %307 = vmatmul.mubr.f32.gmra.mxu0 %v235
      %v308 = vpop.f32.mrf.mxu0
      %v309 = vadd.f32 0.0, %v308
      %v310 = vpop.f32.mrf.mxu0
      %311 = vdwg.mxu0
      %v313 = vsel %vm230, %v212, 0
      %v316 = vsel %vm230, %v213, 0
      %318 = vmatprep.subr.mxu0 0.0
      %319 = vmatpush1.msra.mxu0 0.0
      %320 = vmatprep.subr.mxu0 0.0
      %321 = vmatpush1.msra.mxu0 0.0
      %322 = vmatprep.subr.mxu0 0.0
      %323 = vmatpush1.msra.mxu0 0.0
      %324 = vmatprep.subr.mxu0 0.0
      %325 = vmatpush1.msra.mxu0 0.0
      %326 = vmatprep.subr.mxu0 0.0
      %327 = vmatpush1.msra.mxu0 0.0
      %328 = vmatprep.subr.mxu0 0.0
      %329 = vmatpush1.msra.mxu0 0.0
      %330 = vmatprep.subr.mxu0 0.0
      %331 = vmatpush1.msra.mxu0 0.0
      %332 = vmatprep.subr.mxu0 0.0
      %333 = vmatpush1.msra.mxu0 0.0
      %334 = vmatprep.subr.mxu0 0.0
      %335 = vmatpush1.msra.mxu0 0.0
      %336 = vmatprep.subr.mxu0 0.0
      %337 = vmatpush1.msra.mxu0 0.0
      %338 = vmatprep.subr.mxu0 0.0
      %339 = vmatpush1.msra.mxu0 0.0
      %340 = vmatprep.subr.mxu0 0.0
      %341 = vmatpush1.msra.mxu0 0.0
      %342 = vmatprep.subr.mxu0 0.0
      %343 = vmatpush1.msra.mxu0 %v220
      %344 = vmatprep.subr.mxu0 0.0
      %345 = vmatpush1.msra.mxu0 %v219
      %346 = vmatprep.subr.mxu0 0.0
      %347 = vmatpush1.msra.mxu0 %v218
      %348 = vmatprep.subr.mxu0 0.0
      %349 = vmatpush1.msra.mxu0 %v217
      %350 = vmatprep.subr.mxu0 0.0
      %351 = vmatpush2.msra.mxu0 0.0
      %352 = vmatprep.subr.mxu0 0.0
      %353 = vmatpush2.msra.mxu0 0.0
      %354 = vmatprep.subr.mxu0 0.0
      %355 = vmatpush2.msra.mxu0 0.0
      %356 = vmatprep.subr.mxu0 0.0
      %357 = vmatpush2.msra.mxu0 0.0
      %358 = vmatprep.subr.mxu0 0.0
      %359 = vmatpush2.msra.mxu0 0.0
      %360 = vmatprep.subr.mxu0 0.0
      %361 = vmatpush2.msra.mxu0 0.0
      %362 = vmatprep.subr.mxu0 0.0
      %363 = vmatpush2.msra.mxu0 0.0
      %364 = vmatprep.subr.mxu0 0.0
      %365 = vmatpush2.msra.mxu0 0.0
      %366 = vmatprep.subr.mxu0 0.0
      %367 = vmatpush2.msra.mxu0 0.0
      %368 = vmatprep.subr.mxu0 0.0
      %369 = vmatpush2.msra.mxu0 0.0
      %370 = vmatprep.subr.mxu0 0.0
      %371 = vmatpush2.msra.mxu0 0.0
      %372 = vmatprep.subr.mxu0 0.0
      %373 = vmatpush2.msra.mxu0 0.0
      %374 = vmatprep.subr.mxu0 0.0
      %375 = vmatpush2.msra.mxu0 0.0
      %376 = vmatprep.subr.mxu0 0.0
      %377 = vmatpush2.msra.mxu0 0.0
      %378 = vmatprep.subr.mxu0 0.0
      %379 = vmatpush2.msra.mxu0 0.0
      %380 = vmatprep.subr.mxu0 0.0
      %381 = vmatpush2.msra.mxu0 0.0
      %382 = vmatprep.mubr.f32.mxu0 0.0
      %383 = vmatmul.mubr.f32.gmra.mxu0 %v313
      %v384 = vpop.f32.mrf.mxu0
      %v385 = vadd.f32 %v304, %v384
      %v386 = vpop.f32.mrf.mxu0
      %387 = vmatprep.mubr.f32.mxu0 0.0
      %388 = vmatmul.mubr.f32.gmra.mxu0 %v316
      %v389 = vpop.f32.mrf.mxu0
      %v390 = vadd.f32 %v309, %v389
      %v391 = vpop.f32.mrf.mxu0
      %392 = vdwg.mxu0
      %v393 = vld [vmem:[%s211 + $0x2] sm:$0xff]
      %v394 = vld [vmem:[%s211 + $0xa] sm:$0x7f]
      %s395 = sadd.s32 %s214, 2
      %s396 = smul.u32 %s395, 32
      %s397 = scalar_lea.vmem %s1, %s396
      %v398 = vld [vmem:[%s397] sm:$0xff]
      %v399 = vld [vmem:[%s397 + $0x8] sm:$0xff]
      %v400 = vld [vmem:[%s397 + $0x10] sm:$0xff]
      %v401 = vld [vmem:[%s397 + $0x18] sm:$0xff]
      %v403 = vsel %vm230, %v393, 0
      %v406 = vsel %vm230, %v394, 0
      %408 = vmatprep.subr.mxu0 0.0
      %409 = vmatpush1.msra.mxu0 0.0
      %410 = vmatprep.subr.mxu0 0.0
      %411 = vmatpush1.msra.mxu0 0.0
      %412 = vmatprep.subr.mxu0 0.0
      %413 = vmatpush1.msra.mxu0 0.0
      %414 = vmatprep.subr.mxu0 0.0
      %415 = vmatpush1.msra.mxu0 0.0
      %416 = vmatprep.subr.mxu0 0.0
      %417 = vmatpush1.msra.mxu0 0.0
      %418 = vmatprep.subr.mxu0 0.0
      %419 = vmatpush1.msra.mxu0 0.0
      %420 = vmatprep.subr.mxu0 0.0
      %421 = vmatpush1.msra.mxu0 0.0
      %422 = vmatprep.subr.mxu0 0.0
      %423 = vmatpush1.msra.mxu0 0.0
      %424 = vmatprep.subr.mxu0 0.0
      %425 = vmatpush1.msra.mxu0 0.0
      %426 = vmatprep.subr.mxu0 0.0
      %427 = vmatpush1.msra.mxu0 0.0
      %428 = vmatprep.subr.mxu0 0.0
      %429 = vmatpush1.msra.mxu0 0.0
      %430 = vmatprep.subr.mxu0 0.0
      %431 = vmatpush1.msra.mxu0 0.0
      %432 = vmatprep.subr.mxu0 0.0
      %433 = vmatpush1.msra.mxu0 %v401
      %434 = vmatprep.subr.mxu0 0.0
      %435 = vmatpush1.msra.mxu0 %v400
      %436 = vmatprep.subr.mxu0 0.0
      %437 = vmatpush1.msra.mxu0 %v399
      %438 = vmatprep.subr.mxu0 0.0
      %439 = vmatpush1.msra.mxu0 %v398
      %440 = vmatprep.subr.mxu0 0.0
      %441 = vmatpush2.msra.mxu0 0.0
      %442 = vmatprep.subr.mxu0 0.0
      %443 = vmatpush2.msra.mxu0 0.0
      %444 = vmatprep.subr.mxu0 0.0
      %445 = vmatpush2.msra.mxu0 0.0
      %446 = vmatprep.subr.mxu0 0.0
      %447 = vmatpush2.msra.mxu0 0.0
      %448 = vmatprep.subr.mxu0 0.0
      %449 = vmatpush2.msra.mxu0 0.0
      %450 = vmatprep.subr.mxu0 0.0
      %451 = vmatpush2.msra.mxu0 0.0
      %452 = vmatprep.subr.mxu0 0.0
      %453 = vmatpush2.msra.mxu0 0.0
      %454 = vmatprep.subr.mxu0 0.0
      %455 = vmatpush2.msra.mxu0 0.0
      %456 = vmatprep.subr.mxu0 0.0
      %457 = vmatpush2.msra.mxu0 0.0
      %458 = vmatprep.subr.mxu0 0.0
      %459 = vmatpush2.msra.mxu0 0.0
      %460 = vmatprep.subr.mxu0 0.0
      %461 = vmatpush2.msra.mxu0 0.0
      %462 = vmatprep.subr.mxu0 0.0
      %463 = vmatpush2.msra.mxu0 0.0
      %464 = vmatprep.subr.mxu0 0.0
      %465 = vmatpush2.msra.mxu0 0.0
      %466 = vmatprep.subr.mxu0 0.0
      %467 = vmatpush2.msra.mxu0 0.0
      %468 = vmatprep.subr.mxu0 0.0
      %469 = vmatpush2.msra.mxu0 0.0
      %470 = vmatprep.subr.mxu0 0.0
      %471 = vmatpush2.msra.mxu0 0.0
      %472 = vmatprep.mubr.f32.mxu0 0.0
      %473 = vmatmul.mubr.f32.gmra.mxu0 %v403
      %v474 = vpop.f32.mrf.mxu0
      %v475 = vadd.f32 0.0, %v474
      %v476 = vpop.f32.mrf.mxu0
      %477 = vmatprep.mubr.f32.mxu0 0.0
      %478 = vmatmul.mubr.f32.gmra.mxu0 %v406
      %v479 = vpop.f32.mrf.mxu0
      %v480 = vadd.f32 0.0, %v479
      %v481 = vpop.f32.mrf.mxu0
      %482 = vdwg.mxu0
      %v483 = vadd.f32 %v385, %v475
      %v484 = vadd.f32 %v390, %v480
      %v485 = vld [vmem:[%s211 + $0x3] sm:$0xff]
      %v486 = vld [vmem:[%s211 + $0xb] sm:$0x7f]
      %s487 = sadd.s32 %s214, 3
      %s488 = smul.u32 %s487, 32
      %s489 = scalar_lea.vmem %s1, %s488
      %v490 = vld [vmem:[%s489] sm:$0xff]
      %v491 = vld [vmem:[%s489 + $0x8] sm:$0xff]
      %v492 = vld [vmem:[%s489 + $0x10] sm:$0xff]
      %v493 = vld [vmem:[%s489 + $0x18] sm:$0xff]
      %v495 = vsel %vm230, %v485, 0
      %v498 = vsel %vm230, %v486, 0
      %500 = vmatprep.subr.mxu0 0.0
      %501 = vmatpush1.msra.mxu0 0.0
      %502 = vmatprep.subr.mxu0 0.0
      %503 = vmatpush1.msra.mxu0 0.0
      %504 = vmatprep.subr.mxu0 0.0
      %505 = vmatpush1.msra.mxu0 0.0
      %506 = vmatprep.subr.mxu0 0.0
      %507 = vmatpush1.msra.mxu0 0.0
      %508 = vmatprep.subr.mxu0 0.0
      %509 = vmatpush1.msra.mxu0 0.0
      %510 = vmatprep.subr.mxu0 0.0
      %511 = vmatpush1.msra.mxu0 0.0
      %512 = vmatprep.subr.mxu0 0.0
      %513 = vmatpush1.msra.mxu0 0.0
      %514 = vmatprep.subr.mxu0 0.0
      %515 = vmatpush1.msra.mxu0 0.0
      %516 = vmatprep.subr.mxu0 0.0
      %517 = vmatpush1.msra.mxu0 0.0
      %518 = vmatprep.subr.mxu0 0.0
      %519 = vmatpush1.msra.mxu0 0.0
      %520 = vmatprep.subr.mxu0 0.0
      %521 = vmatpush1.msra.mxu0 0.0
      %522 = vmatprep.subr.mxu0 0.0
      %523 = vmatpush1.msra.mxu0 0.0
      %524 = vmatprep.subr.mxu0 0.0
      %525 = vmatpush1.msra.mxu0 %v493
      %526 = vmatprep.subr.mxu0 0.0
      %527 = vmatpush1.msra.mxu0 %v492
      %528 = vmatprep.subr.mxu0 0.0
      %529 = vmatpush1.msra.mxu0 %v491
      %530 = vmatprep.subr.mxu0 0.0
      %531 = vmatpush1.msra.mxu0 %v490
      %532 = vmatprep.subr.mxu0 0.0
      %533 = vmatpush2.msra.mxu0 0.0
      %534 = vmatprep.subr.mxu0 0.0
      %535 = vmatpush2.msra.mxu0 0.0
      %536 = vmatprep.subr.mxu0 0.0
      %537 = vmatpush2.msra.mxu0 0.0
      %538 = vmatprep.subr.mxu0 0.0
      %539 = vmatpush2.msra.mxu0 0.0
      %540 = vmatprep.subr.mxu0 0.0
      %541 = vmatpush2.msra.mxu0 0.0
      %542 = vmatprep.subr.mxu0 0.0
      %543 = vmatpush2.msra.mxu0 0.0
      %544 = vmatprep.subr.mxu0 0.0
      %545 = vmatpush2.msra.mxu0 0.0
      %546 = vmatprep.subr.mxu0 0.0
      %547 = vmatpush2.msra.mxu0 0.0
      %548 = vmatprep.subr.mxu0 0.0
      %549 = vmatpush2.msra.mxu0 0.0
      %550 = vmatprep.subr.mxu0 0.0
      %551 = vmatpush2.msra.mxu0 0.0
      %552 = vmatprep.subr.mxu0 0.0
      %553 = vmatpush2.msra.mxu0 0.0
      %554 = vmatprep.subr.mxu0 0.0
      %555 = vmatpush2.msra.mxu0 0.0
      %556 = vmatprep.subr.mxu0 0.0
      %557 = vmatpush2.msra.mxu0 0.0
      %558 = vmatprep.subr.mxu0 0.0
      %559 = vmatpush2.msra.mxu0 0.0
      %560 = vmatprep.subr.mxu0 0.0
      %561 = vmatpush2.msra.mxu0 0.0
      %562 = vmatprep.subr.mxu0 0.0
      %563 = vmatpush2.msra.mxu0 0.0
      %564 = vmatprep.mubr.f32.mxu0 0.0
      %565 = vmatmul.mubr.f32.gmra.mxu0 %v495
      %v566 = vpop.f32.mrf.mxu0
      %v567 = vadd.f32 0.0, %v566
      %v568 = vpop.f32.mrf.mxu0
      %569 = vmatprep.mubr.f32.mxu0 0.0
      %570 = vmatmul.mubr.f32.gmra.mxu0 %v498
      %v571 = vpop.f32.mrf.mxu0
      %v572 = vadd.f32 0.0, %v571
      %v573 = vpop.f32.mrf.mxu0
      %574 = vdwg.mxu0
      %v575 = vadd.f32 %v483, %v567
      %v576 = vadd.f32 %v484, %v572
      %v577 = vld [vmem:[#allocation2] sm:$0xff]
      %v578 = vld [vmem:[#allocation2 + $0x8] sm:$0x7f]
      %v579 = vadd.f32 %v577, %v575
      %v580 = vadd.f32 %v578, %v576
      %vm581 = vcmask 523264
      %582 = vst.msk [vmem:[#allocation2] sm:$0xff] %vm581, %v579
      %vm583 = vcmask 522240
      %584 = vst.msk [vmem:[#allocation2 + $0x8] sm:$0x7f] %vm583, %v580
      %p585 = scmp.eq.s32.totalorder %s21, 3
      // Predicated region
      $region37: #{content_encoder_forward.36} parent=31 // pred_check
        %p586 = pneg %p585
      $region38: #{content_encoder_forward.36} parent=31 // pred_check_branch
        %588 = sbr.rel (%p586) target = $region40
      $region39: #{content_encoder_forward.36} parent=31 // pred_region
        %v589 = vld [vmem:[#allocation2] sm:$0xff]
        %v590 = vld [vmem:[#allocation2 + $0x8] sm:$0x7f]
        %v591 = vld [vmem:[%s2] sm:$0x1]
        %v593 = vlaneseq
        %v594 = vshrl.u32 %v593, 7
        %v595 = vsub.s32 0, %v594
        %v596 = vrot.slane %v591, %v595
        %v598 = vadd.f32 %v589, %v596
        %v599 = vadd.f32 %v590, %v596
        %600 = vst.msk [vmem:[%s199] sm:$0xff] %vm581, %v598
        %601 = vst.msk [vmem:[%s199 + $0x8] sm:$0x7f] %vm583, %v599
      $region40: #{content_encoder_forward.36} parent=31 // pred_fallthru
        _
      %p602 = scmp.lt.s32.totalorder %s19, 1
      %s603 = scalar_select %p602, %s19, 1
      %p604 = scmp.lt.s32.totalorder %s20, 7
      %s605 = scalar_select %p604, %s20, 7
      %s606 = smul.addr %s605, 2
      %s607 = smul.addr %s603, 16
      %s608 = sadd.s32 %s606, %s607
      %s609 = smul.addr %s608, 8
      %s610 = scalar_lea.vmem %s3, %s609
      // Predicated region
      $region41: #{content_encoder_forward.36} parent=31 // pred_check
        %p611 = pneg %p121
      $region42: #{content_encoder_forward.36} parent=31 // pred_check_branch
        %613 = sbr.rel (%p611) target = $region44
      $region43: #{content_encoder_forward.36} parent=31 // pred_region
        _
      $region44: #{content_encoder_forward.36} parent=31 // pred_fallthru
        _
    $region32: #{content_encoder_forward.36} parent=5 // pred_fallthru
      _
    %p614 = scmp.le.s32.totalorder 2, %s9
    // Predicated region
    $region45: #{content_encoder_forward.36} parent=5 // pred_check
      %p615 = pneg %p614
    $region46: #{content_encoder_forward.36} parent=5 // pred_check_branch
      %617 = sbr.rel (%p615) target = $region48
    $region47: #{content_encoder_forward.36} parent=5 // pred_region
      %s618 = ssub.s32 %s9, 2
      // Predicated region
      $region49: #{content_encoder_forward.36} parent=47 // pred_check
        %p619 = pneg %p127
      $region50: #{content_encoder_forward.36} parent=47 // pred_check_branch
        %621 = sbr.rel (%p619) target = $region52
      $region51: #{content_encoder_forward.36} parent=47 // pred_region
        %p622 = scmp.lt.s32.totalorder %s22, 1
        %s623 = scalar_select %p622, %s22, 1
        %p624 = scmp.lt.s32.totalorder %s23, 7
        %s625 = scalar_select %p624, %s23, 7
        %s626 = smul.addr %s625, 2
        %s627 = smul.addr %s623, 16
        %s628 = sadd.s32 %s626, %s627
        %s629 = smul.addr %s628, 8
        %s630 = scalar_lea.vmem %s3, %s629
      $region52: #{content_encoder_forward.36} parent=47 // pred_fallthru
        _
    $region48: #{content_encoder_forward.36} parent=5 // pred_fallthru
      _
  $region6: #{content_encoder_forward.36} parent=0 // loop_footer
    %s13 = sadd.s32 1, %s9
  $region7: #{content_encoder_forward.36} parent=0 // loop_footer_branch
    %8 = sbr.rel target = $region3
  $region8: #{content_encoder_forward.36} parent=0 // loop_exit
    _

// kernel: content_encoder_forward.37
$region0: #{content_encoder_forward.37}
  #allocation0 [shape = 'u32[]', space=smem, size = 0x4, offset = 0x4, fixed_abs, tag = 'smem constant byte address 0x4 - core index']
  #allocation1 [shape = 'u32[144,128]{1,0:T(1,128)}', space=vmem, size = 0x12000, scoped, tag = 'internal scratch']
  #allocation2 [shape = 'f32[1,64]{1,0:T(1,128)}', space=vmem, size = 0x200, scoped, tag = 'scratch operand']
  #allocation3 [shape = 'f32[1,64]{1,0:T(1,128)}', space=vmem, size = 0x200, scoped, tag = 'scratch operand']
  %s0 = inlined_call_operand.vmem [shape: f32[2,64,64], index: 0, kind: input, shape index: {}]
  %s1 = inlined_call_operand.vmem [shape: f32[1,64], index: 1, kind: input, shape index: {}]
  %s2 = inlined_call_operand.vmem [shape: f32[1,64], index: 2, kind: input, shape index: {}]
  %s3 = inlined_call_operand.vmem [shape: f32[2,1,64], index: 3, kind: output, shape index: {0}]
  %s4 = inlined_call_operand.vmem [shape: f32[2,1,64], index: 4, kind: output, shape index: {1}]
  %5 = xla_tuple %s3, %s4
  %s6 = sld [smem:[#allocation0]]
  $region61: #{content_encoder_forward.37} parent=0
    _
  %s8 = ssub.s32 1, %s6
  %s9 = scalar_select 0, %s8, %s6
  loop: start=0, step=1, limit=4
  $region2: #{content_encoder_forward.37} parent=0 // loop_pre_header
    _
  $region3: #{content_encoder_forward.37} parent=0 // loop_header
    %s11 = sphi 0, %s15
    %p12 = scmp.ge.s32.totalorder %s11, 4
    %s18 = sphi 0, %s30
    %s19 = sphi 0, %s26
    %s20 = sphi 0, %s18
    %s21 = sphi 0, %s19
    %s22 = sphi 0, %s20
    %s23 = sphi 0, %s21
    %s35 = sphi 0, %s37
    %s38 = sphi 0, %s35
    %s39 = sphi 0, %s38
    %s55 = sphi 0, %s39
    %s59 = sphi 0, %s59
    %s61 = sphi 0, %s59
    %s62 = sphi 0, %s61
    %s76 = sphi 0, %s62
    %s80 = sphi 0, %s80
    %s82 = sphi 0, %s80
    %s83 = sphi 0, %s82
    %s97 = sphi 0, %s83
    %s103 = sphi 0, %s105
    %s106 = sphi 0, %s103
    %s107 = sphi 0, %s106
    %s123 = sphi 0, %s107
    %s129 = sphi 0, %s131
    %s132 = sphi 0, %s129
    %s133 = sphi 0, %s132
    %s149 = sphi 0, %s133
  $region4: #{content_encoder_forward.37} parent=0 // loop_header_branch
    %14 = sbr.rel (%p12) target = $region8
  $region5: #{content_encoder_forward.37} parent=0 // loop_body
    %s16 = ssub.s32 %s11, 1
    %s17 = ssub.s32 %s11, 2
    %s24 = sadd.s32 1, %s19
    %p25 = scmp.ge.s32.totalorder %s24, 1
    %s26 = scalar_select %p25, 0, %s24
    %s27 = sadd.s32 1, %s18
    %s28 = scalar_select %p25, %s27, %s18
    %p29 = scmp.ge.s32.totalorder %s28, 2
    %s30 = scalar_select %p29, 0, %s28
    %s31 = ssub.s32 %s18, %s30
    %s32 = ssub.s32 %s19, %s26
    %s33 = sor.u32 %s31, %s32
    %p34 = scmp.eq.s32.totalorder %s33, 0
    %s36 = sadd.s32 %s35, 1
    %s37 = scalar_select %p34, %s35, %s36
    %p40 = pneg %p34
    %p41 = scmp.eq.s32.totalorder %s11, 1
    %p42 = por %p40, %p41
    %p43 = scmp.ne.s32.totalorder %s35, %s38
    %p44 = scmp.eq.s32.totalorder %s11, 0
    %p45 = por %p43, %p44
    %p46 = scmp.ne.s32.totalorder %s35, %s38
    %p47 = scmp.eq.s32.totalorder %s16, 1
    %p48 = por %p46, %p47
    %p49 = scmp.ne.s32.totalorder %s38, %s39
    %p50 = scmp.eq.s32.totalorder %s16, 0
    %p51 = por %p49, %p50
    %p52 = scmp.ne.s32.totalorder %s38, %s39
    %p53 = scmp.eq.s32.totalorder %s17, 1
    %p54 = por %p52, %p53
    %p56 = scmp.ne.s32.totalorder %s39, %s55
    %p57 = scmp.eq.s32.totalorder %s17, 0
    %p58 = por %p56, %p57
    %s60 = sadd.s32 %s59, 1
    %p63 = scmp.eq.s32.totalorder %s11, 1
    %p64 = scmp.ne.s32.totalorder %s59, %s61
    %p65 = scmp.eq.s32.totalorder %s11, 0
    %p66 = por %p64, %p65
    %p67 = scmp.ne.s32.totalorder %s59, %s61
    %p68 = scmp.eq.s32.totalorder %s16, 1
    %p69 = por %p67, %p68
    %p70 = scmp.ne.s32.totalorder %s61, %s62
    %p71 = scmp.eq.s32.totalorder %s16, 0
    %p72 = por %p70, %p71
    %p73 = scmp.ne.s32.totalorder %s61, %s62
    %p74 = scmp.eq.s32.totalorder %s17, 1
    %p75 = por %p73, %p74
    %p77 = scmp.ne.s32.totalorder %s62, %s76
    %p78 = scmp.eq.s32.totalorder %s17, 0
    %p79 = por %p77, %p78
    %s81 = sadd.s32 %s80, 1
    %p84 = scmp.eq.s32.totalorder %s11, 1
    %p85 = scmp.ne.s32.totalorder %s80, %s82
    %p86 = scmp.eq.s32.totalorder %s11, 0
    %p87 = por %p85, %p86
    %p88 = scmp.ne.s32.totalorder %s80, %s82
    %p89 = scmp.eq.s32.totalorder %s16, 1
    %p90 = por %p88, %p89
    %p91 = scmp.ne.s32.totalorder %s82, %s83
    %p92 = scmp.eq.s32.totalorder %s16, 0
    %p93 = por %p91, %p92
    %p94 = scmp.ne.s32.totalorder %s82, %s83
    %p95 = scmp.eq.s32.totalorder %s17, 1
    %p96 = por %p94, %p95
    %p98 = scmp.ne.s32.totalorder %s83, %s97
    %p99 = scmp.eq.s32.totalorder %s17, 0
    %p100 = por %p98, %p99
    %s101 = ssub.s32 %s18, %s30
    %p102 = scmp.eq.s32.totalorder %s101, 0
    %s104 = sadd.s32 %s103, 1
    %s105 = scalar_select %p102, %s103, %s104
    %p108 = pneg %p102
    %p109 = scmp.eq.s32.totalorder %s11, 1
    %p110 = por %p108, %p109
    %p111 = scmp.ne.s32.totalorder %s103, %s106
    %p112 = scmp.eq.s32.totalorder %s11, 0
    %p113 = por %p111, %p112
    %p114 = scmp.ne.s32.totalorder %s103, %s106
    %p115 = scmp.eq.s32.totalorder %s16, 1
    %p116 = por %p114, %p115
    %p117 = scmp.ne.s32.totalorder %s106, %s107
    %p118 = scmp.eq.s32.totalorder %s16, 0
    %p119 = por %p117, %p118
    %p120 = scmp.ne.s32.totalorder %s106, %s107
    %p121 = scmp.eq.s32.totalorder %s17, 1
    %p122 = por %p120, %p121
    %p124 = scmp.ne.s32.totalorder %s107, %s123
    %p125 = scmp.eq.s32.totalorder %s17, 0
    %p126 = por %p124, %p125
    %s127 = ssub.s32 %s18, %s30
    %p128 = scmp.eq.s32.totalorder %s127, 0
    %s130 = sadd.s32 %s129, 1
    %s131 = scalar_select %p128, %s129, %s130
    %p134 = pneg %p128
    %p135 = scmp.eq.s32.totalorder %s11, 1
    %p136 = por %p134, %p135
    %p137 = scmp.ne.s32.totalorder %s129, %s132
    %p138 = scmp.eq.s32.totalorder %s11, 0
    %p139 = por %p137, %p138
    %p140 = scmp.ne.s32.totalorder %s129, %s132
    %p141 = scmp.eq.s32.totalorder %s16, 1
    %p142 = por %p140, %p141
    %p143 = scmp.ne.s32.totalorder %s132, %s133
    %p144 = scmp.eq.s32.totalorder %s16, 0
    %p145 = por %p143, %p144
    %p146 = scmp.ne.s32.totalorder %s132, %s133
    %p147 = scmp.eq.s32.totalorder %s17, 1
    %p148 = por %p146, %p147
    %p150 = scmp.ne.s32.totalorder %s133, %s149
    %p151 = scmp.eq.s32.totalorder %s17, 0
    %p152 = por %p150, %p151
    %p153 = scmp.le.s32.totalorder 1, %s11
    %p154 = scmp.lt.s32.totalorder %s11, 3
    %p155 = pnand %p153, %p154
    %p156 = pneg %p155
    // Predicated region
    $region9: #{content_encoder_forward.37} parent=5 // pred_check
      _
    $region10: #{content_encoder_forward.37} parent=5 // pred_check_branch
      %158 = sbr.rel (%p155) target = $region12
    $region11: #{content_encoder_forward.37} parent=5 // pred_region
      %s159 = ssub.s32 %s11, 1
      // Predicated region
      $region13: #{content_encoder_forward.37} parent=11 // pred_check
        %p160 = pneg %p72
      $region14: #{content_encoder_forward.37} parent=11 // pred_check_branch
        %162 = sbr.rel (%p160) target = $region16
      $region15: #{content_encoder_forward.37} parent=11 // pred_region
        _
      $region16: #{content_encoder_forward.37} parent=11 // pred_fallthru
        _
      // Predicated region
      $region17: #{content_encoder_forward.37} parent=11 // pred_check
        %p163 = pneg %p93
      $region18: #{content_encoder_forward.37} parent=11 // pred_check_branch
        %165 = sbr.rel (%p163) target = $region20
      $region19: #{content_encoder_forward.37} parent=11 // pred_region
        _
      $region20: #{content_encoder_forward.37} parent=11 // pred_fallthru
        _
    $region12: #{content_encoder_forward.37} parent=5 // pred_fallthru
      _
    %p166 = scmp.lt.s32.totalorder %s11, 2
    // Predicated region
    $region21: #{content_encoder_forward.37} parent=5 // pred_check
      %p167 = pneg %p166
    $region22: #{content_encoder_forward.37} parent=5 // pred_check_branch
      %169 = sbr.rel (%p167) target = $region24
    $region23: #{content_encoder_forward.37} parent=5 // pred_region
      // Predicated region
      $region25: #{content_encoder_forward.37} parent=23 // pred_check
        %p170 = pneg %p45
      $region26: #{content_encoder_forward.37} parent=23 // pred_check_branch
        %172 = sbr.rel (%p170) target = $region28
      $region27: #{content_encoder_forward.37} parent=23 // pred_region
        %s173 = smul.u32 8, %s19
        %p174 = scmp.lt.s32.totalorder %s18, 1
        %s175 = scalar_select %p174, %s18, 1
        %p176 = scmp.lt.s32.totalorder %s173, 7
        %s177 = scalar_select %p176, %s173, 7
        %s178 = smul.addr %s175, 8
        %s179 = sadd.s32 %s177, %s178
        %s180 = smul.addr %s179, 8
        %s181 = scalar_lea.vmem %s0, %s180
        %s182 = smul.u32 8, %s19
      $region28: #{content_encoder_forward.37} parent=23 // pred_fallthru
        _
    $region24: #{content_encoder_forward.37} parent=5 // pred_fallthru
      _
    %p183 = scmp.le.s32.totalorder 1, %s11
    %p184 = scmp.lt.s32.totalorder %s11, 3
    %p185 = pnand %p183, %p184
    %p186 = pneg %p185
    // Predicated region
    $region29: #{content_encoder_forward.37} parent=5 // pred_check
      _
    $region30: #{content_encoder_forward.37} parent=5 // pred_check_branch
      %188 = sbr.rel (%p185) target = $region32
    $region31: #{content_encoder_forward.37} parent=5 // pred_region
      %s189 = ssub.s32 %s11, 1
      %s190 = smul.u32 8, %s21
      %p191 = scmp.lt.s32.totalorder %s20, 1
      %s192 = scalar_select %p191, %s20, 1
      %p193 = scmp.lt.s32.totalorder %s190, 7
      %s194 = scalar_select %p193, %s190, 7
      %s195 = smul.addr %s192, 8
      %s196 = sadd.s32 %s194, %s195
      %s197 = smul.addr %s196, 8
      %s198 = scalar_lea.vmem %s0, %s197
      %p199 = pneg %p51
      %p200 = pneg %p48
      %p201 = pneg %p72
      %p202 = pneg %p69
      %p203 = pneg %p93
      %p204 = pneg %p90
      %p205 = pneg %p119
      %p206 = pneg %p116
      %p207 = scmp.lt.s32.totalorder %s20, 1
      %s208 = scalar_select %p207, %s20, 1
      %s209 = scalar_lea.vmem %s3, %s208
      %p210 = pneg %p145
      %p211 = pneg %p142
      %p212 = scmp.lt.s32.totalorder %s20, 1
      %s213 = scalar_select %p212, %s20, 1
      %s214 = scalar_lea.vmem %s4, %s213
      %s215 = smul.u32 8, %s21
      %p216 = scmp.lt.s32.totalorder %s20, 1
      %s217 = scalar_select %p216, %s20, 1
      %p218 = scmp.lt.s32.totalorder %s215, 7
      %s219 = scalar_select %p218, %s215, 7
      %s220 = smul.addr %s217, 8
      %s221 = sadd.s32 %s219, %s220
      %s222 = smul.addr %s221, 8
      %s223 = scalar_lea.vmem %s0, %s222
      %s224 = smul.u32 8, %s21
      %p225 = scmp.lt.s32.totalorder %s20, 1
      %s226 = scalar_select %p225, %s20, 1
      %s227 = scalar_lea.vmem %s3, %s226
      %p228 = scmp.lt.s32.totalorder %s20, 1
      %s229 = scalar_select %p228, %s20, 1
      %s230 = scalar_lea.vmem %s4, %s229
      %p231 = scmp.eq.s32.totalorder %s21, 0
      // Predicated region
      $region33: #{content_encoder_forward.37} parent=31 // pred_check
        %p232 = pneg %p231
      $region34: #{content_encoder_forward.37} parent=31 // pred_check_branch
        %234 = sbr.rel (%p232) target = $region36
      $region35: #{content_encoder_forward.37} parent=31 // pred_region
        %vm235 = vcmask 516096
        %236 = vst.msk [vmem:[#allocation2] sm:$0x1] %vm235, 0.0
        %237 = vst.msk [vmem:[#allocation3] sm:$0x1] %vm235, 0.0
      $region36: #{content_encoder_forward.37} parent=31 // pred_fallthru
        _
      %v238 = vld [vmem:[%s223] sm:$0xff]
      %v239 = vld [vmem:[%s223 + $0x8] sm:$0xff]
      %v240 = vld [vmem:[%s223 + $0x10] sm:$0xff]
      %v241 = vld [vmem:[%s223 + $0x18] sm:$0xff]
      %v242 = vld [vmem:[%s223 + $0x20] sm:$0xff]
      %v243 = vld [vmem:[%s223 + $0x28] sm:$0xff]
      %v244 = vld [vmem:[%s223 + $0x30] sm:$0xff]
      %v245 = vld [vmem:[%s223 + $0x38] sm:$0xff]
      %v246 = vld [vmem:[#allocation2] sm:$0x1]
      %vm247 = vcmask 523264
      %v248 = vsel %vm247, %v238, 0.0
      %v249 = vsel %vm247, %v239, 0.0
      %v250 = vadd.f32 %v248, %v249
      %v251 = vsel %vm247, %v240, 0.0
      %v252 = vadd.f32 %v250, %v251
      %v253 = vsel %vm247, %v241, 0.0
      %v254 = vadd.f32 %v252, %v253
      %v255 = vsel %vm247, %v242, 0.0
      %v256 = vadd.f32 %v254, %v255
      %v257 = vsel %vm247, %v243, 0.0
      %v258 = vadd.f32 %v256, %v257
      %v259 = vsel %vm247, %v244, 0.0
      %v260 = vadd.f32 %v258, %v259
      %v261 = vsel %vm247, %v245, 0.0
      %v262 = vadd.f32 %v260, %v261
      %v263 = vrot.slane %v262, 4
      %v264 = vadd.f32 %v262, %v263
      %v265 = vrot.slane %v264, 2
      %v266 = vadd.f32 %v264, %v265
      %v267 = vrot.slane %v266, 1
      %v268 = vadd.f32 %v266, %v267
      %v269 = vadd.f32 %v246, %v268
      %vm270 = vcmask 516096
      %271 = vst.msk [vmem:[#allocation2] sm:$0x1] %vm270, %v269
      %v272 = vld [vmem:[#allocation3] sm:$0x1]
      %v273 = vmul.f32 %v238, %v238
      %v274 = vmul.f32 %v239, %v239
      %v275 = vmul.f32 %v240, %v240
      %v276 = vmul.f32 %v241, %v241
      %v277 = vmul.f32 %v242, %v242
      %v278 = vmul.f32 %v243, %v243
      %v279 = vmul.f32 %v244, %v244
      %v280 = vmul.f32 %v245, %v245
      %v281 = vsel %vm247, %v273, 0.0
      %v282 = vsel %vm247, %v274, 0.0
      %v283 = vadd.f32 %v281, %v282
      %v284 = vsel %vm247, %v275, 0.0
      %v285 = vadd.f32 %v283, %v284
      %v286 = vsel %vm247, %v276, 0.0
      %v287 = vadd.f32 %v285, %v286
      %v288 = vsel %vm247, %v277, 0.0
      %v289 = vadd.f32 %v287, %v288
      %v290 = vsel %vm247, %v278, 0.0
      %v291 = vadd.f32 %v289, %v290
      %v292 = vsel %vm247, %v279, 0.0
      %v293 = vadd.f32 %v291, %v292
      %v294 = vsel %vm247, %v280, 0.0
      %v295 = vadd.f32 %v293, %v294
      %v296 = vrot.slane %v295, 4
      %v297 = vadd.f32 %v295, %v296
      %v298 = vrot.slane %v297, 2
      %v299 = vadd.f32 %v297, %v298
      %v300 = vrot.slane %v299, 1
      %v301 = vadd.f32 %v299, %v300
      %v302 = vadd.f32 %v272, %v301
      %303 = vst.msk [vmem:[#allocation3] sm:$0x1] %vm270, %v302
      // Predicated region
      $region37: #{content_encoder_forward.37} parent=31 // pred_check
        %p304 = pneg %p231
      $region38: #{content_encoder_forward.37} parent=31 // pred_check_branch
        %306 = sbr.rel (%p304) target = $region40
      $region39: #{content_encoder_forward.37} parent=31 // pred_region
        %v307 = vld [vmem:[#allocation2] sm:$0x1]
        %v308 = vmul.f32 %v307, 0.015625
        %v309 = vld [vmem:[#allocation3] sm:$0x1]
        %v310 = vmul.f32 %v309, 0.015625
        %v311 = vmul.f32 %v308, %v308
        %v312 = vsub.f32 %v310, %v311
        %v313 = vadd.f32 %v312, 1e-05
        %v314 = vrsqrt.pop %v313
        %v315 = vld [vmem:[%s1] sm:$0x1]
        %v316 = vmul.f32 %v315, %v314
        %317 = vst.msk [vmem:[%s227] sm:$0x1] %vm270, %v316
        %v318 = vld [vmem:[%s2] sm:$0x1]
        %v319 = vmul.f32 %v308, %v316
        %v320 = vsub.f32 %v318, %v319
        %321 = vst.msk [vmem:[%s230] sm:$0x1] %vm270, %v320
      $region40: #{content_encoder_forward.37} parent=31 // pred_fallthru
        _
      %p322 = scmp.lt.s32.totalorder %s20, 1
      %s323 = scalar_select %p322, %s20, 1
      %s324 = scalar_lea.vmem %s3, %s323
      %p325 = scmp.lt.s32.totalorder %s20, 1
      %s326 = scalar_select %p325, %s20, 1
      %s327 = scalar_lea.vmem %s4, %s326
      // Predicated region
      $region41: #{content_encoder_forward.37} parent=31 // pred_check
        %p328 = pneg %p116
      $region42: #{content_encoder_forward.37} parent=31 // pred_check_branch
        %330 = sbr.rel (%p328) target = $region44
      $region43: #{content_encoder_forward.37} parent=31 // pred_region
        _
      $region44: #{content_encoder_forward.37} parent=31 // pred_fallthru
        _
      // Predicated region
      $region45: #{content_encoder_forward.37} parent=31 // pred_check
        %p331 = pneg %p142
      $region46: #{content_encoder_forward.37} parent=31 // pred_check_branch
        %333 = sbr.rel (%p331) target = $region48
      $region47: #{content_encoder_forward.37} parent=31 // pred_region
        _
      $region48: #{content_encoder_forward.37} parent=31 // pred_fallthru
        _
    $region32: #{content_encoder_forward.37} parent=5 // pred_fallthru
      _
    %p334 = scmp.le.s32.totalorder 2, %s11
    // Predicated region
    $region49: #{content_encoder_forward.37} parent=5 // pred_check
      %p335 = pneg %p334
    $region50: #{content_encoder_forward.37} parent=5 // pred_check_branch
      %337 = sbr.rel (%p335) target = $region52
    $region51: #{content_encoder_forward.37} parent=5 // pred_region
      %s338 = ssub.s32 %s11, 2
      // Predicated region
      $region53: #{content_encoder_forward.37} parent=51 // pred_check
        %p339 = pneg %p122
      $region54: #{content_encoder_forward.37} parent=51 // pred_check_branch
        %341 = sbr.rel (%p339) target = $region56
      $region55: #{content_encoder_forward.37} parent=51 // pred_region
        %p342 = scmp.lt.s32.totalorder %s22, 1
        %s343 = scalar_select %p342, %s22, 1
        %s344 = scalar_lea.vmem %s3, %s343
      $region56: #{content_encoder_forward.37} parent=51 // pred_fallthru
        _
      // Predicated region
      $region57: #{content_encoder_forward.37} parent=51 // pred_check
        %p345 = pneg %p148
      $region58: #{content_encoder_forward.37} parent=51 // pred_check_branch
        %347 = sbr.rel (%p345) target = $region60
      $region59: #{content_encoder_forward.37} parent=51 // pred_region
        %p348 = scmp.lt.s32.totalorder %s22, 1
        %s349 = scalar_select %p348, %s22, 1
        %s350 = scalar_lea.vmem %s4, %s349
      $region60: #{content_encoder_forward.37} parent=51 // pred_fallthru
        _
    $region52: #{content_encoder_forward.37} parent=5 // pred_fallthru
      _
  $region6: #{content_encoder_forward.37} parent=0 // loop_footer
    %s15 = sadd.s32 1, %s11
  $region7: #{content_encoder_forward.37} parent=0 // loop_footer_branch
    %10 = sbr.rel target = $region3
  $region8: #{content_encoder_forward.37} parent=0 // loop_exit
    _

// kernel: content_encoder_forward.38
$region0: #{content_encoder_forward.38}
  #allocation0 [shape = 'u32[]', space=smem, size = 0x4, offset = 0x4, fixed_abs, tag = 'smem constant byte address 0x4 - core index']
  #allocation1 [shape = 'u32[144,128]{1,0:T(1,128)}', space=vmem, size = 0x12000, scoped, tag = 'internal scratch']
  %s0 = inlined_call_operand.vmem [shape: f32[2,32,128], index: 0, kind: input, shape index: {}]
  %s1 = inlined_call_operand.vmem [shape: f32[2,1,128], index: 1, kind: input, shape index: {}]
  %s2 = inlined_call_operand.vmem [shape: f32[2,1,128], index: 2, kind: input, shape index: {}]
  %s3 = inlined_call_operand.vmem [shape: f32[2,32,128], index: 3, kind: output, shape index: {}]
  %s4 = sld [smem:[#allocation0]]
  $region45: #{content_encoder_forward.38} parent=0
    _
  %s6 = ssub.s32 1, %s4
  %s7 = scalar_select 0, %s6, %s4
  loop: start=0, step=1, limit=4
  $region2: #{content_encoder_forward.38} parent=0 // loop_pre_header
    _
  $region3: #{content_encoder_forward.38} parent=0 // loop_header
    %s9 = sphi 0, %s13
    %p10 = scmp.ge.s32.totalorder %s9, 4
    %s16 = sphi 0, %s28
    %s17 = sphi 0, %s24
    %s18 = sphi 0, %s16
    %s19 = sphi 0, %s17
    %s20 = sphi 0, %s18
    %s21 = sphi 0, %s19
    %s33 = sphi 0, %s35
    %s36 = sphi 0, %s33
    %s37 = sphi 0, %s36
    %s53 = sphi 0, %s37
    %s59 = sphi 0, %s61
    %s62 = sphi 0, %s59
    %s63 = sphi 0, %s62
    %s79 = sphi 0, %s63
    %s85 = sphi 0, %s87
    %s88 = sphi 0, %s85
    %s89 = sphi 0, %s88
    %s105 = sphi 0, %s89
    %s113 = sphi 0, %s115
    %s116 = sphi 0, %s113
    %s117 = sphi 0, %s116
    %s133 = sphi 0, %s117
  $region4: #{content_encoder_forward.38} parent=0 // loop_header_branch
    %12 = sbr.rel (%p10) target = $region8
  $region5: #{content_encoder_forward.38} parent=0 // loop_body
    %s14 = ssub.s32 %s9, 1
    %s15 = ssub.s32 %s9, 2
    %s22 = sadd.s32 1, %s17
    %p23 = scmp.ge.s32.totalorder %s22, 1
    %s24 = scalar_select %p23, 0, %s22
    %s25 = sadd.s32 1, %s16
    %s26 = scalar_select %p23, %s25, %s16
    %p27 = scmp.ge.s32.totalorder %s26, 2
    %s28 = scalar_select %p27, 0, %s26
    %s29 = ssub.s32 %s16, %s28
    %s30 = ssub.s32 %s17, %s24
    %s31 = sor.u32 %s29, %s30
    %p32 = scmp.eq.s32.totalorder %s31, 0
    %s34 = sadd.s32 %s33, 1
    %s35 = scalar_select %p32, %s33, %s34
    %p38 = pneg %p32
    %p39 = scmp.eq.s32.totalorder %s9, 1
    %p40 = por %p38, %p39
    %p41 = scmp.ne.s32.totalorder %s33, %s36
    %p42 = scmp.eq.s32.totalorder %s9, 0
    %p43 = por %p41, %p42
    %p44 = scmp.ne.s32.totalorder %s33, %s36
    %p45 = scmp.eq.s32.totalorder %s14, 1
    %p46 = por %p44, %p45
    %p47 = scmp.ne.s32.totalorder %s36, %s37
    %p48 = scmp.eq.s32.totalorder %s14, 0
    %p49 = por %p47, %p48
    %p50 = scmp.ne.s32.totalorder %s36, %s37
    %p51 = scmp.eq.s32.totalorder %s15, 1
    %p52 = por %p50, %p51
    %p54 = scmp.ne.s32.totalorder %s37, %s53
    %p55 = scmp.eq.s32.totalorder %s15, 0
    %p56 = por %p54, %p55
    %s57 = ssub.s32 %s16, %s28
    %p58 = scmp.eq.s32.totalorder %s57, 0
    %s60 = sadd.s32 %s59, 1
    %s61 = scalar_select %p58, %s59, %s60
    %p64 = pneg %p58
    %p65 = scmp.eq.s32.totalorder %s9, 1
    %p66 = por %p64, %p65
    %p67 = scmp.ne.s32.totalorder %s59, %s62
    %p68 = scmp.eq.s32.totalorder %s9, 0
    %p69 = por %p67, %p68
    %p70 = scmp.ne.s32.totalorder %s59, %s62
    %p71 = scmp.eq.s32.totalorder %s14, 1
    %p72 = por %p70, %p71
    %p73 = scmp.ne.s32.totalorder %s62, %s63
    %p74 = scmp.eq.s32.totalorder %s14, 0
    %p75 = por %p73, %p74
    %p76 = scmp.ne.s32.totalorder %s62, %s63
    %p77 = scmp.eq.s32.totalorder %s15, 1
    %p78 = por %p76, %p77
    %p80 = scmp.ne.s32.totalorder %s63, %s79
    %p81 = scmp.eq.s32.totalorder %s15, 0
    %p82 = por %p80, %p81
    %s83 = ssub.s32 %s16, %s28
    %p84 = scmp.eq.s32.totalorder %s83, 0
    %s86 = sadd.s32 %s85, 1
    %s87 = scalar_select %p84, %s85, %s86
    %p90 = pneg %p84
    %p91 = scmp.eq.s32.totalorder %s9, 1
    %p92 = por %p90, %p91
    %p93 = scmp.ne.s32.totalorder %s85, %s88
    %p94 = scmp.eq.s32.totalorder %s9, 0
    %p95 = por %p93, %p94
    %p96 = scmp.ne.s32.totalorder %s85, %s88
    %p97 = scmp.eq.s32.totalorder %s14, 1
    %p98 = por %p96, %p97
    %p99 = scmp.ne.s32.totalorder %s88, %s89
    %p100 = scmp.eq.s32.totalorder %s14, 0
    %p101 = por %p99, %p100
    %p102 = scmp.ne.s32.totalorder %s88, %s89
    %p103 = scmp.eq.s32.totalorder %s15, 1
    %p104 = por %p102, %p103
    %p106 = scmp.ne.s32.totalorder %s89, %s105
    %p107 = scmp.eq.s32.totalorder %s15, 0
    %p108 = por %p106, %p107
    %s109 = ssub.s32 %s16, %s28
    %s110 = ssub.s32 %s17, %s24
    %s111 = sor.u32 %s109, %s110
    %p112 = scmp.eq.s32.totalorder %s111, 0
    %s114 = sadd.s32 %s113, 1
    %s115 = scalar_select %p112, %s113, %s114
    %p118 = pneg %p112
    %p119 = scmp.eq.s32.totalorder %s9, 1
    %p120 = por %p118, %p119
    %p121 = scmp.ne.s32.totalorder %s113, %s116
    %p122 = scmp.eq.s32.totalorder %s9, 0
    %p123 = por %p121, %p122
    %p124 = scmp.ne.s32.totalorder %s113, %s116
    %p125 = scmp.eq.s32.totalorder %s14, 1
    %p126 = por %p124, %p125
    %p127 = scmp.ne.s32.totalorder %s116, %s117
    %p128 = scmp.eq.s32.totalorder %s14, 0
    %p129 = por %p127, %p128
    %p130 = scmp.ne.s32.totalorder %s116, %s117
    %p131 = scmp.eq.s32.totalorder %s15, 1
    %p132 = por %p130, %p131
    %p134 = scmp.ne.s32.totalorder %s117, %s133
    %p135 = scmp.eq.s32.totalorder %s15, 0
    %p136 = por %p134, %p135
    %p137 = scmp.le.s32.totalorder 1, %s9
    %p138 = scmp.lt.s32.totalorder %s9, 3
    %p139 = pnand %p137, %p138
    %p140 = pneg %p139
    // Predicated region
    $region9: #{content_encoder_forward.38} parent=5 // pred_check
      _
    $region10: #{content_encoder_forward.38} parent=5 // pred_check_branch
      %142 = sbr.rel (%p139) target = $region12
    $region11: #{content_encoder_forward.38} parent=5 // pred_region
      %s143 = ssub.s32 %s9, 1
    $region12: #{content_encoder_forward.38} parent=5 // pred_fallthru
      _
    %p144 = scmp.lt.s32.totalorder %s9, 2
    // Predicated region
    $region13: #{content_encoder_forward.38} parent=5 // pred_check
      %p145 = pneg %p144
    $region14: #{content_encoder_forward.38} parent=5 // pred_check_branch
      %147 = sbr.rel (%p145) target = $region16
    $region15: #{content_encoder_forward.38} parent=5 // pred_region
      // Predicated region
      $region17: #{content_encoder_forward.38} parent=15 // pred_check
        %p148 = pneg %p43
      $region18: #{content_encoder_forward.38} parent=15 // pred_check_branch
        %150 = sbr.rel (%p148) target = $region20
      $region19: #{content_encoder_forward.38} parent=15 // pred_region
        %s151 = smul.u32 4, %s17
        %p152 = scmp.lt.s32.totalorder %s16, 1
        %s153 = scalar_select %p152, %s16, 1
        %p154 = scmp.lt.s32.totalorder %s151, 3
        %s155 = scalar_select %p154, %s151, 3
        %s156 = smul.addr %s153, 4
        %s157 = sadd.s32 %s155, %s156
        %s158 = smul.addr %s157, 8
        %s159 = scalar_lea.vmem %s0, %s158
        %s160 = smul.u32 4, %s17
      $region20: #{content_encoder_forward.38} parent=15 // pred_fallthru
        _
      // Predicated region
      $region21: #{content_encoder_forward.38} parent=15 // pred_check
        %p161 = pneg %p69
      $region22: #{content_encoder_forward.38} parent=15 // pred_check_branch
        %163 = sbr.rel (%p161) target = $region24
      $region23: #{content_encoder_forward.38} parent=15 // pred_region
        %p164 = scmp.lt.s32.totalorder %s16, 1
        %s165 = scalar_select %p164, %s16, 1
        %s166 = scalar_lea.vmem %s1, %s165
      $region24: #{content_encoder_forward.38} parent=15 // pred_fallthru
        _
      // Predicated region
      $region25: #{content_encoder_forward.38} parent=15 // pred_check
        %p167 = pneg %p95
      $region26: #{content_encoder_forward.38} parent=15 // pred_check_branch
        %169 = sbr.rel (%p167) target = $region28
      $region27: #{content_encoder_forward.38} parent=15 // pred_region
        %p170 = scmp.lt.s32.totalorder %s16, 1
        %s171 = scalar_select %p170, %s16, 1
        %s172 = scalar_lea.vmem %s2, %s171
      $region28: #{content_encoder_forward.38} parent=15 // pred_fallthru
        _
    $region16: #{content_encoder_forward.38} parent=5 // pred_fallthru
      _
    %p173 = scmp.le.s32.totalorder 1, %s9
    %p174 = scmp.lt.s32.totalorder %s9, 3
    %p175 = pnand %p173, %p174
    %p176 = pneg %p175
    // Predicated region
    $region29: #{content_encoder_forward.38} parent=5 // pred_check
      _
    $region30: #{content_encoder_forward.38} parent=5 // pred_check_branch
      %178 = sbr.rel (%p175) target = $region32
    $region31: #{content_encoder_forward.38} parent=5 // pred_region
      %s179 = ssub.s32 %s9, 1
      %s180 = smul.u32 4, %s19
      %p181 = scmp.lt.s32.totalorder %s18, 1
      %s182 = scalar_select %p181, %s18, 1
      %p183 = scmp.lt.s32.totalorder %s180, 3
      %s184 = scalar_select %p183, %s180, 3
      %s185 = smul.addr %s182, 4
      %s186 = sadd.s32 %s184, %s185
      %s187 = smul.addr %s186, 8
      %s188 = scalar_lea.vmem %s0, %s187
      %p189 = pneg %p49
      %p190 = pneg %p46
      %p191 = scmp.lt.s32.totalorder %s18, 1
      %s192 = scalar_select %p191, %s18, 1
      %s193 = scalar_lea.vmem %s1, %s192
      %p194 = pneg %p75
      %p195 = pneg %p72
      %p196 = scmp.lt.s32.totalorder %s18, 1
      %s197 = scalar_select %p196, %s18, 1
      %s198 = scalar_lea.vmem %s2, %s197
      %p199 = pneg %p101
      %p200 = pneg %p98
      %p201 = pneg %p129
      %p202 = pneg %p126
      %s203 = smul.u32 4, %s19
      %p204 = scmp.lt.s32.totalorder %s18, 1
      %s205 = scalar_select %p204, %s18, 1
      %p206 = scmp.lt.s32.totalorder %s203, 3
      %s207 = scalar_select %p206, %s203, 3
      %s208 = smul.addr %s205, 4
      %s209 = sadd.s32 %s207, %s208
      %s210 = smul.addr %s209, 8
      %s211 = scalar_lea.vmem %s3, %s210
      %s212 = smul.u32 4, %s19
      %p213 = scmp.lt.s32.totalorder %s18, 1
      %s214 = scalar_select %p213, %s18, 1
      %p215 = scmp.lt.s32.totalorder %s212, 3
      %s216 = scalar_select %p215, %s212, 3
      %s217 = smul.addr %s214, 4
      %s218 = sadd.s32 %s216, %s217
      %s219 = smul.addr %s218, 8
      %s220 = scalar_lea.vmem %s0, %s219
      %s221 = smul.u32 4, %s19
      %p222 = scmp.lt.s32.totalorder %s18, 1
      %s223 = scalar_select %p222, %s18, 1
      %s224 = scalar_lea.vmem %s1, %s223
      %p225 = scmp.lt.s32.totalorder %s18, 1
      %s226 = scalar_select %p225, %s18, 1
      %s227 = scalar_lea.vmem %s2, %s226
      %s228 = smul.u32 4, %s19
      %p229 = scmp.lt.s32.totalorder %s18, 1
      %s230 = scalar_select %p229, %s18, 1
      %p231 = scmp.lt.s32.totalorder %s228, 3
      %s232 = scalar_select %p231, %s228, 3
      %s233 = smul.addr %s230, 4
      %s234 = sadd.s32 %s232, %s233
      %s235 = smul.addr %s234, 8
      %s236 = scalar_lea.vmem %s3, %s235
      %s237 = smul.u32 4, %s19
      %v238 = vld [vmem:[%s220] sm:$0xff]
      %v239 = vld [vmem:[%s220 + $0x8] sm:$0xff]
      %v240 = vld [vmem:[%s220 + $0x10] sm:$0xff]
      %v241 = vld [vmem:[%s220 + $0x18] sm:$0xff]
      %v242 = vld [vmem:[%s224] sm:$0x1]
      %v244 = vlaneseq
      %v245 = vshrl.u32 %v244, 7
      %v246 = vsub.s32 0, %v245
      %v247 = vrot.slane %v242, %v246
      %v249 = vmul.f32 %v238, %v247
      %v250 = vmul.f32 %v239, %v247
      %v251 = vmul.f32 %v240, %v247
      %v252 = vmul.f32 %v241, %v247
      %v253 = vld [vmem:[%s227] sm:$0x1]
      %v255 = vlaneseq
      %v256 = vshrl.u32 %v255, 7
      %v257 = vsub.s32 0, %v256
      %v258 = vrot.slane %v253, %v257
      %v260 = vadd.f32 %v249, %v258
      %v261 = vadd.f32 %v250, %v258
      %v262 = vadd.f32 %v251, %v258
      %v263 = vadd.f32 %v252, %v258
      %vm264 = vcmp.gt.f32.partialorder %v260, 0.0
      %vm265 = vcmp.gt.f32.partialorder %v261, 0.0
      %vm266 = vcmp.gt.f32.partialorder %v262, 0.0
      %vm267 = vcmp.gt.f32.partialorder %v263, 0.0
      %v268 = vmul.f32 %v260, 0.2
      %v269 = vmul.f32 %v261, 0.2
      %v270 = vmul.f32 %v262, 0.2
      %v271 = vmul.f32 %v263, 0.2
      %v272 = vsel %vm264, %v260, %v268
      %v273 = vsel %vm265, %v261, %v269
      %v274 = vsel %vm266, %v262, %v270
      %v275 = vsel %vm267, %v263, %v271
      %276 = vst [vmem:[%s236] sm:$0xff] %v272
      %277 = vst [vmem:[%s236 + $0x8] sm:$0xff] %v273
      %278 = vst [vmem:[%s236 + $0x10] sm:$0xff] %v274
      %279 = vst [vmem:[%s236 + $0x18] sm:$0xff] %v275
      %s280 = smul.u32 4, %s19
      %p281 = scmp.lt.s32.totalorder %s18, 1
      %s282 = scalar_select %p281, %s18, 1
      %p283 = scmp.lt.s32.totalorder %s280, 3
      %s284 = scalar_select %p283, %s280, 3
      %s285 = smul.addr %s282, 4
      %s286 = sadd.s32 %s284, %s285
      %s287 = smul.addr %s286, 8
      %s288 = scalar_lea.vmem %s3, %s287
      // Predicated region
      $region33: #{content_encoder_forward.38} parent=31 // pred_check
        %p289 = pneg %p126
      $region34: #{content_encoder_forward.38} parent=31 // pred_check_branch
        %291 = sbr.rel (%p289) target = $region36
      $region35: #{content_encoder_forward.38} parent=31 // pred_region
        %s292 = smul.u32 4, %s19
      $region36: #{content_encoder_forward.38} parent=31 // pred_fallthru
        _
    $region32: #{content_encoder_forward.38} parent=5 // pred_fallthru
      _
    %p293 = scmp.le.s32.totalorder 2, %s9
    // Predicated region
    $region37: #{content_encoder_forward.38} parent=5 // pred_check
      %p294 = pneg %p293
    $region38: #{content_encoder_forward.38} parent=5 // pred_check_branch
      %296 = sbr.rel (%p294) target = $region40
    $region39: #{content_encoder_forward.38} parent=5 // pred_region
      %s297 = ssub.s32 %s9, 2
      // Predicated region
      $region41: #{content_encoder_forward.38} parent=39 // pred_check
        %p298 = pneg %p132
      $region42: #{content_encoder_forward.38} parent=39 // pred_check_branch
        %300 = sbr.rel (%p298) target = $region44
      $region43: #{content_encoder_forward.38} parent=39 // pred_region
        %s301 = smul.u32 4, %s21
        %p302 = scmp.lt.s32.totalorder %s20, 1
        %s303 = scalar_select %p302, %s20, 1
        %p304 = scmp.lt.s32.totalorder %s301, 3
        %s305 = scalar_select %p304, %s301, 3
        %s306 = smul.addr %s303, 4
        %s307 = sadd.s32 %s305, %s306
        %s308 = smul.addr %s307, 8
        %s309 = scalar_lea.vmem %s3, %s308
      $region44: #{content_encoder_forward.38} parent=39 // pred_fallthru
        _
    $region40: #{content_encoder_forward.38} parent=5 // pred_fallthru
      _
  $region6: #{content_encoder_forward.38} parent=0 // loop_footer
    %s13 = sadd.s32 1, %s9
  $region7: #{content_encoder_forward.38} parent=0 // loop_footer_branch
    %8 = sbr.rel target = $region3
  $region8: #{content_encoder_forward.38} parent=0 // loop_exit
    _

// kernel: content_encoder_forward.41
$region0: #{content_encoder_forward.41}
  #allocation0 [shape = 'u32[]', space=smem, size = 0x4, offset = 0x4, fixed_abs, tag = 'smem constant byte address 0x4 - core index']
  #allocation1 [shape = 'u32[144,128]{1,0:T(1,128)}', space=vmem, size = 0x12000, scoped, tag = 'internal scratch']
  %s0 = inlined_call_operand.vmem [shape: f32[2,16,128], index: 0, kind: input, shape index: {}]
  %s1 = inlined_call_operand.vmem [shape: f32[2,1,128], index: 1, kind: input, shape index: {}]
  %s2 = inlined_call_operand.vmem [shape: f32[2,1,128], index: 2, kind: input, shape index: {}]
  %s3 = inlined_call_operand.vmem [shape: f32[2,16,128], index: 3, kind: output, shape index: {}]
  %s4 = sld [smem:[#allocation0]]
  $region45: #{content_encoder_forward.41} parent=0
    _
  %s6 = ssub.s32 1, %s4
  %s7 = scalar_select 0, %s6, %s4
  loop: start=0, step=1, limit=4
  $region2: #{content_encoder_forward.41} parent=0 // loop_pre_header
    _
  $region3: #{content_encoder_forward.41} parent=0 // loop_header
    %s9 = sphi 0, %s13
    %p10 = scmp.ge.s32.totalorder %s9, 4
    %s16 = sphi 0, %s28
    %s17 = sphi 0, %s24
    %s18 = sphi 0, %s16
    %s19 = sphi 0, %s17
    %s20 = sphi 0, %s18
    %s21 = sphi 0, %s19
    %s33 = sphi 0, %s35
    %s36 = sphi 0, %s33
    %s37 = sphi 0, %s36
    %s53 = sphi 0, %s37
    %s59 = sphi 0, %s61
    %s62 = sphi 0, %s59
    %s63 = sphi 0, %s62
    %s79 = sphi 0, %s63
    %s85 = sphi 0, %s87
    %s88 = sphi 0, %s85
    %s89 = sphi 0, %s88
    %s105 = sphi 0, %s89
    %s113 = sphi 0, %s115
    %s116 = sphi 0, %s113
    %s117 = sphi 0, %s116
    %s133 = sphi 0, %s117
  $region4: #{content_encoder_forward.41} parent=0 // loop_header_branch
    %12 = sbr.rel (%p10) target = $region8
  $region5: #{content_encoder_forward.41} parent=0 // loop_body
    %s14 = ssub.s32 %s9, 1
    %s15 = ssub.s32 %s9, 2
    %s22 = sadd.s32 1, %s17
    %p23 = scmp.ge.s32.totalorder %s22, 1
    %s24 = scalar_select %p23, 0, %s22
    %s25 = sadd.s32 1, %s16
    %s26 = scalar_select %p23, %s25, %s16
    %p27 = scmp.ge.s32.totalorder %s26, 2
    %s28 = scalar_select %p27, 0, %s26
    %s29 = ssub.s32 %s16, %s28
    %s30 = ssub.s32 %s17, %s24
    %s31 = sor.u32 %s29, %s30
    %p32 = scmp.eq.s32.totalorder %s31, 0
    %s34 = sadd.s32 %s33, 1
    %s35 = scalar_select %p32, %s33, %s34
    %p38 = pneg %p32
    %p39 = scmp.eq.s32.totalorder %s9, 1
    %p40 = por %p38, %p39
    %p41 = scmp.ne.s32.totalorder %s33, %s36
    %p42 = scmp.eq.s32.totalorder %s9, 0
    %p43 = por %p41, %p42
    %p44 = scmp.ne.s32.totalorder %s33, %s36
    %p45 = scmp.eq.s32.totalorder %s14, 1
    %p46 = por %p44, %p45
    %p47 = scmp.ne.s32.totalorder %s36, %s37
    %p48 = scmp.eq.s32.totalorder %s14, 0
    %p49 = por %p47, %p48
    %p50 = scmp.ne.s32.totalorder %s36, %s37
    %p51 = scmp.eq.s32.totalorder %s15, 1
    %p52 = por %p50, %p51
    %p54 = scmp.ne.s32.totalorder %s37, %s53
    %p55 = scmp.eq.s32.totalorder %s15, 0
    %p56 = por %p54, %p55
    %s57 = ssub.s32 %s16, %s28
    %p58 = scmp.eq.s32.totalorder %s57, 0
    %s60 = sadd.s32 %s59, 1
    %s61 = scalar_select %p58, %s59, %s60
    %p64 = pneg %p58
    %p65 = scmp.eq.s32.totalorder %s9, 1
    %p66 = por %p64, %p65
    %p67 = scmp.ne.s32.totalorder %s59, %s62
    %p68 = scmp.eq.s32.totalorder %s9, 0
    %p69 = por %p67, %p68
    %p70 = scmp.ne.s32.totalorder %s59, %s62
    %p71 = scmp.eq.s32.totalorder %s14, 1
    %p72 = por %p70, %p71
    %p73 = scmp.ne.s32.totalorder %s62, %s63
    %p74 = scmp.eq.s32.totalorder %s14, 0
    %p75 = por %p73, %p74
    %p76 = scmp.ne.s32.totalorder %s62, %s63
    %p77 = scmp.eq.s32.totalorder %s15, 1
    %p78 = por %p76, %p77
    %p80 = scmp.ne.s32.totalorder %s63, %s79
    %p81 = scmp.eq.s32.totalorder %s15, 0
    %p82 = por %p80, %p81
    %s83 = ssub.s32 %s16, %s28
    %p84 = scmp.eq.s32.totalorder %s83, 0
    %s86 = sadd.s32 %s85, 1
    %s87 = scalar_select %p84, %s85, %s86
    %p90 = pneg %p84
    %p91 = scmp.eq.s32.totalorder %s9, 1
    %p92 = por %p90, %p91
    %p93 = scmp.ne.s32.totalorder %s85, %s88
    %p94 = scmp.eq.s32.totalorder %s9, 0
    %p95 = por %p93, %p94
    %p96 = scmp.ne.s32.totalorder %s85, %s88
    %p97 = scmp.eq.s32.totalorder %s14, 1
    %p98 = por %p96, %p97
    %p99 = scmp.ne.s32.totalorder %s88, %s89
    %p100 = scmp.eq.s32.totalorder %s14, 0
    %p101 = por %p99, %p100
    %p102 = scmp.ne.s32.totalorder %s88, %s89
    %p103 = scmp.eq.s32.totalorder %s15, 1
    %p104 = por %p102, %p103
    %p106 = scmp.ne.s32.totalorder %s89, %s105
    %p107 = scmp.eq.s32.totalorder %s15, 0
    %p108 = por %p106, %p107
    %s109 = ssub.s32 %s16, %s28
    %s110 = ssub.s32 %s17, %s24
    %s111 = sor.u32 %s109, %s110
    %p112 = scmp.eq.s32.totalorder %s111, 0
    %s114 = sadd.s32 %s113, 1
    %s115 = scalar_select %p112, %s113, %s114
    %p118 = pneg %p112
    %p119 = scmp.eq.s32.totalorder %s9, 1
    %p120 = por %p118, %p119
    %p121 = scmp.ne.s32.totalorder %s113, %s116
    %p122 = scmp.eq.s32.totalorder %s9, 0
    %p123 = por %p121, %p122
    %p124 = scmp.ne.s32.totalorder %s113, %s116
    %p125 = scmp.eq.s32.totalorder %s14, 1
    %p126 = por %p124, %p125
    %p127 = scmp.ne.s32.totalorder %s116, %s117
    %p128 = scmp.eq.s32.totalorder %s14, 0
    %p129 = por %p127, %p128
    %p130 = scmp.ne.s32.totalorder %s116, %s117
    %p131 = scmp.eq.s32.totalorder %s15, 1
    %p132 = por %p130, %p131
    %p134 = scmp.ne.s32.totalorder %s117, %s133
    %p135 = scmp.eq.s32.totalorder %s15, 0
    %p136 = por %p134, %p135
    %p137 = scmp.le.s32.totalorder 1, %s9
    %p138 = scmp.lt.s32.totalorder %s9, 3
    %p139 = pnand %p137, %p138
    %p140 = pneg %p139
    // Predicated region
    $region9: #{content_encoder_forward.41} parent=5 // pred_check
      _
    $region10: #{content_encoder_forward.41} parent=5 // pred_check_branch
      %142 = sbr.rel (%p139) target = $region12
    $region11: #{content_encoder_forward.41} parent=5 // pred_region
      %s143 = ssub.s32 %s9, 1
    $region12: #{content_encoder_forward.41} parent=5 // pred_fallthru
      _
    %p144 = scmp.lt.s32.totalorder %s9, 2
    // Predicated region
    $region13: #{content_encoder_forward.41} parent=5 // pred_check
      %p145 = pneg %p144
    $region14: #{content_encoder_forward.41} parent=5 // pred_check_branch
      %147 = sbr.rel (%p145) target = $region16
    $region15: #{content_encoder_forward.41} parent=5 // pred_region
      // Predicated region
      $region17: #{content_encoder_forward.41} parent=15 // pred_check
        %p148 = pneg %p43
      $region18: #{content_encoder_forward.41} parent=15 // pred_check_branch
        %150 = sbr.rel (%p148) target = $region20
      $region19: #{content_encoder_forward.41} parent=15 // pred_region
        %s151 = smul.u32 2, %s17
        %p152 = scmp.lt.s32.totalorder %s16, 1
        %s153 = scalar_select %p152, %s16, 1
        %p154 = scmp.lt.s32.totalorder %s151, 1
        %s155 = scalar_select %p154, %s151, 1
        %s156 = smul.addr %s153, 2
        %s157 = sadd.s32 %s155, %s156
        %s158 = smul.addr %s157, 8
        %s159 = scalar_lea.vmem %s0, %s158
        %s160 = smul.u32 2, %s17
      $region20: #{content_encoder_forward.41} parent=15 // pred_fallthru
        _
      // Predicated region
      $region21: #{content_encoder_forward.41} parent=15 // pred_check
        %p161 = pneg %p69
      $region22: #{content_encoder_forward.41} parent=15 // pred_check_branch
        %163 = sbr.rel (%p161) target = $region24
      $region23: #{content_encoder_forward.41} parent=15 // pred_region
        %p164 = scmp.lt.s32.totalorder %s16, 1
        %s165 = scalar_select %p164, %s16, 1
        %s166 = scalar_lea.vmem %s1, %s165
      $region24: #{content_encoder_forward.41} parent=15 // pred_fallthru
        _
      // Predicated region
      $region25: #{content_encoder_forward.41} parent=15 // pred_check
        %p167 = pneg %p95
      $region26: #{content_encoder_forward.41} parent=15 // pred_check_branch
        %169 = sbr.rel (%p167) target = $region28
      $region27: #{content_encoder_forward.41} parent=15 // pred_region
        %p170 = scmp.lt.s32.totalorder %s16, 1
        %s171 = scalar_select %p170, %s16, 1
        %s172 = scalar_lea.vmem %s2, %s171
      $region28: #{content_encoder_forward.41} parent=15 // pred_fallthru
        _
    $region16: #{content_encoder_forward.41} parent=5 // pred_fallthru
      _
    %p173 = scmp.le.s32.totalorder 1, %s9
    %p174 = scmp.lt.s32.totalorder %s9, 3
    %p175 = pnand %p173, %p174
    %p176 = pneg %p175
    // Predicated region
    $region29: #{content_encoder_forward.41} parent=5 // pred_check
      _
    $region30: #{content_encoder_forward.41} parent=5 // pred_check_branch
      %178 = sbr.rel (%p175) target = $region32
    $region31: #{content_encoder_forward.41} parent=5 // pred_region
      %s179 = ssub.s32 %s9, 1
      %s180 = smul.u32 2, %s19
      %p181 = scmp.lt.s32.totalorder %s18, 1
      %s182 = scalar_select %p181, %s18, 1
      %p183 = scmp.lt.s32.totalorder %s180, 1
      %s184 = scalar_select %p183, %s180, 1
      %s185 = smul.addr %s182, 2
      %s186 = sadd.s32 %s184, %s185
      %s187 = smul.addr %s186, 8
      %s188 = scalar_lea.vmem %s0, %s187
      %p189 = pneg %p49
      %p190 = pneg %p46
      %p191 = scmp.lt.s32.totalorder %s18, 1
      %s192 = scalar_select %p191, %s18, 1
      %s193 = scalar_lea.vmem %s1, %s192
      %p194 = pneg %p75
      %p195 = pneg %p72
      %p196 = scmp.lt.s32.totalorder %s18, 1
      %s197 = scalar_select %p196, %s18, 1
      %s198 = scalar_lea.vmem %s2, %s197
      %p199 = pneg %p101
      %p200 = pneg %p98
      %p201 = pneg %p129
      %p202 = pneg %p126
      %s203 = smul.u32 2, %s19
      %p204 = scmp.lt.s32.totalorder %s18, 1
      %s205 = scalar_select %p204, %s18, 1
      %p206 = scmp.lt.s32.totalorder %s203, 1
      %s207 = scalar_select %p206, %s203, 1
      %s208 = smul.addr %s205, 2
      %s209 = sadd.s32 %s207, %s208
      %s210 = smul.addr %s209, 8
      %s211 = scalar_lea.vmem %s3, %s210
      %s212 = smul.u32 2, %s19
      %p213 = scmp.lt.s32.totalorder %s18, 1
      %s214 = scalar_select %p213, %s18, 1
      %p215 = scmp.lt.s32.totalorder %s212, 1
      %s216 = scalar_select %p215, %s212, 1
      %s217 = smul.addr %s214, 2
      %s218 = sadd.s32 %s216, %s217
      %s219 = smul.addr %s218, 8
      %s220 = scalar_lea.vmem %s0, %s219
      %s221 = smul.u32 2, %s19
      %p222 = scmp.lt.s32.totalorder %s18, 1
      %s223 = scalar_select %p222, %s18, 1
      %s224 = scalar_lea.vmem %s1, %s223
      %p225 = scmp.lt.s32.totalorder %s18, 1
      %s226 = scalar_select %p225, %s18, 1
      %s227 = scalar_lea.vmem %s2, %s226
      %s228 = smul.u32 2, %s19
      %p229 = scmp.lt.s32.totalorder %s18, 1
      %s230 = scalar_select %p229, %s18, 1
      %p231 = scmp.lt.s32.totalorder %s228, 1
      %s232 = scalar_select %p231, %s228, 1
      %s233 = smul.addr %s230, 2
      %s234 = sadd.s32 %s232, %s233
      %s235 = smul.addr %s234, 8
      %s236 = scalar_lea.vmem %s3, %s235
      %s237 = smul.u32 2, %s19
      %v238 = vld [vmem:[%s220] sm:$0xff]
      %v239 = vld [vmem:[%s220 + $0x8] sm:$0xff]
      %v240 = vld [vmem:[%s224] sm:$0x1]
      %v242 = vlaneseq
      %v243 = vshrl.u32 %v242, 7
      %v244 = vsub.s32 0, %v243
      %v245 = vrot.slane %v240, %v244
      %v247 = vmul.f32 %v238, %v245
      %v248 = vmul.f32 %v239, %v245
      %v249 = vld [vmem:[%s227] sm:$0x1]
      %v251 = vlaneseq
      %v252 = vshrl.u32 %v251, 7
      %v253 = vsub.s32 0, %v252
      %v254 = vrot.slane %v249, %v253
      %v256 = vadd.f32 %v247, %v254
      %v257 = vadd.f32 %v248, %v254
      %vm258 = vcmp.gt.f32.partialorder %v256, 0.0
      %vm259 = vcmp.gt.f32.partialorder %v257, 0.0
      %v260 = vmul.f32 %v256, 0.2
      %v261 = vmul.f32 %v257, 0.2
      %v262 = vsel %vm258, %v256, %v260
      %v263 = vsel %vm259, %v257, %v261
      %264 = vst [vmem:[%s236] sm:$0xff] %v262
      %265 = vst [vmem:[%s236 + $0x8] sm:$0xff] %v263
      %s266 = smul.u32 2, %s19
      %p267 = scmp.lt.s32.totalorder %s18, 1
      %s268 = scalar_select %p267, %s18, 1
      %p269 = scmp.lt.s32.totalorder %s266, 1
      %s270 = scalar_select %p269, %s266, 1
      %s271 = smul.addr %s268, 2
      %s272 = sadd.s32 %s270, %s271
      %s273 = smul.addr %s272, 8
      %s274 = scalar_lea.vmem %s3, %s273
      // Predicated region
      $region33: #{content_encoder_forward.41} parent=31 // pred_check
        %p275 = pneg %p126
      $region34: #{content_encoder_forward.41} parent=31 // pred_check_branch
        %277 = sbr.rel (%p275) target = $region36
      $region35: #{content_encoder_forward.41} parent=31 // pred_region
        %s278 = smul.u32 2, %s19
      $region36: #{content_encoder_forward.41} parent=31 // pred_fallthru
        _
    $region32: #{content_encoder_forward.41} parent=5 // pred_fallthru
      _
    %p279 = scmp.le.s32.totalorder 2, %s9
    // Predicated region
    $region37: #{content_encoder_forward.41} parent=5 // pred_check
      %p280 = pneg %p279
    $region38: #{content_encoder_forward.41} parent=5 // pred_check_branch
      %282 = sbr.rel (%p280) target = $region40
    $region39: #{content_encoder_forward.41} parent=5 // pred_region
      %s283 = ssub.s32 %s9, 2
      // Predicated region
      $region41: #{content_encoder_forward.41} parent=39 // pred_check
        %p284 = pneg %p132
      $region42: #{content_encoder_forward.41} parent=39 // pred_check_branch
        %286 = sbr.rel (%p284) target = $region44
      $region43: #{content_encoder_forward.41} parent=39 // pred_region
        %s287 = smul.u32 2, %s21
        %p288 = scmp.lt.s32.totalorder %s20, 1
        %s289 = scalar_select %p288, %s20, 1
        %p290 = scmp.lt.s32.totalorder %s287, 1
        %s291 = scalar_select %p290, %s287, 1
        %s292 = smul.addr %s289, 2
        %s293 = sadd.s32 %s291, %s292
        %s294 = smul.addr %s293, 8
        %s295 = scalar_lea.vmem %s3, %s294
      $region44: #{content_encoder_forward.41} parent=39 // pred_fallthru
        _
    $region40: #{content_encoder_forward.41} parent=5 // pred_fallthru
      _
  $region6: #{content_encoder_forward.41} parent=0 // loop_footer
    %s13 = sadd.s32 1, %s9
  $region7: #{content_encoder_forward.41} parent=0 // loop_footer_branch
    %8 = sbr.rel target = $region3
  $region8: #{content_encoder_forward.41} parent=0 // loop_exit
    _

// kernel: content_encoder_forward.39
$region0: #{content_encoder_forward.39}
  #allocation0 [shape = 'u32[]', space=smem, size = 0x4, offset = 0x4, fixed_abs, tag = 'smem constant byte address 0x4 - core index']
  #allocation1 [shape = 'u32[144,128]{1,0:T(1,128)}', space=vmem, size = 0x12000, scoped, tag = 'internal scratch']
  #allocation2 [shape = 'f32[7,128]{1,0:T(8,128)}', space=vmem, size = 0x1000, scoped, tag = 'scratch operand']
  %s0 = inlined_call_operand.vmem [shape: f32[2,10,10,64], index: 0, kind: input, shape index: {}]
  %s1 = inlined_call_operand.vmem [shape: f32[16,64,128], index: 1, kind: input, shape index: {}]
  %s2 = inlined_call_operand.vmem [shape: f32[1,128], index: 2, kind: input, shape index: {}]
  %s3 = inlined_call_operand.vmem [shape: f32[2,4,7,128], index: 3, kind: output, shape index: {}]
  %s4 = sld [smem:[#allocation0]]
  $region53: #{content_encoder_forward.39} parent=0
    _
  %s6 = ssub.s32 1, %s4
  %s7 = scalar_select 0, %s6, %s4
  loop: start=0, step=1, limit=34
  $region2: #{content_encoder_forward.39} parent=0 // loop_pre_header
    _
  $region3: #{content_encoder_forward.39} parent=0 // loop_header
    %s9 = sphi 0, %s13
    %p10 = scmp.ge.s32.totalorder %s9, 34
    %s16 = sphi 0, %s35
    %s17 = sphi 0, %s31
    %s18 = sphi 0, %s27
    %s19 = sphi 0, %s16
    %s20 = sphi 0, %s17
    %s21 = sphi 0, %s18
    %s22 = sphi 0, %s19
    %s23 = sphi 0, %s20
    %s24 = sphi 0, %s21
    %s38 = sphi 0, %s40
    %s41 = sphi 0, %s38
    %s42 = sphi 0, %s41
    %s58 = sphi 0, %s42
    %s62 = sphi 0, %s62
    %s64 = sphi 0, %s62
    %s65 = sphi 0, %s64
    %s79 = sphi 0, %s65
    %s83 = sphi 0, %s83
    %s85 = sphi 0, %s83
    %s86 = sphi 0, %s85
    %s100 = sphi 0, %s86
    %s108 = sphi 0, %s110
    %s111 = sphi 0, %s108
    %s112 = sphi 0, %s111
    %s128 = sphi 0, %s112
  $region4: #{content_encoder_forward.39} parent=0 // loop_header_branch
    %12 = sbr.rel (%p10) target = $region8
  $region5: #{content_encoder_forward.39} parent=0 // loop_body
    %s14 = ssub.s32 %s9, 1
    %s15 = ssub.s32 %s9, 2
    %s25 = sadd.s32 1, %s18
    %p26 = scmp.ge.s32.totalorder %s25, 4
    %s27 = scalar_select %p26, 0, %s25
    %s28 = sadd.s32 1, %s17
    %s29 = scalar_select %p26, %s28, %s17
    %p30 = scmp.ge.s32.totalorder %s29, 4
    %s31 = scalar_select %p30, 0, %s29
    %s32 = sadd.s32 1, %s16
    %s33 = scalar_select %p30, %s32, %s16
    %p34 = scmp.ge.s32.totalorder %s33, 2
    %s35 = scalar_select %p34, 0, %s33
    %s36 = ssub.s32 %s16, %s35
    %p37 = scmp.eq.s32.totalorder %s36, 0
    %s39 = sadd.s32 %s38, 1
    %s40 = scalar_select %p37, %s38, %s39
    %p43 = pneg %p37
    %p44 = scmp.eq.s32.totalorder %s9, 31
    %p45 = por %p43, %p44
    %p46 = scmp.ne.s32.totalorder %s38, %s41
    %p47 = scmp.eq.s32.totalorder %s9, 0
    %p48 = por %p46, %p47
    %p49 = scmp.ne.s32.totalorder %s38, %s41
    %p50 = scmp.eq.s32.totalorder %s14, 31
    %p51 = por %p49, %p50
    %p52 = scmp.ne.s32.totalorder %s41, %s42
    %p53 = scmp.eq.s32.totalorder %s14, 0
    %p54 = por %p52, %p53
    %p55 = scmp.ne.s32.totalorder %s41, %s42
    %p56 = scmp.eq.s32.totalorder %s15, 31
    %p57 = por %p55, %p56
    %p59 = scmp.ne.s32.totalorder %s42, %s58
    %p60 = scmp.eq.s32.totalorder %s15, 0
    %p61 = por %p59, %p60
    %s63 = sadd.s32 %s62, 1
    %p66 = scmp.eq.s32.totalorder %s9, 31
    %p67 = scmp.ne.s32.totalorder %s62, %s64
    %p68 = scmp.eq.s32.totalorder %s9, 0
    %p69 = por %p67, %p68
    %p70 = scmp.ne.s32.totalorder %s62, %s64
    %p71 = scmp.eq.s32.totalorder %s14, 31
    %p72 = por %p70, %p71
    %p73 = scmp.ne.s32.totalorder %s64, %s65
    %p74 = scmp.eq.s32.totalorder %s14, 0
    %p75 = por %p73, %p74
    %p76 = scmp.ne.s32.totalorder %s64, %s65
    %p77 = scmp.eq.s32.totalorder %s15, 31
    %p78 = por %p76, %p77
    %p80 = scmp.ne.s32.totalorder %s65, %s79
    %p81 = scmp.eq.s32.totalorder %s15, 0
    %p82 = por %p80, %p81
    %s84 = sadd.s32 %s83, 1
    %p87 = scmp.eq.s32.totalorder %s9, 31
    %p88 = scmp.ne.s32.totalorder %s83, %s85
    %p89 = scmp.eq.s32.totalorder %s9, 0
    %p90 = por %p88, %p89
    %p91 = scmp.ne.s32.totalorder %s83, %s85
    %p92 = scmp.eq.s32.totalorder %s14, 31
    %p93 = por %p91, %p92
    %p94 = scmp.ne.s32.totalorder %s85, %s86
    %p95 = scmp.eq.s32.totalorder %s14, 0
    %p96 = por %p94, %p95
    %p97 = scmp.ne.s32.totalorder %s85, %s86
    %p98 = scmp.eq.s32.totalorder %s15, 31
    %p99 = por %p97, %p98
    %p101 = scmp.ne.s32.totalorder %s86, %s100
    %p102 = scmp.eq.s32.totalorder %s15, 0
    %p103 = por %p101, %p102
    %s104 = ssub.s32 %s16, %s35
    %s105 = ssub.s32 %s17, %s31
    %s106 = sor.u32 %s104, %s105
    %p107 = scmp.eq.s32.totalorder %s106, 0
    %s109 = sadd.s32 %s108, 1
    %s110 = scalar_select %p107, %s108, %s109
    %p113 = pneg %p107
    %p114 = scmp.eq.s32.totalorder %s9, 31
    %p115 = por %p113, %p114
    %p116 = scmp.ne.s32.totalorder %s108, %s111
    %p117 = scmp.eq.s32.totalorder %s9, 0
    %p118 = por %p116, %p117
    %p119 = scmp.ne.s32.totalorder %s108, %s111
    %p120 = scmp.eq.s32.totalorder %s14, 31
    %p121 = por %p119, %p120
    %p122 = scmp.ne.s32.totalorder %s111, %s112
    %p123 = scmp.eq.s32.totalorder %s14, 0
    %p124 = por %p122, %p123
    %p125 = scmp.ne.s32.totalorder %s111, %s112
    %p126 = scmp.eq.s32.totalorder %s15, 31
    %p127 = por %p125, %p126
    %p129 = scmp.ne.s32.totalorder %s112, %s128
    %p130 = scmp.eq.s32.totalorder %s15, 0
    %p131 = por %p129, %p130
    %p132 = scmp.le.s32.totalorder 1, %s9
    %p133 = scmp.lt.s32.totalorder %s9, 33
    %p134 = pnand %p132, %p133
    %p135 = pneg %p134
    // Predicated region
    $region9: #{content_encoder_forward.39} parent=5 // pred_check
      _
    $region10: #{content_encoder_forward.39} parent=5 // pred_check_branch
      %137 = sbr.rel (%p134) target = $region12
    $region11: #{content_encoder_forward.39} parent=5 // pred_region
      %s138 = ssub.s32 %s9, 1
      // Predicated region
      $region13: #{content_encoder_forward.39} parent=11 // pred_check
        %p139 = pneg %p75
      $region14: #{content_encoder_forward.39} parent=11 // pred_check_branch
        %141 = sbr.rel (%p139) target = $region16
      $region15: #{content_encoder_forward.39} parent=11 // pred_region
        _
      $region16: #{content_encoder_forward.39} parent=11 // pred_fallthru
        _
      // Predicated region
      $region17: #{content_encoder_forward.39} parent=11 // pred_check
        %p142 = pneg %p96
      $region18: #{content_encoder_forward.39} parent=11 // pred_check_branch
        %144 = sbr.rel (%p142) target = $region20
      $region19: #{content_encoder_forward.39} parent=11 // pred_region
        _
      $region20: #{content_encoder_forward.39} parent=11 // pred_fallthru
        _
    $region12: #{content_encoder_forward.39} parent=5 // pred_fallthru
      _
    %p145 = scmp.lt.s32.totalorder %s9, 32
    // Predicated region
    $region21: #{content_encoder_forward.39} parent=5 // pred_check
      %p146 = pneg %p145
    $region22: #{content_encoder_forward.39} parent=5 // pred_check_branch
      %148 = sbr.rel (%p146) target = $region24
    $region23: #{content_encoder_forward.39} parent=5 // pred_region
      // Predicated region
      $region25: #{content_encoder_forward.39} parent=23 // pred_check
        %p149 = pneg %p48
      $region26: #{content_encoder_forward.39} parent=23 // pred_check_branch
        %151 = sbr.rel (%p149) target = $region28
      $region27: #{content_encoder_forward.39} parent=23 // pred_region
        %p152 = scmp.lt.s32.totalorder %s16, 1
        %s153 = scalar_select %p152, %s16, 1
        %s154 = smul.addr %s153, 20
        %s155 = smul.addr %s154, 8
        %s156 = scalar_lea.vmem %s0, %s155
      $region28: #{content_encoder_forward.39} parent=23 // pred_fallthru
        _
    $region24: #{content_encoder_forward.39} parent=5 // pred_fallthru
      _
    %p157 = scmp.le.s32.totalorder 1, %s9
    %p158 = scmp.lt.s32.totalorder %s9, 33
    %p159 = pnand %p157, %p158
    %p160 = pneg %p159
    // Predicated region
    $region29: #{content_encoder_forward.39} parent=5 // pred_check
      _
    $region30: #{content_encoder_forward.39} parent=5 // pred_check_branch
      %162 = sbr.rel (%p159) target = $region32
    $region31: #{content_encoder_forward.39} parent=5 // pred_region
      %s163 = ssub.s32 %s9, 1
      %p164 = scmp.lt.s32.totalorder %s19, 1
      %s165 = scalar_select %p164, %s19, 1
      %s166 = smul.addr %s165, 20
      %s167 = smul.addr %s166, 8
      %s168 = scalar_lea.vmem %s0, %s167
      %p169 = pneg %p54
      %p170 = pneg %p51
      %p171 = pneg %p75
      %p172 = pneg %p72
      %p173 = pneg %p96
      %p174 = pneg %p93
      %p175 = pneg %p124
      %p176 = pneg %p121
      %p177 = scmp.lt.s32.totalorder %s19, 1
      %s178 = scalar_select %p177, %s19, 1
      %p179 = scmp.lt.s32.totalorder %s20, 3
      %s180 = scalar_select %p179, %s20, 3
      %s181 = smul.addr %s178, 4
      %s182 = sadd.s32 %s180, %s181
      %s183 = smul.addr %s182, 8
      %s184 = scalar_lea.vmem %s3, %s183
      %p185 = scmp.lt.s32.totalorder %s19, 1
      %s186 = scalar_select %p185, %s19, 1
      %s187 = smul.addr %s186, 20
      %s188 = smul.addr %s187, 8
      %s189 = scalar_lea.vmem %s0, %s188
      %p190 = scmp.lt.s32.totalorder %s19, 1
      %s191 = scalar_select %p190, %s19, 1
      %p192 = scmp.lt.s32.totalorder %s20, 3
      %s193 = scalar_select %p192, %s20, 3
      %s194 = smul.addr %s191, 4
      %s195 = sadd.s32 %s193, %s194
      %s196 = smul.addr %s195, 8
      %s197 = scalar_lea.vmem %s3, %s196
      %p198 = scmp.eq.s32.totalorder %s21, 0
      // Predicated region
      $region33: #{content_encoder_forward.39} parent=31 // pred_check
        %p199 = pneg %p198
      $region34: #{content_encoder_forward.39} parent=31 // pred_check_branch
        %201 = sbr.rel (%p199) target = $region36
      $region35: #{content_encoder_forward.39} parent=31 // pred_region
        %202 = vst [vmem:[#allocation2] sm:$0x7f] 0.0
      $region36: #{content_encoder_forward.39} parent=31 // pred_fallthru
        _
      %s203 = smul.u32 %s20, 2
      %s204 = sadd.s32 %s203, %s21
      %s205 = smul.u32 %s204, 16
      %s206 = scalar_lea.vmem %s189, %s205
      %v207 = vld [vmem:[%s206] sm:$0x7f]
      %s208 = smul.u32 %s21, 4
      %s209 = smul.u32 %s208, 64
      %s210 = scalar_lea.vmem %s1, %s209
      %v211 = vld [vmem:[%s210] sm:$0xff]
      %v212 = vld [vmem:[%s210 + $0x8] sm:$0xff]
      %v213 = vld [vmem:[%s210 + $0x10] sm:$0xff]
      %v214 = vld [vmem:[%s210 + $0x18] sm:$0xff]
      %v215 = vld [vmem:[%s210 + $0x20] sm:$0xff]
      %v216 = vld [vmem:[%s210 + $0x28] sm:$0xff]
      %v217 = vld [vmem:[%s210 + $0x30] sm:$0xff]
      %v218 = vld [vmem:[%s210 + $0x38] sm:$0xff]
      %v219 = vld [vmem:[%s206 + $0x1] sm:$0x7f]
      %s220 = sadd.s32 %s208, 1
      %s221 = smul.u32 %s220, 64
      %s222 = scalar_lea.vmem %s1, %s221
      %v223 = vld [vmem:[%s222] sm:$0xff]
      %v224 = vld [vmem:[%s222 + $0x8] sm:$0xff]
      %v225 = vld [vmem:[%s222 + $0x10] sm:$0xff]
      %v226 = vld [vmem:[%s222 + $0x18] sm:$0xff]
      %v227 = vld [vmem:[%s222 + $0x20] sm:$0xff]
      %v228 = vld [vmem:[%s222 + $0x28] sm:$0xff]
      %v229 = vld [vmem:[%s222 + $0x30] sm:$0xff]
      %v230 = vld [vmem:[%s222 + $0x38] sm:$0xff]
      %vm231 = vcmask 523264
      %v233 = vsel %vm231, %v219, 0
      %235 = vmatprep.subr.mxu0 0.0
      %236 = vmatpush1.msra.mxu0 0.0
      %237 = vmatprep.subr.mxu0 0.0
      %238 = vmatpush1.msra.mxu0 0.0
      %239 = vmatprep.subr.mxu0 0.0
      %240 = vmatpush1.msra.mxu0 0.0
      %241 = vmatprep.subr.mxu0 0.0
      %242 = vmatpush1.msra.mxu0 0.0
      %243 = vmatprep.subr.mxu0 0.0
      %244 = vmatpush1.msra.mxu0 0.0
      %245 = vmatprep.subr.mxu0 0.0
      %246 = vmatpush1.msra.mxu0 0.0
      %247 = vmatprep.subr.mxu0 0.0
      %248 = vmatpush1.msra.mxu0 0.0
      %249 = vmatprep.subr.mxu0 0.0
      %250 = vmatpush1.msra.mxu0 0.0
      %251 = vmatprep.subr.mxu0 0.0
      %252 = vmatpush1.msra.mxu0 %v230
      %253 = vmatprep.subr.mxu0 0.0
      %254 = vmatpush1.msra.mxu0 %v229
      %255 = vmatprep.subr.mxu0 0.0
      %256 = vmatpush1.msra.mxu0 %v228
      %257 = vmatprep.subr.mxu0 0.0
      %258 = vmatpush1.msra.mxu0 %v227
      %259 = vmatprep.subr.mxu0 0.0
      %260 = vmatpush1.msra.mxu0 %v226
      %261 = vmatprep.subr.mxu0 0.0
      %262 = vmatpush1.msra.mxu0 %v225
      %263 = vmatprep.subr.mxu0 0.0
      %264 = vmatpush1.msra.mxu0 %v224
      %265 = vmatprep.subr.mxu0 0.0
      %266 = vmatpush1.msra.mxu0 %v223
      %267 = vmatprep.subr.mxu0 0.0
      %268 = vmatpush2.msra.mxu0 0.0
      %269 = vmatprep.subr.mxu0 0.0
      %270 = vmatpush2.msra.mxu0 0.0
      %271 = vmatprep.subr.mxu0 0.0
      %272 = vmatpush2.msra.mxu0 0.0
      %273 = vmatprep.subr.mxu0 0.0
      %274 = vmatpush2.msra.mxu0 0.0
      %275 = vmatprep.subr.mxu0 0.0
      %276 = vmatpush2.msra.mxu0 0.0
      %277 = vmatprep.subr.mxu0 0.0
      %278 = vmatpush2.msra.mxu0 0.0
      %279 = vmatprep.subr.mxu0 0.0
      %280 = vmatpush2.msra.mxu0 0.0
      %281 = vmatprep.subr.mxu0 0.0
      %282 = vmatpush2.msra.mxu0 0.0
      %283 = vmatprep.subr.mxu0 0.0
      %284 = vmatpush2.msra.mxu0 0.0
      %285 = vmatprep.subr.mxu0 0.0
      %286 = vmatpush2.msra.mxu0 0.0
      %287 = vmatprep.subr.mxu0 0.0
      %288 = vmatpush2.msra.mxu0 0.0
      %289 = vmatprep.subr.mxu0 0.0
      %290 = vmatpush2.msra.mxu0 0.0
      %291 = vmatprep.subr.mxu0 0.0
      %292 = vmatpush2.msra.mxu0 0.0
      %293 = vmatprep.subr.mxu0 0.0
      %294 = vmatpush2.msra.mxu0 0.0
      %295 = vmatprep.subr.mxu0 0.0
      %296 = vmatpush2.msra.mxu0 0.0
      %297 = vmatprep.subr.mxu0 0.0
      %298 = vmatpush2.msra.mxu0 0.0
      %299 = vmatprep.mubr.f32.mxu0 0.0
      %300 = vmatmul.mubr.f32.gmra.mxu0 %v233
      %v301 = vpop.f32.mrf.mxu0
      %v302 = vadd.f32 0.0, %v301
      %v303 = vpop.f32.mrf.mxu0
      %304 = vdwg.mxu0
      %v306 = vsel %vm231, %v207, 0
      %308 = vmatprep.subr.mxu0 0.0
      %309 = vmatpush1.msra.mxu0 0.0
      %310 = vmatprep.subr.mxu0 0.0
      %311 = vmatpush1.msra.mxu0 0.0
      %312 = vmatprep.subr.mxu0 0.0
      %313 = vmatpush1.msra.mxu0 0.0
      %314 = vmatprep.subr.mxu0 0.0
      %315 = vmatpush1.msra.mxu0 0.0
      %316 = vmatprep.subr.mxu0 0.0
      %317 = vmatpush1.msra.mxu0 0.0
      %318 = vmatprep.subr.mxu0 0.0
      %319 = vmatpush1.msra.mxu0 0.0
      %320 = vmatprep.subr.mxu0 0.0
      %321 = vmatpush1.msra.mxu0 0.0
      %322 = vmatprep.subr.mxu0 0.0
      %323 = vmatpush1.msra.mxu0 0.0
      %324 = vmatprep.subr.mxu0 0.0
      %325 = vmatpush1.msra.mxu0 %v218
      %326 = vmatprep.subr.mxu0 0.0
      %327 = vmatpush1.msra.mxu0 %v217
      %328 = vmatprep.subr.mxu0 0.0
      %329 = vmatpush1.msra.mxu0 %v216
      %330 = vmatprep.subr.mxu0 0.0
      %331 = vmatpush1.msra.mxu0 %v215
      %332 = vmatprep.subr.mxu0 0.0
      %333 = vmatpush1.msra.mxu0 %v214
      %334 = vmatprep.subr.mxu0 0.0
      %335 = vmatpush1.msra.mxu0 %v213
      %336 = vmatprep.subr.mxu0 0.0
      %337 = vmatpush1.msra.mxu0 %v212
      %338 = vmatprep.subr.mxu0 0.0
      %339 = vmatpush1.msra.mxu0 %v211
      %340 = vmatprep.subr.mxu0 0.0
      %341 = vmatpush2.msra.mxu0 0.0
      %342 = vmatprep.subr.mxu0 0.0
      %343 = vmatpush2.msra.mxu0 0.0
      %344 = vmatprep.subr.mxu0 0.0
      %345 = vmatpush2.msra.mxu0 0.0
      %346 = vmatprep.subr.mxu0 0.0
      %347 = vmatpush2.msra.mxu0 0.0
      %348 = vmatprep.subr.mxu0 0.0
      %349 = vmatpush2.msra.mxu0 0.0
      %350 = vmatprep.subr.mxu0 0.0
      %351 = vmatpush2.msra.mxu0 0.0
      %352 = vmatprep.subr.mxu0 0.0
      %353 = vmatpush2.msra.mxu0 0.0
      %354 = vmatprep.subr.mxu0 0.0
      %355 = vmatpush2.msra.mxu0 0.0
      %356 = vmatprep.subr.mxu0 0.0
      %357 = vmatpush2.msra.mxu0 0.0
      %358 = vmatprep.subr.mxu0 0.0
      %359 = vmatpush2.msra.mxu0 0.0
      %360 = vmatprep.subr.mxu0 0.0
      %361 = vmatpush2.msra.mxu0 0.0
      %362 = vmatprep.subr.mxu0 0.0
      %363 = vmatpush2.msra.mxu0 0.0
      %364 = vmatprep.subr.mxu0 0.0
      %365 = vmatpush2.msra.mxu0 0.0
      %366 = vmatprep.subr.mxu0 0.0
      %367 = vmatpush2.msra.mxu0 0.0
      %368 = vmatprep.subr.mxu0 0.0
      %369 = vmatpush2.msra.mxu0 0.0
      %370 = vmatprep.subr.mxu0 0.0
      %371 = vmatpush2.msra.mxu0 0.0
      %372 = vmatprep.mubr.f32.mxu0 0.0
      %373 = vmatmul.mubr.f32.gmra.mxu0 %v306
      %v374 = vpop.f32.mrf.mxu0
      %v375 = vadd.f32 %v302, %v374
      %v376 = vpop.f32.mrf.mxu0
      %377 = vdwg.mxu0
      %v378 = vld [vmem:[%s206 + $0x2] sm:$0x7f]
      %s379 = sadd.s32 %s208, 2
      %s380 = smul.u32 %s379, 64
      %s381 = scalar_lea.vmem %s1, %s380
      %v382 = vld [vmem:[%s381] sm:$0xff]
      %v383 = vld [vmem:[%s381 + $0x8] sm:$0xff]
      %v384 = vld [vmem:[%s381 + $0x10] sm:$0xff]
      %v385 = vld [vmem:[%s381 + $0x18] sm:$0xff]
      %v386 = vld [vmem:[%s381 + $0x20] sm:$0xff]
      %v387 = vld [vmem:[%s381 + $0x28] sm:$0xff]
      %v388 = vld [vmem:[%s381 + $0x30] sm:$0xff]
      %v389 = vld [vmem:[%s381 + $0x38] sm:$0xff]
      %v391 = vsel %vm231, %v378, 0
      %393 = vmatprep.subr.mxu0 0.0
      %394 = vmatpush1.msra.mxu0 0.0
      %395 = vmatprep.subr.mxu0 0.0
      %396 = vmatpush1.msra.mxu0 0.0
      %397 = vmatprep.subr.mxu0 0.0
      %398 = vmatpush1.msra.mxu0 0.0
      %399 = vmatprep.subr.mxu0 0.0
      %400 = vmatpush1.msra.mxu0 0.0
      %401 = vmatprep.subr.mxu0 0.0
      %402 = vmatpush1.msra.mxu0 0.0
      %403 = vmatprep.subr.mxu0 0.0
      %404 = vmatpush1.msra.mxu0 0.0
      %405 = vmatprep.subr.mxu0 0.0
      %406 = vmatpush1.msra.mxu0 0.0
      %407 = vmatprep.subr.mxu0 0.0
      %408 = vmatpush1.msra.mxu0 0.0
      %409 = vmatprep.subr.mxu0 0.0
      %410 = vmatpush1.msra.mxu0 %v389
      %411 = vmatprep.subr.mxu0 0.0
      %412 = vmatpush1.msra.mxu0 %v388
      %413 = vmatprep.subr.mxu0 0.0
      %414 = vmatpush1.msra.mxu0 %v387
      %415 = vmatprep.subr.mxu0 0.0
      %416 = vmatpush1.msra.mxu0 %v386
      %417 = vmatprep.subr.mxu0 0.0
      %418 = vmatpush1.msra.mxu0 %v385
      %419 = vmatprep.subr.mxu0 0.0
      %420 = vmatpush1.msra.mxu0 %v384
      %421 = vmatprep.subr.mxu0 0.0
      %422 = vmatpush1.msra.mxu0 %v383
      %423 = vmatprep.subr.mxu0 0.0
      %424 = vmatpush1.msra.mxu0 %v382
      %425 = vmatprep.subr.mxu0 0.0
      %426 = vmatpush2.msra.mxu0 0.0
      %427 = vmatprep.subr.mxu0 0.0
      %428 = vmatpush2.msra.mxu0 0.0
      %429 = vmatprep.subr.mxu0 0.0
      %430 = vmatpush2.msra.mxu0 0.0
      %431 = vmatprep.subr.mxu0 0.0
      %432 = vmatpush2.msra.mxu0 0.0
      %433 = vmatprep.subr.mxu0 0.0
      %434 = vmatpush2.msra.mxu0 0.0
      %435 = vmatprep.subr.mxu0 0.0
      %436 = vmatpush2.msra.mxu0 0.0
      %437 = vmatprep.subr.mxu0 0.0
      %438 = vmatpush2.msra.mxu0 0.0
      %439 = vmatprep.subr.mxu0 0.0
      %440 = vmatpush2.msra.mxu0 0.0
      %441 = vmatprep.subr.mxu0 0.0
      %442 = vmatpush2.msra.mxu0 0.0
      %443 = vmatprep.subr.mxu0 0.0
      %444 = vmatpush2.msra.mxu0 0.0
      %445 = vmatprep.subr.mxu0 0.0
      %446 = vmatpush2.msra.mxu0 0.0
      %447 = vmatprep.subr.mxu0 0.0
      %448 = vmatpush2.msra.mxu0 0.0
      %449 = vmatprep.subr.mxu0 0.0
      %450 = vmatpush2.msra.mxu0 0.0
      %451 = vmatprep.subr.mxu0 0.0
      %452 = vmatpush2.msra.mxu0 0.0
      %453 = vmatprep.subr.mxu0 0.0
      %454 = vmatpush2.msra.mxu0 0.0
      %455 = vmatprep.subr.mxu0 0.0
      %456 = vmatpush2.msra.mxu0 0.0
      %457 = vmatprep.mubr.f32.mxu0 0.0
      %458 = vmatmul.mubr.f32.gmra.mxu0 %v391
      %v459 = vpop.f32.mrf.mxu0
      %v460 = vadd.f32 0.0, %v459
      %v461 = vpop.f32.mrf.mxu0
      %462 = vdwg.mxu0
      %v463 = vadd.f32 %v375, %v460
      %v464 = vld [vmem:[%s206 + $0x3] sm:$0x7f]
      %s465 = sadd.s32 %s208, 3
      %s466 = smul.u32 %s465, 64
      %s467 = scalar_lea.vmem %s1, %s466
      %v468 = vld [vmem:[%s467] sm:$0xff]
      %v469 = vld [vmem:[%s467 + $0x8] sm:$0xff]
      %v470 = vld [vmem:[%s467 + $0x10] sm:$0xff]
      %v471 = vld [vmem:[%s467 + $0x18] sm:$0xff]
      %v472 = vld [vmem:[%s467 + $0x20] sm:$0xff]
      %v473 = vld [vmem:[%s467 + $0x28] sm:$0xff]
      %v474 = vld [vmem:[%s467 + $0x30] sm:$0xff]
      %v475 = vld [vmem:[%s467 + $0x38] sm:$0xff]
      %v477 = vsel %vm231, %v464, 0
      %479 = vmatprep.subr.mxu0 0.0
      %480 = vmatpush1.msra.mxu0 0.0
      %481 = vmatprep.subr.mxu0 0.0
      %482 = vmatpush1.msra.mxu0 0.0
      %483 = vmatprep.subr.mxu0 0.0
      %484 = vmatpush1.msra.mxu0 0.0
      %485 = vmatprep.subr.mxu0 0.0
      %486 = vmatpush1.msra.mxu0 0.0
      %487 = vmatprep.subr.mxu0 0.0
      %488 = vmatpush1.msra.mxu0 0.0
      %489 = vmatprep.subr.mxu0 0.0
      %490 = vmatpush1.msra.mxu0 0.0
      %491 = vmatprep.subr.mxu0 0.0
      %492 = vmatpush1.msra.mxu0 0.0
      %493 = vmatprep.subr.mxu0 0.0
      %494 = vmatpush1.msra.mxu0 0.0
      %495 = vmatprep.subr.mxu0 0.0
      %496 = vmatpush1.msra.mxu0 %v475
      %497 = vmatprep.subr.mxu0 0.0
      %498 = vmatpush1.msra.mxu0 %v474
      %499 = vmatprep.subr.mxu0 0.0
      %500 = vmatpush1.msra.mxu0 %v473
      %501 = vmatprep.subr.mxu0 0.0
      %502 = vmatpush1.msra.mxu0 %v472
      %503 = vmatprep.subr.mxu0 0.0
      %504 = vmatpush1.msra.mxu0 %v471
      %505 = vmatprep.subr.mxu0 0.0
      %506 = vmatpush1.msra.mxu0 %v470
      %507 = vmatprep.subr.mxu0 0.0
      %508 = vmatpush1.msra.mxu0 %v469
      %509 = vmatprep.subr.mxu0 0.0
      %510 = vmatpush1.msra.mxu0 %v468
      %511 = vmatprep.subr.mxu0 0.0
      %512 = vmatpush2.msra.mxu0 0.0
      %513 = vmatprep.subr.mxu0 0.0
      %514 = vmatpush2.msra.mxu0 0.0
      %515 = vmatprep.subr.mxu0 0.0
      %516 = vmatpush2.msra.mxu0 0.0
      %517 = vmatprep.subr.mxu0 0.0
      %518 = vmatpush2.msra.mxu0 0.0
      %519 = vmatprep.subr.mxu0 0.0
      %520 = vmatpush2.msra.mxu0 0.0
      %521 = vmatprep.subr.mxu0 0.0
      %522 = vmatpush2.msra.mxu0 0.0
      %523 = vmatprep.subr.mxu0 0.0
      %524 = vmatpush2.msra.mxu0 0.0
      %525 = vmatprep.subr.mxu0 0.0
      %526 = vmatpush2.msra.mxu0 0.0
      %527 = vmatprep.subr.mxu0 0.0
      %528 = vmatpush2.msra.mxu0 0.0
      %529 = vmatprep.subr.mxu0 0.0
      %530 = vmatpush2.msra.mxu0 0.0
      %531 = vmatprep.subr.mxu0 0.0
      %532 = vmatpush2.msra.mxu0 0.0
      %533 = vmatprep.subr.mxu0 0.0
      %534 = vmatpush2.msra.mxu0 0.0
      %535 = vmatprep.subr.mxu0 0.0
      %536 = vmatpush2.msra.mxu0 0.0
      %537 = vmatprep.subr.mxu0 0.0
      %538 = vmatpush2.msra.mxu0 0.0
      %539 = vmatprep.subr.mxu0 0.0
      %540 = vmatpush2.msra.mxu0 0.0
      %541 = vmatprep.subr.mxu0 0.0
      %542 = vmatpush2.msra.mxu0 0.0
      %543 = vmatprep.mubr.f32.mxu0 0.0
      %544 = vmatmul.mubr.f32.gmra.mxu0 %v477
      %v545 = vpop.f32.mrf.mxu0
      %v546 = vadd.f32 0.0, %v545
      %v547 = vpop.f32.mrf.mxu0
      %548 = vdwg.mxu0
      %v549 = vadd.f32 %v463, %v546
      %v550 = vld [vmem:[#allocation2] sm:$0x7f]
      %v551 = vadd.f32 %v550, %v549
      %552 = vst [vmem:[#allocation2] sm:$0x7f] %v551
      %p553 = scmp.eq.s32.totalorder %s21, 3
      // Predicated region
      $region37: #{content_encoder_forward.39} parent=31 // pred_check
        %p554 = pneg %p553
      $region38: #{content_encoder_forward.39} parent=31 // pred_check_branch
        %556 = sbr.rel (%p554) target = $region40
      $region39: #{content_encoder_forward.39} parent=31 // pred_region
        %v557 = vld [vmem:[#allocation2] sm:$0x7f]
        %v558 = vld [vmem:[%s2] sm:$0x1]
        %v560 = vlaneseq
        %v561 = vshrl.u32 %v560, 7
        %v562 = vsub.s32 0, %v561
        %v563 = vrot.slane %v558, %v562
        %v565 = vadd.f32 %v557, %v563
        %566 = vst [vmem:[%s197] sm:$0x7f] %v565
      $region40: #{content_encoder_forward.39} parent=31 // pred_fallthru
        _
      %p567 = scmp.lt.s32.totalorder %s19, 1
      %s568 = scalar_select %p567, %s19, 1
      %p569 = scmp.lt.s32.totalorder %s20, 3
      %s570 = scalar_select %p569, %s20, 3
      %s571 = smul.addr %s568, 4
      %s572 = sadd.s32 %s570, %s571
      %s573 = smul.addr %s572, 8
      %s574 = scalar_lea.vmem %s3, %s573
      // Predicated region
      $region41: #{content_encoder_forward.39} parent=31 // pred_check
        %p575 = pneg %p121
      $region42: #{content_encoder_forward.39} parent=31 // pred_check_branch
        %577 = sbr.rel (%p575) target = $region44
      $region43: #{content_encoder_forward.39} parent=31 // pred_region
        _
      $region44: #{content_encoder_forward.39} parent=31 // pred_fallthru
        _
    $region32: #{content_encoder_forward.39} parent=5 // pred_fallthru
      _
    %p578 = scmp.le.s32.totalorder 2, %s9
    // Predicated region
    $region45: #{content_encoder_forward.39} parent=5 // pred_check
      %p579 = pneg %p578
    $region46: #{content_encoder_forward.39} parent=5 // pred_check_branch
      %581 = sbr.rel (%p579) target = $region48
    $region47: #{content_encoder_forward.39} parent=5 // pred_region
      %s582 = ssub.s32 %s9, 2
      // Predicated region
      $region49: #{content_encoder_forward.39} parent=47 // pred_check
        %p583 = pneg %p127
      $region50: #{content_encoder_forward.39} parent=47 // pred_check_branch
        %585 = sbr.rel (%p583) target = $region52
      $region51: #{content_encoder_forward.39} parent=47 // pred_region
        %p586 = scmp.lt.s32.totalorder %s22, 1
        %s587 = scalar_select %p586, %s22, 1
        %p588 = scmp.lt.s32.totalorder %s23, 3
        %s589 = scalar_select %p588, %s23, 3
        %s590 = smul.addr %s587, 4
        %s591 = sadd.s32 %s589, %s590
        %s592 = smul.addr %s591, 8
        %s593 = scalar_lea.vmem %s3, %s592
      $region52: #{content_encoder_forward.39} parent=47 // pred_fallthru
        _
    $region48: #{content_encoder_forward.39} parent=5 // pred_fallthru
      _
  $region6: #{content_encoder_forward.39} parent=0 // loop_footer
    %s13 = sadd.s32 1, %s9
  $region7: #{content_encoder_forward.39} parent=0 // loop_footer_branch
    %8 = sbr.rel target = $region3
  $region8: #{content_encoder_forward.39} parent=0 // loop_exit
    _

// kernel: content_encoder_forward.40
$region0: #{content_encoder_forward.40}
  #allocation0 [shape = 'u32[]', space=smem, size = 0x4, offset = 0x4, fixed_abs, tag = 'smem constant byte address 0x4 - core index']
  #allocation1 [shape = 'u32[144,128]{1,0:T(1,128)}', space=vmem, size = 0x12000, scoped, tag = 'internal scratch']
  #allocation2 [shape = 'f32[1,128]{1,0:T(1,128)}', space=vmem, size = 0x200, scoped, tag = 'scratch operand']
  #allocation3 [shape = 'f32[1,128]{1,0:T(1,128)}', space=vmem, size = 0x200, scoped, tag = 'scratch operand']
  %s0 = inlined_call_operand.vmem [shape: f32[2,16,128], index: 0, kind: input, shape index: {}]
  %s1 = inlined_call_operand.vmem [shape: f32[1,128], index: 1, kind: input, shape index: {}]
  %s2 = inlined_call_operand.vmem [shape: f32[1,128], index: 2, kind: input, shape index: {}]
  %s3 = inlined_call_operand.vmem [shape: f32[2,1,128], index: 3, kind: output, shape index: {0}]
  %s4 = inlined_call_operand.vmem [shape: f32[2,1,128], index: 4, kind: output, shape index: {1}]
  %5 = xla_tuple %s3, %s4
  %s6 = sld [smem:[#allocation0]]
  $region61: #{content_encoder_forward.40} parent=0
    _
  %s8 = ssub.s32 1, %s6
  %s9 = scalar_select 0, %s8, %s6
  loop: start=0, step=1, limit=4
  $region2: #{content_encoder_forward.40} parent=0 // loop_pre_header
    _
  $region3: #{content_encoder_forward.40} parent=0 // loop_header
    %s11 = sphi 0, %s15
    %p12 = scmp.ge.s32.totalorder %s11, 4
    %s18 = sphi 0, %s30
    %s19 = sphi 0, %s26
    %s20 = sphi 0, %s18
    %s21 = sphi 0, %s19
    %s22 = sphi 0, %s20
    %s23 = sphi 0, %s21
    %s35 = sphi 0, %s37
    %s38 = sphi 0, %s35
    %s39 = sphi 0, %s38
    %s55 = sphi 0, %s39
    %s59 = sphi 0, %s59
    %s61 = sphi 0, %s59
    %s62 = sphi 0, %s61
    %s76 = sphi 0, %s62
    %s80 = sphi 0, %s80
    %s82 = sphi 0, %s80
    %s83 = sphi 0, %s82
    %s97 = sphi 0, %s83
    %s103 = sphi 0, %s105
    %s106 = sphi 0, %s103
    %s107 = sphi 0, %s106
    %s123 = sphi 0, %s107
    %s129 = sphi 0, %s131
    %s132 = sphi 0, %s129
    %s133 = sphi 0, %s132
    %s149 = sphi 0, %s133
  $region4: #{content_encoder_forward.40} parent=0 // loop_header_branch
    %14 = sbr.rel (%p12) target = $region8
  $region5: #{content_encoder_forward.40} parent=0 // loop_body
    %s16 = ssub.s32 %s11, 1
    %s17 = ssub.s32 %s11, 2
    %s24 = sadd.s32 1, %s19
    %p25 = scmp.ge.s32.totalorder %s24, 1
    %s26 = scalar_select %p25, 0, %s24
    %s27 = sadd.s32 1, %s18
    %s28 = scalar_select %p25, %s27, %s18
    %p29 = scmp.ge.s32.totalorder %s28, 2
    %s30 = scalar_select %p29, 0, %s28
    %s31 = ssub.s32 %s18, %s30
    %s32 = ssub.s32 %s19, %s26
    %s33 = sor.u32 %s31, %s32
    %p34 = scmp.eq.s32.totalorder %s33, 0
    %s36 = sadd.s32 %s35, 1
    %s37 = scalar_select %p34, %s35, %s36
    %p40 = pneg %p34
    %p41 = scmp.eq.s32.totalorder %s11, 1
    %p42 = por %p40, %p41
    %p43 = scmp.ne.s32.totalorder %s35, %s38
    %p44 = scmp.eq.s32.totalorder %s11, 0
    %p45 = por %p43, %p44
    %p46 = scmp.ne.s32.totalorder %s35, %s38
    %p47 = scmp.eq.s32.totalorder %s16, 1
    %p48 = por %p46, %p47
    %p49 = scmp.ne.s32.totalorder %s38, %s39
    %p50 = scmp.eq.s32.totalorder %s16, 0
    %p51 = por %p49, %p50
    %p52 = scmp.ne.s32.totalorder %s38, %s39
    %p53 = scmp.eq.s32.totalorder %s17, 1
    %p54 = por %p52, %p53
    %p56 = scmp.ne.s32.totalorder %s39, %s55
    %p57 = scmp.eq.s32.totalorder %s17, 0
    %p58 = por %p56, %p57
    %s60 = sadd.s32 %s59, 1
    %p63 = scmp.eq.s32.totalorder %s11, 1
    %p64 = scmp.ne.s32.totalorder %s59, %s61
    %p65 = scmp.eq.s32.totalorder %s11, 0
    %p66 = por %p64, %p65
    %p67 = scmp.ne.s32.totalorder %s59, %s61
    %p68 = scmp.eq.s32.totalorder %s16, 1
    %p69 = por %p67, %p68
    %p70 = scmp.ne.s32.totalorder %s61, %s62
    %p71 = scmp.eq.s32.totalorder %s16, 0
    %p72 = por %p70, %p71
    %p73 = scmp.ne.s32.totalorder %s61, %s62
    %p74 = scmp.eq.s32.totalorder %s17, 1
    %p75 = por %p73, %p74
    %p77 = scmp.ne.s32.totalorder %s62, %s76
    %p78 = scmp.eq.s32.totalorder %s17, 0
    %p79 = por %p77, %p78
    %s81 = sadd.s32 %s80, 1
    %p84 = scmp.eq.s32.totalorder %s11, 1
    %p85 = scmp.ne.s32.totalorder %s80, %s82
    %p86 = scmp.eq.s32.totalorder %s11, 0
    %p87 = por %p85, %p86
    %p88 = scmp.ne.s32.totalorder %s80, %s82
    %p89 = scmp.eq.s32.totalorder %s16, 1
    %p90 = por %p88, %p89
    %p91 = scmp.ne.s32.totalorder %s82, %s83
    %p92 = scmp.eq.s32.totalorder %s16, 0
    %p93 = por %p91, %p92
    %p94 = scmp.ne.s32.totalorder %s82, %s83
    %p95 = scmp.eq.s32.totalorder %s17, 1
    %p96 = por %p94, %p95
    %p98 = scmp.ne.s32.totalorder %s83, %s97
    %p99 = scmp.eq.s32.totalorder %s17, 0
    %p100 = por %p98, %p99
    %s101 = ssub.s32 %s18, %s30
    %p102 = scmp.eq.s32.totalorder %s101, 0
    %s104 = sadd.s32 %s103, 1
    %s105 = scalar_select %p102, %s103, %s104
    %p108 = pneg %p102
    %p109 = scmp.eq.s32.totalorder %s11, 1
    %p110 = por %p108, %p109
    %p111 = scmp.ne.s32.totalorder %s103, %s106
    %p112 = scmp.eq.s32.totalorder %s11, 0
    %p113 = por %p111, %p112
    %p114 = scmp.ne.s32.totalorder %s103, %s106
    %p115 = scmp.eq.s32.totalorder %s16, 1
    %p116 = por %p114, %p115
    %p117 = scmp.ne.s32.totalorder %s106, %s107
    %p118 = scmp.eq.s32.totalorder %s16, 0
    %p119 = por %p117, %p118
    %p120 = scmp.ne.s32.totalorder %s106, %s107
    %p121 = scmp.eq.s32.totalorder %s17, 1
    %p122 = por %p120, %p121
    %p124 = scmp.ne.s32.totalorder %s107, %s123
    %p125 = scmp.eq.s32.totalorder %s17, 0
    %p126 = por %p124, %p125
    %s127 = ssub.s32 %s18, %s30
    %p128 = scmp.eq.s32.totalorder %s127, 0
    %s130 = sadd.s32 %s129, 1
    %s131 = scalar_select %p128, %s129, %s130
    %p134 = pneg %p128
    %p135 = scmp.eq.s32.totalorder %s11, 1
    %p136 = por %p134, %p135
    %p137 = scmp.ne.s32.totalorder %s129, %s132
    %p138 = scmp.eq.s32.totalorder %s11, 0
    %p139 = por %p137, %p138
    %p140 = scmp.ne.s32.totalorder %s129, %s132
    %p141 = scmp.eq.s32.totalorder %s16, 1
    %p142 = por %p140, %p141
    %p143 = scmp.ne.s32.totalorder %s132, %s133
    %p144 = scmp.eq.s32.totalorder %s16, 0
    %p145 = por %p143, %p144
    %p146 = scmp.ne.s32.totalorder %s132, %s133
    %p147 = scmp.eq.s32.totalorder %s17, 1
    %p148 = por %p146, %p147
    %p150 = scmp.ne.s32.totalorder %s133, %s149
    %p151 = scmp.eq.s32.totalorder %s17, 0
    %p152 = por %p150, %p151
    %p153 = scmp.le.s32.totalorder 1, %s11
    %p154 = scmp.lt.s32.totalorder %s11, 3
    %p155 = pnand %p153, %p154
    %p156 = pneg %p155
    // Predicated region
    $region9: #{content_encoder_forward.40} parent=5 // pred_check
      _
    $region10: #{content_encoder_forward.40} parent=5 // pred_check_branch
      %158 = sbr.rel (%p155) target = $region12
    $region11: #{content_encoder_forward.40} parent=5 // pred_region
      %s159 = ssub.s32 %s11, 1
      // Predicated region
      $region13: #{content_encoder_forward.40} parent=11 // pred_check
        %p160 = pneg %p72
      $region14: #{content_encoder_forward.40} parent=11 // pred_check_branch
        %162 = sbr.rel (%p160) target = $region16
      $region15: #{content_encoder_forward.40} parent=11 // pred_region
        _
      $region16: #{content_encoder_forward.40} parent=11 // pred_fallthru
        _
      // Predicated region
      $region17: #{content_encoder_forward.40} parent=11 // pred_check
        %p163 = pneg %p93
      $region18: #{content_encoder_forward.40} parent=11 // pred_check_branch
        %165 = sbr.rel (%p163) target = $region20
      $region19: #{content_encoder_forward.40} parent=11 // pred_region
        _
      $region20: #{content_encoder_forward.40} parent=11 // pred_fallthru
        _
    $region12: #{content_encoder_forward.40} parent=5 // pred_fallthru
      _
    %p166 = scmp.lt.s32.totalorder %s11, 2
    // Predicated region
    $region21: #{content_encoder_forward.40} parent=5 // pred_check
      %p167 = pneg %p166
    $region22: #{content_encoder_forward.40} parent=5 // pred_check_branch
      %169 = sbr.rel (%p167) target = $region24
    $region23: #{content_encoder_forward.40} parent=5 // pred_region
      // Predicated region
      $region25: #{content_encoder_forward.40} parent=23 // pred_check
        %p170 = pneg %p45
      $region26: #{content_encoder_forward.40} parent=23 // pred_check_branch
        %172 = sbr.rel (%p170) target = $region28
      $region27: #{content_encoder_forward.40} parent=23 // pred_region
        %s173 = smul.u32 2, %s19
        %p174 = scmp.lt.s32.totalorder %s18, 1
        %s175 = scalar_select %p174, %s18, 1
        %p176 = scmp.lt.s32.totalorder %s173, 1
        %s177 = scalar_select %p176, %s173, 1
        %s178 = smul.addr %s175, 2
        %s179 = sadd.s32 %s177, %s178
        %s180 = smul.addr %s179, 8
        %s181 = scalar_lea.vmem %s0, %s180
        %s182 = smul.u32 2, %s19
      $region28: #{content_encoder_forward.40} parent=23 // pred_fallthru
        _
    $region24: #{content_encoder_forward.40} parent=5 // pred_fallthru
      _
    %p183 = scmp.le.s32.totalorder 1, %s11
    %p184 = scmp.lt.s32.totalorder %s11, 3
    %p185 = pnand %p183, %p184
    %p186 = pneg %p185
    // Predicated region
    $region29: #{content_encoder_forward.40} parent=5 // pred_check
      _
    $region30: #{content_encoder_forward.40} parent=5 // pred_check_branch
      %188 = sbr.rel (%p185) target = $region32
    $region31: #{content_encoder_forward.40} parent=5 // pred_region
      %s189 = ssub.s32 %s11, 1
      %s190 = smul.u32 2, %s21
      %p191 = scmp.lt.s32.totalorder %s20, 1
      %s192 = scalar_select %p191, %s20, 1
      %p193 = scmp.lt.s32.totalorder %s190, 1
      %s194 = scalar_select %p193, %s190, 1
      %s195 = smul.addr %s192, 2
      %s196 = sadd.s32 %s194, %s195
      %s197 = smul.addr %s196, 8
      %s198 = scalar_lea.vmem %s0, %s197
      %p199 = pneg %p51
      %p200 = pneg %p48
      %p201 = pneg %p72
      %p202 = pneg %p69
      %p203 = pneg %p93
      %p204 = pneg %p90
      %p205 = pneg %p119
      %p206 = pneg %p116
      %p207 = scmp.lt.s32.totalorder %s20, 1
      %s208 = scalar_select %p207, %s20, 1
      %s209 = scalar_lea.vmem %s3, %s208
      %p210 = pneg %p145
      %p211 = pneg %p142
      %p212 = scmp.lt.s32.totalorder %s20, 1
      %s213 = scalar_select %p212, %s20, 1
      %s214 = scalar_lea.vmem %s4, %s213
      %s215 = smul.u32 2, %s21
      %p216 = scmp.lt.s32.totalorder %s20, 1
      %s217 = scalar_select %p216, %s20, 1
      %p218 = scmp.lt.s32.totalorder %s215, 1
      %s219 = scalar_select %p218, %s215, 1
      %s220 = smul.addr %s217, 2
      %s221 = sadd.s32 %s219, %s220
      %s222 = smul.addr %s221, 8
      %s223 = scalar_lea.vmem %s0, %s222
      %s224 = smul.u32 2, %s21
      %p225 = scmp.lt.s32.totalorder %s20, 1
      %s226 = scalar_select %p225, %s20, 1
      %s227 = scalar_lea.vmem %s3, %s226
      %p228 = scmp.lt.s32.totalorder %s20, 1
      %s229 = scalar_select %p228, %s20, 1
      %s230 = scalar_lea.vmem %s4, %s229
      %p231 = scmp.eq.s32.totalorder %s21, 0
      // Predicated region
      $region33: #{content_encoder_forward.40} parent=31 // pred_check
        %p232 = pneg %p231
      $region34: #{content_encoder_forward.40} parent=31 // pred_check_branch
        %234 = sbr.rel (%p232) target = $region36
      $region35: #{content_encoder_forward.40} parent=31 // pred_region
        %235 = vst [vmem:[#allocation2] sm:$0x1] 0.0
        %236 = vst [vmem:[#allocation3] sm:$0x1] 0.0
      $region36: #{content_encoder_forward.40} parent=31 // pred_fallthru
        _
      %v237 = vld [vmem:[%s223] sm:$0xff]
      %v238 = vld [vmem:[%s223 + $0x8] sm:$0xff]
      %v239 = vld [vmem:[#allocation2] sm:$0x1]
      %v240 = vadd.f32 %v237, %v238
      %v241 = vrot.slane %v240, 4
      %v242 = vadd.f32 %v240, %v241
      %v243 = vrot.slane %v242, 2
      %v244 = vadd.f32 %v242, %v243
      %v245 = vrot.slane %v244, 1
      %v246 = vadd.f32 %v244, %v245
      %v247 = vadd.f32 %v239, %v246
      %248 = vst [vmem:[#allocation2] sm:$0x1] %v247
      %v249 = vld [vmem:[#allocation3] sm:$0x1]
      %v250 = vmul.f32 %v237, %v237
      %v251 = vmul.f32 %v238, %v238
      %v252 = vadd.f32 %v250, %v251
      %v253 = vrot.slane %v252, 4
      %v254 = vadd.f32 %v252, %v253
      %v255 = vrot.slane %v254, 2
      %v256 = vadd.f32 %v254, %v255
      %v257 = vrot.slane %v256, 1
      %v258 = vadd.f32 %v256, %v257
      %v259 = vadd.f32 %v249, %v258
      %260 = vst [vmem:[#allocation3] sm:$0x1] %v259
      // Predicated region
      $region37: #{content_encoder_forward.40} parent=31 // pred_check
        %p261 = pneg %p231
      $region38: #{content_encoder_forward.40} parent=31 // pred_check_branch
        %263 = sbr.rel (%p261) target = $region40
      $region39: #{content_encoder_forward.40} parent=31 // pred_region
        %v264 = vld [vmem:[#allocation2] sm:$0x1]
        %v265 = vmul.f32 %v264, 0.0625
        %v266 = vld [vmem:[#allocation3] sm:$0x1]
        %v267 = vmul.f32 %v266, 0.0625
        %v268 = vmul.f32 %v265, %v265
        %v269 = vsub.f32 %v267, %v268
        %v270 = vadd.f32 %v269, 1e-05
        %v271 = vrsqrt.pop %v270
        %v272 = vld [vmem:[%s1] sm:$0x1]
        %v273 = vmul.f32 %v272, %v271
        %274 = vst [vmem:[%s227] sm:$0x1] %v273
        %v275 = vld [vmem:[%s2] sm:$0x1]
        %v276 = vmul.f32 %v265, %v273
        %v277 = vsub.f32 %v275, %v276
        %278 = vst [vmem:[%s230] sm:$0x1] %v277
      $region40: #{content_encoder_forward.40} parent=31 // pred_fallthru
        _
      %p279 = scmp.lt.s32.totalorder %s20, 1
      %s280 = scalar_select %p279, %s20, 1
      %s281 = scalar_lea.vmem %s3, %s280
      %p282 = scmp.lt.s32.totalorder %s20, 1
      %s283 = scalar_select %p282, %s20, 1
      %s284 = scalar_lea.vmem %s4, %s283
      // Predicated region
      $region41: #{content_encoder_forward.40} parent=31 // pred_check
        %p285 = pneg %p116
      $region42: #{content_encoder_forward.40} parent=31 // pred_check_branch
        %287 = sbr.rel (%p285) target = $region44
      $region43: #{content_encoder_forward.40} parent=31 // pred_region
        _
      $region44: #{content_encoder_forward.40} parent=31 // pred_fallthru
        _
      // Predicated region
      $region45: #{content_encoder_forward.40} parent=31 // pred_check
        %p288 = pneg %p142
      $region46: #{content_encoder_forward.40} parent=31 // pred_check_branch
        %290 = sbr.rel (%p288) target = $region48
      $region47: #{content_encoder_forward.40} parent=31 // pred_region
        _
      $region48: #{content_encoder_forward.40} parent=31 // pred_fallthru
        _
    $region32: #{content_encoder_forward.40} parent=5 // pred_fallthru
      _
    %p291 = scmp.le.s32.totalorder 2, %s11
    // Predicated region
    $region49: #{content_encoder_forward.40} parent=5 // pred_check
      %p292 = pneg %p291
    $region50: #{content_encoder_forward.40} parent=5 // pred_check_branch
      %294 = sbr.rel (%p292) target = $region52
    $region51: #{content_encoder_forward.40} parent=5 // pred_region
      %s295 = ssub.s32 %s11, 2
      // Predicated region
      $region53: #{content_encoder_forward.40} parent=51 // pred_check
        %p296 = pneg %p122
      $region54: #{content_encoder_forward.40} parent=51 // pred_check_branch
        %298 = sbr.rel (%p296) target = $region56
      $region55: #{content_encoder_forward.40} parent=51 // pred_region
        %p299 = scmp.lt.s32.totalorder %s22, 1
        %s300 = scalar_select %p299, %s22, 1
        %s301 = scalar_lea.vmem %s3, %s300
      $region56: #{content_encoder_forward.40} parent=51 // pred_fallthru
        _
      // Predicated region
      $region57: #{content_encoder_forward.40} parent=51 // pred_check
        %p302 = pneg %p148
      $region58: #{content_encoder_forward.40} parent=51 // pred_check_branch
        %304 = sbr.rel (%p302) target = $region60
      $region59: #{content_encoder_forward.40} parent=51 // pred_region
        %p305 = scmp.lt.s32.totalorder %s22, 1
        %s306 = scalar_select %p305, %s22, 1
        %s307 = scalar_lea.vmem %s4, %s306
      $region60: #{content_encoder_forward.40} parent=51 // pred_fallthru
        _
    $region52: #{content_encoder_forward.40} parent=5 // pred_fallthru
      _
  $region6: #{content_encoder_forward.40} parent=0 // loop_footer
    %s15 = sadd.s32 1, %s11
  $region7: #{content_encoder_forward.40} parent=0 // loop_footer_branch
    %10 = sbr.rel target = $region3
  $region8: #{content_encoder_forward.40} parent=0 // loop_exit
    _

// kernel: content_encoder_forward.44
$region0: #{content_encoder_forward.44}
  #allocation0 [shape = 'u32[]', space=smem, size = 0x4, offset = 0x4, fixed_abs, tag = 'smem constant byte address 0x4 - core index']
  #allocation1 [shape = 'u32[144,128]{1,0:T(1,128)}', space=vmem, size = 0x12000, scoped, tag = 'internal scratch']
  #allocation2 [shape = 'f32[4,128]{1,0:T(4,128)}', space=vmem, size = 0x800, scoped, tag = 'scratch operand']
  %s0 = inlined_call_operand.vmem [shape: f32[2,6,6,128], index: 0, kind: input, shape index: {}]
  %s1 = inlined_call_operand.vmem [shape: f32[9,128,128], index: 1, kind: input, shape index: {}]
  %s2 = inlined_call_operand.vmem [shape: f32[1,128], index: 2, kind: input, shape index: {}]
  %s3 = inlined_call_operand.vmem [shape: f32[2,4,4,128], index: 3, kind: output, shape index: {}]
  %s4 = sld [smem:[#allocation0]]
  $region53: #{content_encoder_forward.44} parent=0
    _
  %s6 = ssub.s32 1, %s4
  %s7 = scalar_select 0, %s6, %s4
  loop: start=0, step=1, limit=26
  $region2: #{content_encoder_forward.44} parent=0 // loop_pre_header
    _
  $region3: #{content_encoder_forward.44} parent=0 // loop_header
    %s9 = sphi 0, %s13
    %p10 = scmp.ge.s32.totalorder %s9, 26
    %s16 = sphi 0, %s35
    %s17 = sphi 0, %s31
    %s18 = sphi 0, %s27
    %s19 = sphi 0, %s16
    %s20 = sphi 0, %s17
    %s21 = sphi 0, %s18
    %s22 = sphi 0, %s19
    %s23 = sphi 0, %s20
    %s24 = sphi 0, %s21
    %s38 = sphi 0, %s40
    %s41 = sphi 0, %s38
    %s42 = sphi 0, %s41
    %s58 = sphi 0, %s42
    %s62 = sphi 0, %s62
    %s64 = sphi 0, %s62
    %s65 = sphi 0, %s64
    %s79 = sphi 0, %s65
    %s83 = sphi 0, %s83
    %s85 = sphi 0, %s83
    %s86 = sphi 0, %s85
    %s100 = sphi 0, %s86
    %s108 = sphi 0, %s110
    %s111 = sphi 0, %s108
    %s112 = sphi 0, %s111
    %s128 = sphi 0, %s112
  $region4: #{content_encoder_forward.44} parent=0 // loop_header_branch
    %12 = sbr.rel (%p10) target = $region8
  $region5: #{content_encoder_forward.44} parent=0 // loop_body
    %s14 = ssub.s32 %s9, 1
    %s15 = ssub.s32 %s9, 2
    %s25 = sadd.s32 1, %s18
    %p26 = scmp.ge.s32.totalorder %s25, 3
    %s27 = scalar_select %p26, 0, %s25
    %s28 = sadd.s32 1, %s17
    %s29 = scalar_select %p26, %s28, %s17
    %p30 = scmp.ge.s32.totalorder %s29, 4
    %s31 = scalar_select %p30, 0, %s29
    %s32 = sadd.s32 1, %s16
    %s33 = scalar_select %p30, %s32, %s16
    %p34 = scmp.ge.s32.totalorder %s33, 2
    %s35 = scalar_select %p34, 0, %s33
    %s36 = ssub.s32 %s16, %s35
    %p37 = scmp.eq.s32.totalorder %s36, 0
    %s39 = sadd.s32 %s38, 1
    %s40 = scalar_select %p37, %s38, %s39
    %p43 = pneg %p37
    %p44 = scmp.eq.s32.totalorder %s9, 23
    %p45 = por %p43, %p44
    %p46 = scmp.ne.s32.totalorder %s38, %s41
    %p47 = scmp.eq.s32.totalorder %s9, 0
    %p48 = por %p46, %p47
    %p49 = scmp.ne.s32.totalorder %s38, %s41
    %p50 = scmp.eq.s32.totalorder %s14, 23
    %p51 = por %p49, %p50
    %p52 = scmp.ne.s32.totalorder %s41, %s42
    %p53 = scmp.eq.s32.totalorder %s14, 0
    %p54 = por %p52, %p53
    %p55 = scmp.ne.s32.totalorder %s41, %s42
    %p56 = scmp.eq.s32.totalorder %s15, 23
    %p57 = por %p55, %p56
    %p59 = scmp.ne.s32.totalorder %s42, %s58
    %p60 = scmp.eq.s32.totalorder %s15, 0
    %p61 = por %p59, %p60
    %s63 = sadd.s32 %s62, 1
    %p66 = scmp.eq.s32.totalorder %s9, 23
    %p67 = scmp.ne.s32.totalorder %s62, %s64
    %p68 = scmp.eq.s32.totalorder %s9, 0
    %p69 = por %p67, %p68
    %p70 = scmp.ne.s32.totalorder %s62, %s64
    %p71 = scmp.eq.s32.totalorder %s14, 23
    %p72 = por %p70, %p71
    %p73 = scmp.ne.s32.totalorder %s64, %s65
    %p74 = scmp.eq.s32.totalorder %s14, 0
    %p75 = por %p73, %p74
    %p76 = scmp.ne.s32.totalorder %s64, %s65
    %p77 = scmp.eq.s32.totalorder %s15, 23
    %p78 = por %p76, %p77
    %p80 = scmp.ne.s32.totalorder %s65, %s79
    %p81 = scmp.eq.s32.totalorder %s15, 0
    %p82 = por %p80, %p81
    %s84 = sadd.s32 %s83, 1
    %p87 = scmp.eq.s32.totalorder %s9, 23
    %p88 = scmp.ne.s32.totalorder %s83, %s85
    %p89 = scmp.eq.s32.totalorder %s9, 0
    %p90 = por %p88, %p89
    %p91 = scmp.ne.s32.totalorder %s83, %s85
    %p92 = scmp.eq.s32.totalorder %s14, 23
    %p93 = por %p91, %p92
    %p94 = scmp.ne.s32.totalorder %s85, %s86
    %p95 = scmp.eq.s32.totalorder %s14, 0
    %p96 = por %p94, %p95
    %p97 = scmp.ne.s32.totalorder %s85, %s86
    %p98 = scmp.eq.s32.totalorder %s15, 23
    %p99 = por %p97, %p98
    %p101 = scmp.ne.s32.totalorder %s86, %s100
    %p102 = scmp.eq.s32.totalorder %s15, 0
    %p103 = por %p101, %p102
    %s104 = ssub.s32 %s16, %s35
    %s105 = ssub.s32 %s17, %s31
    %s106 = sor.u32 %s104, %s105
    %p107 = scmp.eq.s32.totalorder %s106, 0
    %s109 = sadd.s32 %s108, 1
    %s110 = scalar_select %p107, %s108, %s109
    %p113 = pneg %p107
    %p114 = scmp.eq.s32.totalorder %s9, 23
    %p115 = por %p113, %p114
    %p116 = scmp.ne.s32.totalorder %s108, %s111
    %p117 = scmp.eq.s32.totalorder %s9, 0
    %p118 = por %p116, %p117
    %p119 = scmp.ne.s32.totalorder %s108, %s111
    %p120 = scmp.eq.s32.totalorder %s14, 23
    %p121 = por %p119, %p120
    %p122 = scmp.ne.s32.totalorder %s111, %s112
    %p123 = scmp.eq.s32.totalorder %s14, 0
    %p124 = por %p122, %p123
    %p125 = scmp.ne.s32.totalorder %s111, %s112
    %p126 = scmp.eq.s32.totalorder %s15, 23
    %p127 = por %p125, %p126
    %p129 = scmp.ne.s32.totalorder %s112, %s128
    %p130 = scmp.eq.s32.totalorder %s15, 0
    %p131 = por %p129, %p130
    %p132 = scmp.le.s32.totalorder 1, %s9
    %p133 = scmp.lt.s32.totalorder %s9, 25
    %p134 = pnand %p132, %p133
    %p135 = pneg %p134
    // Predicated region
    $region9: #{content_encoder_forward.44} parent=5 // pred_check
      _
    $region10: #{content_encoder_forward.44} parent=5 // pred_check_branch
      %137 = sbr.rel (%p134) target = $region12
    $region11: #{content_encoder_forward.44} parent=5 // pred_region
      %s138 = ssub.s32 %s9, 1
      // Predicated region
      $region13: #{content_encoder_forward.44} parent=11 // pred_check
        %p139 = pneg %p75
      $region14: #{content_encoder_forward.44} parent=11 // pred_check_branch
        %141 = sbr.rel (%p139) target = $region16
      $region15: #{content_encoder_forward.44} parent=11 // pred_region
        _
      $region16: #{content_encoder_forward.44} parent=11 // pred_fallthru
        _
      // Predicated region
      $region17: #{content_encoder_forward.44} parent=11 // pred_check
        %p142 = pneg %p96
      $region18: #{content_encoder_forward.44} parent=11 // pred_check_branch
        %144 = sbr.rel (%p142) target = $region20
      $region19: #{content_encoder_forward.44} parent=11 // pred_region
        _
      $region20: #{content_encoder_forward.44} parent=11 // pred_fallthru
        _
    $region12: #{content_encoder_forward.44} parent=5 // pred_fallthru
      _
    %p145 = scmp.lt.s32.totalorder %s9, 24
    // Predicated region
    $region21: #{content_encoder_forward.44} parent=5 // pred_check
      %p146 = pneg %p145
    $region22: #{content_encoder_forward.44} parent=5 // pred_check_branch
      %148 = sbr.rel (%p146) target = $region24
    $region23: #{content_encoder_forward.44} parent=5 // pred_region
      // Predicated region
      $region25: #{content_encoder_forward.44} parent=23 // pred_check
        %p149 = pneg %p48
      $region26: #{content_encoder_forward.44} parent=23 // pred_check_branch
        %151 = sbr.rel (%p149) target = $region28
      $region27: #{content_encoder_forward.44} parent=23 // pred_region
        %p152 = scmp.lt.s32.totalorder %s16, 1
        %s153 = scalar_select %p152, %s16, 1
        %s154 = smul.addr %s153, 6
        %s155 = smul.addr %s154, 8
        %s156 = scalar_lea.vmem %s0, %s155
      $region28: #{content_encoder_forward.44} parent=23 // pred_fallthru
        _
    $region24: #{content_encoder_forward.44} parent=5 // pred_fallthru
      _
    %p157 = scmp.le.s32.totalorder 1, %s9
    %p158 = scmp.lt.s32.totalorder %s9, 25
    %p159 = pnand %p157, %p158
    %p160 = pneg %p159
    // Predicated region
    $region29: #{content_encoder_forward.44} parent=5 // pred_check
      _
    $region30: #{content_encoder_forward.44} parent=5 // pred_check_branch
      %162 = sbr.rel (%p159) target = $region32
    $region31: #{content_encoder_forward.44} parent=5 // pred_region
      %s163 = ssub.s32 %s9, 1
      %p164 = scmp.lt.s32.totalorder %s19, 1
      %s165 = scalar_select %p164, %s19, 1
      %s166 = smul.addr %s165, 6
      %s167 = smul.addr %s166, 8
      %s168 = scalar_lea.vmem %s0, %s167
      %p169 = pneg %p54
      %p170 = pneg %p51
      %p171 = pneg %p75
      %p172 = pneg %p72
      %p173 = pneg %p96
      %p174 = pneg %p93
      %p175 = pneg %p124
      %p176 = pneg %p121
      %p177 = scmp.lt.s32.totalorder %s19, 1
      %s178 = scalar_select %p177, %s19, 1
      %p179 = scmp.lt.s32.totalorder %s20, 3
      %s180 = scalar_select %p179, %s20, 3
      %s181 = smul.addr %s178, 4
      %s182 = sadd.s32 %s180, %s181
      %s183 = smul.addr %s182, 4
      %s184 = scalar_lea.vmem %s3, %s183
      %p185 = scmp.lt.s32.totalorder %s19, 1
      %s186 = scalar_select %p185, %s19, 1
      %s187 = smul.addr %s186, 6
      %s188 = smul.addr %s187, 8
      %s189 = scalar_lea.vmem %s0, %s188
      %p190 = scmp.lt.s32.totalorder %s19, 1
      %s191 = scalar_select %p190, %s19, 1
      %p192 = scmp.lt.s32.totalorder %s20, 3
      %s193 = scalar_select %p192, %s20, 3
      %s194 = smul.addr %s191, 4
      %s195 = sadd.s32 %s193, %s194
      %s196 = smul.addr %s195, 4
      %s197 = scalar_lea.vmem %s3, %s196
      %p198 = scmp.eq.s32.totalorder %s21, 0
      // Predicated region
      $region33: #{content_encoder_forward.44} parent=31 // pred_check
        %p199 = pneg %p198
      $region34: #{content_encoder_forward.44} parent=31 // pred_check_branch
        %201 = sbr.rel (%p199) target = $region36
      $region35: #{content_encoder_forward.44} parent=31 // pred_region
        %202 = vst [vmem:[#allocation2] sm:$0xf] 0.0
      $region36: #{content_encoder_forward.44} parent=31 // pred_fallthru
        _
      %s203 = sadd.s32 %s20, %s21
      %s204 = smul.u32 %s203, 8
      %s205 = scalar_lea.vmem %s189, %s204
      %v206 = vld [vmem:[%s205] sm:$0xf]
      %s207 = smul.u32 %s21, 3
      %s208 = smul.u32 %s207, 128
      %s209 = scalar_lea.vmem %s1, %s208
      %v210 = vld [vmem:[%s209] sm:$0xff]
      %v211 = vld [vmem:[%s209 + $0x8] sm:$0xff]
      %v212 = vld [vmem:[%s209 + $0x10] sm:$0xff]
      %v213 = vld [vmem:[%s209 + $0x18] sm:$0xff]
      %v214 = vld [vmem:[%s209 + $0x20] sm:$0xff]
      %v215 = vld [vmem:[%s209 + $0x28] sm:$0xff]
      %v216 = vld [vmem:[%s209 + $0x30] sm:$0xff]
      %v217 = vld [vmem:[%s209 + $0x38] sm:$0xff]
      %v218 = vld [vmem:[%s209 + $0x40] sm:$0xff]
      %v219 = vld [vmem:[%s209 + $0x48] sm:$0xff]
      %v220 = vld [vmem:[%s209 + $0x50] sm:$0xff]
      %v221 = vld [vmem:[%s209 + $0x58] sm:$0xff]
      %v222 = vld [vmem:[%s209 + $0x60] sm:$0xff]
      %v223 = vld [vmem:[%s209 + $0x68] sm:$0xff]
      %v224 = vld [vmem:[%s209 + $0x70] sm:$0xff]
      %v225 = vld [vmem:[%s209 + $0x78] sm:$0xff]
      %v226 = vld [vmem:[%s205 + $0x1] sm:$0xf]
      %s227 = sadd.s32 %s207, 1
      %s228 = smul.u32 %s227, 128
      %s229 = scalar_lea.vmem %s1, %s228
      %v230 = vld [vmem:[%s229] sm:$0xff]
      %v231 = vld [vmem:[%s229 + $0x8] sm:$0xff]
      %v232 = vld [vmem:[%s229 + $0x10] sm:$0xff]
      %v233 = vld [vmem:[%s229 + $0x18] sm:$0xff]
      %v234 = vld [vmem:[%s229 + $0x20] sm:$0xff]
      %v235 = vld [vmem:[%s229 + $0x28] sm:$0xff]
      %v236 = vld [vmem:[%s229 + $0x30] sm:$0xff]
      %v237 = vld [vmem:[%s229 + $0x38] sm:$0xff]
      %v238 = vld [vmem:[%s229 + $0x40] sm:$0xff]
      %v239 = vld [vmem:[%s229 + $0x48] sm:$0xff]
      %v240 = vld [vmem:[%s229 + $0x50] sm:$0xff]
      %v241 = vld [vmem:[%s229 + $0x58] sm:$0xff]
      %v242 = vld [vmem:[%s229 + $0x60] sm:$0xff]
      %v243 = vld [vmem:[%s229 + $0x68] sm:$0xff]
      %v244 = vld [vmem:[%s229 + $0x70] sm:$0xff]
      %v245 = vld [vmem:[%s229 + $0x78] sm:$0xff]
      %246 = vmatprep.subr.mxu0 0.0
      %247 = vmatpush1.msra.mxu0 %v245
      %248 = vmatprep.subr.mxu0 0.0
      %249 = vmatpush1.msra.mxu0 %v244
      %250 = vmatprep.subr.mxu0 0.0
      %251 = vmatpush1.msra.mxu0 %v243
      %252 = vmatprep.subr.mxu0 0.0
      %253 = vmatpush1.msra.mxu0 %v242
      %254 = vmatprep.subr.mxu0 0.0
      %255 = vmatpush1.msra.mxu0 %v241
      %256 = vmatprep.subr.mxu0 0.0
      %257 = vmatpush1.msra.mxu0 %v240
      %258 = vmatprep.subr.mxu0 0.0
      %259 = vmatpush1.msra.mxu0 %v239
      %260 = vmatprep.subr.mxu0 0.0
      %261 = vmatpush1.msra.mxu0 %v238
      %262 = vmatprep.subr.mxu0 0.0
      %263 = vmatpush1.msra.mxu0 %v237
      %264 = vmatprep.subr.mxu0 0.0
      %265 = vmatpush1.msra.mxu0 %v236
      %266 = vmatprep.subr.mxu0 0.0
      %267 = vmatpush1.msra.mxu0 %v235
      %268 = vmatprep.subr.mxu0 0.0
      %269 = vmatpush1.msra.mxu0 %v234
      %270 = vmatprep.subr.mxu0 0.0
      %271 = vmatpush1.msra.mxu0 %v233
      %272 = vmatprep.subr.mxu0 0.0
      %273 = vmatpush1.msra.mxu0 %v232
      %274 = vmatprep.subr.mxu0 0.0
      %275 = vmatpush1.msra.mxu0 %v231
      %276 = vmatprep.subr.mxu0 0.0
      %277 = vmatpush1.msra.mxu0 %v230
      %278 = vmatprep.subr.mxu0 0.0
      %279 = vmatpush2.msra.mxu0 0.0
      %280 = vmatprep.subr.mxu0 0.0
      %281 = vmatpush2.msra.mxu0 0.0
      %282 = vmatprep.subr.mxu0 0.0
      %283 = vmatpush2.msra.mxu0 0.0
      %284 = vmatprep.subr.mxu0 0.0
      %285 = vmatpush2.msra.mxu0 0.0
      %286 = vmatprep.subr.mxu0 0.0
      %287 = vmatpush2.msra.mxu0 0.0
      %288 = vmatprep.subr.mxu0 0.0
      %289 = vmatpush2.msra.mxu0 0.0
      %290 = vmatprep.subr.mxu0 0.0
      %291 = vmatpush2.msra.mxu0 0.0
      %292 = vmatprep.subr.mxu0 0.0
      %293 = vmatpush2.msra.mxu0 0.0
      %294 = vmatprep.subr.mxu0 0.0
      %295 = vmatpush2.msra.mxu0 0.0
      %296 = vmatprep.subr.mxu0 0.0
      %297 = vmatpush2.msra.mxu0 0.0
      %298 = vmatprep.subr.mxu0 0.0
      %299 = vmatpush2.msra.mxu0 0.0
      %300 = vmatprep.subr.mxu0 0.0
      %301 = vmatpush2.msra.mxu0 0.0
      %302 = vmatprep.subr.mxu0 0.0
      %303 = vmatpush2.msra.mxu0 0.0
      %304 = vmatprep.subr.mxu0 0.0
      %305 = vmatpush2.msra.mxu0 0.0
      %306 = vmatprep.subr.mxu0 0.0
      %307 = vmatpush2.msra.mxu0 0.0
      %308 = vmatprep.subr.mxu0 0.0
      %309 = vmatpush2.msra.mxu0 0.0
      %310 = vmatprep.mubr.f32.mxu0 0.0
      %311 = vmatmul.mubr.f32.gmra.mxu0 %v226
      %v312 = vpop.f32.mrf.mxu0
      %v313 = vadd.f32 0.0, %v312
      %v314 = vpop.f32.mrf.mxu0
      %315 = vdwg.mxu0
      %316 = vmatprep.subr.mxu0 0.0
      %317 = vmatpush1.msra.mxu0 %v225
      %318 = vmatprep.subr.mxu0 0.0
      %319 = vmatpush1.msra.mxu0 %v224
      %320 = vmatprep.subr.mxu0 0.0
      %321 = vmatpush1.msra.mxu0 %v223
      %322 = vmatprep.subr.mxu0 0.0
      %323 = vmatpush1.msra.mxu0 %v222
      %324 = vmatprep.subr.mxu0 0.0
      %325 = vmatpush1.msra.mxu0 %v221
      %326 = vmatprep.subr.mxu0 0.0
      %327 = vmatpush1.msra.mxu0 %v220
      %328 = vmatprep.subr.mxu0 0.0
      %329 = vmatpush1.msra.mxu0 %v219
      %330 = vmatprep.subr.mxu0 0.0
      %331 = vmatpush1.msra.mxu0 %v218
      %332 = vmatprep.subr.mxu0 0.0
      %333 = vmatpush1.msra.mxu0 %v217
      %334 = vmatprep.subr.mxu0 0.0
      %335 = vmatpush1.msra.mxu0 %v216
      %336 = vmatprep.subr.mxu0 0.0
      %337 = vmatpush1.msra.mxu0 %v215
      %338 = vmatprep.subr.mxu0 0.0
      %339 = vmatpush1.msra.mxu0 %v214
      %340 = vmatprep.subr.mxu0 0.0
      %341 = vmatpush1.msra.mxu0 %v213
      %342 = vmatprep.subr.mxu0 0.0
      %343 = vmatpush1.msra.mxu0 %v212
      %344 = vmatprep.subr.mxu0 0.0
      %345 = vmatpush1.msra.mxu0 %v211
      %346 = vmatprep.subr.mxu0 0.0
      %347 = vmatpush1.msra.mxu0 %v210
      %348 = vmatprep.subr.mxu0 0.0
      %349 = vmatpush2.msra.mxu0 0.0
      %350 = vmatprep.subr.mxu0 0.0
      %351 = vmatpush2.msra.mxu0 0.0
      %352 = vmatprep.subr.mxu0 0.0
      %353 = vmatpush2.msra.mxu0 0.0
      %354 = vmatprep.subr.mxu0 0.0
      %355 = vmatpush2.msra.mxu0 0.0
      %356 = vmatprep.subr.mxu0 0.0
      %357 = vmatpush2.msra.mxu0 0.0
      %358 = vmatprep.subr.mxu0 0.0
      %359 = vmatpush2.msra.mxu0 0.0
      %360 = vmatprep.subr.mxu0 0.0
      %361 = vmatpush2.msra.mxu0 0.0
      %362 = vmatprep.subr.mxu0 0.0
      %363 = vmatpush2.msra.mxu0 0.0
      %364 = vmatprep.subr.mxu0 0.0
      %365 = vmatpush2.msra.mxu0 0.0
      %366 = vmatprep.subr.mxu0 0.0
      %367 = vmatpush2.msra.mxu0 0.0
      %368 = vmatprep.subr.mxu0 0.0
      %369 = vmatpush2.msra.mxu0 0.0
      %370 = vmatprep.subr.mxu0 0.0
      %371 = vmatpush2.msra.mxu0 0.0
      %372 = vmatprep.subr.mxu0 0.0
      %373 = vmatpush2.msra.mxu0 0.0
      %374 = vmatprep.subr.mxu0 0.0
      %375 = vmatpush2.msra.mxu0 0.0
      %376 = vmatprep.subr.mxu0 0.0
      %377 = vmatpush2.msra.mxu0 0.0
      %378 = vmatprep.subr.mxu0 0.0
      %379 = vmatpush2.msra.mxu0 0.0
      %380 = vmatprep.mubr.f32.mxu0 0.0
      %381 = vmatmul.mubr.f32.gmra.mxu0 %v206
      %v382 = vpop.f32.mrf.mxu0
      %v383 = vadd.f32 %v313, %v382
      %v384 = vpop.f32.mrf.mxu0
      %385 = vdwg.mxu0
      %v386 = vld [vmem:[%s205 + $0x2] sm:$0xf]
      %s387 = sadd.s32 %s207, 2
      %s388 = smul.u32 %s387, 128
      %s389 = scalar_lea.vmem %s1, %s388
      %v390 = vld [vmem:[%s389] sm:$0xff]
      %v391 = vld [vmem:[%s389 + $0x8] sm:$0xff]
      %v392 = vld [vmem:[%s389 + $0x10] sm:$0xff]
      %v393 = vld [vmem:[%s389 + $0x18] sm:$0xff]
      %v394 = vld [vmem:[%s389 + $0x20] sm:$0xff]
      %v395 = vld [vmem:[%s389 + $0x28] sm:$0xff]
      %v396 = vld [vmem:[%s389 + $0x30] sm:$0xff]
      %v397 = vld [vmem:[%s389 + $0x38] sm:$0xff]
      %v398 = vld [vmem:[%s389 + $0x40] sm:$0xff]
      %v399 = vld [vmem:[%s389 + $0x48] sm:$0xff]
      %v400 = vld [vmem:[%s389 + $0x50] sm:$0xff]
      %v401 = vld [vmem:[%s389 + $0x58] sm:$0xff]
      %v402 = vld [vmem:[%s389 + $0x60] sm:$0xff]
      %v403 = vld [vmem:[%s389 + $0x68] sm:$0xff]
      %v404 = vld [vmem:[%s389 + $0x70] sm:$0xff]
      %v405 = vld [vmem:[%s389 + $0x78] sm:$0xff]
      %406 = vmatprep.subr.mxu0 0.0
      %407 = vmatpush1.msra.mxu0 %v405
      %408 = vmatprep.subr.mxu0 0.0
      %409 = vmatpush1.msra.mxu0 %v404
      %410 = vmatprep.subr.mxu0 0.0
      %411 = vmatpush1.msra.mxu0 %v403
      %412 = vmatprep.subr.mxu0 0.0
      %413 = vmatpush1.msra.mxu0 %v402
      %414 = vmatprep.subr.mxu0 0.0
      %415 = vmatpush1.msra.mxu0 %v401
      %416 = vmatprep.subr.mxu0 0.0
      %417 = vmatpush1.msra.mxu0 %v400
      %418 = vmatprep.subr.mxu0 0.0
      %419 = vmatpush1.msra.mxu0 %v399
      %420 = vmatprep.subr.mxu0 0.0
      %421 = vmatpush1.msra.mxu0 %v398
      %422 = vmatprep.subr.mxu0 0.0
      %423 = vmatpush1.msra.mxu0 %v397
      %424 = vmatprep.subr.mxu0 0.0
      %425 = vmatpush1.msra.mxu0 %v396
      %426 = vmatprep.subr.mxu0 0.0
      %427 = vmatpush1.msra.mxu0 %v395
      %428 = vmatprep.subr.mxu0 0.0
      %429 = vmatpush1.msra.mxu0 %v394
      %430 = vmatprep.subr.mxu0 0.0
      %431 = vmatpush1.msra.mxu0 %v393
      %432 = vmatprep.subr.mxu0 0.0
      %433 = vmatpush1.msra.mxu0 %v392
      %434 = vmatprep.subr.mxu0 0.0
      %435 = vmatpush1.msra.mxu0 %v391
      %436 = vmatprep.subr.mxu0 0.0
      %437 = vmatpush1.msra.mxu0 %v390
      %438 = vmatprep.subr.mxu0 0.0
      %439 = vmatpush2.msra.mxu0 0.0
      %440 = vmatprep.subr.mxu0 0.0
      %441 = vmatpush2.msra.mxu0 0.0
      %442 = vmatprep.subr.mxu0 0.0
      %443 = vmatpush2.msra.mxu0 0.0
      %444 = vmatprep.subr.mxu0 0.0
      %445 = vmatpush2.msra.mxu0 0.0
      %446 = vmatprep.subr.mxu0 0.0
      %447 = vmatpush2.msra.mxu0 0.0
      %448 = vmatprep.subr.mxu0 0.0
      %449 = vmatpush2.msra.mxu0 0.0
      %450 = vmatprep.subr.mxu0 0.0
      %451 = vmatpush2.msra.mxu0 0.0
      %452 = vmatprep.subr.mxu0 0.0
      %453 = vmatpush2.msra.mxu0 0.0
      %454 = vmatprep.subr.mxu0 0.0
      %455 = vmatpush2.msra.mxu0 0.0
      %456 = vmatprep.subr.mxu0 0.0
      %457 = vmatpush2.msra.mxu0 0.0
      %458 = vmatprep.subr.mxu0 0.0
      %459 = vmatpush2.msra.mxu0 0.0
      %460 = vmatprep.subr.mxu0 0.0
      %461 = vmatpush2.msra.mxu0 0.0
      %462 = vmatprep.subr.mxu0 0.0
      %463 = vmatpush2.msra.mxu0 0.0
      %464 = vmatprep.subr.mxu0 0.0
      %465 = vmatpush2.msra.mxu0 0.0
      %466 = vmatprep.subr.mxu0 0.0
      %467 = vmatpush2.msra.mxu0 0.0
      %468 = vmatprep.subr.mxu0 0.0
      %469 = vmatpush2.msra.mxu0 0.0
      %470 = vmatprep.mubr.f32.mxu0 0.0
      %471 = vmatmul.mubr.f32.gmra.mxu0 %v386
      %v472 = vpop.f32.mrf.mxu0
      %v473 = vadd.f32 0.0, %v472
      %v474 = vpop.f32.mrf.mxu0
      %475 = vdwg.mxu0
      %v476 = vadd.f32 %v383, %v473
      %v477 = vld [vmem:[#allocation2] sm:$0xf]
      %v478 = vadd.f32 %v477, %v476
      %479 = vst [vmem:[#allocation2] sm:$0xf] %v478
      %p480 = scmp.eq.s32.totalorder %s21, 2
      // Predicated region
      $region37: #{content_encoder_forward.44} parent=31 // pred_check
        %p481 = pneg %p480
      $region38: #{content_encoder_forward.44} parent=31 // pred_check_branch
        %483 = sbr.rel (%p481) target = $region40
      $region39: #{content_encoder_forward.44} parent=31 // pred_region
        %v484 = vld [vmem:[#allocation2] sm:$0xf]
        %v485 = vld [vmem:[%s2] sm:$0x1]
        %v487 = vlaneseq
        %v488 = vshrl.u32 %v487, 7
        %v489 = vsub.s32 0, %v488
        %v490 = vrot.slane %v485, %v489
        %v492 = vadd.f32 %v484, %v490
        %493 = vst [vmem:[%s197] sm:$0xf] %v492
      $region40: #{content_encoder_forward.44} parent=31 // pred_fallthru
        _
      %p494 = scmp.lt.s32.totalorder %s19, 1
      %s495 = scalar_select %p494, %s19, 1
      %p496 = scmp.lt.s32.totalorder %s20, 3
      %s497 = scalar_select %p496, %s20, 3
      %s498 = smul.addr %s495, 4
      %s499 = sadd.s32 %s497, %s498
      %s500 = smul.addr %s499, 4
      %s501 = scalar_lea.vmem %s3, %s500
      // Predicated region
      $region41: #{content_encoder_forward.44} parent=31 // pred_check
        %p502 = pneg %p121
      $region42: #{content_encoder_forward.44} parent=31 // pred_check_branch
        %504 = sbr.rel (%p502) target = $region44
      $region43: #{content_encoder_forward.44} parent=31 // pred_region
        _
      $region44: #{content_encoder_forward.44} parent=31 // pred_fallthru
        _
    $region32: #{content_encoder_forward.44} parent=5 // pred_fallthru
      _
    %p505 = scmp.le.s32.totalorder 2, %s9
    // Predicated region
    $region45: #{content_encoder_forward.44} parent=5 // pred_check
      %p506 = pneg %p505
    $region46: #{content_encoder_forward.44} parent=5 // pred_check_branch
      %508 = sbr.rel (%p506) target = $region48
    $region47: #{content_encoder_forward.44} parent=5 // pred_region
      %s509 = ssub.s32 %s9, 2
      // Predicated region
      $region49: #{content_encoder_forward.44} parent=47 // pred_check
        %p510 = pneg %p127
      $region50: #{content_encoder_forward.44} parent=47 // pred_check_branch
        %512 = sbr.rel (%p510) target = $region52
      $region51: #{content_encoder_forward.44} parent=47 // pred_region
        %p513 = scmp.lt.s32.totalorder %s22, 1
        %s514 = scalar_select %p513, %s22, 1
        %p515 = scmp.lt.s32.totalorder %s23, 3
        %s516 = scalar_select %p515, %s23, 3
        %s517 = smul.addr %s514, 4
        %s518 = sadd.s32 %s516, %s517
        %s519 = smul.addr %s518, 4
        %s520 = scalar_lea.vmem %s3, %s519
      $region52: #{content_encoder_forward.44} parent=47 // pred_fallthru
        _
    $region48: #{content_encoder_forward.44} parent=5 // pred_fallthru
      _
  $region6: #{content_encoder_forward.44} parent=0 // loop_footer
    %s13 = sadd.s32 1, %s9
  $region7: #{content_encoder_forward.44} parent=0 // loop_footer_branch
    %8 = sbr.rel target = $region3
  $region8: #{content_encoder_forward.44} parent=0 // loop_exit
    _

// kernel: content_encoder_forward.47
$region0: #{content_encoder_forward.47}
  #allocation0 [shape = 'u32[]', space=smem, size = 0x4, offset = 0x4, fixed_abs, tag = 'smem constant byte address 0x4 - core index']
  #allocation1 [shape = 'u32[144,128]{1,0:T(1,128)}', space=vmem, size = 0x12000, scoped, tag = 'internal scratch']
  #allocation2 [shape = 'f32[4,128]{1,0:T(4,128)}', space=vmem, size = 0x800, scoped, tag = 'scratch operand']
  %s0 = inlined_call_operand.vmem [shape: f32[2,6,6,128], index: 0, kind: input, shape index: {}]
  %s1 = inlined_call_operand.vmem [shape: f32[9,128,128], index: 1, kind: input, shape index: {}]
  %s2 = inlined_call_operand.vmem [shape: f32[1,128], index: 2, kind: input, shape index: {}]
  %s3 = inlined_call_operand.vmem [shape: f32[2,4,4,128], index: 3, kind: input, shape index: {}]
  %s4 = inlined_call_operand.vmem [shape: f32[2,4,4,128], index: 4, kind: output, shape index: {}]
  %s5 = sld [smem:[#allocation0]]
  $region57: #{content_encoder_forward.47} parent=0
    _
  %s7 = ssub.s32 1, %s5
  %s8 = scalar_select 0, %s7, %s5
  loop: start=0, step=1, limit=26
  $region2: #{content_encoder_forward.47} parent=0 // loop_pre_header
    _
  $region3: #{content_encoder_forward.47} parent=0 // loop_header
    %s10 = sphi 0, %s14
    %p11 = scmp.ge.s32.totalorder %s10, 26
    %s17 = sphi 0, %s36
    %s18 = sphi 0, %s32
    %s19 = sphi 0, %s28
    %s20 = sphi 0, %s17
    %s21 = sphi 0, %s18
    %s22 = sphi 0, %s19
    %s23 = sphi 0, %s20
    %s24 = sphi 0, %s21
    %s25 = sphi 0, %s22
    %s39 = sphi 0, %s41
    %s42 = sphi 0, %s39
    %s43 = sphi 0, %s42
    %s59 = sphi 0, %s43
    %s63 = sphi 0, %s63
    %s65 = sphi 0, %s63
    %s66 = sphi 0, %s65
    %s80 = sphi 0, %s66
    %s84 = sphi 0, %s84
    %s86 = sphi 0, %s84
    %s87 = sphi 0, %s86
    %s101 = sphi 0, %s87
    %s109 = sphi 0, %s111
    %s112 = sphi 0, %s109
    %s113 = sphi 0, %s112
    %s129 = sphi 0, %s113
    %s137 = sphi 0, %s139
    %s140 = sphi 0, %s137
    %s141 = sphi 0, %s140
    %s157 = sphi 0, %s141
  $region4: #{content_encoder_forward.47} parent=0 // loop_header_branch
    %13 = sbr.rel (%p11) target = $region8
  $region5: #{content_encoder_forward.47} parent=0 // loop_body
    %s15 = ssub.s32 %s10, 1
    %s16 = ssub.s32 %s10, 2
    %s26 = sadd.s32 1, %s19
    %p27 = scmp.ge.s32.totalorder %s26, 3
    %s28 = scalar_select %p27, 0, %s26
    %s29 = sadd.s32 1, %s18
    %s30 = scalar_select %p27, %s29, %s18
    %p31 = scmp.ge.s32.totalorder %s30, 4
    %s32 = scalar_select %p31, 0, %s30
    %s33 = sadd.s32 1, %s17
    %s34 = scalar_select %p31, %s33, %s17
    %p35 = scmp.ge.s32.totalorder %s34, 2
    %s36 = scalar_select %p35, 0, %s34
    %s37 = ssub.s32 %s17, %s36
    %p38 = scmp.eq.s32.totalorder %s37, 0
    %s40 = sadd.s32 %s39, 1
    %s41 = scalar_select %p38, %s39, %s40
    %p44 = pneg %p38
    %p45 = scmp.eq.s32.totalorder %s10, 23
    %p46 = por %p44, %p45
    %p47 = scmp.ne.s32.totalorder %s39, %s42
    %p48 = scmp.eq.s32.totalorder %s10, 0
    %p49 = por %p47, %p48
    %p50 = scmp.ne.s32.totalorder %s39, %s42
    %p51 = scmp.eq.s32.totalorder %s15, 23
    %p52 = por %p50, %p51
    %p53 = scmp.ne.s32.totalorder %s42, %s43
    %p54 = scmp.eq.s32.totalorder %s15, 0
    %p55 = por %p53, %p54
    %p56 = scmp.ne.s32.totalorder %s42, %s43
    %p57 = scmp.eq.s32.totalorder %s16, 23
    %p58 = por %p56, %p57
    %p60 = scmp.ne.s32.totalorder %s43, %s59
    %p61 = scmp.eq.s32.totalorder %s16, 0
    %p62 = por %p60, %p61
    %s64 = sadd.s32 %s63, 1
    %p67 = scmp.eq.s32.totalorder %s10, 23
    %p68 = scmp.ne.s32.totalorder %s63, %s65
    %p69 = scmp.eq.s32.totalorder %s10, 0
    %p70 = por %p68, %p69
    %p71 = scmp.ne.s32.totalorder %s63, %s65
    %p72 = scmp.eq.s32.totalorder %s15, 23
    %p73 = por %p71, %p72
    %p74 = scmp.ne.s32.totalorder %s65, %s66
    %p75 = scmp.eq.s32.totalorder %s15, 0
    %p76 = por %p74, %p75
    %p77 = scmp.ne.s32.totalorder %s65, %s66
    %p78 = scmp.eq.s32.totalorder %s16, 23
    %p79 = por %p77, %p78
    %p81 = scmp.ne.s32.totalorder %s66, %s80
    %p82 = scmp.eq.s32.totalorder %s16, 0
    %p83 = por %p81, %p82
    %s85 = sadd.s32 %s84, 1
    %p88 = scmp.eq.s32.totalorder %s10, 23
    %p89 = scmp.ne.s32.totalorder %s84, %s86
    %p90 = scmp.eq.s32.totalorder %s10, 0
    %p91 = por %p89, %p90
    %p92 = scmp.ne.s32.totalorder %s84, %s86
    %p93 = scmp.eq.s32.totalorder %s15, 23
    %p94 = por %p92, %p93
    %p95 = scmp.ne.s32.totalorder %s86, %s87
    %p96 = scmp.eq.s32.totalorder %s15, 0
    %p97 = por %p95, %p96
    %p98 = scmp.ne.s32.totalorder %s86, %s87
    %p99 = scmp.eq.s32.totalorder %s16, 23
    %p100 = por %p98, %p99
    %p102 = scmp.ne.s32.totalorder %s87, %s101
    %p103 = scmp.eq.s32.totalorder %s16, 0
    %p104 = por %p102, %p103
    %s105 = ssub.s32 %s17, %s36
    %s106 = ssub.s32 %s18, %s32
    %s107 = sor.u32 %s105, %s106
    %p108 = scmp.eq.s32.totalorder %s107, 0
    %s110 = sadd.s32 %s109, 1
    %s111 = scalar_select %p108, %s109, %s110
    %p114 = pneg %p108
    %p115 = scmp.eq.s32.totalorder %s10, 23
    %p116 = por %p114, %p115
    %p117 = scmp.ne.s32.totalorder %s109, %s112
    %p118 = scmp.eq.s32.totalorder %s10, 0
    %p119 = por %p117, %p118
    %p120 = scmp.ne.s32.totalorder %s109, %s112
    %p121 = scmp.eq.s32.totalorder %s15, 23
    %p122 = por %p120, %p121
    %p123 = scmp.ne.s32.totalorder %s112, %s113
    %p124 = scmp.eq.s32.totalorder %s15, 0
    %p125 = por %p123, %p124
    %p126 = scmp.ne.s32.totalorder %s112, %s113
    %p127 = scmp.eq.s32.totalorder %s16, 23
    %p128 = por %p126, %p127
    %p130 = scmp.ne.s32.totalorder %s113, %s129
    %p131 = scmp.eq.s32.totalorder %s16, 0
    %p132 = por %p130, %p131
    %s133 = ssub.s32 %s17, %s36
    %s134 = ssub.s32 %s18, %s32
    %s135 = sor.u32 %s133, %s134
    %p136 = scmp.eq.s32.totalorder %s135, 0
    %s138 = sadd.s32 %s137, 1
    %s139 = scalar_select %p136, %s137, %s138
    %p142 = pneg %p136
    %p143 = scmp.eq.s32.totalorder %s10, 23
    %p144 = por %p142, %p143
    %p145 = scmp.ne.s32.totalorder %s137, %s140
    %p146 = scmp.eq.s32.totalorder %s10, 0
    %p147 = por %p145, %p146
    %p148 = scmp.ne.s32.totalorder %s137, %s140
    %p149 = scmp.eq.s32.totalorder %s15, 23
    %p150 = por %p148, %p149
    %p151 = scmp.ne.s32.totalorder %s140, %s141
    %p152 = scmp.eq.s32.totalorder %s15, 0
    %p153 = por %p151, %p152
    %p154 = scmp.ne.s32.totalorder %s140, %s141
    %p155 = scmp.eq.s32.totalorder %s16, 23
    %p156 = por %p154, %p155
    %p158 = scmp.ne.s32.totalorder %s141, %s157
    %p159 = scmp.eq.s32.totalorder %s16, 0
    %p160 = por %p158, %p159
    %p161 = scmp.le.s32.totalorder 1, %s10
    %p162 = scmp.lt.s32.totalorder %s10, 25
    %p163 = pnand %p161, %p162
    %p164 = pneg %p163
    // Predicated region
    $region9: #{content_encoder_forward.47} parent=5 // pred_check
      _
    $region10: #{content_encoder_forward.47} parent=5 // pred_check_branch
      %166 = sbr.rel (%p163) target = $region12
    $region11: #{content_encoder_forward.47} parent=5 // pred_region
      %s167 = ssub.s32 %s10, 1
      // Predicated region
      $region13: #{content_encoder_forward.47} parent=11 // pred_check
        %p168 = pneg %p76
      $region14: #{content_encoder_forward.47} parent=11 // pred_check_branch
        %170 = sbr.rel (%p168) target = $region16
      $region15: #{content_encoder_forward.47} parent=11 // pred_region
        _
      $region16: #{content_encoder_forward.47} parent=11 // pred_fallthru
        _
      // Predicated region
      $region17: #{content_encoder_forward.47} parent=11 // pred_check
        %p171 = pneg %p97
      $region18: #{content_encoder_forward.47} parent=11 // pred_check_branch
        %173 = sbr.rel (%p171) target = $region20
      $region19: #{content_encoder_forward.47} parent=11 // pred_region
        _
      $region20: #{content_encoder_forward.47} parent=11 // pred_fallthru
        _
    $region12: #{content_encoder_forward.47} parent=5 // pred_fallthru
      _
    %p174 = scmp.lt.s32.totalorder %s10, 24
    // Predicated region
    $region21: #{content_encoder_forward.47} parent=5 // pred_check
      %p175 = pneg %p174
    $region22: #{content_encoder_forward.47} parent=5 // pred_check_branch
      %177 = sbr.rel (%p175) target = $region24
    $region23: #{content_encoder_forward.47} parent=5 // pred_region
      // Predicated region
      $region25: #{content_encoder_forward.47} parent=23 // pred_check
        %p178 = pneg %p49
      $region26: #{content_encoder_forward.47} parent=23 // pred_check_branch
        %180 = sbr.rel (%p178) target = $region28
      $region27: #{content_encoder_forward.47} parent=23 // pred_region
        %p181 = scmp.lt.s32.totalorder %s17, 1
        %s182 = scalar_select %p181, %s17, 1
        %s183 = smul.addr %s182, 6
        %s184 = smul.addr %s183, 8
        %s185 = scalar_lea.vmem %s0, %s184
      $region28: #{content_encoder_forward.47} parent=23 // pred_fallthru
        _
      // Predicated region
      $region29: #{content_encoder_forward.47} parent=23 // pred_check
        %p186 = pneg %p119
      $region30: #{content_encoder_forward.47} parent=23 // pred_check_branch
        %188 = sbr.rel (%p186) target = $region32
      $region31: #{content_encoder_forward.47} parent=23 // pred_region
        %p189 = scmp.lt.s32.totalorder %s17, 1
        %s190 = scalar_select %p189, %s17, 1
        %p191 = scmp.lt.s32.totalorder %s18, 3
        %s192 = scalar_select %p191, %s18, 3
        %s193 = smul.addr %s190, 4
        %s194 = sadd.s32 %s192, %s193
        %s195 = smul.addr %s194, 4
        %s196 = scalar_lea.vmem %s3, %s195
      $region32: #{content_encoder_forward.47} parent=23 // pred_fallthru
        _
    $region24: #{content_encoder_forward.47} parent=5 // pred_fallthru
      _
    %p197 = scmp.le.s32.totalorder 1, %s10
    %p198 = scmp.lt.s32.totalorder %s10, 25
    %p199 = pnand %p197, %p198
    %p200 = pneg %p199
    // Predicated region
    $region33: #{content_encoder_forward.47} parent=5 // pred_check
      _
    $region34: #{content_encoder_forward.47} parent=5 // pred_check_branch
      %202 = sbr.rel (%p199) target = $region36
    $region35: #{content_encoder_forward.47} parent=5 // pred_region
      %s203 = ssub.s32 %s10, 1
      %p204 = scmp.lt.s32.totalorder %s20, 1
      %s205 = scalar_select %p204, %s20, 1
      %s206 = smul.addr %s205, 6
      %s207 = smul.addr %s206, 8
      %s208 = scalar_lea.vmem %s0, %s207
      %p209 = pneg %p55
      %p210 = pneg %p52
      %p211 = pneg %p76
      %p212 = pneg %p73
      %p213 = pneg %p97
      %p214 = pneg %p94
      %p215 = scmp.lt.s32.totalorder %s20, 1
      %s216 = scalar_select %p215, %s20, 1
      %p217 = scmp.lt.s32.totalorder %s21, 3
      %s218 = scalar_select %p217, %s21, 3
      %s219 = smul.addr %s216, 4
      %s220 = sadd.s32 %s218, %s219
      %s221 = smul.addr %s220, 4
      %s222 = scalar_lea.vmem %s3, %s221
      %p223 = pneg %p125
      %p224 = pneg %p122
      %p225 = pneg %p153
      %p226 = pneg %p150
      %p227 = scmp.lt.s32.totalorder %s20, 1
      %s228 = scalar_select %p227, %s20, 1
      %p229 = scmp.lt.s32.totalorder %s21, 3
      %s230 = scalar_select %p229, %s21, 3
      %s231 = smul.addr %s228, 4
      %s232 = sadd.s32 %s230, %s231
      %s233 = smul.addr %s232, 4
      %s234 = scalar_lea.vmem %s4, %s233
      %p235 = scmp.lt.s32.totalorder %s20, 1
      %s236 = scalar_select %p235, %s20, 1
      %s237 = smul.addr %s236, 6
      %s238 = smul.addr %s237, 8
      %s239 = scalar_lea.vmem %s0, %s238
      %p240 = scmp.lt.s32.totalorder %s20, 1
      %s241 = scalar_select %p240, %s20, 1
      %p242 = scmp.lt.s32.totalorder %s21, 3
      %s243 = scalar_select %p242, %s21, 3
      %s244 = smul.addr %s241, 4
      %s245 = sadd.s32 %s243, %s244
      %s246 = smul.addr %s245, 4
      %s247 = scalar_lea.vmem %s3, %s246
      %p248 = scmp.lt.s32.totalorder %s20, 1
      %s249 = scalar_select %p248, %s20, 1
      %p250 = scmp.lt.s32.totalorder %s21, 3
      %s251 = scalar_select %p250, %s21, 3
      %s252 = smul.addr %s249, 4
      %s253 = sadd.s32 %s251, %s252
      %s254 = smul.addr %s253, 4
      %s255 = scalar_lea.vmem %s4, %s254
      %p256 = scmp.eq.s32.totalorder %s22, 0
      // Predicated region
      $region37: #{content_encoder_forward.47} parent=35 // pred_check
        %p257 = pneg %p256
      $region38: #{content_encoder_forward.47} parent=35 // pred_check_branch
        %259 = sbr.rel (%p257) target = $region40
      $region39: #{content_encoder_forward.47} parent=35 // pred_region
        %260 = vst [vmem:[#allocation2] sm:$0xf] 0.0
      $region40: #{content_encoder_forward.47} parent=35 // pred_fallthru
        _
      %s261 = sadd.s32 %s21, %s22
      %s262 = smul.u32 %s261, 8
      %s263 = scalar_lea.vmem %s239, %s262
      %v264 = vld [vmem:[%s263] sm:$0xf]
      %s265 = smul.u32 %s22, 3
      %s266 = smul.u32 %s265, 128
      %s267 = scalar_lea.vmem %s1, %s266
      %v268 = vld [vmem:[%s267] sm:$0xff]
      %v269 = vld [vmem:[%s267 + $0x8] sm:$0xff]
      %v270 = vld [vmem:[%s267 + $0x10] sm:$0xff]
      %v271 = vld [vmem:[%s267 + $0x18] sm:$0xff]
      %v272 = vld [vmem:[%s267 + $0x20] sm:$0xff]
      %v273 = vld [vmem:[%s267 + $0x28] sm:$0xff]
      %v274 = vld [vmem:[%s267 + $0x30] sm:$0xff]
      %v275 = vld [vmem:[%s267 + $0x38] sm:$0xff]
      %v276 = vld [vmem:[%s267 + $0x40] sm:$0xff]
      %v277 = vld [vmem:[%s267 + $0x48] sm:$0xff]
      %v278 = vld [vmem:[%s267 + $0x50] sm:$0xff]
      %v279 = vld [vmem:[%s267 + $0x58] sm:$0xff]
      %v280 = vld [vmem:[%s267 + $0x60] sm:$0xff]
      %v281 = vld [vmem:[%s267 + $0x68] sm:$0xff]
      %v282 = vld [vmem:[%s267 + $0x70] sm:$0xff]
      %v283 = vld [vmem:[%s267 + $0x78] sm:$0xff]
      %v284 = vld [vmem:[%s263 + $0x1] sm:$0xf]
      %s285 = sadd.s32 %s265, 1
      %s286 = smul.u32 %s285, 128
      %s287 = scalar_lea.vmem %s1, %s286
      %v288 = vld [vmem:[%s287] sm:$0xff]
      %v289 = vld [vmem:[%s287 + $0x8] sm:$0xff]
      %v290 = vld [vmem:[%s287 + $0x10] sm:$0xff]
      %v291 = vld [vmem:[%s287 + $0x18] sm:$0xff]
      %v292 = vld [vmem:[%s287 + $0x20] sm:$0xff]
      %v293 = vld [vmem:[%s287 + $0x28] sm:$0xff]
      %v294 = vld [vmem:[%s287 + $0x30] sm:$0xff]
      %v295 = vld [vmem:[%s287 + $0x38] sm:$0xff]
      %v296 = vld [vmem:[%s287 + $0x40] sm:$0xff]
      %v297 = vld [vmem:[%s287 + $0x48] sm:$0xff]
      %v298 = vld [vmem:[%s287 + $0x50] sm:$0xff]
      %v299 = vld [vmem:[%s287 + $0x58] sm:$0xff]
      %v300 = vld [vmem:[%s287 + $0x60] sm:$0xff]
      %v301 = vld [vmem:[%s287 + $0x68] sm:$0xff]
      %v302 = vld [vmem:[%s287 + $0x70] sm:$0xff]
      %v303 = vld [vmem:[%s287 + $0x78] sm:$0xff]
      %304 = vmatprep.subr.mxu0 0.0
      %305 = vmatpush1.msra.mxu0 %v303
      %306 = vmatprep.subr.mxu0 0.0
      %307 = vmatpush1.msra.mxu0 %v302
      %308 = vmatprep.subr.mxu0 0.0
      %309 = vmatpush1.msra.mxu0 %v301
      %310 = vmatprep.subr.mxu0 0.0
      %311 = vmatpush1.msra.mxu0 %v300
      %312 = vmatprep.subr.mxu0 0.0
      %313 = vmatpush1.msra.mxu0 %v299
      %314 = vmatprep.subr.mxu0 0.0
      %315 = vmatpush1.msra.mxu0 %v298
      %316 = vmatprep.subr.mxu0 0.0
      %317 = vmatpush1.msra.mxu0 %v297
      %318 = vmatprep.subr.mxu0 0.0
      %319 = vmatpush1.msra.mxu0 %v296
      %320 = vmatprep.subr.mxu0 0.0
      %321 = vmatpush1.msra.mxu0 %v295
      %322 = vmatprep.subr.mxu0 0.0
      %323 = vmatpush1.msra.mxu0 %v294
      %324 = vmatprep.subr.mxu0 0.0
      %325 = vmatpush1.msra.mxu0 %v293
      %326 = vmatprep.subr.mxu0 0.0
      %327 = vmatpush1.msra.mxu0 %v292
      %328 = vmatprep.subr.mxu0 0.0
      %329 = vmatpush1.msra.mxu0 %v291
      %330 = vmatprep.subr.mxu0 0.0
      %331 = vmatpush1.msra.mxu0 %v290
      %332 = vmatprep.subr.mxu0 0.0
      %333 = vmatpush1.msra.mxu0 %v289
      %334 = vmatprep.subr.mxu0 0.0
      %335 = vmatpush1.msra.mxu0 %v288
      %336 = vmatprep.subr.mxu0 0.0
      %337 = vmatpush2.msra.mxu0 0.0
      %338 = vmatprep.subr.mxu0 0.0
      %339 = vmatpush2.msra.mxu0 0.0
      %340 = vmatprep.subr.mxu0 0.0
      %341 = vmatpush2.msra.mxu0 0.0
      %342 = vmatprep.subr.mxu0 0.0
      %343 = vmatpush2.msra.mxu0 0.0
      %344 = vmatprep.subr.mxu0 0.0
      %345 = vmatpush2.msra.mxu0 0.0
      %346 = vmatprep.subr.mxu0 0.0
      %347 = vmatpush2.msra.mxu0 0.0
      %348 = vmatprep.subr.mxu0 0.0
      %349 = vmatpush2.msra.mxu0 0.0
      %350 = vmatprep.subr.mxu0 0.0
      %351 = vmatpush2.msra.mxu0 0.0
      %352 = vmatprep.subr.mxu0 0.0
      %353 = vmatpush2.msra.mxu0 0.0
      %354 = vmatprep.subr.mxu0 0.0
      %355 = vmatpush2.msra.mxu0 0.0
      %356 = vmatprep.subr.mxu0 0.0
      %357 = vmatpush2.msra.mxu0 0.0
      %358 = vmatprep.subr.mxu0 0.0
      %359 = vmatpush2.msra.mxu0 0.0
      %360 = vmatprep.subr.mxu0 0.0
      %361 = vmatpush2.msra.mxu0 0.0
      %362 = vmatprep.subr.mxu0 0.0
      %363 = vmatpush2.msra.mxu0 0.0
      %364 = vmatprep.subr.mxu0 0.0
      %365 = vmatpush2.msra.mxu0 0.0
      %366 = vmatprep.subr.mxu0 0.0
      %367 = vmatpush2.msra.mxu0 0.0
      %368 = vmatprep.mubr.f32.mxu0 0.0
      %369 = vmatmul.mubr.f32.gmra.mxu0 %v284
      %v370 = vpop.f32.mrf.mxu0
      %v371 = vadd.f32 0.0, %v370
      %v372 = vpop.f32.mrf.mxu0
      %373 = vdwg.mxu0
      %374 = vmatprep.subr.mxu0 0.0
      %375 = vmatpush1.msra.mxu0 %v283
      %376 = vmatprep.subr.mxu0 0.0
      %377 = vmatpush1.msra.mxu0 %v282
      %378 = vmatprep.subr.mxu0 0.0
      %379 = vmatpush1.msra.mxu0 %v281
      %380 = vmatprep.subr.mxu0 0.0
      %381 = vmatpush1.msra.mxu0 %v280
      %382 = vmatprep.subr.mxu0 0.0
      %383 = vmatpush1.msra.mxu0 %v279
      %384 = vmatprep.subr.mxu0 0.0
      %385 = vmatpush1.msra.mxu0 %v278
      %386 = vmatprep.subr.mxu0 0.0
      %387 = vmatpush1.msra.mxu0 %v277
      %388 = vmatprep.subr.mxu0 0.0
      %389 = vmatpush1.msra.mxu0 %v276
      %390 = vmatprep.subr.mxu0 0.0
      %391 = vmatpush1.msra.mxu0 %v275
      %392 = vmatprep.subr.mxu0 0.0
      %393 = vmatpush1.msra.mxu0 %v274
      %394 = vmatprep.subr.mxu0 0.0
      %395 = vmatpush1.msra.mxu0 %v273
      %396 = vmatprep.subr.mxu0 0.0
      %397 = vmatpush1.msra.mxu0 %v272
      %398 = vmatprep.subr.mxu0 0.0
      %399 = vmatpush1.msra.mxu0 %v271
      %400 = vmatprep.subr.mxu0 0.0
      %401 = vmatpush1.msra.mxu0 %v270
      %402 = vmatprep.subr.mxu0 0.0
      %403 = vmatpush1.msra.mxu0 %v269
      %404 = vmatprep.subr.mxu0 0.0
      %405 = vmatpush1.msra.mxu0 %v268
      %406 = vmatprep.subr.mxu0 0.0
      %407 = vmatpush2.msra.mxu0 0.0
      %408 = vmatprep.subr.mxu0 0.0
      %409 = vmatpush2.msra.mxu0 0.0
      %410 = vmatprep.subr.mxu0 0.0
      %411 = vmatpush2.msra.mxu0 0.0
      %412 = vmatprep.subr.mxu0 0.0
      %413 = vmatpush2.msra.mxu0 0.0
      %414 = vmatprep.subr.mxu0 0.0
      %415 = vmatpush2.msra.mxu0 0.0
      %416 = vmatprep.subr.mxu0 0.0
      %417 = vmatpush2.msra.mxu0 0.0
      %418 = vmatprep.subr.mxu0 0.0
      %419 = vmatpush2.msra.mxu0 0.0
      %420 = vmatprep.subr.mxu0 0.0
      %421 = vmatpush2.msra.mxu0 0.0
      %422 = vmatprep.subr.mxu0 0.0
      %423 = vmatpush2.msra.mxu0 0.0
      %424 = vmatprep.subr.mxu0 0.0
      %425 = vmatpush2.msra.mxu0 0.0
      %426 = vmatprep.subr.mxu0 0.0
      %427 = vmatpush2.msra.mxu0 0.0
      %428 = vmatprep.subr.mxu0 0.0
      %429 = vmatpush2.msra.mxu0 0.0
      %430 = vmatprep.subr.mxu0 0.0
      %431 = vmatpush2.msra.mxu0 0.0
      %432 = vmatprep.subr.mxu0 0.0
      %433 = vmatpush2.msra.mxu0 0.0
      %434 = vmatprep.subr.mxu0 0.0
      %435 = vmatpush2.msra.mxu0 0.0
      %436 = vmatprep.subr.mxu0 0.0
      %437 = vmatpush2.msra.mxu0 0.0
      %438 = vmatprep.mubr.f32.mxu0 0.0
      %439 = vmatmul.mubr.f32.gmra.mxu0 %v264
      %v440 = vpop.f32.mrf.mxu0
      %v441 = vadd.f32 %v371, %v440
      %v442 = vpop.f32.mrf.mxu0
      %443 = vdwg.mxu0
      %v444 = vld [vmem:[%s263 + $0x2] sm:$0xf]
      %s445 = sadd.s32 %s265, 2
      %s446 = smul.u32 %s445, 128
      %s447 = scalar_lea.vmem %s1, %s446
      %v448 = vld [vmem:[%s447] sm:$0xff]
      %v449 = vld [vmem:[%s447 + $0x8] sm:$0xff]
      %v450 = vld [vmem:[%s447 + $0x10] sm:$0xff]
      %v451 = vld [vmem:[%s447 + $0x18] sm:$0xff]
      %v452 = vld [vmem:[%s447 + $0x20] sm:$0xff]
      %v453 = vld [vmem:[%s447 + $0x28] sm:$0xff]
      %v454 = vld [vmem:[%s447 + $0x30] sm:$0xff]
      %v455 = vld [vmem:[%s447 + $0x38] sm:$0xff]
      %v456 = vld [vmem:[%s447 + $0x40] sm:$0xff]
      %v457 = vld [vmem:[%s447 + $0x48] sm:$0xff]
      %v458 = vld [vmem:[%s447 + $0x50] sm:$0xff]
      %v459 = vld [vmem:[%s447 + $0x58] sm:$0xff]
      %v460 = vld [vmem:[%s447 + $0x60] sm:$0xff]
      %v461 = vld [vmem:[%s447 + $0x68] sm:$0xff]
      %v462 = vld [vmem:[%s447 + $0x70] sm:$0xff]
      %v463 = vld [vmem:[%s447 + $0x78] sm:$0xff]
      %464 = vmatprep.subr.mxu0 0.0
      %465 = vmatpush1.msra.mxu0 %v463
      %466 = vmatprep.subr.mxu0 0.0
      %467 = vmatpush1.msra.mxu0 %v462
      %468 = vmatprep.subr.mxu0 0.0
      %469 = vmatpush1.msra.mxu0 %v461
      %470 = vmatprep.subr.mxu0 0.0
      %471 = vmatpush1.msra.mxu0 %v460
      %472 = vmatprep.subr.mxu0 0.0
      %473 = vmatpush1.msra.mxu0 %v459
      %474 = vmatprep.subr.mxu0 0.0
      %475 = vmatpush1.msra.mxu0 %v458
      %476 = vmatprep.subr.mxu0 0.0
      %477 = vmatpush1.msra.mxu0 %v457
      %478 = vmatprep.subr.mxu0 0.0
      %479 = vmatpush1.msra.mxu0 %v456
      %480 = vmatprep.subr.mxu0 0.0
      %481 = vmatpush1.msra.mxu0 %v455
      %482 = vmatprep.subr.mxu0 0.0
      %483 = vmatpush1.msra.mxu0 %v454
      %484 = vmatprep.subr.mxu0 0.0
      %485 = vmatpush1.msra.mxu0 %v453
      %486 = vmatprep.subr.mxu0 0.0
      %487 = vmatpush1.msra.mxu0 %v452
      %488 = vmatprep.subr.mxu0 0.0
      %489 = vmatpush1.msra.mxu0 %v451
      %490 = vmatprep.subr.mxu0 0.0
      %491 = vmatpush1.msra.mxu0 %v450
      %492 = vmatprep.subr.mxu0 0.0
      %493 = vmatpush1.msra.mxu0 %v449
      %494 = vmatprep.subr.mxu0 0.0
      %495 = vmatpush1.msra.mxu0 %v448
      %496 = vmatprep.subr.mxu0 0.0
      %497 = vmatpush2.msra.mxu0 0.0
      %498 = vmatprep.subr.mxu0 0.0
      %499 = vmatpush2.msra.mxu0 0.0
      %500 = vmatprep.subr.mxu0 0.0
      %501 = vmatpush2.msra.mxu0 0.0
      %502 = vmatprep.subr.mxu0 0.0
      %503 = vmatpush2.msra.mxu0 0.0
      %504 = vmatprep.subr.mxu0 0.0
      %505 = vmatpush2.msra.mxu0 0.0
      %506 = vmatprep.subr.mxu0 0.0
      %507 = vmatpush2.msra.mxu0 0.0
      %508 = vmatprep.subr.mxu0 0.0
      %509 = vmatpush2.msra.mxu0 0.0
      %510 = vmatprep.subr.mxu0 0.0
      %511 = vmatpush2.msra.mxu0 0.0
      %512 = vmatprep.subr.mxu0 0.0
      %513 = vmatpush2.msra.mxu0 0.0
      %514 = vmatprep.subr.mxu0 0.0
      %515 = vmatpush2.msra.mxu0 0.0
      %516 = vmatprep.subr.mxu0 0.0
      %517 = vmatpush2.msra.mxu0 0.0
      %518 = vmatprep.subr.mxu0 0.0
      %519 = vmatpush2.msra.mxu0 0.0
      %520 = vmatprep.subr.mxu0 0.0
      %521 = vmatpush2.msra.mxu0 0.0
      %522 = vmatprep.subr.mxu0 0.0
      %523 = vmatpush2.msra.mxu0 0.0
      %524 = vmatprep.subr.mxu0 0.0
      %525 = vmatpush2.msra.mxu0 0.0
      %526 = vmatprep.subr.mxu0 0.0
      %527 = vmatpush2.msra.mxu0 0.0
      %528 = vmatprep.mubr.f32.mxu0 0.0
      %529 = vmatmul.mubr.f32.gmra.mxu0 %v444
      %v530 = vpop.f32.mrf.mxu0
      %v531 = vadd.f32 0.0, %v530
      %v532 = vpop.f32.mrf.mxu0
      %533 = vdwg.mxu0
      %v534 = vadd.f32 %v441, %v531
      %v535 = vld [vmem:[#allocation2] sm:$0xf]
      %v536 = vadd.f32 %v535, %v534
      %537 = vst [vmem:[#allocation2] sm:$0xf] %v536
      %p538 = scmp.eq.s32.totalorder %s22, 2
      // Predicated region
      $region41: #{content_encoder_forward.47} parent=35 // pred_check
        %p539 = pneg %p538
      $region42: #{content_encoder_forward.47} parent=35 // pred_check_branch
        %541 = sbr.rel (%p539) target = $region44
      $region43: #{content_encoder_forward.47} parent=35 // pred_region
        %v542 = vld [vmem:[#allocation2] sm:$0xf]
        %v543 = vld [vmem:[%s2] sm:$0x1]
        %v545 = vlaneseq
        %v546 = vshrl.u32 %v545, 7
        %v547 = vsub.s32 0, %v546
        %v548 = vrot.slane %v543, %v547
        %v550 = vadd.f32 %v542, %v548
        %v551 = vld [vmem:[%s247] sm:$0xf]
        %v552 = vadd.f32 %v550, %v551
        %v553 = vmul.f32 %v552, 0.70710677
        %554 = vst [vmem:[%s255] sm:$0xf] %v553
      $region44: #{content_encoder_forward.47} parent=35 // pred_fallthru
        _
      %p555 = scmp.lt.s32.totalorder %s20, 1
      %s556 = scalar_select %p555, %s20, 1
      %p557 = scmp.lt.s32.totalorder %s21, 3
      %s558 = scalar_select %p557, %s21, 3
      %s559 = smul.addr %s556, 4
      %s560 = sadd.s32 %s558, %s559
      %s561 = smul.addr %s560, 4
      %s562 = scalar_lea.vmem %s4, %s561
      // Predicated region
      $region45: #{content_encoder_forward.47} parent=35 // pred_check
        %p563 = pneg %p150
      $region46: #{content_encoder_forward.47} parent=35 // pred_check_branch
        %565 = sbr.rel (%p563) target = $region48
      $region47: #{content_encoder_forward.47} parent=35 // pred_region
        _
      $region48: #{content_encoder_forward.47} parent=35 // pred_fallthru
        _
    $region36: #{content_encoder_forward.47} parent=5 // pred_fallthru
      _
    %p566 = scmp.le.s32.totalorder 2, %s10
    // Predicated region
    $region49: #{content_encoder_forward.47} parent=5 // pred_check
      %p567 = pneg %p566
    $region50: #{content_encoder_forward.47} parent=5 // pred_check_branch
      %569 = sbr.rel (%p567) target = $region52
    $region51: #{content_encoder_forward.47} parent=5 // pred_region
      %s570 = ssub.s32 %s10, 2
      // Predicated region
      $region53: #{content_encoder_forward.47} parent=51 // pred_check
        %p571 = pneg %p156
      $region54: #{content_encoder_forward.47} parent=51 // pred_check_branch
        %573 = sbr.rel (%p571) target = $region56
      $region55: #{content_encoder_forward.47} parent=51 // pred_region
        %p574 = scmp.lt.s32.totalorder %s23, 1
        %s575 = scalar_select %p574, %s23, 1
        %p576 = scmp.lt.s32.totalorder %s24, 3
        %s577 = scalar_select %p576, %s24, 3
        %s578 = smul.addr %s575, 4
        %s579 = sadd.s32 %s577, %s578
        %s580 = smul.addr %s579, 4
        %s581 = scalar_lea.vmem %s4, %s580
      $region56: #{content_encoder_forward.47} parent=51 // pred_fallthru
        _
    $region52: #{content_encoder_forward.47} parent=5 // pred_fallthru
      _
  $region6: #{content_encoder_forward.47} parent=0 // loop_footer
    %s14 = sadd.s32 1, %s10
  $region7: #{content_encoder_forward.47} parent=0 // loop_footer_branch
    %9 = sbr.rel target = $region3
  $region8: #{content_encoder_forward.47} parent=0 // loop_exit
    _

// kernel: content_encoder_forward.65
$region0: #{content_encoder_forward.65}
  #allocation0 [shape = 'u32[]', space=smem, size = 0x4, offset = 0x4, fixed_abs, tag = 'smem constant byte address 0x4 - core index']
  #allocation1 [shape = 'u32[144,128]{1,0:T(1,128)}', space=vmem, size = 0x12000, scoped, tag = 'internal scratch']
  #allocation2 [shape = 'f32[4,128]{1,0:T(4,128)}', space=vmem, size = 0x800, scoped, tag = 'scratch operand']
  %s0 = inlined_call_operand.vmem [shape: f32[2,6,6,128], index: 0, kind: input, shape index: {}]
  %s1 = inlined_call_operand.vmem [shape: f32[9,128,128], index: 1, kind: input, shape index: {}]
  %s2 = inlined_call_operand.vmem [shape: f32[1,128], index: 2, kind: input, shape index: {}]
  %s3 = inlined_call_operand.vmem [shape: f32[2,4,4,128], index: 3, kind: input, shape index: {}]
  %s4 = inlined_call_operand.hbm [shape: f32[2,4,4,128], index: 4, kind: output, shape index: {}]
  %s5 = sld [smem:[#allocation0]]
  $region57: #{content_encoder_forward.65} parent=0
    _
  %s7 = ssub.s32 1, %s5
  %s8 = scalar_select 0, %s7, %s5
  $region1: #{content_encoder_forward.65} parent=0
    #allocation3 [shape = 'u8[4096]{0}', space=vmem, size = 0x1000, scoped, tag = 'output window, operand 0']
    #allocation4 [shape = 's32[2]{0}', space=sflag, size = 0x8, scoped, tag = 'scoped memory for content_encoder_forward.65']
    %9 = vsyncpa [#allocation4], 0
    %s10 = scalar_lea.sflag [#allocation4], 1
    %11 = vsyncpa %s10, 0
    loop: start=0, step=1, limit=26
    $region2: #{content_encoder_forward.65} parent=1 // loop_pre_header
      _
    $region3: #{content_encoder_forward.65} parent=1 // loop_header
      %s13 = sphi 0, %s17
      %p14 = scmp.ge.s32.totalorder %s13, 26
      %s20 = sphi 0, %s39
      %s21 = sphi 0, %s35
      %s22 = sphi 0, %s31
      %s23 = sphi 0, %s20
      %s24 = sphi 0, %s21
      %s25 = sphi 0, %s22
      %s26 = sphi 0, %s23
      %s27 = sphi 0, %s24
      %s28 = sphi 0, %s25
      %s42 = sphi 0, %s44
      %s45 = sphi 0, %s42
      %s46 = sphi 0, %s45
      %s62 = sphi 0, %s46
      %s66 = sphi 0, %s66
      %s68 = sphi 0, %s66
      %s69 = sphi 0, %s68
      %s83 = sphi 0, %s69
      %s87 = sphi 0, %s87
      %s89 = sphi 0, %s87
      %s90 = sphi 0, %s89
      %s104 = sphi 0, %s90
      %s112 = sphi 0, %s114
      %s115 = sphi 0, %s112
      %s116 = sphi 0, %s115
      %s132 = sphi 0, %s116
      %s140 = sphi 0, %s142
      %s143 = sphi 0, %s140
      %s144 = sphi 0, %s143
      %s160 = sphi 0, %s144
    $region4: #{content_encoder_forward.65} parent=1 // loop_header_branch
      %16 = sbr.rel (%p14) target = $region8
    $region5: #{content_encoder_forward.65} parent=1 // loop_body
      %s18 = ssub.s32 %s13, 1
      %s19 = ssub.s32 %s13, 2
      %s29 = sadd.s32 1, %s22
      %p30 = scmp.ge.s32.totalorder %s29, 3
      %s31 = scalar_select %p30, 0, %s29
      %s32 = sadd.s32 1, %s21
      %s33 = scalar_select %p30, %s32, %s21
      %p34 = scmp.ge.s32.totalorder %s33, 4
      %s35 = scalar_select %p34, 0, %s33
      %s36 = sadd.s32 1, %s20
      %s37 = scalar_select %p34, %s36, %s20
      %p38 = scmp.ge.s32.totalorder %s37, 2
      %s39 = scalar_select %p38, 0, %s37
      %s40 = ssub.s32 %s20, %s39
      %p41 = scmp.eq.s32.totalorder %s40, 0
      %s43 = sadd.s32 %s42, 1
      %s44 = scalar_select %p41, %s42, %s43
      %p47 = pneg %p41
      %p48 = scmp.eq.s32.totalorder %s13, 23
      %p49 = por %p47, %p48
      %p50 = scmp.ne.s32.totalorder %s42, %s45
      %p51 = scmp.eq.s32.totalorder %s13, 0
      %p52 = por %p50, %p51
      %p53 = scmp.ne.s32.totalorder %s42, %s45
      %p54 = scmp.eq.s32.totalorder %s18, 23
      %p55 = por %p53, %p54
      %p56 = scmp.ne.s32.totalorder %s45, %s46
      %p57 = scmp.eq.s32.totalorder %s18, 0
      %p58 = por %p56, %p57
      %p59 = scmp.ne.s32.totalorder %s45, %s46
      %p60 = scmp.eq.s32.totalorder %s19, 23
      %p61 = por %p59, %p60
      %p63 = scmp.ne.s32.totalorder %s46, %s62
      %p64 = scmp.eq.s32.totalorder %s19, 0
      %p65 = por %p63, %p64
      %s67 = sadd.s32 %s66, 1
      %p70 = scmp.eq.s32.totalorder %s13, 23
      %p71 = scmp.ne.s32.totalorder %s66, %s68
      %p72 = scmp.eq.s32.totalorder %s13, 0
      %p73 = por %p71, %p72
      %p74 = scmp.ne.s32.totalorder %s66, %s68
      %p75 = scmp.eq.s32.totalorder %s18, 23
      %p76 = por %p74, %p75
      %p77 = scmp.ne.s32.totalorder %s68, %s69
      %p78 = scmp.eq.s32.totalorder %s18, 0
      %p79 = por %p77, %p78
      %p80 = scmp.ne.s32.totalorder %s68, %s69
      %p81 = scmp.eq.s32.totalorder %s19, 23
      %p82 = por %p80, %p81
      %p84 = scmp.ne.s32.totalorder %s69, %s83
      %p85 = scmp.eq.s32.totalorder %s19, 0
      %p86 = por %p84, %p85
      %s88 = sadd.s32 %s87, 1
      %p91 = scmp.eq.s32.totalorder %s13, 23
      %p92 = scmp.ne.s32.totalorder %s87, %s89
      %p93 = scmp.eq.s32.totalorder %s13, 0
      %p94 = por %p92, %p93
      %p95 = scmp.ne.s32.totalorder %s87, %s89
      %p96 = scmp.eq.s32.totalorder %s18, 23
      %p97 = por %p95, %p96
      %p98 = scmp.ne.s32.totalorder %s89, %s90
      %p99 = scmp.eq.s32.totalorder %s18, 0
      %p100 = por %p98, %p99
      %p101 = scmp.ne.s32.totalorder %s89, %s90
      %p102 = scmp.eq.s32.totalorder %s19, 23
      %p103 = por %p101, %p102
      %p105 = scmp.ne.s32.totalorder %s90, %s104
      %p106 = scmp.eq.s32.totalorder %s19, 0
      %p107 = por %p105, %p106
      %s108 = ssub.s32 %s20, %s39
      %s109 = ssub.s32 %s21, %s35
      %s110 = sor.u32 %s108, %s109
      %p111 = scmp.eq.s32.totalorder %s110, 0
      %s113 = sadd.s32 %s112, 1
      %s114 = scalar_select %p111, %s112, %s113
      %p117 = pneg %p111
      %p118 = scmp.eq.s32.totalorder %s13, 23
      %p119 = por %p117, %p118
      %p120 = scmp.ne.s32.totalorder %s112, %s115
      %p121 = scmp.eq.s32.totalorder %s13, 0
      %p122 = por %p120, %p121
      %p123 = scmp.ne.s32.totalorder %s112, %s115
      %p124 = scmp.eq.s32.totalorder %s18, 23
      %p125 = por %p123, %p124
      %p126 = scmp.ne.s32.totalorder %s115, %s116
      %p127 = scmp.eq.s32.totalorder %s18, 0
      %p128 = por %p126, %p127
      %p129 = scmp.ne.s32.totalorder %s115, %s116
      %p130 = scmp.eq.s32.totalorder %s19, 23
      %p131 = por %p129, %p130
      %p133 = scmp.ne.s32.totalorder %s116, %s132
      %p134 = scmp.eq.s32.totalorder %s19, 0
      %p135 = por %p133, %p134
      %s136 = ssub.s32 %s20, %s39
      %s137 = ssub.s32 %s21, %s35
      %s138 = sor.u32 %s136, %s137
      %p139 = scmp.eq.s32.totalorder %s138, 0
      %s141 = sadd.s32 %s140, 1
      %s142 = scalar_select %p139, %s140, %s141
      %p145 = pneg %p139
      %p146 = scmp.eq.s32.totalorder %s13, 23
      %p147 = por %p145, %p146
      %p148 = scmp.ne.s32.totalorder %s140, %s143
      %p149 = scmp.eq.s32.totalorder %s13, 0
      %p150 = por %p148, %p149
      %p151 = scmp.ne.s32.totalorder %s140, %s143
      %p152 = scmp.eq.s32.totalorder %s18, 23
      %p153 = por %p151, %p152
      %p154 = scmp.ne.s32.totalorder %s143, %s144
      %p155 = scmp.eq.s32.totalorder %s18, 0
      %p156 = por %p154, %p155
      %p157 = scmp.ne.s32.totalorder %s143, %s144
      %p158 = scmp.eq.s32.totalorder %s19, 23
      %p159 = por %p157, %p158
      %p161 = scmp.ne.s32.totalorder %s144, %s160
      %p162 = scmp.eq.s32.totalorder %s19, 0
      %p163 = por %p161, %p162
      %p164 = scmp.le.s32.totalorder 1, %s13
      %p165 = scmp.lt.s32.totalorder %s13, 25
      %p166 = pnand %p164, %p165
      %p167 = pneg %p166
      // Predicated region
      $region9: #{content_encoder_forward.65} parent=5 // pred_check
        _
      $region10: #{content_encoder_forward.65} parent=5 // pred_check_branch
        %169 = sbr.rel (%p166) target = $region12
      $region11: #{content_encoder_forward.65} parent=5 // pred_region
        %s170 = ssub.s32 %s13, 1
        // Predicated region
        $region13: #{content_encoder_forward.65} parent=11 // pred_check
          %p171 = pneg %p79
        $region14: #{content_encoder_forward.65} parent=11 // pred_check_branch
          %173 = sbr.rel (%p171) target = $region16
        $region15: #{content_encoder_forward.65} parent=11 // pred_region
          _
        $region16: #{content_encoder_forward.65} parent=11 // pred_fallthru
          _
        // Predicated region
        $region17: #{content_encoder_forward.65} parent=11 // pred_check
          %p174 = pneg %p100
        $region18: #{content_encoder_forward.65} parent=11 // pred_check_branch
          %176 = sbr.rel (%p174) target = $region20
        $region19: #{content_encoder_forward.65} parent=11 // pred_region
          _
        $region20: #{content_encoder_forward.65} parent=11 // pred_fallthru
          _
      $region12: #{content_encoder_forward.65} parent=5 // pred_fallthru
        _
      %p177 = scmp.lt.s32.totalorder %s13, 24
      // Predicated region
      $region21: #{content_encoder_forward.65} parent=5 // pred_check
        %p178 = pneg %p177
      $region22: #{content_encoder_forward.65} parent=5 // pred_check_branch
        %180 = sbr.rel (%p178) target = $region24
      $region23: #{content_encoder_forward.65} parent=5 // pred_region
        // Predicated region
        $region25: #{content_encoder_forward.65} parent=23 // pred_check
          %p181 = pneg %p52
        $region26: #{content_encoder_forward.65} parent=23 // pred_check_branch
          %183 = sbr.rel (%p181) target = $region28
        $region27: #{content_encoder_forward.65} parent=23 // pred_region
          %p184 = scmp.lt.s32.totalorder %s20, 1
          %s185 = scalar_select %p184, %s20, 1
          %s186 = smul.addr %s185, 6
          %s187 = smul.addr %s186, 8
          %s188 = scalar_lea.vmem %s0, %s187
        $region28: #{content_encoder_forward.65} parent=23 // pred_fallthru
          _
        // Predicated region
        $region29: #{content_encoder_forward.65} parent=23 // pred_check
          %p189 = pneg %p122
        $region30: #{content_encoder_forward.65} parent=23 // pred_check_branch
          %191 = sbr.rel (%p189) target = $region32
        $region31: #{content_encoder_forward.65} parent=23 // pred_region
          %p192 = scmp.lt.s32.totalorder %s20, 1
          %s193 = scalar_select %p192, %s20, 1
          %p194 = scmp.lt.s32.totalorder %s21, 3
          %s195 = scalar_select %p194, %s21, 3
          %s196 = smul.addr %s193, 4
          %s197 = sadd.s32 %s195, %s196
          %s198 = smul.addr %s197, 4
          %s199 = scalar_lea.vmem %s3, %s198
        $region32: #{content_encoder_forward.65} parent=23 // pred_fallthru
          _
      $region24: #{content_encoder_forward.65} parent=5 // pred_fallthru
        _
      %p200 = scmp.le.s32.totalorder 1, %s13
      %p201 = scmp.lt.s32.totalorder %s13, 25
      %p202 = pnand %p200, %p201
      %p203 = pneg %p202
      // Predicated region
      $region33: #{content_encoder_forward.65} parent=5 // pred_check
        _
      $region34: #{content_encoder_forward.65} parent=5 // pred_check_branch
        %205 = sbr.rel (%p202) target = $region36
      $region35: #{content_encoder_forward.65} parent=5 // pred_region
        %s206 = ssub.s32 %s13, 1
        %p207 = scmp.lt.s32.totalorder %s23, 1
        %s208 = scalar_select %p207, %s23, 1
        %s209 = smul.addr %s208, 6
        %s210 = smul.addr %s209, 8
        %s211 = scalar_lea.vmem %s0, %s210
        %p212 = pneg %p58
        %p213 = pneg %p55
        %p214 = pneg %p79
        %p215 = pneg %p76
        %p216 = pneg %p100
        %p217 = pneg %p97
        %p218 = scmp.lt.s32.totalorder %s23, 1
        %s219 = scalar_select %p218, %s23, 1
        %p220 = scmp.lt.s32.totalorder %s24, 3
        %s221 = scalar_select %p220, %s24, 3
        %s222 = smul.addr %s219, 4
        %s223 = sadd.s32 %s221, %s222
        %s224 = smul.addr %s223, 4
        %s225 = scalar_lea.vmem %s3, %s224
        %p226 = pneg %p128
        %p227 = pneg %p125
        %p228 = pneg %p156
        %p229 = pneg %p153
        %s230 = sand.u32 %s143, 1
        %s231 = scalar_lea.sflag [#allocation4], %s230
        %s232 = sand.u32 %s143, 1
        %s233 = smul.addr %s232, 4
        %s234 = scalar_lea.vmem [#allocation3], %s233
        %p235 = scmp.lt.s32.totalorder %s23, 1
        %s236 = scalar_select %p235, %s23, 1
        %s237 = smul.addr %s236, 6
        %s238 = smul.addr %s237, 8
        %s239 = scalar_lea.vmem %s0, %s238
        %p240 = scmp.lt.s32.totalorder %s23, 1
        %s241 = scalar_select %p240, %s23, 1
        %p242 = scmp.lt.s32.totalorder %s24, 3
        %s243 = scalar_select %p242, %s24, 3
        %s244 = smul.addr %s241, 4
        %s245 = sadd.s32 %s243, %s244
        %s246 = smul.addr %s245, 4
        %s247 = scalar_lea.vmem %s3, %s246
        %p248 = scmp.eq.s32.totalorder %s25, 0
        // Predicated region
        $region37: #{content_encoder_forward.65} parent=35 // pred_check
          %p249 = pneg %p248
        $region38: #{content_encoder_forward.65} parent=35 // pred_check_branch
          %251 = sbr.rel (%p249) target = $region40
        $region39: #{content_encoder_forward.65} parent=35 // pred_region
          %252 = vst [vmem:[#allocation2] sm:$0xf] 0.0
        $region40: #{content_encoder_forward.65} parent=35 // pred_fallthru
          _
        %s253 = sadd.s32 %s24, %s25
        %s254 = smul.u32 %s253, 8
        %s255 = scalar_lea.vmem %s239, %s254
        %v256 = vld [vmem:[%s255] sm:$0xf]
        %s257 = smul.u32 %s25, 3
        %s258 = smul.u32 %s257, 128
        %s259 = scalar_lea.vmem %s1, %s258
        %v260 = vld [vmem:[%s259] sm:$0xff]
        %v261 = vld [vmem:[%s259 + $0x8] sm:$0xff]
        %v262 = vld [vmem:[%s259 + $0x10] sm:$0xff]
        %v263 = vld [vmem:[%s259 + $0x18] sm:$0xff]
        %v264 = vld [vmem:[%s259 + $0x20] sm:$0xff]
        %v265 = vld [vmem:[%s259 + $0x28] sm:$0xff]
        %v266 = vld [vmem:[%s259 + $0x30] sm:$0xff]
        %v267 = vld [vmem:[%s259 + $0x38] sm:$0xff]
        %v268 = vld [vmem:[%s259 + $0x40] sm:$0xff]
        %v269 = vld [vmem:[%s259 + $0x48] sm:$0xff]
        %v270 = vld [vmem:[%s259 + $0x50] sm:$0xff]
        %v271 = vld [vmem:[%s259 + $0x58] sm:$0xff]
        %v272 = vld [vmem:[%s259 + $0x60] sm:$0xff]
        %v273 = vld [vmem:[%s259 + $0x68] sm:$0xff]
        %v274 = vld [vmem:[%s259 + $0x70] sm:$0xff]
        %v275 = vld [vmem:[%s259 + $0x78] sm:$0xff]
        %v276 = vld [vmem:[%s255 + $0x1] sm:$0xf]
        %s277 = sadd.s32 %s257, 1
        %s278 = smul.u32 %s277, 128
        %s279 = scalar_lea.vmem %s1, %s278
        %v280 = vld [vmem:[%s279] sm:$0xff]
        %v281 = vld [vmem:[%s279 + $0x8] sm:$0xff]
        %v282 = vld [vmem:[%s279 + $0x10] sm:$0xff]
        %v283 = vld [vmem:[%s279 + $0x18] sm:$0xff]
        %v284 = vld [vmem:[%s279 + $0x20] sm:$0xff]
        %v285 = vld [vmem:[%s279 + $0x28] sm:$0xff]
        %v286 = vld [vmem:[%s279 + $0x30] sm:$0xff]
        %v287 = vld [vmem:[%s279 + $0x38] sm:$0xff]
        %v288 = vld [vmem:[%s279 + $0x40] sm:$0xff]
        %v289 = vld [vmem:[%s279 + $0x48] sm:$0xff]
        %v290 = vld [vmem:[%s279 + $0x50] sm:$0xff]
        %v291 = vld [vmem:[%s279 + $0x58] sm:$0xff]
        %v292 = vld [vmem:[%s279 + $0x60] sm:$0xff]
        %v293 = vld [vmem:[%s279 + $0x68] sm:$0xff]
        %v294 = vld [vmem:[%s279 + $0x70] sm:$0xff]
        %v295 = vld [vmem:[%s279 + $0x78] sm:$0xff]
        %296 = vmatprep.subr.mxu0 0.0
        %297 = vmatpush1.msra.mxu0 %v295
        %298 = vmatprep.subr.mxu0 0.0
        %299 = vmatpush1.msra.mxu0 %v294
        %300 = vmatprep.subr.mxu0 0.0
        %301 = vmatpush1.msra.mxu0 %v293
        %302 = vmatprep.subr.mxu0 0.0
        %303 = vmatpush1.msra.mxu0 %v292
        %304 = vmatprep.subr.mxu0 0.0
        %305 = vmatpush1.msra.mxu0 %v291
        %306 = vmatprep.subr.mxu0 0.0
        %307 = vmatpush1.msra.mxu0 %v290
        %308 = vmatprep.subr.mxu0 0.0
        %309 = vmatpush1.msra.mxu0 %v289
        %310 = vmatprep.subr.mxu0 0.0
        %311 = vmatpush1.msra.mxu0 %v288
        %312 = vmatprep.subr.mxu0 0.0
        %313 = vmatpush1.msra.mxu0 %v287
        %314 = vmatprep.subr.mxu0 0.0
        %315 = vmatpush1.msra.mxu0 %v286
        %316 = vmatprep.subr.mxu0 0.0
        %317 = vmatpush1.msra.mxu0 %v285
        %318 = vmatprep.subr.mxu0 0.0
        %319 = vmatpush1.msra.mxu0 %v284
        %320 = vmatprep.subr.mxu0 0.0
        %321 = vmatpush1.msra.mxu0 %v283
        %322 = vmatprep.subr.mxu0 0.0
        %323 = vmatpush1.msra.mxu0 %v282
        %324 = vmatprep.subr.mxu0 0.0
        %325 = vmatpush1.msra.mxu0 %v281
        %326 = vmatprep.subr.mxu0 0.0
        %327 = vmatpush1.msra.mxu0 %v280
        %328 = vmatprep.subr.mxu0 0.0
        %329 = vmatpush2.msra.mxu0 0.0
        %330 = vmatprep.subr.mxu0 0.0
        %331 = vmatpush2.msra.mxu0 0.0
        %332 = vmatprep.subr.mxu0 0.0
        %333 = vmatpush2.msra.mxu0 0.0
        %334 = vmatprep.subr.mxu0 0.0
        %335 = vmatpush2.msra.mxu0 0.0
        %336 = vmatprep.subr.mxu0 0.0
        %337 = vmatpush2.msra.mxu0 0.0
        %338 = vmatprep.subr.mxu0 0.0
        %339 = vmatpush2.msra.mxu0 0.0
        %340 = vmatprep.subr.mxu0 0.0
        %341 = vmatpush2.msra.mxu0 0.0
        %342 = vmatprep.subr.mxu0 0.0
        %343 = vmatpush2.msra.mxu0 0.0
        %344 = vmatprep.subr.mxu0 0.0
        %345 = vmatpush2.msra.mxu0 0.0
        %346 = vmatprep.subr.mxu0 0.0
        %347 = vmatpush2.msra.mxu0 0.0
        %348 = vmatprep.subr.mxu0 0.0
        %349 = vmatpush2.msra.mxu0 0.0
        %350 = vmatprep.subr.mxu0 0.0
        %351 = vmatpush2.msra.mxu0 0.0
        %352 = vmatprep.subr.mxu0 0.0
        %353 = vmatpush2.msra.mxu0 0.0
        %354 = vmatprep.subr.mxu0 0.0
        %355 = vmatpush2.msra.mxu0 0.0
        %356 = vmatprep.subr.mxu0 0.0
        %357 = vmatpush2.msra.mxu0 0.0
        %358 = vmatprep.subr.mxu0 0.0
        %359 = vmatpush2.msra.mxu0 0.0
        %360 = vmatprep.mubr.f32.mxu0 0.0
        %361 = vmatmul.mubr.f32.gmra.mxu0 %v276
        %v362 = vpop.f32.mrf.mxu0
        %v363 = vadd.f32 0.0, %v362
        %v364 = vpop.f32.mrf.mxu0
        %365 = vdwg.mxu0
        %366 = vmatprep.subr.mxu0 0.0
        %367 = vmatpush1.msra.mxu0 %v275
        %368 = vmatprep.subr.mxu0 0.0
        %369 = vmatpush1.msra.mxu0 %v274
        %370 = vmatprep.subr.mxu0 0.0
        %371 = vmatpush1.msra.mxu0 %v273
        %372 = vmatprep.subr.mxu0 0.0
        %373 = vmatpush1.msra.mxu0 %v272
        %374 = vmatprep.subr.mxu0 0.0
        %375 = vmatpush1.msra.mxu0 %v271
        %376 = vmatprep.subr.mxu0 0.0
        %377 = vmatpush1.msra.mxu0 %v270
        %378 = vmatprep.subr.mxu0 0.0
        %379 = vmatpush1.msra.mxu0 %v269
        %380 = vmatprep.subr.mxu0 0.0
        %381 = vmatpush1.msra.mxu0 %v268
        %382 = vmatprep.subr.mxu0 0.0
        %383 = vmatpush1.msra.mxu0 %v267
        %384 = vmatprep.subr.mxu0 0.0
        %385 = vmatpush1.msra.mxu0 %v266
        %386 = vmatprep.subr.mxu0 0.0
        %387 = vmatpush1.msra.mxu0 %v265
        %388 = vmatprep.subr.mxu0 0.0
        %389 = vmatpush1.msra.mxu0 %v264
        %390 = vmatprep.subr.mxu0 0.0
        %391 = vmatpush1.msra.mxu0 %v263
        %392 = vmatprep.subr.mxu0 0.0
        %393 = vmatpush1.msra.mxu0 %v262
        %394 = vmatprep.subr.mxu0 0.0
        %395 = vmatpush1.msra.mxu0 %v261
        %396 = vmatprep.subr.mxu0 0.0
        %397 = vmatpush1.msra.mxu0 %v260
        %398 = vmatprep.subr.mxu0 0.0
        %399 = vmatpush2.msra.mxu0 0.0
        %400 = vmatprep.subr.mxu0 0.0
        %401 = vmatpush2.msra.mxu0 0.0
        %402 = vmatprep.subr.mxu0 0.0
        %403 = vmatpush2.msra.mxu0 0.0
        %404 = vmatprep.subr.mxu0 0.0
        %405 = vmatpush2.msra.mxu0 0.0
        %406 = vmatprep.subr.mxu0 0.0
        %407 = vmatpush2.msra.mxu0 0.0
        %408 = vmatprep.subr.mxu0 0.0
        %409 = vmatpush2.msra.mxu0 0.0
        %410 = vmatprep.subr.mxu0 0.0
        %411 = vmatpush2.msra.mxu0 0.0
        %412 = vmatprep.subr.mxu0 0.0
        %413 = vmatpush2.msra.mxu0 0.0
        %414 = vmatprep.subr.mxu0 0.0
        %415 = vmatpush2.msra.mxu0 0.0
        %416 = vmatprep.subr.mxu0 0.0
        %417 = vmatpush2.msra.mxu0 0.0
        %418 = vmatprep.subr.mxu0 0.0
        %419 = vmatpush2.msra.mxu0 0.0
        %420 = vmatprep.subr.mxu0 0.0
        %421 = vmatpush2.msra.mxu0 0.0
        %422 = vmatprep.subr.mxu0 0.0
        %423 = vmatpush2.msra.mxu0 0.0
        %424 = vmatprep.subr.mxu0 0.0
        %425 = vmatpush2.msra.mxu0 0.0
        %426 = vmatprep.subr.mxu0 0.0
        %427 = vmatpush2.msra.mxu0 0.0
        %428 = vmatprep.subr.mxu0 0.0
        %429 = vmatpush2.msra.mxu0 0.0
        %430 = vmatprep.mubr.f32.mxu0 0.0
        %431 = vmatmul.mubr.f32.gmra.mxu0 %v256
        %v432 = vpop.f32.mrf.mxu0
        %v433 = vadd.f32 %v363, %v432
        %v434 = vpop.f32.mrf.mxu0
        %435 = vdwg.mxu0
        %v436 = vld [vmem:[%s255 + $0x2] sm:$0xf]
        %s437 = sadd.s32 %s257, 2
        %s438 = smul.u32 %s437, 128
        %s439 = scalar_lea.vmem %s1, %s438
        %v440 = vld [vmem:[%s439] sm:$0xff]
        %v441 = vld [vmem:[%s439 + $0x8] sm:$0xff]
        %v442 = vld [vmem:[%s439 + $0x10] sm:$0xff]
        %v443 = vld [vmem:[%s439 + $0x18] sm:$0xff]
        %v444 = vld [vmem:[%s439 + $0x20] sm:$0xff]
        %v445 = vld [vmem:[%s439 + $0x28] sm:$0xff]
        %v446 = vld [vmem:[%s439 + $0x30] sm:$0xff]
        %v447 = vld [vmem:[%s439 + $0x38] sm:$0xff]
        %v448 = vld [vmem:[%s439 + $0x40] sm:$0xff]
        %v449 = vld [vmem:[%s439 + $0x48] sm:$0xff]
        %v450 = vld [vmem:[%s439 + $0x50] sm:$0xff]
        %v451 = vld [vmem:[%s439 + $0x58] sm:$0xff]
        %v452 = vld [vmem:[%s439 + $0x60] sm:$0xff]
        %v453 = vld [vmem:[%s439 + $0x68] sm:$0xff]
        %v454 = vld [vmem:[%s439 + $0x70] sm:$0xff]
        %v455 = vld [vmem:[%s439 + $0x78] sm:$0xff]
        %456 = vmatprep.subr.mxu0 0.0
        %457 = vmatpush1.msra.mxu0 %v455
        %458 = vmatprep.subr.mxu0 0.0
        %459 = vmatpush1.msra.mxu0 %v454
        %460 = vmatprep.subr.mxu0 0.0
        %461 = vmatpush1.msra.mxu0 %v453
        %462 = vmatprep.subr.mxu0 0.0
        %463 = vmatpush1.msra.mxu0 %v452
        %464 = vmatprep.subr.mxu0 0.0
        %465 = vmatpush1.msra.mxu0 %v451
        %466 = vmatprep.subr.mxu0 0.0
        %467 = vmatpush1.msra.mxu0 %v450
        %468 = vmatprep.subr.mxu0 0.0
        %469 = vmatpush1.msra.mxu0 %v449
        %470 = vmatprep.subr.mxu0 0.0
        %471 = vmatpush1.msra.mxu0 %v448
        %472 = vmatprep.subr.mxu0 0.0
        %473 = vmatpush1.msra.mxu0 %v447
        %474 = vmatprep.subr.mxu0 0.0
        %475 = vmatpush1.msra.mxu0 %v446
        %476 = vmatprep.subr.mxu0 0.0
        %477 = vmatpush1.msra.mxu0 %v445
        %478 = vmatprep.subr.mxu0 0.0
        %479 = vmatpush1.msra.mxu0 %v444
        %480 = vmatprep.subr.mxu0 0.0
        %481 = vmatpush1.msra.mxu0 %v443
        %482 = vmatprep.subr.mxu0 0.0
        %483 = vmatpush1.msra.mxu0 %v442
        %484 = vmatprep.subr.mxu0 0.0
        %485 = vmatpush1.msra.mxu0 %v441
        %486 = vmatprep.subr.mxu0 0.0
        %487 = vmatpush1.msra.mxu0 %v440
        %488 = vmatprep.subr.mxu0 0.0
        %489 = vmatpush2.msra.mxu0 0.0
        %490 = vmatprep.subr.mxu0 0.0
        %491 = vmatpush2.msra.mxu0 0.0
        %492 = vmatprep.subr.mxu0 0.0
        %493 = vmatpush2.msra.mxu0 0.0
        %494 = vmatprep.subr.mxu0 0.0
        %495 = vmatpush2.msra.mxu0 0.0
        %496 = vmatprep.subr.mxu0 0.0
        %497 = vmatpush2.msra.mxu0 0.0
        %498 = vmatprep.subr.mxu0 0.0
        %499 = vmatpush2.msra.mxu0 0.0
        %500 = vmatprep.subr.mxu0 0.0
        %501 = vmatpush2.msra.mxu0 0.0
        %502 = vmatprep.subr.mxu0 0.0
        %503 = vmatpush2.msra.mxu0 0.0
        %504 = vmatprep.subr.mxu0 0.0
        %505 = vmatpush2.msra.mxu0 0.0
        %506 = vmatprep.subr.mxu0 0.0
        %507 = vmatpush2.msra.mxu0 0.0
        %508 = vmatprep.subr.mxu0 0.0
        %509 = vmatpush2.msra.mxu0 0.0
        %510 = vmatprep.subr.mxu0 0.0
        %511 = vmatpush2.msra.mxu0 0.0
        %512 = vmatprep.subr.mxu0 0.0
        %513 = vmatpush2.msra.mxu0 0.0
        %514 = vmatprep.subr.mxu0 0.0
        %515 = vmatpush2.msra.mxu0 0.0
        %516 = vmatprep.subr.mxu0 0.0
        %517 = vmatpush2.msra.mxu0 0.0
        %518 = vmatprep.subr.mxu0 0.0
        %519 = vmatpush2.msra.mxu0 0.0
        %520 = vmatprep.mubr.f32.mxu0 0.0
        %521 = vmatmul.mubr.f32.gmra.mxu0 %v436
        %v522 = vpop.f32.mrf.mxu0
        %v523 = vadd.f32 0.0, %v522
        %v524 = vpop.f32.mrf.mxu0
        %525 = vdwg.mxu0
        %v526 = vadd.f32 %v433, %v523
        %v527 = vld [vmem:[#allocation2] sm:$0xf]
        %v528 = vadd.f32 %v527, %v526
        %529 = vst [vmem:[#allocation2] sm:$0xf] %v528
        %p530 = scmp.eq.s32.totalorder %s25, 2
        // Predicated region
        $region41: #{content_encoder_forward.65} parent=35 // pred_check
          %p531 = pneg %p530
        $region42: #{content_encoder_forward.65} parent=35 // pred_check_branch
          %533 = sbr.rel (%p531) target = $region44
        $region43: #{content_encoder_forward.65} parent=35 // pred_region
          %v534 = vld [vmem:[#allocation2] sm:$0xf]
          %v535 = vld [vmem:[%s2] sm:$0x1]
          %v537 = vlaneseq
          %v538 = vshrl.u32 %v537, 7
          %v539 = vsub.s32 0, %v538
          %v540 = vrot.slane %v535, %v539
          %v542 = vadd.f32 %v534, %v540
          %v543 = vld [vmem:[%s247] sm:$0xf]
          %v544 = vadd.f32 %v542, %v543
          %v545 = vmul.f32 %v544, 0.70710677
          %546 = vst [vmem:[%s234] sm:$0xf] %v545
        $region44: #{content_encoder_forward.65} parent=35 // pred_fallthru
          _
        %s547 = sand.u32 %s143, 1
        %s548 = scalar_lea.sflag [#allocation4], %s547
        %s549 = sand.u32 %s143, 1
        %s550 = smul.addr %s549, 4
        %s551 = scalar_lea.vmem [#allocation3], %s550
        // Predicated region
        $region45: #{content_encoder_forward.65} parent=35 // pred_check
          %p552 = pneg %p153
        $region46: #{content_encoder_forward.65} parent=35 // pred_check_branch
          %554 = sbr.rel (%p552) target = $region48
        $region47: #{content_encoder_forward.65} parent=35 // pred_region
          %s556 = ssub.s32 64, 64
          %557 = vsyncadd %s548, %s556
          %s558 = smul.addr %s23, 4
          %s559 = sadd.s32 %s24, %s558
          %s560 = smul.addr %s559, 64
          %s561 = scalar_lea.hbm %s4, %s560
          %s563 = sshll.u32 %s551, 4
          %s564 = int_to_ptr.vmem [resolvable:$true] %s563
          %566 = dma.vmem_to_hbm [thread:$0]  %s564, 64, %s561, %s548
        $region48: #{content_encoder_forward.65} parent=35 // pred_fallthru
          _
      $region36: #{content_encoder_forward.65} parent=5 // pred_fallthru
        _
      %p567 = scmp.le.s32.totalorder 2, %s13
      // Predicated region
      $region49: #{content_encoder_forward.65} parent=5 // pred_check
        %p568 = pneg %p567
      $region50: #{content_encoder_forward.65} parent=5 // pred_check_branch
        %570 = sbr.rel (%p568) target = $region52
      $region51: #{content_encoder_forward.65} parent=5 // pred_region
        %s571 = ssub.s32 %s13, 2
        // Predicated region
        $region53: #{content_encoder_forward.65} parent=51 // pred_check
          %p572 = pneg %p159
        $region54: #{content_encoder_forward.65} parent=51 // pred_check_branch
          %574 = sbr.rel (%p572) target = $region56
        $region55: #{content_encoder_forward.65} parent=51 // pred_region
          %s575 = sand.u32 %s144, 1
          %s576 = scalar_lea.sflag [#allocation4], %s575
          %s577 = sand.u32 %s144, 1
          %s578 = smul.addr %s577, 4
          %s579 = scalar_lea.vmem [#allocation3], %s578
          %580 = dma.done %s576, 64
        $region56: #{content_encoder_forward.65} parent=51 // pred_fallthru
          _
      $region52: #{content_encoder_forward.65} parent=5 // pred_fallthru
        _
    $region6: #{content_encoder_forward.65} parent=1 // loop_footer
      %s17 = sadd.s32 1, %s13
    $region7: #{content_encoder_forward.65} parent=1 // loop_footer_branch
      %12 = sbr.rel target = $region3
    $region8: #{content_encoder_forward.65} parent=1 // loop_exit
      _
    %581 = vsyncpa [#allocation4], 1
    %s582 = scalar_lea.sflag [#allocation4], 1
    %583 = vsyncpa %s582, 1

</llo_original>
